<compile_context>
chip_gen: v6e
topology: v6e:2x2x1
jax: 0.10.0
libtpu: 0.0.40
codegen_flags: <defaults>
</compile_context>

<pallas_src>
import functools

import jax
import jax.numpy as jnp
from jax import lax
from jax.experimental import pallas as pl
from jax.experimental.pallas import tpu as pltpu


def _unroll_factor(trip_count):
    # Fully unroll small static loops; cap code size for large ones.
    return True if trip_count <= 32 else 8


def _group_kernel(pos_t_ref, pc_ref, nb_ref, cen_ref, idx_ref, *,
                  num_group, group_size):
    # layout: pos_t_ref (1, 3, N)  xyz coordinates, N (points) on the lane axis
    #         pc_ref    (1, N, C)  full point features, channel-last
    # outputs: nb_ref  (1, G, S, C)  neighborhoods (xyz centered)
    #          cen_ref (1, G, C)     group centers
    #          idx_ref (1, G, S)     int32 kNN indices (ascending distance)
    pos = pos_t_ref[0]                       # (3, N) f32
    pc = pc_ref[0]                           # (N, C) f32
    _, N = pos.shape
    _, C = pc.shape
    G = num_group
    S = group_size

    f32 = jnp.float32
    highest = jax.lax.Precision.HIGHEST

    iota_row = lax.broadcasted_iota(jnp.int32, (1, N), 1)    # (1, N) lane iota
    iota_g = lax.broadcasted_iota(jnp.int32, (G, 1), 0)      # (G, 1)
    iota_s = lax.broadcasted_iota(jnp.int32, (1, S), 1)      # (1, S)
    iota_s3 = lax.broadcasted_iota(jnp.int32, (1, S, 1), 1)  # (1, S, 1)
    iota_gn = lax.broadcasted_iota(jnp.int32, (G, N), 1)     # (G, N)

    # -------- farthest point sampling: pick G indices (xyz only) --------
    # TODO(synk): pytorch3d's random_start_point=True uses a random seed point;
    # here we deterministically start at index 0.
    def fps_body(g, carry):
        mind, sel, cur = carry
        sel = jnp.where(iota_g == g, cur, sel)                        # (G, 1)
        oh = (iota_row == cur).astype(f32)                            # (1, N)
        sp = jnp.sum(pos * oh, axis=1, keepdims=True)                 # (3, 1)
        d = jnp.sum((pos - sp) ** 2, axis=0, keepdims=True)           # (1, N)
        mind = jnp.minimum(mind, d)
        mx = jnp.max(mind)
        nxt = jnp.min(jnp.where(mind == mx, iota_row, N)).astype(jnp.int32)
        return mind, sel, nxt

    mind0 = jnp.full((1, N), jnp.inf, dtype=f32)
    sel0 = jnp.zeros((G, 1), dtype=jnp.int32)
    _, sel_idx, _ = lax.fori_loop(0, G, fps_body,
                                  (mind0, sel0, jnp.int32(0)),
                                  unroll=_unroll_factor(G))

    # -------- gather all G centers at once with a single MXU matmul --------
    cen_oh = (sel_idx == iota_row).astype(f32)                        # (G, N)
    centers = jnp.dot(cen_oh, pc, precision=highest,
                      preferred_element_type=f32)                     # (G, C)

    # -------- kNN: squared Euclidean distances (same ordering as cdist) ----
    cen_xyz = centers[:, 0:3]                                         # (G, 3)
    dist = jnp.zeros((G, N), dtype=f32)
    for c in range(3):
        dist = dist + (cen_xyz[:, c:c + 1] - pos[c:c + 1, :]) ** 2    # (G, N)

    # -------- iterative top-k smallest (sorted ascending, ties -> lowest idx)
    # The per-step one-hot mask is reused both for the distance kill and as
    # the MXU gather operand for that neighbor's features, so no (G, S, N)
    # one-hot slab is ever materialized.
    def topk_body(k, carry):
        d, idx_acc, nb_acc = carry
        mn = jnp.min(d, axis=1, keepdims=True)                                  # (G, 1)
        amin = jnp.min(jnp.where(d == mn, iota_gn, N), axis=1, keepdims=True)   # (G, 1)
        idx_acc = idx_acc + jnp.where(iota_s == k, amin, 0)                     # (G, S)
        mask = iota_gn == amin                                                  # (G, N)
        nb_k = jnp.dot(mask.astype(f32), pc, precision=highest,
                       preferred_element_type=f32)                              # (G, C)
        nb_acc = nb_acc + jnp.where(iota_s3 == k, nb_k[:, None, :], 0.0)        # (G, S, C)
        d = jnp.where(mask, jnp.inf, d)
        return d, idx_acc, nb_acc

    _, nn_idx, nb = lax.fori_loop(
        0, S, topk_body,
        (dist, jnp.zeros((G, S), jnp.int32), jnp.zeros((G, S, C), f32)),
        unroll=_unroll_factor(S))

    # -------- subtract center xyz from neighbor xyz channels --------
    ch_iota = lax.broadcasted_iota(jnp.int32, (1, 1, C), 2)
    nb = nb - jnp.where(ch_iota < 3, centers[:, None, :], 0.0)

    nb_ref[0] = nb.astype(nb_ref.dtype)
    cen_ref[0] = centers.astype(cen_ref.dtype)
    idx_ref[0] = nn_idx


def group_forward(pc, num_group, group_size):
    """pc: (B, N, C) with C == 3 or 6. Returns (neighborhood, center, nn_idx)."""
    B, N, C = pc.shape
    pos_t = jnp.transpose(pc[:, :, 0:3], (0, 2, 1))                   # (B, 3, N)

    kernel = functools.partial(_group_kernel, num_group=num_group,
                               group_size=group_size)
    out_shape = (
        jax.ShapeDtypeStruct((B, num_group, group_size, C), pc.dtype),
        jax.ShapeDtypeStruct((B, num_group, C), pc.dtype),
        jax.ShapeDtypeStruct((B, num_group, group_size), jnp.int32),
    )
    grid_spec = pltpu.PrefetchScalarGridSpec(
        num_scalar_prefetch=0,
        grid=(B,),
        in_specs=[
            pl.BlockSpec((1, 3, N), lambda b: (b, 0, 0)),
            pl.BlockSpec((1, N, C), lambda b: (b, 0, 0)),
        ],
        out_specs=[
            pl.BlockSpec((1, num_group, group_size, C), lambda b: (b, 0, 0, 0)),
            pl.BlockSpec((1, num_group, C), lambda b: (b, 0, 0)),
            pl.BlockSpec((1, num_group, group_size), lambda b: (b, 0, 0)),
        ],
    )
    return pl.pallas_call(
        kernel,
        out_shape=out_shape,
        grid_spec=grid_spec,
        compiler_params=pltpu.CompilerParams(
            dimension_semantics=("parallel",)),
    )(pos_t, pc)


def _group_reference(pc, num_group, group_size):
    """Plain-JAX reference matching the kernel semantics (start index 0)."""
    B, N, C = pc.shape
    pos = pc[:, :, 0:3]

    def fps_one(p):                                                   # (N, 3)
        def body(g, carry):
            mind, idxs, cur = carry
            idxs = idxs.at[g].set(cur)
            d = jnp.sum((p - p[cur]) ** 2, axis=-1)
            mind = jnp.minimum(mind, d)
            nxt = jnp.argmax(mind).astype(jnp.int32)
            return mind, idxs, nxt
        mind0 = jnp.full((N,), jnp.inf, jnp.float32)
        idxs0 = jnp.zeros((num_group,), jnp.int32)
        _, idxs, _ = lax.fori_loop(0, num_group, body,
                                   (mind0, idxs0, jnp.int32(0)))
        return idxs

    rep_idx = jax.vmap(fps_one)(pos)                                  # (B, G)
    center = jax.vmap(lambda p, i: p[i])(pc, rep_idx)                 # (B, G, C)
    d2 = jnp.sum((center[:, :, None, 0:3] - pos[:, None, :, :]) ** 2, axis=-1)
    nn_idx = jnp.argsort(d2, axis=-1)[:, :, :group_size].astype(jnp.int32)
    nb = jax.vmap(lambda p, i: p[i])(pc, nn_idx)                      # (B, G, S, C)
    nb = nb.at[:, :, :, 0:3].add(-center[:, :, None, 0:3])
    return nb, center, nn_idx


if __name__ == "__main__":
    key = jax.random.PRNGKey(0)
    B, N, C = 2, 64, 6          # points with xyz + normals
    num_group, group_size = 8, 8
    pc = jax.random.uniform(key, (B, N, C), dtype=jnp.float32)

    nb, cen, idx = group_forward(pc, num_group, group_size)
    jax.block_until_ready((nb, cen, idx))

    assert nb.shape == (B, num_group, group_size, C)
    assert cen.shape == (B, num_group, C)
    assert idx.shape == (B, num_group, group_size) and idx.dtype == jnp.int32

    nb_r, cen_r, idx_r = _group_reference(pc, num_group, group_size)
    assert jnp.array_equal(idx, idx_r), "nn_idx mismatch vs reference"
    assert jnp.allclose(cen, cen_r, atol=1e-5), "center mismatch vs reference"
    assert jnp.allclose(nb, nb_r, atol=1e-5), "neighborhood mismatch vs reference"

    print("KERNEL_OK")
</pallas_src>

<mosaic_0001>
module attributes {stable_mosaic.version = 11 : i64} {
  func.func @_group_kernel(%arg0: i32, %arg1: memref<1x3x64xf32, #tpu.memory_space<vmem>>, %arg2: memref<1x64x6xf32, #tpu.memory_space<vmem>>, %arg3: memref<1x8x8x6xf32, #tpu.memory_space<vmem>>, %arg4: memref<1x8x6xf32, #tpu.memory_space<vmem>>, %arg5: memref<1x8x8xi32, #tpu.memory_space<vmem>>) attributes {dimension_semantics = [#tpu.dimension_semantics<parallel>], iteration_bounds = array<i64: 2>, scalar_prefetch = 0 : i64, scratch_operands = 0 : i64, tpu.core_type = #tpu.core_type<tc>, window_params = [{transform_indices = @transform_0, window_bounds = array<i64: 1, 3, 64>}, {transform_indices = @transform_1, window_bounds = array<i64: 1, 64, 6>}, {transform_indices = @transform_2, window_bounds = array<i64: 1, 8, 8, 6>}, {transform_indices = @transform_3, window_bounds = array<i64: 1, 8, 6>}, {transform_indices = @transform_4, window_bounds = array<i64: 1, 8, 8>}]} {
    %c0 = arith.constant 0 : index
    %c0_0 = arith.constant 0 : index
    %c0_1 = arith.constant 0 : index
    %0 = vector.load %arg1[%c0, %c0_0, %c0_1] : memref<1x3x64xf32, #tpu.memory_space<vmem>>, vector<1x3x64xf32>
    %1 = vector.shape_cast %0 : vector<1x3x64xf32> to vector<3x64xf32>
    %c0_2 = arith.constant 0 : index
    %c0_3 = arith.constant 0 : index
    %c0_4 = arith.constant 0 : index
    %2 = vector.load %arg2[%c0_2, %c0_3, %c0_4] : memref<1x64x6xf32, #tpu.memory_space<vmem>>, vector<1x64x6xf32>
    %3 = vector.shape_cast %2 : vector<1x64x6xf32> to vector<64x6xf32>
    %4 = tpu.iota {dimensions = array<i32: 1>} : vector<1x64xi32>
    %5 = tpu.iota {dimensions = array<i32: 0>} : vector<8x1xi32>
    %6 = tpu.iota {dimensions = array<i32: 1>} : vector<1x8xi32>
    %7 = tpu.iota {dimensions = array<i32: 1>} : vector<1x8x1xi32>
    %8 = tpu.iota {dimensions = array<i32: 1>} : vector<8x64xi32>
    %cst = arith.constant 0x7F800000 : f32
    %9 = vector.broadcast %cst : f32 to vector<1x64xf32>
    %c0_i32 = arith.constant 0 : i32
    %10 = vector.broadcast %c0_i32 : i32 to vector<8x1xi32>
    %c0_i32_5 = arith.constant 0 : i32
    %c0_i32_6 = arith.constant 0 : i32
    %11 = vector.broadcast %c0_i32_6 : i32 to vector<8x1xi32>
    %12 = arith.cmpi eq, %5, %11 : vector<8x1xi32>
    %13 = vector.broadcast %c0_i32_5 : i32 to vector<8x1xi32>
    %14 = arith.select %12, %13, %10 : vector<8x1xi1>, vector<8x1xi32>
    %15 = vector.broadcast %c0_i32_5 : i32 to vector<1x64xi32>
    %16 = arith.cmpi eq, %4, %15 : vector<1x64xi32>
    %17 = arith.extui %16 : vector<1x64xi1> to vector<1x64xi32>
    %18 = arith.sitofp %17 : vector<1x64xi32> to vector<1x64xf32>
    %19 = vector.broadcast %18 : vector<1x64xf32> to vector<3x64xf32>
    %20 = arith.mulf %1, %19 : vector<3x64xf32>
    %cst_7 = arith.constant dense<0.000000e+00> : vector<3xf32>
    %21 = vector.multi_reduction <add>, %20, %cst_7 [1] : vector<3x64xf32> to vector<3xf32>
    %22 = vector.shape_cast %21 : vector<3xf32> to vector<3x1xf32>
    %23 = vector.broadcast %22 : vector<3x1xf32> to vector<3x64xf32>
    %24 = arith.subf %1, %23 : vector<3x64xf32>
    %25 = arith.mulf %24, %24 : vector<3x64xf32>
    %cst_8 = arith.constant dense<0.000000e+00> : vector<64xf32>
    %26 = vector.multi_reduction <add>, %25, %cst_8 [0] : vector<3x64xf32> to vector<64xf32>
    %27 = vector.shape_cast %26 : vector<64xf32> to vector<1x64xf32>
    %28 = arith.minimumf %9, %27 : vector<1x64xf32>
    %29 = vector.shape_cast %28 : vector<1x64xf32> to vector<1x1x64xf32>
    %cst_9 = arith.constant dense<0xFF800000> : vector<1xf32>
    %30 = vector.multi_reduction <maximumf>, %29, %cst_9 [1, 2] : vector<1x1x64xf32> to vector<1xf32>
    %31 = vector.shape_cast %30 : vector<1xf32> to vector<1x1x1xf32>
    %32 = vector.extract %31[0, 0, 0] : f32 from vector<1x1x1xf32>
    %33 = vector.broadcast %32 : f32 to vector<1x64xf32>
    %34 = arith.cmpf oeq, %28, %33 : vector<1x64xf32>
    %c64_i32 = arith.constant 64 : i32
    %35 = vector.broadcast %c64_i32 : i32 to vector<1x64xi32>
    %36 = arith.select %34, %4, %35 : vector<1x64xi1>, vector<1x64xi32>
    %37 = vector.shape_cast %36 : vector<1x64xi32> to vector<1x1x64xi32>
    %cst_10 = arith.constant dense<2147483647> : vector<1xi32>
    %38 = vector.multi_reduction <minsi>, %37, %cst_10 [1, 2] : vector<1x1x64xi32> to vector<1xi32>
    %39 = vector.shape_cast %38 : vector<1xi32> to vector<1x1x1xi32>
    %40 = vector.extract %39[0, 0, 0] : i32 from vector<1x1x1xi32>
    %c1_i32 = arith.constant 1 : i32
    %41 = vector.broadcast %c1_i32 : i32 to vector<8x1xi32>
    %42 = arith.cmpi eq, %5, %41 : vector<8x1xi32>
    %43 = vector.broadcast %40 : i32 to vector<8x1xi32>
    %44 = arith.select %42, %43, %14 : vector<8x1xi1>, vector<8x1xi32>
    %45 = vector.broadcast %40 : i32 to vector<1x64xi32>
    %46 = arith.cmpi eq, %4, %45 : vector<1x64xi32>
    %47 = arith.extui %46 : vector<1x64xi1> to vector<1x64xi32>
    %48 = arith.sitofp %47 : vector<1x64xi32> to vector<1x64xf32>
    %49 = vector.broadcast %48 : vector<1x64xf32> to vector<3x64xf32>
    %50 = arith.mulf %1, %49 : vector<3x64xf32>
    %cst_11 = arith.constant dense<0.000000e+00> : vector<3xf32>
    %51 = vector.multi_reduction <add>, %50, %cst_11 [1] : vector<3x64xf32> to vector<3xf32>
    %52 = vector.shape_cast %51 : vector<3xf32> to vector<3x1xf32>
    %53 = vector.broadcast %52 : vector<3x1xf32> to vector<3x64xf32>
    %54 = arith.subf %1, %53 : vector<3x64xf32>
    %55 = arith.mulf %54, %54 : vector<3x64xf32>
    %cst_12 = arith.constant dense<0.000000e+00> : vector<64xf32>
    %56 = vector.multi_reduction <add>, %55, %cst_12 [0] : vector<3x64xf32> to vector<64xf32>
    %57 = vector.shape_cast %56 : vector<64xf32> to vector<1x64xf32>
    %58 = arith.minimumf %28, %57 : vector<1x64xf32>
    %59 = vector.shape_cast %58 : vector<1x64xf32> to vector<1x1x64xf32>
    %cst_13 = arith.constant dense<0xFF800000> : vector<1xf32>
    %60 = vector.multi_reduction <maximumf>, %59, %cst_13 [1, 2] : vector<1x1x64xf32> to vector<1xf32>
    %61 = vector.shape_cast %60 : vector<1xf32> to vector<1x1x1xf32>
    %62 = vector.extract %61[0, 0, 0] : f32 from vector<1x1x1xf32>
    %63 = vector.broadcast %62 : f32 to vector<1x64xf32>
    %64 = arith.cmpf oeq, %58, %63 : vector<1x64xf32>
    %c64_i32_14 = arith.constant 64 : i32
    %65 = vector.broadcast %c64_i32_14 : i32 to vector<1x64xi32>
    %66 = arith.select %64, %4, %65 : vector<1x64xi1>, vector<1x64xi32>
    %67 = vector.shape_cast %66 : vector<1x64xi32> to vector<1x1x64xi32>
    %cst_15 = arith.constant dense<2147483647> : vector<1xi32>
    %68 = vector.multi_reduction <minsi>, %67, %cst_15 [1, 2] : vector<1x1x64xi32> to vector<1xi32>
    %69 = vector.shape_cast %68 : vector<1xi32> to vector<1x1x1xi32>
    %70 = vector.extract %69[0, 0, 0] : i32 from vector<1x1x1xi32>
    %c2_i32 = arith.constant 2 : i32
    %71 = vector.broadcast %c2_i32 : i32 to vector<8x1xi32>
    %72 = arith.cmpi eq, %5, %71 : vector<8x1xi32>
    %73 = vector.broadcast %70 : i32 to vector<8x1xi32>
    %74 = arith.select %72, %73, %44 : vector<8x1xi1>, vector<8x1xi32>
    %75 = vector.broadcast %70 : i32 to vector<1x64xi32>
    %76 = arith.cmpi eq, %4, %75 : vector<1x64xi32>
    %77 = arith.extui %76 : vector<1x64xi1> to vector<1x64xi32>
    %78 = arith.sitofp %77 : vector<1x64xi32> to vector<1x64xf32>
    %79 = vector.broadcast %78 : vector<1x64xf32> to vector<3x64xf32>
    %80 = arith.mulf %1, %79 : vector<3x64xf32>
    %cst_16 = arith.constant dense<0.000000e+00> : vector<3xf32>
    %81 = vector.multi_reduction <add>, %80, %cst_16 [1] : vector<3x64xf32> to vector<3xf32>
    %82 = vector.shape_cast %81 : vector<3xf32> to vector<3x1xf32>
    %83 = vector.broadcast %82 : vector<3x1xf32> to vector<3x64xf32>
    %84 = arith.subf %1, %83 : vector<3x64xf32>
    %85 = arith.mulf %84, %84 : vector<3x64xf32>
    %cst_17 = arith.constant dense<0.000000e+00> : vector<64xf32>
    %86 = vector.multi_reduction <add>, %85, %cst_17 [0] : vector<3x64xf32> to vector<64xf32>
    %87 = vector.shape_cast %86 : vector<64xf32> to vector<1x64xf32>
    %88 = arith.minimumf %58, %87 : vector<1x64xf32>
    %89 = vector.shape_cast %88 : vector<1x64xf32> to vector<1x1x64xf32>
    %cst_18 = arith.constant dense<0xFF800000> : vector<1xf32>
    %90 = vector.multi_reduction <maximumf>, %89, %cst_18 [1, 2] : vector<1x1x64xf32> to vector<1xf32>
    %91 = vector.shape_cast %90 : vector<1xf32> to vector<1x1x1xf32>
    %92 = vector.extract %91[0, 0, 0] : f32 from vector<1x1x1xf32>
    %93 = vector.broadcast %92 : f32 to vector<1x64xf32>
    %94 = arith.cmpf oeq, %88, %93 : vector<1x64xf32>
    %c64_i32_19 = arith.constant 64 : i32
    %95 = vector.broadcast %c64_i32_19 : i32 to vector<1x64xi32>
    %96 = arith.select %94, %4, %95 : vector<1x64xi1>, vector<1x64xi32>
    %97 = vector.shape_cast %96 : vector<1x64xi32> to vector<1x1x64xi32>
    %cst_20 = arith.constant dense<2147483647> : vector<1xi32>
    %98 = vector.multi_reduction <minsi>, %97, %cst_20 [1, 2] : vector<1x1x64xi32> to vector<1xi32>
    %99 = vector.shape_cast %98 : vector<1xi32> to vector<1x1x1xi32>
    %100 = vector.extract %99[0, 0, 0] : i32 from vector<1x1x1xi32>
    %c3_i32 = arith.constant 3 : i32
    %101 = vector.broadcast %c3_i32 : i32 to vector<8x1xi32>
    %102 = arith.cmpi eq, %5, %101 : vector<8x1xi32>
    %103 = vector.broadcast %100 : i32 to vector<8x1xi32>
    %104 = arith.select %102, %103, %74 : vector<8x1xi1>, vector<8x1xi32>
    %105 = vector.broadcast %100 : i32 to vector<1x64xi32>
    %106 = arith.cmpi eq, %4, %105 : vector<1x64xi32>
    %107 = arith.extui %106 : vector<1x64xi1> to vector<1x64xi32>
    %108 = arith.sitofp %107 : vector<1x64xi32> to vector<1x64xf32>
    %109 = vector.broadcast %108 : vector<1x64xf32> to vector<3x64xf32>
    %110 = arith.mulf %1, %109 : vector<3x64xf32>
    %cst_21 = arith.constant dense<0.000000e+00> : vector<3xf32>
    %111 = vector.multi_reduction <add>, %110, %cst_21 [1] : vector<3x64xf32> to vector<3xf32>
    %112 = vector.shape_cast %111 : vector<3xf32> to vector<3x1xf32>
    %113 = vector.broadcast %112 : vector<3x1xf32> to vector<3x64xf32>
    %114 = arith.subf %1, %113 : vector<3x64xf32>
    %115 = arith.mulf %114, %114 : vector<3x64xf32>
    %cst_22 = arith.constant dense<0.000000e+00> : vector<64xf32>
    %116 = vector.multi_reduction <add>, %115, %cst_22 [0] : vector<3x64xf32> to vector<64xf32>
    %117 = vector.shape_cast %116 : vector<64xf32> to vector<1x64xf32>
    %118 = arith.minimumf %88, %117 : vector<1x64xf32>
    %119 = vector.shape_cast %118 : vector<1x64xf32> to vector<1x1x64xf32>
    %cst_23 = arith.constant dense<0xFF800000> : vector<1xf32>
    %120 = vector.multi_reduction <maximumf>, %119, %cst_23 [1, 2] : vector<1x1x64xf32> to vector<1xf32>
    %121 = vector.shape_cast %120 : vector<1xf32> to vector<1x1x1xf32>
    %122 = vector.extract %121[0, 0, 0] : f32 from vector<1x1x1xf32>
    %123 = vector.broadcast %122 : f32 to vector<1x64xf32>
    %124 = arith.cmpf oeq, %118, %123 : vector<1x64xf32>
    %c64_i32_24 = arith.constant 64 : i32
    %125 = vector.broadcast %c64_i32_24 : i32 to vector<1x64xi32>
    %126 = arith.select %124, %4, %125 : vector<1x64xi1>, vector<1x64xi32>
    %127 = vector.shape_cast %126 : vector<1x64xi32> to vector<1x1x64xi32>
    %cst_25 = arith.constant dense<2147483647> : vector<1xi32>
    %128 = vector.multi_reduction <minsi>, %127, %cst_25 [1, 2] : vector<1x1x64xi32> to vector<1xi32>
    %129 = vector.shape_cast %128 : vector<1xi32> to vector<1x1x1xi32>
    %130 = vector.extract %129[0, 0, 0] : i32 from vector<1x1x1xi32>
    %c4_i32 = arith.constant 4 : i32
    %131 = vector.broadcast %c4_i32 : i32 to vector<8x1xi32>
    %132 = arith.cmpi eq, %5, %131 : vector<8x1xi32>
    %133 = vector.broadcast %130 : i32 to vector<8x1xi32>
    %134 = arith.select %132, %133, %104 : vector<8x1xi1>, vector<8x1xi32>
    %135 = vector.broadcast %130 : i32 to vector<1x64xi32>
    %136 = arith.cmpi eq, %4, %135 : vector<1x64xi32>
    %137 = arith.extui %136 : vector<1x64xi1> to vector<1x64xi32>
    %138 = arith.sitofp %137 : vector<1x64xi32> to vector<1x64xf32>
    %139 = vector.broadcast %138 : vector<1x64xf32> to vector<3x64xf32>
    %140 = arith.mulf %1, %139 : vector<3x64xf32>
    %cst_26 = arith.constant dense<0.000000e+00> : vector<3xf32>
    %141 = vector.multi_reduction <add>, %140, %cst_26 [1] : vector<3x64xf32> to vector<3xf32>
    %142 = vector.shape_cast %141 : vector<3xf32> to vector<3x1xf32>
    %143 = vector.broadcast %142 : vector<3x1xf32> to vector<3x64xf32>
    %144 = arith.subf %1, %143 : vector<3x64xf32>
    %145 = arith.mulf %144, %144 : vector<3x64xf32>
    %cst_27 = arith.constant dense<0.000000e+00> : vector<64xf32>
    %146 = vector.multi_reduction <add>, %145, %cst_27 [0] : vector<3x64xf32> to vector<64xf32>
    %147 = vector.shape_cast %146 : vector<64xf32> to vector<1x64xf32>
    %148 = arith.minimumf %118, %147 : vector<1x64xf32>
    %149 = vector.shape_cast %148 : vector<1x64xf32> to vector<1x1x64xf32>
    %cst_28 = arith.constant dense<0xFF800000> : vector<1xf32>
    %150 = vector.multi_reduction <maximumf>, %149, %cst_28 [1, 2] : vector<1x1x64xf32> to vector<1xf32>
    %151 = vector.shape_cast %150 : vector<1xf32> to vector<1x1x1xf32>
    %152 = vector.extract %151[0, 0, 0] : f32 from vector<1x1x1xf32>
    %153 = vector.broadcast %152 : f32 to vector<1x64xf32>
    %154 = arith.cmpf oeq, %148, %153 : vector<1x64xf32>
    %c64_i32_29 = arith.constant 64 : i32
    %155 = vector.broadcast %c64_i32_29 : i32 to vector<1x64xi32>
    %156 = arith.select %154, %4, %155 : vector<1x64xi1>, vector<1x64xi32>
    %157 = vector.shape_cast %156 : vector<1x64xi32> to vector<1x1x64xi32>
    %cst_30 = arith.constant dense<2147483647> : vector<1xi32>
    %158 = vector.multi_reduction <minsi>, %157, %cst_30 [1, 2] : vector<1x1x64xi32> to vector<1xi32>
    %159 = vector.shape_cast %158 : vector<1xi32> to vector<1x1x1xi32>
    %160 = vector.extract %159[0, 0, 0] : i32 from vector<1x1x1xi32>
    %c5_i32 = arith.constant 5 : i32
    %161 = vector.broadcast %c5_i32 : i32 to vector<8x1xi32>
    %162 = arith.cmpi eq, %5, %161 : vector<8x1xi32>
    %163 = vector.broadcast %160 : i32 to vector<8x1xi32>
    %164 = arith.select %162, %163, %134 : vector<8x1xi1>, vector<8x1xi32>
    %165 = vector.broadcast %160 : i32 to vector<1x64xi32>
    %166 = arith.cmpi eq, %4, %165 : vector<1x64xi32>
    %167 = arith.extui %166 : vector<1x64xi1> to vector<1x64xi32>
    %168 = arith.sitofp %167 : vector<1x64xi32> to vector<1x64xf32>
    %169 = vector.broadcast %168 : vector<1x64xf32> to vector<3x64xf32>
    %170 = arith.mulf %1, %169 : vector<3x64xf32>
    %cst_31 = arith.constant dense<0.000000e+00> : vector<3xf32>
    %171 = vector.multi_reduction <add>, %170, %cst_31 [1] : vector<3x64xf32> to vector<3xf32>
    %172 = vector.shape_cast %171 : vector<3xf32> to vector<3x1xf32>
    %173 = vector.broadcast %172 : vector<3x1xf32> to vector<3x64xf32>
    %174 = arith.subf %1, %173 : vector<3x64xf32>
    %175 = arith.mulf %174, %174 : vector<3x64xf32>
    %cst_32 = arith.constant dense<0.000000e+00> : vector<64xf32>
    %176 = vector.multi_reduction <add>, %175, %cst_32 [0] : vector<3x64xf32> to vector<64xf32>
    %177 = vector.shape_cast %176 : vector<64xf32> to vector<1x64xf32>
    %178 = arith.minimumf %148, %177 : vector<1x64xf32>
    %179 = vector.shape_cast %178 : vector<1x64xf32> to vector<1x1x64xf32>
    %cst_33 = arith.constant dense<0xFF800000> : vector<1xf32>
    %180 = vector.multi_reduction <maximumf>, %179, %cst_33 [1, 2] : vector<1x1x64xf32> to vector<1xf32>
    %181 = vector.shape_cast %180 : vector<1xf32> to vector<1x1x1xf32>
    %182 = vector.extract %181[0, 0, 0] : f32 from vector<1x1x1xf32>
    %183 = vector.broadcast %182 : f32 to vector<1x64xf32>
    %184 = arith.cmpf oeq, %178, %183 : vector<1x64xf32>
    %c64_i32_34 = arith.constant 64 : i32
    %185 = vector.broadcast %c64_i32_34 : i32 to vector<1x64xi32>
    %186 = arith.select %184, %4, %185 : vector<1x64xi1>, vector<1x64xi32>
    %187 = vector.shape_cast %186 : vector<1x64xi32> to vector<1x1x64xi32>
    %cst_35 = arith.constant dense<2147483647> : vector<1xi32>
    %188 = vector.multi_reduction <minsi>, %187, %cst_35 [1, 2] : vector<1x1x64xi32> to vector<1xi32>
    %189 = vector.shape_cast %188 : vector<1xi32> to vector<1x1x1xi32>
    %190 = vector.extract %189[0, 0, 0] : i32 from vector<1x1x1xi32>
    %c6_i32 = arith.constant 6 : i32
    %191 = vector.broadcast %c6_i32 : i32 to vector<8x1xi32>
    %192 = arith.cmpi eq, %5, %191 : vector<8x1xi32>
    %193 = vector.broadcast %190 : i32 to vector<8x1xi32>
    %194 = arith.select %192, %193, %164 : vector<8x1xi1>, vector<8x1xi32>
    %195 = vector.broadcast %190 : i32 to vector<1x64xi32>
    %196 = arith.cmpi eq, %4, %195 : vector<1x64xi32>
    %197 = arith.extui %196 : vector<1x64xi1> to vector<1x64xi32>
    %198 = arith.sitofp %197 : vector<1x64xi32> to vector<1x64xf32>
    %199 = vector.broadcast %198 : vector<1x64xf32> to vector<3x64xf32>
    %200 = arith.mulf %1, %199 : vector<3x64xf32>
    %cst_36 = arith.constant dense<0.000000e+00> : vector<3xf32>
    %201 = vector.multi_reduction <add>, %200, %cst_36 [1] : vector<3x64xf32> to vector<3xf32>
    %202 = vector.shape_cast %201 : vector<3xf32> to vector<3x1xf32>
    %203 = vector.broadcast %202 : vector<3x1xf32> to vector<3x64xf32>
    %204 = arith.subf %1, %203 : vector<3x64xf32>
    %205 = arith.mulf %204, %204 : vector<3x64xf32>
    %cst_37 = arith.constant dense<0.000000e+00> : vector<64xf32>
    %206 = vector.multi_reduction <add>, %205, %cst_37 [0] : vector<3x64xf32> to vector<64xf32>
    %207 = vector.shape_cast %206 : vector<64xf32> to vector<1x64xf32>
    %208 = arith.minimumf %178, %207 : vector<1x64xf32>
    %209 = vector.shape_cast %208 : vector<1x64xf32> to vector<1x1x64xf32>
    %cst_38 = arith.constant dense<0xFF800000> : vector<1xf32>
    %210 = vector.multi_reduction <maximumf>, %209, %cst_38 [1, 2] : vector<1x1x64xf32> to vector<1xf32>
    %211 = vector.shape_cast %210 : vector<1xf32> to vector<1x1x1xf32>
    %212 = vector.extract %211[0, 0, 0] : f32 from vector<1x1x1xf32>
    %213 = vector.broadcast %212 : f32 to vector<1x64xf32>
    %214 = arith.cmpf oeq, %208, %213 : vector<1x64xf32>
    %c64_i32_39 = arith.constant 64 : i32
    %215 = vector.broadcast %c64_i32_39 : i32 to vector<1x64xi32>
    %216 = arith.select %214, %4, %215 : vector<1x64xi1>, vector<1x64xi32>
    %217 = vector.shape_cast %216 : vector<1x64xi32> to vector<1x1x64xi32>
    %cst_40 = arith.constant dense<2147483647> : vector<1xi32>
    %218 = vector.multi_reduction <minsi>, %217, %cst_40 [1, 2] : vector<1x1x64xi32> to vector<1xi32>
    %219 = vector.shape_cast %218 : vector<1xi32> to vector<1x1x1xi32>
    %220 = vector.extract %219[0, 0, 0] : i32 from vector<1x1x1xi32>
    %c7_i32 = arith.constant 7 : i32
    %221 = vector.broadcast %c7_i32 : i32 to vector<8x1xi32>
    %222 = arith.cmpi eq, %5, %221 : vector<8x1xi32>
    %223 = vector.broadcast %220 : i32 to vector<8x1xi32>
    %224 = arith.select %222, %223, %194 : vector<8x1xi1>, vector<8x1xi32>
    %225 = vector.broadcast %220 : i32 to vector<1x64xi32>
    %226 = arith.cmpi eq, %4, %225 : vector<1x64xi32>
    %227 = arith.extui %226 : vector<1x64xi1> to vector<1x64xi32>
    %228 = arith.sitofp %227 : vector<1x64xi32> to vector<1x64xf32>
    %229 = vector.broadcast %228 : vector<1x64xf32> to vector<3x64xf32>
    %230 = arith.mulf %1, %229 : vector<3x64xf32>
    %cst_41 = arith.constant dense<0.000000e+00> : vector<3xf32>
    %231 = vector.multi_reduction <add>, %230, %cst_41 [1] : vector<3x64xf32> to vector<3xf32>
    %232 = vector.shape_cast %231 : vector<3xf32> to vector<3x1xf32>
    %233 = vector.broadcast %232 : vector<3x1xf32> to vector<3x64xf32>
    %234 = arith.subf %1, %233 : vector<3x64xf32>
    %235 = arith.mulf %234, %234 : vector<3x64xf32>
    %cst_42 = arith.constant dense<0.000000e+00> : vector<64xf32>
    %236 = vector.multi_reduction <add>, %235, %cst_42 [0] : vector<3x64xf32> to vector<64xf32>
    %237 = vector.shape_cast %236 : vector<64xf32> to vector<1x64xf32>
    %238 = arith.minimumf %208, %237 : vector<1x64xf32>
    %239 = vector.shape_cast %238 : vector<1x64xf32> to vector<1x1x64xf32>
    %cst_43 = arith.constant dense<0xFF800000> : vector<1xf32>
    %240 = vector.multi_reduction <maximumf>, %239, %cst_43 [1, 2] : vector<1x1x64xf32> to vector<1xf32>
    %241 = vector.shape_cast %240 : vector<1xf32> to vector<1x1x1xf32>
    %242 = vector.extract %241[0, 0, 0] : f32 from vector<1x1x1xf32>
    %243 = vector.broadcast %242 : f32 to vector<1x64xf32>
    %244 = arith.cmpf oeq, %238, %243 : vector<1x64xf32>
    %c64_i32_44 = arith.constant 64 : i32
    %245 = vector.broadcast %c64_i32_44 : i32 to vector<1x64xi32>
    %246 = arith.select %244, %4, %245 : vector<1x64xi1>, vector<1x64xi32>
    %247 = vector.shape_cast %246 : vector<1x64xi32> to vector<1x1x64xi32>
    %cst_45 = arith.constant dense<2147483647> : vector<1xi32>
    %248 = vector.multi_reduction <minsi>, %247, %cst_45 [1, 2] : vector<1x1x64xi32> to vector<1xi32>
    %249 = vector.shape_cast %248 : vector<1xi32> to vector<1x1x1xi32>
    %250 = vector.extract %249[0, 0, 0] : i32 from vector<1x1x1xi32>
    %c8_i32 = arith.constant 8 : i32
    %251 = vector.broadcast %224 : vector<8x1xi32> to vector<8x64xi32>
    %252 = vector.broadcast %4 : vector<1x64xi32> to vector<8x64xi32>
    %253 = arith.cmpi eq, %251, %252 : vector<8x64xi32>
    %254 = arith.extui %253 : vector<8x64xi1> to vector<8x64xi32>
    %255 = arith.sitofp %254 : vector<8x64xi32> to vector<8x64xf32>
    %cst_46 = arith.constant dense<0.000000e+00> : vector<8x6xf32>
    %256 = tpu.matmul %255, %3, %cst_46 {dimension_numbers = #tpu.dot_dimension_numbers<[1], [0], [0], [1], [0, 0, 1, 1], [], []>, precision = #tpu.contract_precision<fp32>} : vector<8x64xf32>, vector<64x6xf32>, vector<8x6xf32> -> vector<8x6xf32>
    %257 = vector.extract_strided_slice %256 {offsets = [0, 0], sizes = [8, 3], strides = [1, 1]} : vector<8x6xf32> to vector<8x3xf32>
    %cst_47 = arith.constant 0.000000e+00 : f32
    %258 = vector.broadcast %cst_47 : f32 to vector<8x64xf32>
    %259 = vector.extract_strided_slice %257 {offsets = [0, 0], sizes = [8, 1], strides = [1, 1]} : vector<8x3xf32> to vector<8x1xf32>
    %260 = vector.extract_strided_slice %1 {offsets = [0, 0], sizes = [1, 64], strides = [1, 1]} : vector<3x64xf32> to vector<1x64xf32>
    %261 = vector.broadcast %259 : vector<8x1xf32> to vector<8x64xf32>
    %262 = vector.broadcast %260 : vector<1x64xf32> to vector<8x64xf32>
    %263 = arith.subf %261, %262 : vector<8x64xf32>
    %264 = arith.mulf %263, %263 : vector<8x64xf32>
    %265 = arith.addf %258, %264 : vector<8x64xf32>
    %266 = vector.extract_strided_slice %257 {offsets = [0, 1], sizes = [8, 1], strides = [1, 1]} : vector<8x3xf32> to vector<8x1xf32>
    %267 = vector.extract_strided_slice %1 {offsets = [1, 0], sizes = [1, 64], strides = [1, 1]} : vector<3x64xf32> to vector<1x64xf32>
    %268 = vector.broadcast %266 : vector<8x1xf32> to vector<8x64xf32>
    %269 = vector.broadcast %267 : vector<1x64xf32> to vector<8x64xf32>
    %270 = arith.subf %268, %269 : vector<8x64xf32>
    %271 = arith.mulf %270, %270 : vector<8x64xf32>
    %272 = arith.addf %265, %271 : vector<8x64xf32>
    %273 = vector.extract_strided_slice %257 {offsets = [0, 2], sizes = [8, 1], strides = [1, 1]} : vector<8x3xf32> to vector<8x1xf32>
    %274 = vector.extract_strided_slice %1 {offsets = [2, 0], sizes = [1, 64], strides = [1, 1]} : vector<3x64xf32> to vector<1x64xf32>
    %275 = vector.broadcast %273 : vector<8x1xf32> to vector<8x64xf32>
    %276 = vector.broadcast %274 : vector<1x64xf32> to vector<8x64xf32>
    %277 = arith.subf %275, %276 : vector<8x64xf32>
    %278 = arith.mulf %277, %277 : vector<8x64xf32>
    %279 = arith.addf %272, %278 : vector<8x64xf32>
    %c0_i32_48 = arith.constant 0 : i32
    %280 = vector.broadcast %c0_i32_48 : i32 to vector<8x8xi32>
    %cst_49 = arith.constant 0.000000e+00 : f32
    %281 = vector.broadcast %cst_49 : f32 to vector<8x8x6xf32>
    %c0_i32_50 = arith.constant 0 : i32
    %cst_51 = arith.constant dense<0x7F800000> : vector<8xf32>
    %282 = vector.multi_reduction <minimumf>, %279, %cst_51 [1] : vector<8x64xf32> to vector<8xf32>
    %283 = vector.shape_cast %282 : vector<8xf32> to vector<8x1xf32>
    %284 = vector.broadcast %283 : vector<8x1xf32> to vector<8x64xf32>
    %285 = arith.cmpf oeq, %279, %284 : vector<8x64xf32>
    %c64_i32_52 = arith.constant 64 : i32
    %286 = vector.broadcast %c64_i32_52 : i32 to vector<8x64xi32>
    %287 = arith.select %285, %8, %286 : vector<8x64xi1>, vector<8x64xi32>
    %cst_53 = arith.constant dense<2147483647> : vector<8xi32>
    %288 = vector.multi_reduction <minsi>, %287, %cst_53 [1] : vector<8x64xi32> to vector<8xi32>
    %289 = vector.shape_cast %288 : vector<8xi32> to vector<8x1xi32>
    %290 = vector.broadcast %c0_i32_50 : i32 to vector<1x8xi32>
    %291 = arith.cmpi eq, %6, %290 : vector<1x8xi32>
    %c0_i32_54 = arith.constant 0 : i32
    %292 = vector.shape_cast %291 : vector<1x8xi1> to vector<1x8xi1>
    %293 = vector.broadcast %292 : vector<1x8xi1> to vector<8x8xi1>
    %294 = vector.shape_cast %289 : vector<8x1xi32> to vector<8x1xi32>
    %295 = vector.broadcast %294 : vector<8x1xi32> to vector<8x8xi32>
    %296 = vector.broadcast %c0_i32_54 : i32 to vector<8x8xi32>
    %297 = arith.select %293, %295, %296 : vector<8x8xi1>, vector<8x8xi32>
    %298 = arith.addi %280, %297 : vector<8x8xi32>
    %299 = vector.broadcast %289 : vector<8x1xi32> to vector<8x64xi32>
    %300 = arith.cmpi eq, %8, %299 : vector<8x64xi32>
    %301 = arith.extui %300 : vector<8x64xi1> to vector<8x64xi32>
    %302 = arith.sitofp %301 : vector<8x64xi32> to vector<8x64xf32>
    %cst_55 = arith.constant dense<0.000000e+00> : vector<8x6xf32>
    %303 = tpu.matmul %302, %3, %cst_55 {dimension_numbers = #tpu.dot_dimension_numbers<[1], [0], [0], [1], [0, 0, 1, 1], [], []>, precision = #tpu.contract_precision<fp32>} : vector<8x64xf32>, vector<64x6xf32>, vector<8x6xf32> -> vector<8x6xf32>
    %304 = vector.broadcast %c0_i32_50 : i32 to vector<1x8x1xi32>
    %305 = arith.cmpi eq, %7, %304 : vector<1x8x1xi32>
    %306 = vector.shape_cast %303 : vector<8x6xf32> to vector<8x1x6xf32>
    %cst_56 = arith.constant 0.000000e+00 : f32
    %307 = vector.shape_cast %305 : vector<1x8x1xi1> to vector<1x8x1xi1>
    %308 = vector.broadcast %307 : vector<1x8x1xi1> to vector<8x8x6xi1>
    %309 = vector.shape_cast %306 : vector<8x1x6xf32> to vector<8x1x6xf32>
    %310 = vector.broadcast %309 : vector<8x1x6xf32> to vector<8x8x6xf32>
    %311 = vector.broadcast %cst_56 : f32 to vector<8x8x6xf32>
    %312 = arith.select %308, %310, %311 : vector<8x8x6xi1>, vector<8x8x6xf32>
    %313 = arith.addf %281, %312 : vector<8x8x6xf32>
    %cst_57 = arith.constant 0x7F800000 : f32
    %314 = vector.broadcast %cst_57 : f32 to vector<8x64xf32>
    %315 = arith.select %300, %314, %279 : vector<8x64xi1>, vector<8x64xf32>
    %c1_i32_58 = arith.constant 1 : i32
    %cst_59 = arith.constant dense<0x7F800000> : vector<8xf32>
    %316 = vector.multi_reduction <minimumf>, %315, %cst_59 [1] : vector<8x64xf32> to vector<8xf32>
    %317 = vector.shape_cast %316 : vector<8xf32> to vector<8x1xf32>
    %318 = vector.broadcast %317 : vector<8x1xf32> to vector<8x64xf32>
    %319 = arith.cmpf oeq, %315, %318 : vector<8x64xf32>
    %c64_i32_60 = arith.constant 64 : i32
    %320 = vector.broadcast %c64_i32_60 : i32 to vector<8x64xi32>
    %321 = arith.select %319, %8, %320 : vector<8x64xi1>, vector<8x64xi32>
    %cst_61 = arith.constant dense<2147483647> : vector<8xi32>
    %322 = vector.multi_reduction <minsi>, %321, %cst_61 [1] : vector<8x64xi32> to vector<8xi32>
    %323 = vector.shape_cast %322 : vector<8xi32> to vector<8x1xi32>
    %324 = vector.broadcast %c1_i32_58 : i32 to vector<1x8xi32>
    %325 = arith.cmpi eq, %6, %324 : vector<1x8xi32>
    %c0_i32_62 = arith.constant 0 : i32
    %326 = vector.shape_cast %325 : vector<1x8xi1> to vector<1x8xi1>
    %327 = vector.broadcast %326 : vector<1x8xi1> to vector<8x8xi1>
    %328 = vector.shape_cast %323 : vector<8x1xi32> to vector<8x1xi32>
    %329 = vector.broadcast %328 : vector<8x1xi32> to vector<8x8xi32>
    %330 = vector.broadcast %c0_i32_62 : i32 to vector<8x8xi32>
    %331 = arith.select %327, %329, %330 : vector<8x8xi1>, vector<8x8xi32>
    %332 = arith.addi %298, %331 : vector<8x8xi32>
    %333 = vector.broadcast %323 : vector<8x1xi32> to vector<8x64xi32>
    %334 = arith.cmpi eq, %8, %333 : vector<8x64xi32>
    %335 = arith.extui %334 : vector<8x64xi1> to vector<8x64xi32>
    %336 = arith.sitofp %335 : vector<8x64xi32> to vector<8x64xf32>
    %cst_63 = arith.constant dense<0.000000e+00> : vector<8x6xf32>
    %337 = tpu.matmul %336, %3, %cst_63 {dimension_numbers = #tpu.dot_dimension_numbers<[1], [0], [0], [1], [0, 0, 1, 1], [], []>, precision = #tpu.contract_precision<fp32>} : vector<8x64xf32>, vector<64x6xf32>, vector<8x6xf32> -> vector<8x6xf32>
    %338 = vector.broadcast %c1_i32_58 : i32 to vector<1x8x1xi32>
    %339 = arith.cmpi eq, %7, %338 : vector<1x8x1xi32>
    %340 = vector.shape_cast %337 : vector<8x6xf32> to vector<8x1x6xf32>
    %cst_64 = arith.constant 0.000000e+00 : f32
    %341 = vector.shape_cast %339 : vector<1x8x1xi1> to vector<1x8x1xi1>
    %342 = vector.broadcast %341 : vector<1x8x1xi1> to vector<8x8x6xi1>
    %343 = vector.shape_cast %340 : vector<8x1x6xf32> to vector<8x1x6xf32>
    %344 = vector.broadcast %343 : vector<8x1x6xf32> to vector<8x8x6xf32>
    %345 = vector.broadcast %cst_64 : f32 to vector<8x8x6xf32>
    %346 = arith.select %342, %344, %345 : vector<8x8x6xi1>, vector<8x8x6xf32>
    %347 = arith.addf %313, %346 : vector<8x8x6xf32>
    %cst_65 = arith.constant 0x7F800000 : f32
    %348 = vector.broadcast %cst_65 : f32 to vector<8x64xf32>
    %349 = arith.select %334, %348, %315 : vector<8x64xi1>, vector<8x64xf32>
    %c2_i32_66 = arith.constant 2 : i32
    %cst_67 = arith.constant dense<0x7F800000> : vector<8xf32>
    %350 = vector.multi_reduction <minimumf>, %349, %cst_67 [1] : vector<8x64xf32> to vector<8xf32>
    %351 = vector.shape_cast %350 : vector<8xf32> to vector<8x1xf32>
    %352 = vector.broadcast %351 : vector<8x1xf32> to vector<8x64xf32>
    %353 = arith.cmpf oeq, %349, %352 : vector<8x64xf32>
    %c64_i32_68 = arith.constant 64 : i32
    %354 = vector.broadcast %c64_i32_68 : i32 to vector<8x64xi32>
    %355 = arith.select %353, %8, %354 : vector<8x64xi1>, vector<8x64xi32>
    %cst_69 = arith.constant dense<2147483647> : vector<8xi32>
    %356 = vector.multi_reduction <minsi>, %355, %cst_69 [1] : vector<8x64xi32> to vector<8xi32>
    %357 = vector.shape_cast %356 : vector<8xi32> to vector<8x1xi32>
    %358 = vector.broadcast %c2_i32_66 : i32 to vector<1x8xi32>
    %359 = arith.cmpi eq, %6, %358 : vector<1x8xi32>
    %c0_i32_70 = arith.constant 0 : i32
    %360 = vector.shape_cast %359 : vector<1x8xi1> to vector<1x8xi1>
    %361 = vector.broadcast %360 : vector<1x8xi1> to vector<8x8xi1>
    %362 = vector.shape_cast %357 : vector<8x1xi32> to vector<8x1xi32>
    %363 = vector.broadcast %362 : vector<8x1xi32> to vector<8x8xi32>
    %364 = vector.broadcast %c0_i32_70 : i32 to vector<8x8xi32>
    %365 = arith.select %361, %363, %364 : vector<8x8xi1>, vector<8x8xi32>
    %366 = arith.addi %332, %365 : vector<8x8xi32>
    %367 = vector.broadcast %357 : vector<8x1xi32> to vector<8x64xi32>
    %368 = arith.cmpi eq, %8, %367 : vector<8x64xi32>
    %369 = arith.extui %368 : vector<8x64xi1> to vector<8x64xi32>
    %370 = arith.sitofp %369 : vector<8x64xi32> to vector<8x64xf32>
    %cst_71 = arith.constant dense<0.000000e+00> : vector<8x6xf32>
    %371 = tpu.matmul %370, %3, %cst_71 {dimension_numbers = #tpu.dot_dimension_numbers<[1], [0], [0], [1], [0, 0, 1, 1], [], []>, precision = #tpu.contract_precision<fp32>} : vector<8x64xf32>, vector<64x6xf32>, vector<8x6xf32> -> vector<8x6xf32>
    %372 = vector.broadcast %c2_i32_66 : i32 to vector<1x8x1xi32>
    %373 = arith.cmpi eq, %7, %372 : vector<1x8x1xi32>
    %374 = vector.shape_cast %371 : vector<8x6xf32> to vector<8x1x6xf32>
    %cst_72 = arith.constant 0.000000e+00 : f32
    %375 = vector.shape_cast %373 : vector<1x8x1xi1> to vector<1x8x1xi1>
    %376 = vector.broadcast %375 : vector<1x8x1xi1> to vector<8x8x6xi1>
    %377 = vector.shape_cast %374 : vector<8x1x6xf32> to vector<8x1x6xf32>
    %378 = vector.broadcast %377 : vector<8x1x6xf32> to vector<8x8x6xf32>
    %379 = vector.broadcast %cst_72 : f32 to vector<8x8x6xf32>
    %380 = arith.select %376, %378, %379 : vector<8x8x6xi1>, vector<8x8x6xf32>
    %381 = arith.addf %347, %380 : vector<8x8x6xf32>
    %cst_73 = arith.constant 0x7F800000 : f32
    %382 = vector.broadcast %cst_73 : f32 to vector<8x64xf32>
    %383 = arith.select %368, %382, %349 : vector<8x64xi1>, vector<8x64xf32>
    %c3_i32_74 = arith.constant 3 : i32
    %cst_75 = arith.constant dense<0x7F800000> : vector<8xf32>
    %384 = vector.multi_reduction <minimumf>, %383, %cst_75 [1] : vector<8x64xf32> to vector<8xf32>
    %385 = vector.shape_cast %384 : vector<8xf32> to vector<8x1xf32>
    %386 = vector.broadcast %385 : vector<8x1xf32> to vector<8x64xf32>
    %387 = arith.cmpf oeq, %383, %386 : vector<8x64xf32>
    %c64_i32_76 = arith.constant 64 : i32
    %388 = vector.broadcast %c64_i32_76 : i32 to vector<8x64xi32>
    %389 = arith.select %387, %8, %388 : vector<8x64xi1>, vector<8x64xi32>
    %cst_77 = arith.constant dense<2147483647> : vector<8xi32>
    %390 = vector.multi_reduction <minsi>, %389, %cst_77 [1] : vector<8x64xi32> to vector<8xi32>
    %391 = vector.shape_cast %390 : vector<8xi32> to vector<8x1xi32>
    %392 = vector.broadcast %c3_i32_74 : i32 to vector<1x8xi32>
    %393 = arith.cmpi eq, %6, %392 : vector<1x8xi32>
    %c0_i32_78 = arith.constant 0 : i32
    %394 = vector.shape_cast %393 : vector<1x8xi1> to vector<1x8xi1>
    %395 = vector.broadcast %394 : vector<1x8xi1> to vector<8x8xi1>
    %396 = vector.shape_cast %391 : vector<8x1xi32> to vector<8x1xi32>
    %397 = vector.broadcast %396 : vector<8x1xi32> to vector<8x8xi32>
    %398 = vector.broadcast %c0_i32_78 : i32 to vector<8x8xi32>
    %399 = arith.select %395, %397, %398 : vector<8x8xi1>, vector<8x8xi32>
    %400 = arith.addi %366, %399 : vector<8x8xi32>
    %401 = vector.broadcast %391 : vector<8x1xi32> to vector<8x64xi32>
    %402 = arith.cmpi eq, %8, %401 : vector<8x64xi32>
    %403 = arith.extui %402 : vector<8x64xi1> to vector<8x64xi32>
    %404 = arith.sitofp %403 : vector<8x64xi32> to vector<8x64xf32>
    %cst_79 = arith.constant dense<0.000000e+00> : vector<8x6xf32>
    %405 = tpu.matmul %404, %3, %cst_79 {dimension_numbers = #tpu.dot_dimension_numbers<[1], [0], [0], [1], [0, 0, 1, 1], [], []>, precision = #tpu.contract_precision<fp32>} : vector<8x64xf32>, vector<64x6xf32>, vector<8x6xf32> -> vector<8x6xf32>
    %406 = vector.broadcast %c3_i32_74 : i32 to vector<1x8x1xi32>
    %407 = arith.cmpi eq, %7, %406 : vector<1x8x1xi32>
    %408 = vector.shape_cast %405 : vector<8x6xf32> to vector<8x1x6xf32>
    %cst_80 = arith.constant 0.000000e+00 : f32
    %409 = vector.shape_cast %407 : vector<1x8x1xi1> to vector<1x8x1xi1>
    %410 = vector.broadcast %409 : vector<1x8x1xi1> to vector<8x8x6xi1>
    %411 = vector.shape_cast %408 : vector<8x1x6xf32> to vector<8x1x6xf32>
    %412 = vector.broadcast %411 : vector<8x1x6xf32> to vector<8x8x6xf32>
    %413 = vector.broadcast %cst_80 : f32 to vector<8x8x6xf32>
    %414 = arith.select %410, %412, %413 : vector<8x8x6xi1>, vector<8x8x6xf32>
    %415 = arith.addf %381, %414 : vector<8x8x6xf32>
    %cst_81 = arith.constant 0x7F800000 : f32
    %416 = vector.broadcast %cst_81 : f32 to vector<8x64xf32>
    %417 = arith.select %402, %416, %383 : vector<8x64xi1>, vector<8x64xf32>
    %c4_i32_82 = arith.constant 4 : i32
    %cst_83 = arith.constant dense<0x7F800000> : vector<8xf32>
    %418 = vector.multi_reduction <minimumf>, %417, %cst_83 [1] : vector<8x64xf32> to vector<8xf32>
    %419 = vector.shape_cast %418 : vector<8xf32> to vector<8x1xf32>
    %420 = vector.broadcast %419 : vector<8x1xf32> to vector<8x64xf32>
    %421 = arith.cmpf oeq, %417, %420 : vector<8x64xf32>
    %c64_i32_84 = arith.constant 64 : i32
    %422 = vector.broadcast %c64_i32_84 : i32 to vector<8x64xi32>
    %423 = arith.select %421, %8, %422 : vector<8x64xi1>, vector<8x64xi32>
    %cst_85 = arith.constant dense<2147483647> : vector<8xi32>
    %424 = vector.multi_reduction <minsi>, %423, %cst_85 [1] : vector<8x64xi32> to vector<8xi32>
    %425 = vector.shape_cast %424 : vector<8xi32> to vector<8x1xi32>
    %426 = vector.broadcast %c4_i32_82 : i32 to vector<1x8xi32>
    %427 = arith.cmpi eq, %6, %426 : vector<1x8xi32>
    %c0_i32_86 = arith.constant 0 : i32
    %428 = vector.shape_cast %427 : vector<1x8xi1> to vector<1x8xi1>
    %429 = vector.broadcast %428 : vector<1x8xi1> to vector<8x8xi1>
    %430 = vector.shape_cast %425 : vector<8x1xi32> to vector<8x1xi32>
    %431 = vector.broadcast %430 : vector<8x1xi32> to vector<8x8xi32>
    %432 = vector.broadcast %c0_i32_86 : i32 to vector<8x8xi32>
    %433 = arith.select %429, %431, %432 : vector<8x8xi1>, vector<8x8xi32>
    %434 = arith.addi %400, %433 : vector<8x8xi32>
    %435 = vector.broadcast %425 : vector<8x1xi32> to vector<8x64xi32>
    %436 = arith.cmpi eq, %8, %435 : vector<8x64xi32>
    %437 = arith.extui %436 : vector<8x64xi1> to vector<8x64xi32>
    %438 = arith.sitofp %437 : vector<8x64xi32> to vector<8x64xf32>
    %cst_87 = arith.constant dense<0.000000e+00> : vector<8x6xf32>
    %439 = tpu.matmul %438, %3, %cst_87 {dimension_numbers = #tpu.dot_dimension_numbers<[1], [0], [0], [1], [0, 0, 1, 1], [], []>, precision = #tpu.contract_precision<fp32>} : vector<8x64xf32>, vector<64x6xf32>, vector<8x6xf32> -> vector<8x6xf32>
    %440 = vector.broadcast %c4_i32_82 : i32 to vector<1x8x1xi32>
    %441 = arith.cmpi eq, %7, %440 : vector<1x8x1xi32>
    %442 = vector.shape_cast %439 : vector<8x6xf32> to vector<8x1x6xf32>
    %cst_88 = arith.constant 0.000000e+00 : f32
    %443 = vector.shape_cast %441 : vector<1x8x1xi1> to vector<1x8x1xi1>
    %444 = vector.broadcast %443 : vector<1x8x1xi1> to vector<8x8x6xi1>
    %445 = vector.shape_cast %442 : vector<8x1x6xf32> to vector<8x1x6xf32>
    %446 = vector.broadcast %445 : vector<8x1x6xf32> to vector<8x8x6xf32>
    %447 = vector.broadcast %cst_88 : f32 to vector<8x8x6xf32>
    %448 = arith.select %444, %446, %447 : vector<8x8x6xi1>, vector<8x8x6xf32>
    %449 = arith.addf %415, %448 : vector<8x8x6xf32>
    %cst_89 = arith.constant 0x7F800000 : f32
    %450 = vector.broadcast %cst_89 : f32 to vector<8x64xf32>
    %451 = arith.select %436, %450, %417 : vector<8x64xi1>, vector<8x64xf32>
    %c5_i32_90 = arith.constant 5 : i32
    %cst_91 = arith.constant dense<0x7F800000> : vector<8xf32>
    %452 = vector.multi_reduction <minimumf>, %451, %cst_91 [1] : vector<8x64xf32> to vector<8xf32>
    %453 = vector.shape_cast %452 : vector<8xf32> to vector<8x1xf32>
    %454 = vector.broadcast %453 : vector<8x1xf32> to vector<8x64xf32>
    %455 = arith.cmpf oeq, %451, %454 : vector<8x64xf32>
    %c64_i32_92 = arith.constant 64 : i32
    %456 = vector.broadcast %c64_i32_92 : i32 to vector<8x64xi32>
    %457 = arith.select %455, %8, %456 : vector<8x64xi1>, vector<8x64xi32>
    %cst_93 = arith.constant dense<2147483647> : vector<8xi32>
    %458 = vector.multi_reduction <minsi>, %457, %cst_93 [1] : vector<8x64xi32> to vector<8xi32>
    %459 = vector.shape_cast %458 : vector<8xi32> to vector<8x1xi32>
    %460 = vector.broadcast %c5_i32_90 : i32 to vector<1x8xi32>
    %461 = arith.cmpi eq, %6, %460 : vector<1x8xi32>
    %c0_i32_94 = arith.constant 0 : i32
    %462 = vector.shape_cast %461 : vector<1x8xi1> to vector<1x8xi1>
    %463 = vector.broadcast %462 : vector<1x8xi1> to vector<8x8xi1>
    %464 = vector.shape_cast %459 : vector<8x1xi32> to vector<8x1xi32>
    %465 = vector.broadcast %464 : vector<8x1xi32> to vector<8x8xi32>
    %466 = vector.broadcast %c0_i32_94 : i32 to vector<8x8xi32>
    %467 = arith.select %463, %465, %466 : vector<8x8xi1>, vector<8x8xi32>
    %468 = arith.addi %434, %467 : vector<8x8xi32>
    %469 = vector.broadcast %459 : vector<8x1xi32> to vector<8x64xi32>
    %470 = arith.cmpi eq, %8, %469 : vector<8x64xi32>
    %471 = arith.extui %470 : vector<8x64xi1> to vector<8x64xi32>
    %472 = arith.sitofp %471 : vector<8x64xi32> to vector<8x64xf32>
    %cst_95 = arith.constant dense<0.000000e+00> : vector<8x6xf32>
    %473 = tpu.matmul %472, %3, %cst_95 {dimension_numbers = #tpu.dot_dimension_numbers<[1], [0], [0], [1], [0, 0, 1, 1], [], []>, precision = #tpu.contract_precision<fp32>} : vector<8x64xf32>, vector<64x6xf32>, vector<8x6xf32> -> vector<8x6xf32>
    %474 = vector.broadcast %c5_i32_90 : i32 to vector<1x8x1xi32>
    %475 = arith.cmpi eq, %7, %474 : vector<1x8x1xi32>
    %476 = vector.shape_cast %473 : vector<8x6xf32> to vector<8x1x6xf32>
    %cst_96 = arith.constant 0.000000e+00 : f32
    %477 = vector.shape_cast %475 : vector<1x8x1xi1> to vector<1x8x1xi1>
    %478 = vector.broadcast %477 : vector<1x8x1xi1> to vector<8x8x6xi1>
    %479 = vector.shape_cast %476 : vector<8x1x6xf32> to vector<8x1x6xf32>
    %480 = vector.broadcast %479 : vector<8x1x6xf32> to vector<8x8x6xf32>
    %481 = vector.broadcast %cst_96 : f32 to vector<8x8x6xf32>
    %482 = arith.select %478, %480, %481 : vector<8x8x6xi1>, vector<8x8x6xf32>
    %483 = arith.addf %449, %482 : vector<8x8x6xf32>
    %cst_97 = arith.constant 0x7F800000 : f32
    %484 = vector.broadcast %cst_97 : f32 to vector<8x64xf32>
    %485 = arith.select %470, %484, %451 : vector<8x64xi1>, vector<8x64xf32>
    %c6_i32_98 = arith.constant 6 : i32
    %cst_99 = arith.constant dense<0x7F800000> : vector<8xf32>
    %486 = vector.multi_reduction <minimumf>, %485, %cst_99 [1] : vector<8x64xf32> to vector<8xf32>
    %487 = vector.shape_cast %486 : vector<8xf32> to vector<8x1xf32>
    %488 = vector.broadcast %487 : vector<8x1xf32> to vector<8x64xf32>
    %489 = arith.cmpf oeq, %485, %488 : vector<8x64xf32>
    %c64_i32_100 = arith.constant 64 : i32
    %490 = vector.broadcast %c64_i32_100 : i32 to vector<8x64xi32>
    %491 = arith.select %489, %8, %490 : vector<8x64xi1>, vector<8x64xi32>
    %cst_101 = arith.constant dense<2147483647> : vector<8xi32>
    %492 = vector.multi_reduction <minsi>, %491, %cst_101 [1] : vector<8x64xi32> to vector<8xi32>
    %493 = vector.shape_cast %492 : vector<8xi32> to vector<8x1xi32>
    %494 = vector.broadcast %c6_i32_98 : i32 to vector<1x8xi32>
    %495 = arith.cmpi eq, %6, %494 : vector<1x8xi32>
    %c0_i32_102 = arith.constant 0 : i32
    %496 = vector.shape_cast %495 : vector<1x8xi1> to vector<1x8xi1>
    %497 = vector.broadcast %496 : vector<1x8xi1> to vector<8x8xi1>
    %498 = vector.shape_cast %493 : vector<8x1xi32> to vector<8x1xi32>
    %499 = vector.broadcast %498 : vector<8x1xi32> to vector<8x8xi32>
    %500 = vector.broadcast %c0_i32_102 : i32 to vector<8x8xi32>
    %501 = arith.select %497, %499, %500 : vector<8x8xi1>, vector<8x8xi32>
    %502 = arith.addi %468, %501 : vector<8x8xi32>
    %503 = vector.broadcast %493 : vector<8x1xi32> to vector<8x64xi32>
    %504 = arith.cmpi eq, %8, %503 : vector<8x64xi32>
    %505 = arith.extui %504 : vector<8x64xi1> to vector<8x64xi32>
    %506 = arith.sitofp %505 : vector<8x64xi32> to vector<8x64xf32>
    %cst_103 = arith.constant dense<0.000000e+00> : vector<8x6xf32>
    %507 = tpu.matmul %506, %3, %cst_103 {dimension_numbers = #tpu.dot_dimension_numbers<[1], [0], [0], [1], [0, 0, 1, 1], [], []>, precision = #tpu.contract_precision<fp32>} : vector<8x64xf32>, vector<64x6xf32>, vector<8x6xf32> -> vector<8x6xf32>
    %508 = vector.broadcast %c6_i32_98 : i32 to vector<1x8x1xi32>
    %509 = arith.cmpi eq, %7, %508 : vector<1x8x1xi32>
    %510 = vector.shape_cast %507 : vector<8x6xf32> to vector<8x1x6xf32>
    %cst_104 = arith.constant 0.000000e+00 : f32
    %511 = vector.shape_cast %509 : vector<1x8x1xi1> to vector<1x8x1xi1>
    %512 = vector.broadcast %511 : vector<1x8x1xi1> to vector<8x8x6xi1>
    %513 = vector.shape_cast %510 : vector<8x1x6xf32> to vector<8x1x6xf32>
    %514 = vector.broadcast %513 : vector<8x1x6xf32> to vector<8x8x6xf32>
    %515 = vector.broadcast %cst_104 : f32 to vector<8x8x6xf32>
    %516 = arith.select %512, %514, %515 : vector<8x8x6xi1>, vector<8x8x6xf32>
    %517 = arith.addf %483, %516 : vector<8x8x6xf32>
    %cst_105 = arith.constant 0x7F800000 : f32
    %518 = vector.broadcast %cst_105 : f32 to vector<8x64xf32>
    %519 = arith.select %504, %518, %485 : vector<8x64xi1>, vector<8x64xf32>
    %c7_i32_106 = arith.constant 7 : i32
    %cst_107 = arith.constant dense<0x7F800000> : vector<8xf32>
    %520 = vector.multi_reduction <minimumf>, %519, %cst_107 [1] : vector<8x64xf32> to vector<8xf32>
    %521 = vector.shape_cast %520 : vector<8xf32> to vector<8x1xf32>
    %522 = vector.broadcast %521 : vector<8x1xf32> to vector<8x64xf32>
    %523 = arith.cmpf oeq, %519, %522 : vector<8x64xf32>
    %c64_i32_108 = arith.constant 64 : i32
    %524 = vector.broadcast %c64_i32_108 : i32 to vector<8x64xi32>
    %525 = arith.select %523, %8, %524 : vector<8x64xi1>, vector<8x64xi32>
    %cst_109 = arith.constant dense<2147483647> : vector<8xi32>
    %526 = vector.multi_reduction <minsi>, %525, %cst_109 [1] : vector<8x64xi32> to vector<8xi32>
    %527 = vector.shape_cast %526 : vector<8xi32> to vector<8x1xi32>
    %528 = vector.broadcast %c7_i32_106 : i32 to vector<1x8xi32>
    %529 = arith.cmpi eq, %6, %528 : vector<1x8xi32>
    %c0_i32_110 = arith.constant 0 : i32
    %530 = vector.shape_cast %529 : vector<1x8xi1> to vector<1x8xi1>
    %531 = vector.broadcast %530 : vector<1x8xi1> to vector<8x8xi1>
    %532 = vector.shape_cast %527 : vector<8x1xi32> to vector<8x1xi32>
    %533 = vector.broadcast %532 : vector<8x1xi32> to vector<8x8xi32>
    %534 = vector.broadcast %c0_i32_110 : i32 to vector<8x8xi32>
    %535 = arith.select %531, %533, %534 : vector<8x8xi1>, vector<8x8xi32>
    %536 = arith.addi %502, %535 : vector<8x8xi32>
    %537 = vector.broadcast %527 : vector<8x1xi32> to vector<8x64xi32>
    %538 = arith.cmpi eq, %8, %537 : vector<8x64xi32>
    %539 = arith.extui %538 : vector<8x64xi1> to vector<8x64xi32>
    %540 = arith.sitofp %539 : vector<8x64xi32> to vector<8x64xf32>
    %cst_111 = arith.constant dense<0.000000e+00> : vector<8x6xf32>
    %541 = tpu.matmul %540, %3, %cst_111 {dimension_numbers = #tpu.dot_dimension_numbers<[1], [0], [0], [1], [0, 0, 1, 1], [], []>, precision = #tpu.contract_precision<fp32>} : vector<8x64xf32>, vector<64x6xf32>, vector<8x6xf32> -> vector<8x6xf32>
    %542 = vector.broadcast %c7_i32_106 : i32 to vector<1x8x1xi32>
    %543 = arith.cmpi eq, %7, %542 : vector<1x8x1xi32>
    %544 = vector.shape_cast %541 : vector<8x6xf32> to vector<8x1x6xf32>
    %cst_112 = arith.constant 0.000000e+00 : f32
    %545 = vector.shape_cast %543 : vector<1x8x1xi1> to vector<1x8x1xi1>
    %546 = vector.broadcast %545 : vector<1x8x1xi1> to vector<8x8x6xi1>
    %547 = vector.shape_cast %544 : vector<8x1x6xf32> to vector<8x1x6xf32>
    %548 = vector.broadcast %547 : vector<8x1x6xf32> to vector<8x8x6xf32>
    %549 = vector.broadcast %cst_112 : f32 to vector<8x8x6xf32>
    %550 = arith.select %546, %548, %549 : vector<8x8x6xi1>, vector<8x8x6xf32>
    %551 = arith.addf %517, %550 : vector<8x8x6xf32>
    %cst_113 = arith.constant 0x7F800000 : f32
    %552 = vector.broadcast %cst_113 : f32 to vector<8x64xf32>
    %553 = arith.select %538, %552, %519 : vector<8x64xi1>, vector<8x64xf32>
    %c8_i32_114 = arith.constant 8 : i32
    %554 = tpu.iota {dimensions = array<i32: 2>} : vector<1x1x6xi32>
    %c3_i32_115 = arith.constant 3 : i32
    %555 = vector.broadcast %c3_i32_115 : i32 to vector<1x1x6xi32>
    %556 = arith.cmpi slt, %554, %555 : vector<1x1x6xi32>
    %557 = vector.shape_cast %256 : vector<8x6xf32> to vector<8x1x6xf32>
    %cst_116 = arith.constant 0.000000e+00 : f32
    %558 = vector.shape_cast %556 : vector<1x1x6xi1> to vector<1x1x6xi1>
    %559 = vector.broadcast %558 : vector<1x1x6xi1> to vector<8x1x6xi1>
    %560 = vector.broadcast %cst_116 : f32 to vector<8x1x6xf32>
    %561 = arith.select %559, %557, %560 : vector<8x1x6xi1>, vector<8x1x6xf32>
    %562 = vector.broadcast %561 : vector<8x1x6xf32> to vector<8x8x6xf32>
    %563 = arith.subf %551, %562 : vector<8x8x6xf32>
    %c0_117 = arith.constant 0 : index
    %c0_118 = arith.constant 0 : index
    %c0_119 = arith.constant 0 : index
    %c0_120 = arith.constant 0 : index
    %564 = vector.load %arg3[%c0_117, %c0_118, %c0_119, %c0_120] : memref<1x8x8x6xf32, #tpu.memory_space<vmem>>, vector<1x8x8x6xf32>
    %565 = vector.shape_cast %564 : vector<1x8x8x6xf32> to vector<8x8x6xf32>
    %566 = vector.shape_cast %563 : vector<8x8x6xf32> to vector<1x8x8x6xf32>
    tpu.vector_store %arg3[%c0_117, %c0_118, %c0_119, %c0_120], %566 {strides = array<i32>} : memref<1x8x8x6xf32, #tpu.memory_space<vmem>>, vector<1x8x8x6xf32>,
    %c0_121 = arith.constant 0 : index
    %c0_122 = arith.constant 0 : index
    %c0_123 = arith.constant 0 : index
    %567 = vector.load %arg4[%c0_121, %c0_122, %c0_123] : memref<1x8x6xf32, #tpu.memory_space<vmem>>, vector<1x8x6xf32>
    %568 = vector.shape_cast %567 : vector<1x8x6xf32> to vector<8x6xf32>
    %569 = vector.shape_cast %256 : vector<8x6xf32> to vector<1x8x6xf32>
    tpu.vector_store %arg4[%c0_121, %c0_122, %c0_123], %569 {strides = array<i32>} : memref<1x8x6xf32, #tpu.memory_space<vmem>>, vector<1x8x6xf32>,
    %c0_124 = arith.constant 0 : index
    %c0_125 = arith.constant 0 : index
    %c0_126 = arith.constant 0 : index
    %570 = vector.load %arg5[%c0_124, %c0_125, %c0_126] : memref<1x8x8xi32, #tpu.memory_space<vmem>>, vector<1x8x8xi32>
    %571 = vector.shape_cast %570 : vector<1x8x8xi32> to vector<8x8xi32>
    %572 = vector.shape_cast %536 : vector<8x8xi32> to vector<1x8x8xi32>
    tpu.vector_store %arg5[%c0_124, %c0_125, %c0_126], %572 {strides = array<i32>} : memref<1x8x8xi32, #tpu.memory_space<vmem>>, vector<1x8x8xi32>,
    return
  }
  func.func @transform_0(%arg0: i32) -> (i32, i32, i32) {
    %c0_i32 = arith.constant 0 : i32
    %c0_i32_0 = arith.constant 0 : i32
    %c0_i32_1 = arith.constant 0 : i32
    return %arg0, %c0_i32, %c0_i32_0 : i32, i32, i32
  }
  func.func @transform_1(%arg0: i32) -> (i32, i32, i32) {
    %c0_i32 = arith.constant 0 : i32
    %c0_i32_0 = arith.constant 0 : i32
    %c0_i32_1 = arith.constant 0 : i32
    return %arg0, %c0_i32, %c0_i32_0 : i32, i32, i32
  }
  func.func @transform_2(%arg0: i32) -> (i32, i32, i32, i32) {
    %c0_i32 = arith.constant 0 : i32
    %c0_i32_0 = arith.constant 0 : i32
    %c0_i32_1 = arith.constant 0 : i32
    %c0_i32_2 = arith.constant 0 : i32
    return %arg0, %c0_i32, %c0_i32_0, %c0_i32_1 : i32, i32, i32, i32
  }
  func.func @transform_3(%arg0: i32) -> (i32, i32, i32) {
    %c0_i32 = arith.constant 0 : i32
    %c0_i32_0 = arith.constant 0 : i32
    %c0_i32_1 = arith.constant 0 : i32
    return %arg0, %c0_i32, %c0_i32_0 : i32, i32, i32
  }
  func.func @transform_4(%arg0: i32) -> (i32, i32, i32) {
    %c0_i32 = arith.constant 0 : i32
    %c0_i32_0 = arith.constant 0 : i32
    %c0_i32_1 = arith.constant 0 : i32
    return %arg0, %c0_i32, %c0_i32_0 : i32, i32, i32
  }
}

</mosaic_0001>

<llo_original>
// kernel: tpu_custom_call.1
$region0: #{tpu_custom_call.1}
  #allocation0 [shape = 'u32[]', space=smem, size = 0x4, offset = 0x4, fixed_abs, tag = 'smem constant byte address 0x4 - core index']
  #allocation1 [shape = 'u32[144,128]{1,0:T(1,128)}', space=vmem, size = 0x12000, scoped, tag = 'internal scratch']
  %s0 = inlined_call_operand.vmem [shape: f32[2,3,64], index: 0, kind: input, shape index: {}]
  %s1 = inlined_call_operand.vmem [shape: f32[2,64,6], index: 1, kind: input, shape index: {}]
  %s2 = inlined_call_operand.vmem [shape: f32[2,8,8,6], index: 2, kind: output, shape index: {0}]
  %s3 = inlined_call_operand.vmem [shape: f32[2,8,6], index: 3, kind: output, shape index: {1}]
  %s4 = inlined_call_operand.hbm [shape: s32[2,8,8], index: 4, kind: output, shape index: {2}]
  %5 = xla_tuple %s2, %s3, %s4
  %s6 = sld [smem:[#allocation0]]
  $region57: #{tpu_custom_call.1} parent=0
    _
  %s8 = ssub.s32 1, %s6
  %s9 = scalar_select 0, %s8, %s6
  $region1: #{tpu_custom_call.1} parent=0
    #allocation2 [shape = 'u8[8192]{0}', space=vmem, size = 0x2000, scoped, tag = 'output window, operand 2']
    #allocation3 [shape = 's32[2]{0}', space=sflag, size = 0x8, scoped, tag = 'scoped memory for tpu_custom_call.1']
    %10 = vsyncpa [#allocation3], 0
    %s11 = scalar_lea.sflag [#allocation3], 1
    %12 = vsyncpa %s11, 0
    loop: start=0, step=1, limit=4
    $region2: #{tpu_custom_call.1} parent=1 // loop_pre_header
      _
    $region3: #{tpu_custom_call.1} parent=1 // loop_header
      %s14 = sphi 0, %s18
      %p15 = scmp.ge.s32.totalorder %s14, 4
      %s24 = sphi 0, %s26
      %s27 = sphi 0, %s24
      %s28 = sphi 0, %s27
      %s44 = sphi 0, %s28
      %s50 = sphi 0, %s52
      %s53 = sphi 0, %s50
      %s54 = sphi 0, %s53
      %s70 = sphi 0, %s54
      %s76 = sphi 0, %s78
      %s79 = sphi 0, %s76
      %s80 = sphi 0, %s79
      %s96 = sphi 0, %s80
      %s102 = sphi 0, %s104
      %s105 = sphi 0, %s102
      %s106 = sphi 0, %s105
      %s122 = sphi 0, %s106
      %s128 = sphi 0, %s130
      %s131 = sphi 0, %s128
      %s132 = sphi 0, %s131
      %s148 = sphi 0, %s132
    $region4: #{tpu_custom_call.1} parent=1 // loop_header_branch
      %17 = sbr.rel (%p15) target = $region8
    $region5: #{tpu_custom_call.1} parent=1 // loop_body
      %s19 = ssub.s32 %s14, 1
      %s20 = ssub.s32 %s14, 2
      %s21 = sadd.s32 %s14, 1
      %s22 = ssub.s32 %s14, %s21
      %p23 = scmp.eq.s32.totalorder %s22, 0
      %s25 = sadd.s32 %s24, 1
      %s26 = scalar_select %p23, %s24, %s25
      %p29 = pneg %p23
      %p30 = scmp.eq.s32.totalorder %s14, 1
      %p31 = por %p29, %p30
      %p32 = scmp.ne.s32.totalorder %s24, %s27
      %p33 = scmp.eq.s32.totalorder %s14, 0
      %p34 = por %p32, %p33
      %p35 = scmp.ne.s32.totalorder %s24, %s27
      %p36 = scmp.eq.s32.totalorder %s19, 1
      %p37 = por %p35, %p36
      %p38 = scmp.ne.s32.totalorder %s27, %s28
      %p39 = scmp.eq.s32.totalorder %s19, 0
      %p40 = por %p38, %p39
      %p41 = scmp.ne.s32.totalorder %s27, %s28
      %p42 = scmp.eq.s32.totalorder %s20, 1
      %p43 = por %p41, %p42
      %p45 = scmp.ne.s32.totalorder %s28, %s44
      %p46 = scmp.eq.s32.totalorder %s20, 0
      %p47 = por %p45, %p46
      %s48 = ssub.s32 %s14, %s21
      %p49 = scmp.eq.s32.totalorder %s48, 0
      %s51 = sadd.s32 %s50, 1
      %s52 = scalar_select %p49, %s50, %s51
      %p55 = pneg %p49
      %p56 = scmp.eq.s32.totalorder %s14, 1
      %p57 = por %p55, %p56
      %p58 = scmp.ne.s32.totalorder %s50, %s53
      %p59 = scmp.eq.s32.totalorder %s14, 0
      %p60 = por %p58, %p59
      %p61 = scmp.ne.s32.totalorder %s50, %s53
      %p62 = scmp.eq.s32.totalorder %s19, 1
      %p63 = por %p61, %p62
      %p64 = scmp.ne.s32.totalorder %s53, %s54
      %p65 = scmp.eq.s32.totalorder %s19, 0
      %p66 = por %p64, %p65
      %p67 = scmp.ne.s32.totalorder %s53, %s54
      %p68 = scmp.eq.s32.totalorder %s20, 1
      %p69 = por %p67, %p68
      %p71 = scmp.ne.s32.totalorder %s54, %s70
      %p72 = scmp.eq.s32.totalorder %s20, 0
      %p73 = por %p71, %p72
      %s74 = ssub.s32 %s14, %s21
      %p75 = scmp.eq.s32.totalorder %s74, 0
      %s77 = sadd.s32 %s76, 1
      %s78 = scalar_select %p75, %s76, %s77
      %p81 = pneg %p75
      %p82 = scmp.eq.s32.totalorder %s14, 1
      %p83 = por %p81, %p82
      %p84 = scmp.ne.s32.totalorder %s76, %s79
      %p85 = scmp.eq.s32.totalorder %s14, 0
      %p86 = por %p84, %p85
      %p87 = scmp.ne.s32.totalorder %s76, %s79
      %p88 = scmp.eq.s32.totalorder %s19, 1
      %p89 = por %p87, %p88
      %p90 = scmp.ne.s32.totalorder %s79, %s80
      %p91 = scmp.eq.s32.totalorder %s19, 0
      %p92 = por %p90, %p91
      %p93 = scmp.ne.s32.totalorder %s79, %s80
      %p94 = scmp.eq.s32.totalorder %s20, 1
      %p95 = por %p93, %p94
      %p97 = scmp.ne.s32.totalorder %s80, %s96
      %p98 = scmp.eq.s32.totalorder %s20, 0
      %p99 = por %p97, %p98
      %s100 = ssub.s32 %s14, %s21
      %p101 = scmp.eq.s32.totalorder %s100, 0
      %s103 = sadd.s32 %s102, 1
      %s104 = scalar_select %p101, %s102, %s103
      %p107 = pneg %p101
      %p108 = scmp.eq.s32.totalorder %s14, 1
      %p109 = por %p107, %p108
      %p110 = scmp.ne.s32.totalorder %s102, %s105
      %p111 = scmp.eq.s32.totalorder %s14, 0
      %p112 = por %p110, %p111
      %p113 = scmp.ne.s32.totalorder %s102, %s105
      %p114 = scmp.eq.s32.totalorder %s19, 1
      %p115 = por %p113, %p114
      %p116 = scmp.ne.s32.totalorder %s105, %s106
      %p117 = scmp.eq.s32.totalorder %s19, 0
      %p118 = por %p116, %p117
      %p119 = scmp.ne.s32.totalorder %s105, %s106
      %p120 = scmp.eq.s32.totalorder %s20, 1
      %p121 = por %p119, %p120
      %p123 = scmp.ne.s32.totalorder %s106, %s122
      %p124 = scmp.eq.s32.totalorder %s20, 0
      %p125 = por %p123, %p124
      %s126 = ssub.s32 %s14, %s21
      %p127 = scmp.eq.s32.totalorder %s126, 0
      %s129 = sadd.s32 %s128, 1
      %s130 = scalar_select %p127, %s128, %s129
      %p133 = pneg %p127
      %p134 = scmp.eq.s32.totalorder %s14, 1
      %p135 = por %p133, %p134
      %p136 = scmp.ne.s32.totalorder %s128, %s131
      %p137 = scmp.eq.s32.totalorder %s14, 0
      %p138 = por %p136, %p137
      %p139 = scmp.ne.s32.totalorder %s128, %s131
      %p140 = scmp.eq.s32.totalorder %s19, 1
      %p141 = por %p139, %p140
      %p142 = scmp.ne.s32.totalorder %s131, %s132
      %p143 = scmp.eq.s32.totalorder %s19, 0
      %p144 = por %p142, %p143
      %p145 = scmp.ne.s32.totalorder %s131, %s132
      %p146 = scmp.eq.s32.totalorder %s20, 1
      %p147 = por %p145, %p146
      %p149 = scmp.ne.s32.totalorder %s132, %s148
      %p150 = scmp.eq.s32.totalorder %s20, 0
      %p151 = por %p149, %p150
      %p152 = scmp.le.s32.totalorder 1, %s14
      %p153 = scmp.lt.s32.totalorder %s14, 3
      %p154 = pnand %p152, %p153
      %p155 = pneg %p154
      // Predicated region
      $region9: #{tpu_custom_call.1} parent=5 // pred_check
        _
      $region10: #{tpu_custom_call.1} parent=5 // pred_check_branch
        %157 = sbr.rel (%p154) target = $region12
      $region11: #{tpu_custom_call.1} parent=5 // pred_region
        %s158 = ssub.s32 %s14, 1
      $region12: #{tpu_custom_call.1} parent=5 // pred_fallthru
        _
      %p159 = scmp.lt.s32.totalorder %s14, 2
      // Predicated region
      $region13: #{tpu_custom_call.1} parent=5 // pred_check
        %p160 = pneg %p159
      $region14: #{tpu_custom_call.1} parent=5 // pred_check_branch
        %162 = sbr.rel (%p160) target = $region16
      $region15: #{tpu_custom_call.1} parent=5 // pred_region
        // Predicated region
        $region17: #{tpu_custom_call.1} parent=15 // pred_check
          %p163 = pneg %p34
        $region18: #{tpu_custom_call.1} parent=15 // pred_check_branch
          %165 = sbr.rel (%p163) target = $region20
        $region19: #{tpu_custom_call.1} parent=15 // pred_region
          %p166 = scmp.lt.s32.totalorder %s14, 1
          %s167 = scalar_select %p166, %s14, 1
          %s168 = smul.addr %s167, 4
          %s169 = scalar_lea.vmem %s0, %s168
        $region20: #{tpu_custom_call.1} parent=15 // pred_fallthru
          _
        // Predicated region
        $region21: #{tpu_custom_call.1} parent=15 // pred_check
          %p170 = pneg %p60
        $region22: #{tpu_custom_call.1} parent=15 // pred_check_branch
          %172 = sbr.rel (%p170) target = $region24
        $region23: #{tpu_custom_call.1} parent=15 // pred_region
          %p173 = scmp.lt.s32.totalorder %s14, 1
          %s174 = scalar_select %p173, %s14, 1
          %s175 = smul.addr %s174, 8
          %s176 = smul.addr %s175, 8
          %s177 = scalar_lea.vmem %s1, %s176
        $region24: #{tpu_custom_call.1} parent=15 // pred_fallthru
          _
      $region16: #{tpu_custom_call.1} parent=5 // pred_fallthru
        _
      %p178 = scmp.le.s32.totalorder 1, %s14
      %p179 = scmp.lt.s32.totalorder %s14, 3
      %p180 = pnand %p178, %p179
      %p181 = pneg %p180
      // Predicated region
      $region25: #{tpu_custom_call.1} parent=5 // pred_check
        _
      $region26: #{tpu_custom_call.1} parent=5 // pred_check_branch
        %183 = sbr.rel (%p180) target = $region28
      $region27: #{tpu_custom_call.1} parent=5 // pred_region
        %s184 = ssub.s32 %s14, 1
        %p185 = scmp.lt.s32.totalorder %s19, 1
        %s186 = scalar_select %p185, %s19, 1
        %s187 = smul.addr %s186, 4
        %s188 = scalar_lea.vmem %s0, %s187
        %p189 = pneg %p40
        %p190 = pneg %p37
        %p191 = scmp.lt.s32.totalorder %s19, 1
        %s192 = scalar_select %p191, %s19, 1
        %s193 = smul.addr %s192, 8
        %s194 = smul.addr %s193, 8
        %s195 = scalar_lea.vmem %s1, %s194
        %p196 = pneg %p66
        %p197 = pneg %p63
        %p198 = pneg %p92
        %p199 = pneg %p89
        %p200 = scmp.lt.s32.totalorder %s19, 1
        %s201 = scalar_select %p200, %s19, 1
        %s202 = smul.addr %s201, 8
        %s203 = smul.addr %s202, 8
        %s204 = scalar_lea.vmem %s2, %s203
        %p205 = pneg %p118
        %p206 = pneg %p115
        %p207 = scmp.lt.s32.totalorder %s19, 1
        %s208 = scalar_select %p207, %s19, 1
        %s209 = smul.addr %s208, 8
        %s210 = scalar_lea.vmem %s3, %s209
        %p211 = pneg %p144
        %p212 = pneg %p141
        %s213 = sand.u32 %s131, 1
        %s214 = scalar_lea.sflag [#allocation3], %s213
        %s215 = sand.u32 %s131, 1
        %s216 = smul.addr %s215, 8
        %s217 = scalar_lea.vmem [#allocation2], %s216
        %p218 = scmp.lt.s32.totalorder %s19, 1
        %s219 = scalar_select %p218, %s19, 1
        %s220 = smul.addr %s219, 4
        %s221 = scalar_lea.vmem %s0, %s220
        %p222 = scmp.lt.s32.totalorder %s19, 1
        %s223 = scalar_select %p222, %s19, 1
        %s224 = smul.addr %s223, 8
        %s225 = smul.addr %s224, 8
        %s226 = scalar_lea.vmem %s1, %s225
        %p227 = scmp.lt.s32.totalorder %s19, 1
        %s228 = scalar_select %p227, %s19, 1
        %s229 = smul.addr %s228, 8
        %s230 = smul.addr %s229, 8
        %s231 = scalar_lea.vmem %s2, %s230
        %p232 = scmp.lt.s32.totalorder %s19, 1
        %s233 = scalar_select %p232, %s19, 1
        %s234 = smul.addr %s233, 8
        %s235 = scalar_lea.vmem %s3, %s234
        %v236 = vld [vmem:[%s221] sm:$0x7]
        %v237 = vld [vmem:[%s226] sm:$0xff]
        %v238 = vld [vmem:[%s226 + $0x8] sm:$0xff]
        %v239 = vld [vmem:[%s226 + $0x10] sm:$0xff]
        %v240 = vld [vmem:[%s226 + $0x18] sm:$0xff]
        %v241 = vld [vmem:[%s226 + $0x20] sm:$0xff]
        %v242 = vld [vmem:[%s226 + $0x28] sm:$0xff]
        %v243 = vld [vmem:[%s226 + $0x30] sm:$0xff]
        %v244 = vld [vmem:[%s226 + $0x38] sm:$0xff]
        %v245 = vlaneseq
        %v246 = vand.u32 %v245, 127
        %v247 = vlaneseq
        %v248 = vshrl.u32 %v247, 7
        %vm249 = vcmp.eq.s32.totalorder %v246, 0
        %v250 = vsel %vm249, 1, 0
        %v251 = vcvt.s32.f32 %v250
        %v252 = vmul.f32 %v236, %v251
        %vm253 = vcmask 518144
        %v254 = vsel %vm253, %v252, 0.0
        %255 = vadd.xlane.f32.xlu0 %v254
        %v256 = vpop.xlane.xlu0 %255
        %v257 = vsub.f32 %v236, %v256
        %v258 = vmul.f32 %v257, %v257
        %v259 = vsel %vm253, %v258, 0.0
        %v260 = vrot.slane %v259, 4
        %v261 = vadd.f32 %v259, %v260
        %v262 = vrot.slane %v261, 2
        %v263 = vadd.f32 %v261, %v262
        %v264 = vrot.slane %v263, 1
        %v265 = vadd.f32 %v263, %v264
        %vm266 = vcmask 523264
        %v267 = vsel %vm266, %v265, -inf
        %268 = vmax.xlane.f32.xlu0 %v267
        %v269 = vpop.xlane.xlu0 %268
        %s270 = vtos %v269
        %v271 = vstv %s270
        %vm272 = vcmp.eq.f32.partialorder %v265, %v271
        %v273 = vsel %vm272, %v246, 64
        %v274 = vsel %vm266, %v273, 2147483647
        %v275 = vand.u32 %v274, 65535
        %v276 = vshra.s32 %v274, 16
        %v277 = vcvt.s32.f32 %v275
        %v278 = vcvt.s32.f32 %v276
        %279 = vmin.xlane.f32.xlu0 %v278
        %v280 = vpop.xlane.xlu0 %279
        %vm281 = vcmp.eq.f32.partialorder %v278, %v280
        %v282 = vsel %vm281, %v277, inf
        %283 = vmin.xlane.f32.xlu0 %v282
        %v284 = vpop.xlane.xlu0 %283
        %v285 = vcvt.f32.s32 %v284
        %v286 = vcvt.f32.s32 %v280
        %v287 = vshll.u32 %v286, 16
        %v288 = vadd.s32 %v287, %v285
        %s289 = vtos %v288
        %vm290 = vcmp.eq.s32.totalorder %v248, 1
        %v291 = vstv %s289
        %v292 = vsel %vm290, %v291, 0
        %vm293 = vcmp.eq.s32.totalorder %v246, %v291
        %v294 = vsel %vm293, 1, 0
        %v295 = vcvt.s32.f32 %v294
        %v296 = vmul.f32 %v236, %v295
        %v297 = vsel %vm253, %v296, 0.0
        %298 = vadd.xlane.f32.xlu0 %v297
        %v299 = vpop.xlane.xlu0 %298
        %v300 = vsub.f32 %v236, %v299
        %v301 = vmul.f32 %v300, %v300
        %v302 = vsel %vm253, %v301, 0.0
        %v303 = vrot.slane %v302, 4
        %v304 = vadd.f32 %v302, %v303
        %v305 = vrot.slane %v304, 2
        %v306 = vadd.f32 %v304, %v305
        %v307 = vrot.slane %v306, 1
        %v308 = vadd.f32 %v306, %v307
        %v309 = vmin.f32 %v265, %v308
        %v310 = vsel %vm266, %v309, -inf
        %311 = vmax.xlane.f32.xlu0 %v310
        %v312 = vpop.xlane.xlu0 %311
        %s313 = vtos %v312
        %v314 = vstv %s313
        %vm315 = vcmp.eq.f32.partialorder %v309, %v314
        %v316 = vsel %vm315, %v246, 64
        %v317 = vsel %vm266, %v316, 2147483647
        %v318 = vand.u32 %v317, 65535
        %v319 = vshra.s32 %v317, 16
        %v320 = vcvt.s32.f32 %v318
        %v321 = vcvt.s32.f32 %v319
        %322 = vmin.xlane.f32.xlu0 %v321
        %v323 = vpop.xlane.xlu0 %322
        %vm324 = vcmp.eq.f32.partialorder %v321, %v323
        %v325 = vsel %vm324, %v320, inf
        %326 = vmin.xlane.f32.xlu0 %v325
        %v327 = vpop.xlane.xlu0 %326
        %v328 = vcvt.f32.s32 %v327
        %v329 = vcvt.f32.s32 %v323
        %v330 = vshll.u32 %v329, 16
        %v331 = vadd.s32 %v330, %v328
        %s332 = vtos %v331
        %vm333 = vcmp.eq.s32.totalorder %v248, 2
        %v334 = vstv %s332
        %v335 = vsel %vm333, %v334, %v292
        %vm336 = vcmp.eq.s32.totalorder %v246, %v334
        %v337 = vsel %vm336, 1, 0
        %v338 = vcvt.s32.f32 %v337
        %v339 = vmul.f32 %v236, %v338
        %v340 = vsel %vm253, %v339, 0.0
        %341 = vadd.xlane.f32.xlu0 %v340
        %v342 = vpop.xlane.xlu0 %341
        %v343 = vsub.f32 %v236, %v342
        %v344 = vmul.f32 %v343, %v343
        %v345 = vsel %vm253, %v344, 0.0
        %v346 = vrot.slane %v345, 4
        %v347 = vadd.f32 %v345, %v346
        %v348 = vrot.slane %v347, 2
        %v349 = vadd.f32 %v347, %v348
        %v350 = vrot.slane %v349, 1
        %v351 = vadd.f32 %v349, %v350
        %v352 = vmin.f32 %v309, %v351
        %v353 = vsel %vm266, %v352, -inf
        %354 = vmax.xlane.f32.xlu0 %v353
        %v355 = vpop.xlane.xlu0 %354
        %s356 = vtos %v355
        %v357 = vstv %s356
        %vm358 = vcmp.eq.f32.partialorder %v352, %v357
        %v359 = vsel %vm358, %v246, 64
        %v360 = vsel %vm266, %v359, 2147483647
        %v361 = vand.u32 %v360, 65535
        %v362 = vshra.s32 %v360, 16
        %v363 = vcvt.s32.f32 %v361
        %v364 = vcvt.s32.f32 %v362
        %365 = vmin.xlane.f32.xlu0 %v364
        %v366 = vpop.xlane.xlu0 %365
        %vm367 = vcmp.eq.f32.partialorder %v364, %v366
        %v368 = vsel %vm367, %v363, inf
        %369 = vmin.xlane.f32.xlu0 %v368
        %v370 = vpop.xlane.xlu0 %369
        %v371 = vcvt.f32.s32 %v370
        %v372 = vcvt.f32.s32 %v366
        %v373 = vshll.u32 %v372, 16
        %v374 = vadd.s32 %v373, %v371
        %s375 = vtos %v374
        %vm376 = vcmp.eq.s32.totalorder %v248, 3
        %v377 = vstv %s375
        %v378 = vsel %vm376, %v377, %v335
        %vm379 = vcmp.eq.s32.totalorder %v246, %v377
        %v380 = vsel %vm379, 1, 0
        %v381 = vcvt.s32.f32 %v380
        %v382 = vmul.f32 %v236, %v381
        %v383 = vsel %vm253, %v382, 0.0
        %384 = vadd.xlane.f32.xlu0 %v383
        %v385 = vpop.xlane.xlu0 %384
        %v386 = vsub.f32 %v236, %v385
        %v387 = vmul.f32 %v386, %v386
        %v388 = vsel %vm253, %v387, 0.0
        %v389 = vrot.slane %v388, 4
        %v390 = vadd.f32 %v388, %v389
        %v391 = vrot.slane %v390, 2
        %v392 = vadd.f32 %v390, %v391
        %v393 = vrot.slane %v392, 1
        %v394 = vadd.f32 %v392, %v393
        %v395 = vmin.f32 %v352, %v394
        %v396 = vsel %vm266, %v395, -inf
        %397 = vmax.xlane.f32.xlu0 %v396
        %v398 = vpop.xlane.xlu0 %397
        %s399 = vtos %v398
        %v400 = vstv %s399
        %vm401 = vcmp.eq.f32.partialorder %v395, %v400
        %v402 = vsel %vm401, %v246, 64
        %v403 = vsel %vm266, %v402, 2147483647
        %v404 = vand.u32 %v403, 65535
        %v405 = vshra.s32 %v403, 16
        %v406 = vcvt.s32.f32 %v404
        %v407 = vcvt.s32.f32 %v405
        %408 = vmin.xlane.f32.xlu0 %v407
        %v409 = vpop.xlane.xlu0 %408
        %vm410 = vcmp.eq.f32.partialorder %v407, %v409
        %v411 = vsel %vm410, %v406, inf
        %412 = vmin.xlane.f32.xlu0 %v411
        %v413 = vpop.xlane.xlu0 %412
        %v414 = vcvt.f32.s32 %v413
        %v415 = vcvt.f32.s32 %v409
        %v416 = vshll.u32 %v415, 16
        %v417 = vadd.s32 %v416, %v414
        %s418 = vtos %v417
        %vm419 = vcmp.eq.s32.totalorder %v248, 4
        %v420 = vstv %s418
        %v421 = vsel %vm419, %v420, %v378
        %vm422 = vcmp.eq.s32.totalorder %v246, %v420
        %v423 = vsel %vm422, 1, 0
        %v424 = vcvt.s32.f32 %v423
        %v425 = vmul.f32 %v236, %v424
        %v426 = vsel %vm253, %v425, 0.0
        %427 = vadd.xlane.f32.xlu0 %v426
        %v428 = vpop.xlane.xlu0 %427
        %v429 = vsub.f32 %v236, %v428
        %v430 = vmul.f32 %v429, %v429
        %v431 = vsel %vm253, %v430, 0.0
        %v432 = vrot.slane %v431, 4
        %v433 = vadd.f32 %v431, %v432
        %v434 = vrot.slane %v433, 2
        %v435 = vadd.f32 %v433, %v434
        %v436 = vrot.slane %v435, 1
        %v437 = vadd.f32 %v435, %v436
        %v438 = vmin.f32 %v395, %v437
        %v439 = vsel %vm266, %v438, -inf
        %440 = vmax.xlane.f32.xlu0 %v439
        %v441 = vpop.xlane.xlu0 %440
        %s442 = vtos %v441
        %v443 = vstv %s442
        %vm444 = vcmp.eq.f32.partialorder %v438, %v443
        %v445 = vsel %vm444, %v246, 64
        %v446 = vsel %vm266, %v445, 2147483647
        %v447 = vand.u32 %v446, 65535
        %v448 = vshra.s32 %v446, 16
        %v449 = vcvt.s32.f32 %v447
        %v450 = vcvt.s32.f32 %v448
        %451 = vmin.xlane.f32.xlu0 %v450
        %v452 = vpop.xlane.xlu0 %451
        %vm453 = vcmp.eq.f32.partialorder %v450, %v452
        %v454 = vsel %vm453, %v449, inf
        %455 = vmin.xlane.f32.xlu0 %v454
        %v456 = vpop.xlane.xlu0 %455
        %v457 = vcvt.f32.s32 %v456
        %v458 = vcvt.f32.s32 %v452
        %v459 = vshll.u32 %v458, 16
        %v460 = vadd.s32 %v459, %v457
        %s461 = vtos %v460
        %vm462 = vcmp.eq.s32.totalorder %v248, 5
        %v463 = vstv %s461
        %v464 = vsel %vm462, %v463, %v421
        %vm465 = vcmp.eq.s32.totalorder %v246, %v463
        %v466 = vsel %vm465, 1, 0
        %v467 = vcvt.s32.f32 %v466
        %v468 = vmul.f32 %v236, %v467
        %v469 = vsel %vm253, %v468, 0.0
        %470 = vadd.xlane.f32.xlu0 %v469
        %v471 = vpop.xlane.xlu0 %470
        %v472 = vsub.f32 %v236, %v471
        %v473 = vmul.f32 %v472, %v472
        %v474 = vsel %vm253, %v473, 0.0
        %v475 = vrot.slane %v474, 4
        %v476 = vadd.f32 %v474, %v475
        %v477 = vrot.slane %v476, 2
        %v478 = vadd.f32 %v476, %v477
        %v479 = vrot.slane %v478, 1
        %v480 = vadd.f32 %v478, %v479
        %v481 = vmin.f32 %v438, %v480
        %v482 = vsel %vm266, %v481, -inf
        %483 = vmax.xlane.f32.xlu0 %v482
        %v484 = vpop.xlane.xlu0 %483
        %s485 = vtos %v484
        %v486 = vstv %s485
        %vm487 = vcmp.eq.f32.partialorder %v481, %v486
        %v488 = vsel %vm487, %v246, 64
        %v489 = vsel %vm266, %v488, 2147483647
        %v490 = vand.u32 %v489, 65535
        %v491 = vshra.s32 %v489, 16
        %v492 = vcvt.s32.f32 %v490
        %v493 = vcvt.s32.f32 %v491
        %494 = vmin.xlane.f32.xlu0 %v493
        %v495 = vpop.xlane.xlu0 %494
        %vm496 = vcmp.eq.f32.partialorder %v493, %v495
        %v497 = vsel %vm496, %v492, inf
        %498 = vmin.xlane.f32.xlu0 %v497
        %v499 = vpop.xlane.xlu0 %498
        %v500 = vcvt.f32.s32 %v499
        %v501 = vcvt.f32.s32 %v495
        %v502 = vshll.u32 %v501, 16
        %v503 = vadd.s32 %v502, %v500
        %s504 = vtos %v503
        %vm505 = vcmp.eq.s32.totalorder %v248, 6
        %v506 = vstv %s504
        %v507 = vsel %vm505, %v506, %v464
        %vm508 = vcmp.eq.s32.totalorder %v246, %v506
        %v509 = vsel %vm508, 1, 0
        %v510 = vcvt.s32.f32 %v509
        %v511 = vmul.f32 %v236, %v510
        %v512 = vsel %vm253, %v511, 0.0
        %513 = vadd.xlane.f32.xlu0 %v512
        %v514 = vpop.xlane.xlu0 %513
        %v515 = vsub.f32 %v236, %v514
        %v516 = vmul.f32 %v515, %v515
        %v517 = vsel %vm253, %v516, 0.0
        %v518 = vrot.slane %v517, 4
        %v519 = vadd.f32 %v517, %v518
        %v520 = vrot.slane %v519, 2
        %v521 = vadd.f32 %v519, %v520
        %v522 = vrot.slane %v521, 1
        %v523 = vadd.f32 %v521, %v522
        %v524 = vmin.f32 %v481, %v523
        %v525 = vsel %vm266, %v524, -inf
        %526 = vmax.xlane.f32.xlu0 %v525
        %v527 = vpop.xlane.xlu0 %526
        %s528 = vtos %v527
        %v529 = vstv %s528
        %vm530 = vcmp.eq.f32.partialorder %v524, %v529
        %v531 = vsel %vm530, %v246, 64
        %v532 = vsel %vm266, %v531, 2147483647
        %v533 = vand.u32 %v532, 65535
        %v534 = vshra.s32 %v532, 16
        %v535 = vcvt.s32.f32 %v533
        %v536 = vcvt.s32.f32 %v534
        %537 = vmin.xlane.f32.xlu0 %v536
        %v538 = vpop.xlane.xlu0 %537
        %vm539 = vcmp.eq.f32.partialorder %v536, %v538
        %v540 = vsel %vm539, %v535, inf
        %541 = vmin.xlane.f32.xlu0 %v540
        %v542 = vpop.xlane.xlu0 %541
        %v543 = vcvt.f32.s32 %v542
        %v544 = vcvt.f32.s32 %v538
        %v545 = vshll.u32 %v544, 16
        %v546 = vadd.s32 %v545, %v543
        %s547 = vtos %v546
        %vm548 = vcmp.eq.s32.totalorder %v248, 7
        %v549 = vstv %s547
        %v550 = vsel %vm548, %v549, %v507
        %vm551 = vcmp.eq.s32.totalorder %v550, %v246
        %v552 = vsel %vm551, 1, 0
        %v553 = vcvt.s32.f32 %v552
        %v555 = vsel %vm266, %v553, 0
        %557 = vmatprep.subr.mxu0 0.0
        %558 = vmatpush1.msra.mxu0 0.0
        %559 = vmatprep.subr.mxu0 0.0
        %560 = vmatpush1.msra.mxu0 0.0
        %561 = vmatprep.subr.mxu0 0.0
        %562 = vmatpush1.msra.mxu0 0.0
        %563 = vmatprep.subr.mxu0 0.0
        %564 = vmatpush1.msra.mxu0 0.0
        %565 = vmatprep.subr.mxu0 0.0
        %566 = vmatpush1.msra.mxu0 0.0
        %567 = vmatprep.subr.mxu0 0.0
        %568 = vmatpush1.msra.mxu0 0.0
        %569 = vmatprep.subr.mxu0 0.0
        %570 = vmatpush1.msra.mxu0 0.0
        %571 = vmatprep.subr.mxu0 0.0
        %572 = vmatpush1.msra.mxu0 0.0
        %573 = vmatprep.subr.mxu0 0.0
        %v574 = vand.u32 %v244, 4294901760
        %575 = vmatpush1.msra.mxu0 %v574
        %576 = vmatprep.subr.mxu0 0.0
        %v577 = vand.u32 %v243, 4294901760
        %578 = vmatpush1.msra.mxu0 %v577
        %579 = vmatprep.subr.mxu0 0.0
        %v580 = vand.u32 %v242, 4294901760
        %581 = vmatpush1.msra.mxu0 %v580
        %582 = vmatprep.subr.mxu0 0.0
        %v583 = vand.u32 %v241, 4294901760
        %584 = vmatpush1.msra.mxu0 %v583
        %585 = vmatprep.subr.mxu0 0.0
        %v586 = vand.u32 %v240, 4294901760
        %587 = vmatpush1.msra.mxu0 %v586
        %588 = vmatprep.subr.mxu0 0.0
        %v589 = vand.u32 %v239, 4294901760
        %590 = vmatpush1.msra.mxu0 %v589
        %591 = vmatprep.subr.mxu0 0.0
        %v592 = vand.u32 %v238, 4294901760
        %593 = vmatpush1.msra.mxu0 %v592
        %594 = vmatprep.subr.mxu0 0.0
        %v595 = vand.u32 %v237, 4294901760
        %596 = vmatpush1.msra.mxu0 %v595
        %597 = vmatprep.subr.mxu0 0.0
        %598 = vmatpush2.msra.mxu0 0.0
        %599 = vmatprep.subr.mxu0 0.0
        %600 = vmatpush2.msra.mxu0 0.0
        %601 = vmatprep.subr.mxu0 0.0
        %602 = vmatpush2.msra.mxu0 0.0
        %603 = vmatprep.subr.mxu0 0.0
        %604 = vmatpush2.msra.mxu0 0.0
        %605 = vmatprep.subr.mxu0 0.0
        %606 = vmatpush2.msra.mxu0 0.0
        %607 = vmatprep.subr.mxu0 0.0
        %608 = vmatpush2.msra.mxu0 0.0
        %609 = vmatprep.subr.mxu0 0.0
        %610 = vmatpush2.msra.mxu0 0.0
        %611 = vmatprep.subr.mxu0 0.0
        %612 = vmatpush2.msra.mxu0 0.0
        %613 = vmatprep.subr.mxu0 0.0
        %614 = vmatpush2.msra.mxu0 0.0
        %615 = vmatprep.subr.mxu0 0.0
        %616 = vmatpush2.msra.mxu0 0.0
        %617 = vmatprep.subr.mxu0 0.0
        %618 = vmatpush2.msra.mxu0 0.0
        %619 = vmatprep.subr.mxu0 0.0
        %620 = vmatpush2.msra.mxu0 0.0
        %621 = vmatprep.subr.mxu0 0.0
        %622 = vmatpush2.msra.mxu0 0.0
        %623 = vmatprep.subr.mxu0 0.0
        %624 = vmatpush2.msra.mxu0 0.0
        %625 = vmatprep.subr.mxu0 0.0
        %626 = vmatpush2.msra.mxu0 0.0
        %627 = vmatprep.subr.mxu0 0.0
        %628 = vmatpush2.msra.mxu0 0.0
        %629 = vmatprep.mubr.f32.mxu0 0.0
        %v630 = vand.u32 %v555, 4294901760
        %v631 = vsub.f32 %v555, %v630
        %v632 = vand.u32 %v631, 4294901760
        %v633 = vsub.f32 %v631, %v632
        %v634 = vand.u32 %v633, 4294901760
        %635 = vmatmul.mubr.f32.gmra.mxu0 %v634
        %v636 = vpop.f32.mrf.mxu0
        %v637 = vadd.f32 0.0, %v636
        %v638 = vpop.f32.mrf.mxu0
        %639 = vdwg.mxu0
        %640 = vmatprep.subr.mxu0 0.0
        %641 = vmatpush1.msra.mxu0 0.0
        %642 = vmatprep.subr.mxu0 0.0
        %643 = vmatpush1.msra.mxu0 0.0
        %644 = vmatprep.subr.mxu0 0.0
        %645 = vmatpush1.msra.mxu0 0.0
        %646 = vmatprep.subr.mxu0 0.0
        %647 = vmatpush1.msra.mxu0 0.0
        %648 = vmatprep.subr.mxu0 0.0
        %649 = vmatpush1.msra.mxu0 0.0
        %650 = vmatprep.subr.mxu0 0.0
        %651 = vmatpush1.msra.mxu0 0.0
        %652 = vmatprep.subr.mxu0 0.0
        %653 = vmatpush1.msra.mxu0 0.0
        %654 = vmatprep.subr.mxu0 0.0
        %655 = vmatpush1.msra.mxu0 0.0
        %656 = vmatprep.subr.mxu0 0.0
        %v657 = vand.u32 %v244, 4294901760
        %v658 = vsub.f32 %v244, %v657
        %v659 = vand.u32 %v658, 4294901760
        %v660 = vsub.f32 %v658, %v659
        %v661 = vand.u32 %v660, 4294901760
        %662 = vmatpush1.msra.mxu0 %v661
        %663 = vmatprep.subr.mxu0 0.0
        %v664 = vand.u32 %v243, 4294901760
        %v665 = vsub.f32 %v243, %v664
        %v666 = vand.u32 %v665, 4294901760
        %v667 = vsub.f32 %v665, %v666
        %v668 = vand.u32 %v667, 4294901760
        %669 = vmatpush1.msra.mxu0 %v668
        %670 = vmatprep.subr.mxu0 0.0
        %v671 = vand.u32 %v242, 4294901760
        %v672 = vsub.f32 %v242, %v671
        %v673 = vand.u32 %v672, 4294901760
        %v674 = vsub.f32 %v672, %v673
        %v675 = vand.u32 %v674, 4294901760
        %676 = vmatpush1.msra.mxu0 %v675
        %677 = vmatprep.subr.mxu0 0.0
        %v678 = vand.u32 %v241, 4294901760
        %v679 = vsub.f32 %v241, %v678
        %v680 = vand.u32 %v679, 4294901760
        %v681 = vsub.f32 %v679, %v680
        %v682 = vand.u32 %v681, 4294901760
        %683 = vmatpush1.msra.mxu0 %v682
        %684 = vmatprep.subr.mxu0 0.0
        %v685 = vand.u32 %v240, 4294901760
        %v686 = vsub.f32 %v240, %v685
        %v687 = vand.u32 %v686, 4294901760
        %v688 = vsub.f32 %v686, %v687
        %v689 = vand.u32 %v688, 4294901760
        %690 = vmatpush1.msra.mxu0 %v689
        %691 = vmatprep.subr.mxu0 0.0
        %v692 = vand.u32 %v239, 4294901760
        %v693 = vsub.f32 %v239, %v692
        %v694 = vand.u32 %v693, 4294901760
        %v695 = vsub.f32 %v693, %v694
        %v696 = vand.u32 %v695, 4294901760
        %697 = vmatpush1.msra.mxu0 %v696
        %698 = vmatprep.subr.mxu0 0.0
        %v699 = vand.u32 %v238, 4294901760
        %v700 = vsub.f32 %v238, %v699
        %v701 = vand.u32 %v700, 4294901760
        %v702 = vsub.f32 %v700, %v701
        %v703 = vand.u32 %v702, 4294901760
        %704 = vmatpush1.msra.mxu0 %v703
        %705 = vmatprep.subr.mxu0 0.0
        %v706 = vand.u32 %v237, 4294901760
        %v707 = vsub.f32 %v237, %v706
        %v708 = vand.u32 %v707, 4294901760
        %v709 = vsub.f32 %v707, %v708
        %v710 = vand.u32 %v709, 4294901760
        %711 = vmatpush1.msra.mxu0 %v710
        %712 = vmatprep.subr.mxu0 0.0
        %713 = vmatpush2.msra.mxu0 0.0
        %714 = vmatprep.subr.mxu0 0.0
        %715 = vmatpush2.msra.mxu0 0.0
        %716 = vmatprep.subr.mxu0 0.0
        %717 = vmatpush2.msra.mxu0 0.0
        %718 = vmatprep.subr.mxu0 0.0
        %719 = vmatpush2.msra.mxu0 0.0
        %720 = vmatprep.subr.mxu0 0.0
        %721 = vmatpush2.msra.mxu0 0.0
        %722 = vmatprep.subr.mxu0 0.0
        %723 = vmatpush2.msra.mxu0 0.0
        %724 = vmatprep.subr.mxu0 0.0
        %725 = vmatpush2.msra.mxu0 0.0
        %726 = vmatprep.subr.mxu0 0.0
        %727 = vmatpush2.msra.mxu0 0.0
        %728 = vmatprep.subr.mxu0 0.0
        %729 = vmatpush2.msra.mxu0 0.0
        %730 = vmatprep.subr.mxu0 0.0
        %731 = vmatpush2.msra.mxu0 0.0
        %732 = vmatprep.subr.mxu0 0.0
        %733 = vmatpush2.msra.mxu0 0.0
        %734 = vmatprep.subr.mxu0 0.0
        %735 = vmatpush2.msra.mxu0 0.0
        %736 = vmatprep.subr.mxu0 0.0
        %737 = vmatpush2.msra.mxu0 0.0
        %738 = vmatprep.subr.mxu0 0.0
        %739 = vmatpush2.msra.mxu0 0.0
        %740 = vmatprep.subr.mxu0 0.0
        %741 = vmatpush2.msra.mxu0 0.0
        %742 = vmatprep.subr.mxu0 0.0
        %743 = vmatpush2.msra.mxu0 0.0
        %744 = vmatprep.mubr.f32.mxu0 0.0
        %v745 = vand.u32 %v555, 4294901760
        %746 = vmatmul.mubr.f32.gmra.mxu0 %v745
        %v747 = vpop.f32.mrf.mxu0
        %v748 = vadd.f32 %v637, %v747
        %v749 = vpop.f32.mrf.mxu0
        %750 = vdwg.mxu0
        %751 = vmatprep.subr.mxu0 0.0
        %752 = vmatpush1.msra.mxu0 0.0
        %753 = vmatprep.subr.mxu0 0.0
        %754 = vmatpush1.msra.mxu0 0.0
        %755 = vmatprep.subr.mxu0 0.0
        %756 = vmatpush1.msra.mxu0 0.0
        %757 = vmatprep.subr.mxu0 0.0
        %758 = vmatpush1.msra.mxu0 0.0
        %759 = vmatprep.subr.mxu0 0.0
        %760 = vmatpush1.msra.mxu0 0.0
        %761 = vmatprep.subr.mxu0 0.0
        %762 = vmatpush1.msra.mxu0 0.0
        %763 = vmatprep.subr.mxu0 0.0
        %764 = vmatpush1.msra.mxu0 0.0
        %765 = vmatprep.subr.mxu0 0.0
        %766 = vmatpush1.msra.mxu0 0.0
        %767 = vmatprep.subr.mxu0 0.0
        %v768 = vand.u32 %v244, 4294901760
        %v769 = vsub.f32 %v244, %v768
        %770 = vmatpush1.msra.mxu0 %v769
        %771 = vmatprep.subr.mxu0 0.0
        %v772 = vand.u32 %v243, 4294901760
        %v773 = vsub.f32 %v243, %v772
        %774 = vmatpush1.msra.mxu0 %v773
        %775 = vmatprep.subr.mxu0 0.0
        %v776 = vand.u32 %v242, 4294901760
        %v777 = vsub.f32 %v242, %v776
        %778 = vmatpush1.msra.mxu0 %v777
        %779 = vmatprep.subr.mxu0 0.0
        %v780 = vand.u32 %v241, 4294901760
        %v781 = vsub.f32 %v241, %v780
        %782 = vmatpush1.msra.mxu0 %v781
        %783 = vmatprep.subr.mxu0 0.0
        %v784 = vand.u32 %v240, 4294901760
        %v785 = vsub.f32 %v240, %v784
        %786 = vmatpush1.msra.mxu0 %v785
        %787 = vmatprep.subr.mxu0 0.0
        %v788 = vand.u32 %v239, 4294901760
        %v789 = vsub.f32 %v239, %v788
        %790 = vmatpush1.msra.mxu0 %v789
        %791 = vmatprep.subr.mxu0 0.0
        %v792 = vand.u32 %v238, 4294901760
        %v793 = vsub.f32 %v238, %v792
        %794 = vmatpush1.msra.mxu0 %v793
        %795 = vmatprep.subr.mxu0 0.0
        %v796 = vand.u32 %v237, 4294901760
        %v797 = vsub.f32 %v237, %v796
        %798 = vmatpush1.msra.mxu0 %v797
        %799 = vmatprep.subr.mxu0 0.0
        %800 = vmatpush2.msra.mxu0 0.0
        %801 = vmatprep.subr.mxu0 0.0
        %802 = vmatpush2.msra.mxu0 0.0
        %803 = vmatprep.subr.mxu0 0.0
        %804 = vmatpush2.msra.mxu0 0.0
        %805 = vmatprep.subr.mxu0 0.0
        %806 = vmatpush2.msra.mxu0 0.0
        %807 = vmatprep.subr.mxu0 0.0
        %808 = vmatpush2.msra.mxu0 0.0
        %809 = vmatprep.subr.mxu0 0.0
        %810 = vmatpush2.msra.mxu0 0.0
        %811 = vmatprep.subr.mxu0 0.0
        %812 = vmatpush2.msra.mxu0 0.0
        %813 = vmatprep.subr.mxu0 0.0
        %814 = vmatpush2.msra.mxu0 0.0
        %815 = vmatprep.subr.mxu0 0.0
        %816 = vmatpush2.msra.mxu0 0.0
        %817 = vmatprep.subr.mxu0 0.0
        %818 = vmatpush2.msra.mxu0 0.0
        %819 = vmatprep.subr.mxu0 0.0
        %820 = vmatpush2.msra.mxu0 0.0
        %821 = vmatprep.subr.mxu0 0.0
        %822 = vmatpush2.msra.mxu0 0.0
        %823 = vmatprep.subr.mxu0 0.0
        %824 = vmatpush2.msra.mxu0 0.0
        %825 = vmatprep.subr.mxu0 0.0
        %826 = vmatpush2.msra.mxu0 0.0
        %827 = vmatprep.subr.mxu0 0.0
        %828 = vmatpush2.msra.mxu0 0.0
        %829 = vmatprep.subr.mxu0 0.0
        %830 = vmatpush2.msra.mxu0 0.0
        %831 = vmatprep.mubr.f32.mxu0 0.0
        %v832 = vand.u32 %v555, 4294901760
        %v833 = vsub.f32 %v555, %v832
        %834 = vmatmul.mubr.f32.gmra.mxu0 %v833
        %v835 = vpop.f32.mrf.mxu0
        %v836 = vadd.f32 %v748, %v835
        %v837 = vpop.f32.mrf.mxu0
        %838 = vdwg.mxu0
        %839 = vmatprep.subr.mxu0 0.0
        %840 = vmatpush1.msra.mxu0 0.0
        %841 = vmatprep.subr.mxu0 0.0
        %842 = vmatpush1.msra.mxu0 0.0
        %843 = vmatprep.subr.mxu0 0.0
        %844 = vmatpush1.msra.mxu0 0.0
        %845 = vmatprep.subr.mxu0 0.0
        %846 = vmatpush1.msra.mxu0 0.0
        %847 = vmatprep.subr.mxu0 0.0
        %848 = vmatpush1.msra.mxu0 0.0
        %849 = vmatprep.subr.mxu0 0.0
        %850 = vmatpush1.msra.mxu0 0.0
        %851 = vmatprep.subr.mxu0 0.0
        %852 = vmatpush1.msra.mxu0 0.0
        %853 = vmatprep.subr.mxu0 0.0
        %854 = vmatpush1.msra.mxu0 0.0
        %855 = vmatprep.subr.mxu0 0.0
        %v856 = vand.u32 %v244, 4294901760
        %857 = vmatpush1.msra.mxu0 %v856
        %858 = vmatprep.subr.mxu0 0.0
        %v859 = vand.u32 %v243, 4294901760
        %860 = vmatpush1.msra.mxu0 %v859
        %861 = vmatprep.subr.mxu0 0.0
        %v862 = vand.u32 %v242, 4294901760
        %863 = vmatpush1.msra.mxu0 %v862
        %864 = vmatprep.subr.mxu0 0.0
        %v865 = vand.u32 %v241, 4294901760
        %866 = vmatpush1.msra.mxu0 %v865
        %867 = vmatprep.subr.mxu0 0.0
        %v868 = vand.u32 %v240, 4294901760
        %869 = vmatpush1.msra.mxu0 %v868
        %870 = vmatprep.subr.mxu0 0.0
        %v871 = vand.u32 %v239, 4294901760
        %872 = vmatpush1.msra.mxu0 %v871
        %873 = vmatprep.subr.mxu0 0.0
        %v874 = vand.u32 %v238, 4294901760
        %875 = vmatpush1.msra.mxu0 %v874
        %876 = vmatprep.subr.mxu0 0.0
        %v877 = vand.u32 %v237, 4294901760
        %878 = vmatpush1.msra.mxu0 %v877
        %879 = vmatprep.subr.mxu0 0.0
        %880 = vmatpush2.msra.mxu0 0.0
        %881 = vmatprep.subr.mxu0 0.0
        %882 = vmatpush2.msra.mxu0 0.0
        %883 = vmatprep.subr.mxu0 0.0
        %884 = vmatpush2.msra.mxu0 0.0
        %885 = vmatprep.subr.mxu0 0.0
        %886 = vmatpush2.msra.mxu0 0.0
        %887 = vmatprep.subr.mxu0 0.0
        %888 = vmatpush2.msra.mxu0 0.0
        %889 = vmatprep.subr.mxu0 0.0
        %890 = vmatpush2.msra.mxu0 0.0
        %891 = vmatprep.subr.mxu0 0.0
        %892 = vmatpush2.msra.mxu0 0.0
        %893 = vmatprep.subr.mxu0 0.0
        %894 = vmatpush2.msra.mxu0 0.0
        %895 = vmatprep.subr.mxu0 0.0
        %896 = vmatpush2.msra.mxu0 0.0
        %897 = vmatprep.subr.mxu0 0.0
        %898 = vmatpush2.msra.mxu0 0.0
        %899 = vmatprep.subr.mxu0 0.0
        %900 = vmatpush2.msra.mxu0 0.0
        %901 = vmatprep.subr.mxu0 0.0
        %902 = vmatpush2.msra.mxu0 0.0
        %903 = vmatprep.subr.mxu0 0.0
        %904 = vmatpush2.msra.mxu0 0.0
        %905 = vmatprep.subr.mxu0 0.0
        %906 = vmatpush2.msra.mxu0 0.0
        %907 = vmatprep.subr.mxu0 0.0
        %908 = vmatpush2.msra.mxu0 0.0
        %909 = vmatprep.subr.mxu0 0.0
        %910 = vmatpush2.msra.mxu0 0.0
        %911 = vmatprep.mubr.f32.mxu0 0.0
        %v912 = vand.u32 %v555, 4294901760
        %v913 = vsub.f32 %v555, %v912
        %v914 = vand.u32 %v913, 4294901760
        %915 = vmatmul.mubr.f32.gmra.mxu0 %v914
        %v916 = vpop.f32.mrf.mxu0
        %v917 = vadd.f32 %v836, %v916
        %v918 = vpop.f32.mrf.mxu0
        %919 = vdwg.mxu0
        %920 = vmatprep.subr.mxu0 0.0
        %921 = vmatpush1.msra.mxu0 0.0
        %922 = vmatprep.subr.mxu0 0.0
        %923 = vmatpush1.msra.mxu0 0.0
        %924 = vmatprep.subr.mxu0 0.0
        %925 = vmatpush1.msra.mxu0 0.0
        %926 = vmatprep.subr.mxu0 0.0
        %927 = vmatpush1.msra.mxu0 0.0
        %928 = vmatprep.subr.mxu0 0.0
        %929 = vmatpush1.msra.mxu0 0.0
        %930 = vmatprep.subr.mxu0 0.0
        %931 = vmatpush1.msra.mxu0 0.0
        %932 = vmatprep.subr.mxu0 0.0
        %933 = vmatpush1.msra.mxu0 0.0
        %934 = vmatprep.subr.mxu0 0.0
        %935 = vmatpush1.msra.mxu0 0.0
        %936 = vmatprep.subr.mxu0 0.0
        %v937 = vand.u32 %v244, 4294901760
        %v938 = vsub.f32 %v244, %v937
        %v939 = vand.u32 %v938, 4294901760
        %940 = vmatpush1.msra.mxu0 %v939
        %941 = vmatprep.subr.mxu0 0.0
        %v942 = vand.u32 %v243, 4294901760
        %v943 = vsub.f32 %v243, %v942
        %v944 = vand.u32 %v943, 4294901760
        %945 = vmatpush1.msra.mxu0 %v944
        %946 = vmatprep.subr.mxu0 0.0
        %v947 = vand.u32 %v242, 4294901760
        %v948 = vsub.f32 %v242, %v947
        %v949 = vand.u32 %v948, 4294901760
        %950 = vmatpush1.msra.mxu0 %v949
        %951 = vmatprep.subr.mxu0 0.0
        %v952 = vand.u32 %v241, 4294901760
        %v953 = vsub.f32 %v241, %v952
        %v954 = vand.u32 %v953, 4294901760
        %955 = vmatpush1.msra.mxu0 %v954
        %956 = vmatprep.subr.mxu0 0.0
        %v957 = vand.u32 %v240, 4294901760
        %v958 = vsub.f32 %v240, %v957
        %v959 = vand.u32 %v958, 4294901760
        %960 = vmatpush1.msra.mxu0 %v959
        %961 = vmatprep.subr.mxu0 0.0
        %v962 = vand.u32 %v239, 4294901760
        %v963 = vsub.f32 %v239, %v962
        %v964 = vand.u32 %v963, 4294901760
        %965 = vmatpush1.msra.mxu0 %v964
        %966 = vmatprep.subr.mxu0 0.0
        %v967 = vand.u32 %v238, 4294901760
        %v968 = vsub.f32 %v238, %v967
        %v969 = vand.u32 %v968, 4294901760
        %970 = vmatpush1.msra.mxu0 %v969
        %971 = vmatprep.subr.mxu0 0.0
        %v972 = vand.u32 %v237, 4294901760
        %v973 = vsub.f32 %v237, %v972
        %v974 = vand.u32 %v973, 4294901760
        %975 = vmatpush1.msra.mxu0 %v974
        %976 = vmatprep.subr.mxu0 0.0
        %977 = vmatpush2.msra.mxu0 0.0
        %978 = vmatprep.subr.mxu0 0.0
        %979 = vmatpush2.msra.mxu0 0.0
        %980 = vmatprep.subr.mxu0 0.0
        %981 = vmatpush2.msra.mxu0 0.0
        %982 = vmatprep.subr.mxu0 0.0
        %983 = vmatpush2.msra.mxu0 0.0
        %984 = vmatprep.subr.mxu0 0.0
        %985 = vmatpush2.msra.mxu0 0.0
        %986 = vmatprep.subr.mxu0 0.0
        %987 = vmatpush2.msra.mxu0 0.0
        %988 = vmatprep.subr.mxu0 0.0
        %989 = vmatpush2.msra.mxu0 0.0
        %990 = vmatprep.subr.mxu0 0.0
        %991 = vmatpush2.msra.mxu0 0.0
        %992 = vmatprep.subr.mxu0 0.0
        %993 = vmatpush2.msra.mxu0 0.0
        %994 = vmatprep.subr.mxu0 0.0
        %995 = vmatpush2.msra.mxu0 0.0
        %996 = vmatprep.subr.mxu0 0.0
        %997 = vmatpush2.msra.mxu0 0.0
        %998 = vmatprep.subr.mxu0 0.0
        %999 = vmatpush2.msra.mxu0 0.0
        %1000 = vmatprep.subr.mxu0 0.0
        %1001 = vmatpush2.msra.mxu0 0.0
        %1002 = vmatprep.subr.mxu0 0.0
        %1003 = vmatpush2.msra.mxu0 0.0
        %1004 = vmatprep.subr.mxu0 0.0
        %1005 = vmatpush2.msra.mxu0 0.0
        %1006 = vmatprep.subr.mxu0 0.0
        %1007 = vmatpush2.msra.mxu0 0.0
        %1008 = vmatprep.mubr.f32.mxu0 0.0
        %v1009 = vand.u32 %v555, 4294901760
        %1010 = vmatmul.mubr.f32.gmra.mxu0 %v1009
        %v1011 = vpop.f32.mrf.mxu0
        %v1012 = vadd.f32 %v917, %v1011
        %v1013 = vpop.f32.mrf.mxu0
        %1014 = vdwg.mxu0
        %1015 = vmatprep.subr.mxu0 0.0
        %1016 = vmatpush1.msra.mxu0 0.0
        %1017 = vmatprep.subr.mxu0 0.0
        %1018 = vmatpush1.msra.mxu0 0.0
        %1019 = vmatprep.subr.mxu0 0.0
        %1020 = vmatpush1.msra.mxu0 0.0
        %1021 = vmatprep.subr.mxu0 0.0
        %1022 = vmatpush1.msra.mxu0 0.0
        %1023 = vmatprep.subr.mxu0 0.0
        %1024 = vmatpush1.msra.mxu0 0.0
        %1025 = vmatprep.subr.mxu0 0.0
        %1026 = vmatpush1.msra.mxu0 0.0
        %1027 = vmatprep.subr.mxu0 0.0
        %1028 = vmatpush1.msra.mxu0 0.0
        %1029 = vmatprep.subr.mxu0 0.0
        %1030 = vmatpush1.msra.mxu0 0.0
        %1031 = vmatprep.subr.mxu0 0.0
        %v1032 = vand.u32 %v244, 4294901760
        %1033 = vmatpush1.msra.mxu0 %v1032
        %1034 = vmatprep.subr.mxu0 0.0
        %v1035 = vand.u32 %v243, 4294901760
        %1036 = vmatpush1.msra.mxu0 %v1035
        %1037 = vmatprep.subr.mxu0 0.0
        %v1038 = vand.u32 %v242, 4294901760
        %1039 = vmatpush1.msra.mxu0 %v1038
        %1040 = vmatprep.subr.mxu0 0.0
        %v1041 = vand.u32 %v241, 4294901760
        %1042 = vmatpush1.msra.mxu0 %v1041
        %1043 = vmatprep.subr.mxu0 0.0
        %v1044 = vand.u32 %v240, 4294901760
        %1045 = vmatpush1.msra.mxu0 %v1044
        %1046 = vmatprep.subr.mxu0 0.0
        %v1047 = vand.u32 %v239, 4294901760
        %1048 = vmatpush1.msra.mxu0 %v1047
        %1049 = vmatprep.subr.mxu0 0.0
        %v1050 = vand.u32 %v238, 4294901760
        %1051 = vmatpush1.msra.mxu0 %v1050
        %1052 = vmatprep.subr.mxu0 0.0
        %v1053 = vand.u32 %v237, 4294901760
        %1054 = vmatpush1.msra.mxu0 %v1053
        %1055 = vmatprep.subr.mxu0 0.0
        %1056 = vmatpush2.msra.mxu0 0.0
        %1057 = vmatprep.subr.mxu0 0.0
        %1058 = vmatpush2.msra.mxu0 0.0
        %1059 = vmatprep.subr.mxu0 0.0
        %1060 = vmatpush2.msra.mxu0 0.0
        %1061 = vmatprep.subr.mxu0 0.0
        %1062 = vmatpush2.msra.mxu0 0.0
        %1063 = vmatprep.subr.mxu0 0.0
        %1064 = vmatpush2.msra.mxu0 0.0
        %1065 = vmatprep.subr.mxu0 0.0
        %1066 = vmatpush2.msra.mxu0 0.0
        %1067 = vmatprep.subr.mxu0 0.0
        %1068 = vmatpush2.msra.mxu0 0.0
        %1069 = vmatprep.subr.mxu0 0.0
        %1070 = vmatpush2.msra.mxu0 0.0
        %1071 = vmatprep.subr.mxu0 0.0
        %1072 = vmatpush2.msra.mxu0 0.0
        %1073 = vmatprep.subr.mxu0 0.0
        %1074 = vmatpush2.msra.mxu0 0.0
        %1075 = vmatprep.subr.mxu0 0.0
        %1076 = vmatpush2.msra.mxu0 0.0
        %1077 = vmatprep.subr.mxu0 0.0
        %1078 = vmatpush2.msra.mxu0 0.0
        %1079 = vmatprep.subr.mxu0 0.0
        %1080 = vmatpush2.msra.mxu0 0.0
        %1081 = vmatprep.subr.mxu0 0.0
        %1082 = vmatpush2.msra.mxu0 0.0
        %1083 = vmatprep.subr.mxu0 0.0
        %1084 = vmatpush2.msra.mxu0 0.0
        %1085 = vmatprep.subr.mxu0 0.0
        %1086 = vmatpush2.msra.mxu0 0.0
        %1087 = vmatprep.mubr.f32.mxu0 0.0
        %v1088 = vand.u32 %v555, 4294901760
        %1089 = vmatmul.mubr.f32.gmra.mxu0 %v1088
        %v1090 = vpop.f32.mrf.mxu0
        %v1091 = vadd.f32 %v1012, %v1090
        %v1092 = vpop.f32.mrf.mxu0
        %1093 = vdwg.mxu0
        %1095 = vset.pattern.permute.xlu0 0
        %1096 = vperm.xlu0 %1095, %v1091
        %v1097 = vpop.permute.xlu0 %1096
        %v1099 = vlaneseq
        %v1100 = vshrl.u32 %v1099, 7
        %v1101 = vsub.s32 0, %v1100
        %v1102 = vrot.slane %v236, %v1101
        %v1103 = vsub.f32 %v1097, %v1102
        %v1104 = vmul.f32 %v1103, %v1103
        %v1105 = vadd.f32 %v1104, 0.0
        %1106 = vset.pattern.permute.xlu0 1
        %1107 = vperm.xlu0 %1106, %v1091
        %v1108 = vpop.permute.xlu0 %1107
        %v1110 = vlaneseq
        %v1111 = vshrl.u32 %v1110, 7
        %v1112 = vsub.s32 1, %v1111
        %v1113 = vrot.slane %v236, %v1112
        %v1114 = vsub.f32 %v1108, %v1113
        %v1115 = vmul.f32 %v1114, %v1114
        %v1116 = vadd.f32 %v1105, %v1115
        %1117 = vset.pattern.permute.xlu0 2
        %1118 = vperm.xlu0 %1117, %v1091
        %v1119 = vpop.permute.xlu0 %1118
        %v1121 = vlaneseq
        %v1122 = vshrl.u32 %v1121, 7
        %v1123 = vsub.s32 2, %v1122
        %v1124 = vrot.slane %v236, %v1123
        %v1125 = vsub.f32 %v1119, %v1124
        %v1126 = vmul.f32 %v1125, %v1125
        %v1127 = vadd.f32 %v1116, %v1126
        %v1128 = vsel %vm266, %v1127, inf
        %1129 = vmin.xlane.f32.xlu0 %v1128
        %v1130 = vpop.xlane.xlu0 %1129
        %vm1131 = vcmp.eq.f32.partialorder %v1127, %v1130
        %v1132 = vsel %vm1131, %v246, 64
        %v1133 = vsel %vm266, %v1132, 2147483647
        %v1134 = vand.u32 %v1133, 65535
        %v1135 = vshra.s32 %v1133, 16
        %v1136 = vcvt.s32.f32 %v1134
        %v1137 = vcvt.s32.f32 %v1135
        %1138 = vmin.xlane.f32.xlu0 %v1137
        %v1139 = vpop.xlane.xlu0 %1138
        %vm1140 = vcmp.eq.f32.partialorder %v1137, %v1139
        %v1141 = vsel %vm1140, %v1136, inf
        %1142 = vmin.xlane.f32.xlu0 %v1141
        %v1143 = vpop.xlane.xlu0 %1142
        %v1144 = vcvt.f32.s32 %v1143
        %v1145 = vcvt.f32.s32 %v1139
        %v1146 = vshll.u32 %v1145, 16
        %v1147 = vadd.s32 %v1146, %v1144
        %vm1148 = vcmp.eq.s32.totalorder %v250, 1
        %v1149 = vsel %vm1148, %v1147, 0
        %vm1150 = vcmp.eq.s32.totalorder %v246, %v1147
        %v1151 = vsel %vm1150, 1, 0
        %v1152 = vcvt.s32.f32 %v1151
        %v1154 = vsel %vm266, %v1152, 0
        %1156 = vmatprep.subr.mxu0 0.0
        %1157 = vmatpush1.msra.mxu0 0.0
        %1158 = vmatprep.subr.mxu0 0.0
        %1159 = vmatpush1.msra.mxu0 0.0
        %1160 = vmatprep.subr.mxu0 0.0
        %1161 = vmatpush1.msra.mxu0 0.0
        %1162 = vmatprep.subr.mxu0 0.0
        %1163 = vmatpush1.msra.mxu0 0.0
        %1164 = vmatprep.subr.mxu0 0.0
        %1165 = vmatpush1.msra.mxu0 0.0
        %1166 = vmatprep.subr.mxu0 0.0
        %1167 = vmatpush1.msra.mxu0 0.0
        %1168 = vmatprep.subr.mxu0 0.0
        %1169 = vmatpush1.msra.mxu0 0.0
        %1170 = vmatprep.subr.mxu0 0.0
        %1171 = vmatpush1.msra.mxu0 0.0
        %1172 = vmatprep.subr.mxu0 0.0
        %v1173 = vand.u32 %v244, 4294901760
        %1174 = vmatpush1.msra.mxu0 %v1173
        %1175 = vmatprep.subr.mxu0 0.0
        %v1176 = vand.u32 %v243, 4294901760
        %1177 = vmatpush1.msra.mxu0 %v1176
        %1178 = vmatprep.subr.mxu0 0.0
        %v1179 = vand.u32 %v242, 4294901760
        %1180 = vmatpush1.msra.mxu0 %v1179
        %1181 = vmatprep.subr.mxu0 0.0
        %v1182 = vand.u32 %v241, 4294901760
        %1183 = vmatpush1.msra.mxu0 %v1182
        %1184 = vmatprep.subr.mxu0 0.0
        %v1185 = vand.u32 %v240, 4294901760
        %1186 = vmatpush1.msra.mxu0 %v1185
        %1187 = vmatprep.subr.mxu0 0.0
        %v1188 = vand.u32 %v239, 4294901760
        %1189 = vmatpush1.msra.mxu0 %v1188
        %1190 = vmatprep.subr.mxu0 0.0
        %v1191 = vand.u32 %v238, 4294901760
        %1192 = vmatpush1.msra.mxu0 %v1191
        %1193 = vmatprep.subr.mxu0 0.0
        %v1194 = vand.u32 %v237, 4294901760
        %1195 = vmatpush1.msra.mxu0 %v1194
        %1196 = vmatprep.subr.mxu0 0.0
        %1197 = vmatpush2.msra.mxu0 0.0
        %1198 = vmatprep.subr.mxu0 0.0
        %1199 = vmatpush2.msra.mxu0 0.0
        %1200 = vmatprep.subr.mxu0 0.0
        %1201 = vmatpush2.msra.mxu0 0.0
        %1202 = vmatprep.subr.mxu0 0.0
        %1203 = vmatpush2.msra.mxu0 0.0
        %1204 = vmatprep.subr.mxu0 0.0
        %1205 = vmatpush2.msra.mxu0 0.0
        %1206 = vmatprep.subr.mxu0 0.0
        %1207 = vmatpush2.msra.mxu0 0.0
        %1208 = vmatprep.subr.mxu0 0.0
        %1209 = vmatpush2.msra.mxu0 0.0
        %1210 = vmatprep.subr.mxu0 0.0
        %1211 = vmatpush2.msra.mxu0 0.0
        %1212 = vmatprep.subr.mxu0 0.0
        %1213 = vmatpush2.msra.mxu0 0.0
        %1214 = vmatprep.subr.mxu0 0.0
        %1215 = vmatpush2.msra.mxu0 0.0
        %1216 = vmatprep.subr.mxu0 0.0
        %1217 = vmatpush2.msra.mxu0 0.0
        %1218 = vmatprep.subr.mxu0 0.0
        %1219 = vmatpush2.msra.mxu0 0.0
        %1220 = vmatprep.subr.mxu0 0.0
        %1221 = vmatpush2.msra.mxu0 0.0
        %1222 = vmatprep.subr.mxu0 0.0
        %1223 = vmatpush2.msra.mxu0 0.0
        %1224 = vmatprep.subr.mxu0 0.0
        %1225 = vmatpush2.msra.mxu0 0.0
        %1226 = vmatprep.subr.mxu0 0.0
        %1227 = vmatpush2.msra.mxu0 0.0
        %1228 = vmatprep.mubr.f32.mxu0 0.0
        %v1229 = vand.u32 %v1154, 4294901760
        %v1230 = vsub.f32 %v1154, %v1229
        %v1231 = vand.u32 %v1230, 4294901760
        %v1232 = vsub.f32 %v1230, %v1231
        %v1233 = vand.u32 %v1232, 4294901760
        %1234 = vmatmul.mubr.f32.gmra.mxu0 %v1233
        %v1235 = vpop.f32.mrf.mxu0
        %v1236 = vadd.f32 0.0, %v1235
        %v1237 = vpop.f32.mrf.mxu0
        %1238 = vdwg.mxu0
        %1239 = vmatprep.subr.mxu0 0.0
        %1240 = vmatpush1.msra.mxu0 0.0
        %1241 = vmatprep.subr.mxu0 0.0
        %1242 = vmatpush1.msra.mxu0 0.0
        %1243 = vmatprep.subr.mxu0 0.0
        %1244 = vmatpush1.msra.mxu0 0.0
        %1245 = vmatprep.subr.mxu0 0.0
        %1246 = vmatpush1.msra.mxu0 0.0
        %1247 = vmatprep.subr.mxu0 0.0
        %1248 = vmatpush1.msra.mxu0 0.0
        %1249 = vmatprep.subr.mxu0 0.0
        %1250 = vmatpush1.msra.mxu0 0.0
        %1251 = vmatprep.subr.mxu0 0.0
        %1252 = vmatpush1.msra.mxu0 0.0
        %1253 = vmatprep.subr.mxu0 0.0
        %1254 = vmatpush1.msra.mxu0 0.0
        %1255 = vmatprep.subr.mxu0 0.0
        %v1256 = vand.u32 %v244, 4294901760
        %v1257 = vsub.f32 %v244, %v1256
        %v1258 = vand.u32 %v1257, 4294901760
        %v1259 = vsub.f32 %v1257, %v1258
        %v1260 = vand.u32 %v1259, 4294901760
        %1261 = vmatpush1.msra.mxu0 %v1260
        %1262 = vmatprep.subr.mxu0 0.0
        %v1263 = vand.u32 %v243, 4294901760
        %v1264 = vsub.f32 %v243, %v1263
        %v1265 = vand.u32 %v1264, 4294901760
        %v1266 = vsub.f32 %v1264, %v1265
        %v1267 = vand.u32 %v1266, 4294901760
        %1268 = vmatpush1.msra.mxu0 %v1267
        %1269 = vmatprep.subr.mxu0 0.0
        %v1270 = vand.u32 %v242, 4294901760
        %v1271 = vsub.f32 %v242, %v1270
        %v1272 = vand.u32 %v1271, 4294901760
        %v1273 = vsub.f32 %v1271, %v1272
        %v1274 = vand.u32 %v1273, 4294901760
        %1275 = vmatpush1.msra.mxu0 %v1274
        %1276 = vmatprep.subr.mxu0 0.0
        %v1277 = vand.u32 %v241, 4294901760
        %v1278 = vsub.f32 %v241, %v1277
        %v1279 = vand.u32 %v1278, 4294901760
        %v1280 = vsub.f32 %v1278, %v1279
        %v1281 = vand.u32 %v1280, 4294901760
        %1282 = vmatpush1.msra.mxu0 %v1281
        %1283 = vmatprep.subr.mxu0 0.0
        %v1284 = vand.u32 %v240, 4294901760
        %v1285 = vsub.f32 %v240, %v1284
        %v1286 = vand.u32 %v1285, 4294901760
        %v1287 = vsub.f32 %v1285, %v1286
        %v1288 = vand.u32 %v1287, 4294901760
        %1289 = vmatpush1.msra.mxu0 %v1288
        %1290 = vmatprep.subr.mxu0 0.0
        %v1291 = vand.u32 %v239, 4294901760
        %v1292 = vsub.f32 %v239, %v1291
        %v1293 = vand.u32 %v1292, 4294901760
        %v1294 = vsub.f32 %v1292, %v1293
        %v1295 = vand.u32 %v1294, 4294901760
        %1296 = vmatpush1.msra.mxu0 %v1295
        %1297 = vmatprep.subr.mxu0 0.0
        %v1298 = vand.u32 %v238, 4294901760
        %v1299 = vsub.f32 %v238, %v1298
        %v1300 = vand.u32 %v1299, 4294901760
        %v1301 = vsub.f32 %v1299, %v1300
        %v1302 = vand.u32 %v1301, 4294901760
        %1303 = vmatpush1.msra.mxu0 %v1302
        %1304 = vmatprep.subr.mxu0 0.0
        %v1305 = vand.u32 %v237, 4294901760
        %v1306 = vsub.f32 %v237, %v1305
        %v1307 = vand.u32 %v1306, 4294901760
        %v1308 = vsub.f32 %v1306, %v1307
        %v1309 = vand.u32 %v1308, 4294901760
        %1310 = vmatpush1.msra.mxu0 %v1309
        %1311 = vmatprep.subr.mxu0 0.0
        %1312 = vmatpush2.msra.mxu0 0.0
        %1313 = vmatprep.subr.mxu0 0.0
        %1314 = vmatpush2.msra.mxu0 0.0
        %1315 = vmatprep.subr.mxu0 0.0
        %1316 = vmatpush2.msra.mxu0 0.0
        %1317 = vmatprep.subr.mxu0 0.0
        %1318 = vmatpush2.msra.mxu0 0.0
        %1319 = vmatprep.subr.mxu0 0.0
        %1320 = vmatpush2.msra.mxu0 0.0
        %1321 = vmatprep.subr.mxu0 0.0
        %1322 = vmatpush2.msra.mxu0 0.0
        %1323 = vmatprep.subr.mxu0 0.0
        %1324 = vmatpush2.msra.mxu0 0.0
        %1325 = vmatprep.subr.mxu0 0.0
        %1326 = vmatpush2.msra.mxu0 0.0
        %1327 = vmatprep.subr.mxu0 0.0
        %1328 = vmatpush2.msra.mxu0 0.0
        %1329 = vmatprep.subr.mxu0 0.0
        %1330 = vmatpush2.msra.mxu0 0.0
        %1331 = vmatprep.subr.mxu0 0.0
        %1332 = vmatpush2.msra.mxu0 0.0
        %1333 = vmatprep.subr.mxu0 0.0
        %1334 = vmatpush2.msra.mxu0 0.0
        %1335 = vmatprep.subr.mxu0 0.0
        %1336 = vmatpush2.msra.mxu0 0.0
        %1337 = vmatprep.subr.mxu0 0.0
        %1338 = vmatpush2.msra.mxu0 0.0
        %1339 = vmatprep.subr.mxu0 0.0
        %1340 = vmatpush2.msra.mxu0 0.0
        %1341 = vmatprep.subr.mxu0 0.0
        %1342 = vmatpush2.msra.mxu0 0.0
        %1343 = vmatprep.mubr.f32.mxu0 0.0
        %v1344 = vand.u32 %v1154, 4294901760
        %1345 = vmatmul.mubr.f32.gmra.mxu0 %v1344
        %v1346 = vpop.f32.mrf.mxu0
        %v1347 = vadd.f32 %v1236, %v1346
        %v1348 = vpop.f32.mrf.mxu0
        %1349 = vdwg.mxu0
        %1350 = vmatprep.subr.mxu0 0.0
        %1351 = vmatpush1.msra.mxu0 0.0
        %1352 = vmatprep.subr.mxu0 0.0
        %1353 = vmatpush1.msra.mxu0 0.0
        %1354 = vmatprep.subr.mxu0 0.0
        %1355 = vmatpush1.msra.mxu0 0.0
        %1356 = vmatprep.subr.mxu0 0.0
        %1357 = vmatpush1.msra.mxu0 0.0
        %1358 = vmatprep.subr.mxu0 0.0
        %1359 = vmatpush1.msra.mxu0 0.0
        %1360 = vmatprep.subr.mxu0 0.0
        %1361 = vmatpush1.msra.mxu0 0.0
        %1362 = vmatprep.subr.mxu0 0.0
        %1363 = vmatpush1.msra.mxu0 0.0
        %1364 = vmatprep.subr.mxu0 0.0
        %1365 = vmatpush1.msra.mxu0 0.0
        %1366 = vmatprep.subr.mxu0 0.0
        %v1367 = vand.u32 %v244, 4294901760
        %v1368 = vsub.f32 %v244, %v1367
        %1369 = vmatpush1.msra.mxu0 %v1368
        %1370 = vmatprep.subr.mxu0 0.0
        %v1371 = vand.u32 %v243, 4294901760
        %v1372 = vsub.f32 %v243, %v1371
        %1373 = vmatpush1.msra.mxu0 %v1372
        %1374 = vmatprep.subr.mxu0 0.0
        %v1375 = vand.u32 %v242, 4294901760
        %v1376 = vsub.f32 %v242, %v1375
        %1377 = vmatpush1.msra.mxu0 %v1376
        %1378 = vmatprep.subr.mxu0 0.0
        %v1379 = vand.u32 %v241, 4294901760
        %v1380 = vsub.f32 %v241, %v1379
        %1381 = vmatpush1.msra.mxu0 %v1380
        %1382 = vmatprep.subr.mxu0 0.0
        %v1383 = vand.u32 %v240, 4294901760
        %v1384 = vsub.f32 %v240, %v1383
        %1385 = vmatpush1.msra.mxu0 %v1384
        %1386 = vmatprep.subr.mxu0 0.0
        %v1387 = vand.u32 %v239, 4294901760
        %v1388 = vsub.f32 %v239, %v1387
        %1389 = vmatpush1.msra.mxu0 %v1388
        %1390 = vmatprep.subr.mxu0 0.0
        %v1391 = vand.u32 %v238, 4294901760
        %v1392 = vsub.f32 %v238, %v1391
        %1393 = vmatpush1.msra.mxu0 %v1392
        %1394 = vmatprep.subr.mxu0 0.0
        %v1395 = vand.u32 %v237, 4294901760
        %v1396 = vsub.f32 %v237, %v1395
        %1397 = vmatpush1.msra.mxu0 %v1396
        %1398 = vmatprep.subr.mxu0 0.0
        %1399 = vmatpush2.msra.mxu0 0.0
        %1400 = vmatprep.subr.mxu0 0.0
        %1401 = vmatpush2.msra.mxu0 0.0
        %1402 = vmatprep.subr.mxu0 0.0
        %1403 = vmatpush2.msra.mxu0 0.0
        %1404 = vmatprep.subr.mxu0 0.0
        %1405 = vmatpush2.msra.mxu0 0.0
        %1406 = vmatprep.subr.mxu0 0.0
        %1407 = vmatpush2.msra.mxu0 0.0
        %1408 = vmatprep.subr.mxu0 0.0
        %1409 = vmatpush2.msra.mxu0 0.0
        %1410 = vmatprep.subr.mxu0 0.0
        %1411 = vmatpush2.msra.mxu0 0.0
        %1412 = vmatprep.subr.mxu0 0.0
        %1413 = vmatpush2.msra.mxu0 0.0
        %1414 = vmatprep.subr.mxu0 0.0
        %1415 = vmatpush2.msra.mxu0 0.0
        %1416 = vmatprep.subr.mxu0 0.0
        %1417 = vmatpush2.msra.mxu0 0.0
        %1418 = vmatprep.subr.mxu0 0.0
        %1419 = vmatpush2.msra.mxu0 0.0
        %1420 = vmatprep.subr.mxu0 0.0
        %1421 = vmatpush2.msra.mxu0 0.0
        %1422 = vmatprep.subr.mxu0 0.0
        %1423 = vmatpush2.msra.mxu0 0.0
        %1424 = vmatprep.subr.mxu0 0.0
        %1425 = vmatpush2.msra.mxu0 0.0
        %1426 = vmatprep.subr.mxu0 0.0
        %1427 = vmatpush2.msra.mxu0 0.0
        %1428 = vmatprep.subr.mxu0 0.0
        %1429 = vmatpush2.msra.mxu0 0.0
        %1430 = vmatprep.mubr.f32.mxu0 0.0
        %v1431 = vand.u32 %v1154, 4294901760
        %v1432 = vsub.f32 %v1154, %v1431
        %1433 = vmatmul.mubr.f32.gmra.mxu0 %v1432
        %v1434 = vpop.f32.mrf.mxu0
        %v1435 = vadd.f32 %v1347, %v1434
        %v1436 = vpop.f32.mrf.mxu0
        %1437 = vdwg.mxu0
        %1438 = vmatprep.subr.mxu0 0.0
        %1439 = vmatpush1.msra.mxu0 0.0
        %1440 = vmatprep.subr.mxu0 0.0
        %1441 = vmatpush1.msra.mxu0 0.0
        %1442 = vmatprep.subr.mxu0 0.0
        %1443 = vmatpush1.msra.mxu0 0.0
        %1444 = vmatprep.subr.mxu0 0.0
        %1445 = vmatpush1.msra.mxu0 0.0
        %1446 = vmatprep.subr.mxu0 0.0
        %1447 = vmatpush1.msra.mxu0 0.0
        %1448 = vmatprep.subr.mxu0 0.0
        %1449 = vmatpush1.msra.mxu0 0.0
        %1450 = vmatprep.subr.mxu0 0.0
        %1451 = vmatpush1.msra.mxu0 0.0
        %1452 = vmatprep.subr.mxu0 0.0
        %1453 = vmatpush1.msra.mxu0 0.0
        %1454 = vmatprep.subr.mxu0 0.0
        %v1455 = vand.u32 %v244, 4294901760
        %1456 = vmatpush1.msra.mxu0 %v1455
        %1457 = vmatprep.subr.mxu0 0.0
        %v1458 = vand.u32 %v243, 4294901760
        %1459 = vmatpush1.msra.mxu0 %v1458
        %1460 = vmatprep.subr.mxu0 0.0
        %v1461 = vand.u32 %v242, 4294901760
        %1462 = vmatpush1.msra.mxu0 %v1461
        %1463 = vmatprep.subr.mxu0 0.0
        %v1464 = vand.u32 %v241, 4294901760
        %1465 = vmatpush1.msra.mxu0 %v1464
        %1466 = vmatprep.subr.mxu0 0.0
        %v1467 = vand.u32 %v240, 4294901760
        %1468 = vmatpush1.msra.mxu0 %v1467
        %1469 = vmatprep.subr.mxu0 0.0
        %v1470 = vand.u32 %v239, 4294901760
        %1471 = vmatpush1.msra.mxu0 %v1470
        %1472 = vmatprep.subr.mxu0 0.0
        %v1473 = vand.u32 %v238, 4294901760
        %1474 = vmatpush1.msra.mxu0 %v1473
        %1475 = vmatprep.subr.mxu0 0.0
        %v1476 = vand.u32 %v237, 4294901760
        %1477 = vmatpush1.msra.mxu0 %v1476
        %1478 = vmatprep.subr.mxu0 0.0
        %1479 = vmatpush2.msra.mxu0 0.0
        %1480 = vmatprep.subr.mxu0 0.0
        %1481 = vmatpush2.msra.mxu0 0.0
        %1482 = vmatprep.subr.mxu0 0.0
        %1483 = vmatpush2.msra.mxu0 0.0
        %1484 = vmatprep.subr.mxu0 0.0
        %1485 = vmatpush2.msra.mxu0 0.0
        %1486 = vmatprep.subr.mxu0 0.0
        %1487 = vmatpush2.msra.mxu0 0.0
        %1488 = vmatprep.subr.mxu0 0.0
        %1489 = vmatpush2.msra.mxu0 0.0
        %1490 = vmatprep.subr.mxu0 0.0
        %1491 = vmatpush2.msra.mxu0 0.0
        %1492 = vmatprep.subr.mxu0 0.0
        %1493 = vmatpush2.msra.mxu0 0.0
        %1494 = vmatprep.subr.mxu0 0.0
        %1495 = vmatpush2.msra.mxu0 0.0
        %1496 = vmatprep.subr.mxu0 0.0
        %1497 = vmatpush2.msra.mxu0 0.0
        %1498 = vmatprep.subr.mxu0 0.0
        %1499 = vmatpush2.msra.mxu0 0.0
        %1500 = vmatprep.subr.mxu0 0.0
        %1501 = vmatpush2.msra.mxu0 0.0
        %1502 = vmatprep.subr.mxu0 0.0
        %1503 = vmatpush2.msra.mxu0 0.0
        %1504 = vmatprep.subr.mxu0 0.0
        %1505 = vmatpush2.msra.mxu0 0.0
        %1506 = vmatprep.subr.mxu0 0.0
        %1507 = vmatpush2.msra.mxu0 0.0
        %1508 = vmatprep.subr.mxu0 0.0
        %1509 = vmatpush2.msra.mxu0 0.0
        %1510 = vmatprep.mubr.f32.mxu0 0.0
        %v1511 = vand.u32 %v1154, 4294901760
        %v1512 = vsub.f32 %v1154, %v1511
        %v1513 = vand.u32 %v1512, 4294901760
        %1514 = vmatmul.mubr.f32.gmra.mxu0 %v1513
        %v1515 = vpop.f32.mrf.mxu0
        %v1516 = vadd.f32 %v1435, %v1515
        %v1517 = vpop.f32.mrf.mxu0
        %1518 = vdwg.mxu0
        %1519 = vmatprep.subr.mxu0 0.0
        %1520 = vmatpush1.msra.mxu0 0.0
        %1521 = vmatprep.subr.mxu0 0.0
        %1522 = vmatpush1.msra.mxu0 0.0
        %1523 = vmatprep.subr.mxu0 0.0
        %1524 = vmatpush1.msra.mxu0 0.0
        %1525 = vmatprep.subr.mxu0 0.0
        %1526 = vmatpush1.msra.mxu0 0.0
        %1527 = vmatprep.subr.mxu0 0.0
        %1528 = vmatpush1.msra.mxu0 0.0
        %1529 = vmatprep.subr.mxu0 0.0
        %1530 = vmatpush1.msra.mxu0 0.0
        %1531 = vmatprep.subr.mxu0 0.0
        %1532 = vmatpush1.msra.mxu0 0.0
        %1533 = vmatprep.subr.mxu0 0.0
        %1534 = vmatpush1.msra.mxu0 0.0
        %1535 = vmatprep.subr.mxu0 0.0
        %v1536 = vand.u32 %v244, 4294901760
        %v1537 = vsub.f32 %v244, %v1536
        %v1538 = vand.u32 %v1537, 4294901760
        %1539 = vmatpush1.msra.mxu0 %v1538
        %1540 = vmatprep.subr.mxu0 0.0
        %v1541 = vand.u32 %v243, 4294901760
        %v1542 = vsub.f32 %v243, %v1541
        %v1543 = vand.u32 %v1542, 4294901760
        %1544 = vmatpush1.msra.mxu0 %v1543
        %1545 = vmatprep.subr.mxu0 0.0
        %v1546 = vand.u32 %v242, 4294901760
        %v1547 = vsub.f32 %v242, %v1546
        %v1548 = vand.u32 %v1547, 4294901760
        %1549 = vmatpush1.msra.mxu0 %v1548
        %1550 = vmatprep.subr.mxu0 0.0
        %v1551 = vand.u32 %v241, 4294901760
        %v1552 = vsub.f32 %v241, %v1551
        %v1553 = vand.u32 %v1552, 4294901760
        %1554 = vmatpush1.msra.mxu0 %v1553
        %1555 = vmatprep.subr.mxu0 0.0
        %v1556 = vand.u32 %v240, 4294901760
        %v1557 = vsub.f32 %v240, %v1556
        %v1558 = vand.u32 %v1557, 4294901760
        %1559 = vmatpush1.msra.mxu0 %v1558
        %1560 = vmatprep.subr.mxu0 0.0
        %v1561 = vand.u32 %v239, 4294901760
        %v1562 = vsub.f32 %v239, %v1561
        %v1563 = vand.u32 %v1562, 4294901760
        %1564 = vmatpush1.msra.mxu0 %v1563
        %1565 = vmatprep.subr.mxu0 0.0
        %v1566 = vand.u32 %v238, 4294901760
        %v1567 = vsub.f32 %v238, %v1566
        %v1568 = vand.u32 %v1567, 4294901760
        %1569 = vmatpush1.msra.mxu0 %v1568
        %1570 = vmatprep.subr.mxu0 0.0
        %v1571 = vand.u32 %v237, 4294901760
        %v1572 = vsub.f32 %v237, %v1571
        %v1573 = vand.u32 %v1572, 4294901760
        %1574 = vmatpush1.msra.mxu0 %v1573
        %1575 = vmatprep.subr.mxu0 0.0
        %1576 = vmatpush2.msra.mxu0 0.0
        %1577 = vmatprep.subr.mxu0 0.0
        %1578 = vmatpush2.msra.mxu0 0.0
        %1579 = vmatprep.subr.mxu0 0.0
        %1580 = vmatpush2.msra.mxu0 0.0
        %1581 = vmatprep.subr.mxu0 0.0
        %1582 = vmatpush2.msra.mxu0 0.0
        %1583 = vmatprep.subr.mxu0 0.0
        %1584 = vmatpush2.msra.mxu0 0.0
        %1585 = vmatprep.subr.mxu0 0.0
        %1586 = vmatpush2.msra.mxu0 0.0
        %1587 = vmatprep.subr.mxu0 0.0
        %1588 = vmatpush2.msra.mxu0 0.0
        %1589 = vmatprep.subr.mxu0 0.0
        %1590 = vmatpush2.msra.mxu0 0.0
        %1591 = vmatprep.subr.mxu0 0.0
        %1592 = vmatpush2.msra.mxu0 0.0
        %1593 = vmatprep.subr.mxu0 0.0
        %1594 = vmatpush2.msra.mxu0 0.0
        %1595 = vmatprep.subr.mxu0 0.0
        %1596 = vmatpush2.msra.mxu0 0.0
        %1597 = vmatprep.subr.mxu0 0.0
        %1598 = vmatpush2.msra.mxu0 0.0
        %1599 = vmatprep.subr.mxu0 0.0
        %1600 = vmatpush2.msra.mxu0 0.0
        %1601 = vmatprep.subr.mxu0 0.0
        %1602 = vmatpush2.msra.mxu0 0.0
        %1603 = vmatprep.subr.mxu0 0.0
        %1604 = vmatpush2.msra.mxu0 0.0
        %1605 = vmatprep.subr.mxu0 0.0
        %1606 = vmatpush2.msra.mxu0 0.0
        %1607 = vmatprep.mubr.f32.mxu0 0.0
        %v1608 = vand.u32 %v1154, 4294901760
        %1609 = vmatmul.mubr.f32.gmra.mxu0 %v1608
        %v1610 = vpop.f32.mrf.mxu0
        %v1611 = vadd.f32 %v1516, %v1610
        %v1612 = vpop.f32.mrf.mxu0
        %1613 = vdwg.mxu0
        %1614 = vmatprep.subr.mxu0 0.0
        %1615 = vmatpush1.msra.mxu0 0.0
        %1616 = vmatprep.subr.mxu0 0.0
        %1617 = vmatpush1.msra.mxu0 0.0
        %1618 = vmatprep.subr.mxu0 0.0
        %1619 = vmatpush1.msra.mxu0 0.0
        %1620 = vmatprep.subr.mxu0 0.0
        %1621 = vmatpush1.msra.mxu0 0.0
        %1622 = vmatprep.subr.mxu0 0.0
        %1623 = vmatpush1.msra.mxu0 0.0
        %1624 = vmatprep.subr.mxu0 0.0
        %1625 = vmatpush1.msra.mxu0 0.0
        %1626 = vmatprep.subr.mxu0 0.0
        %1627 = vmatpush1.msra.mxu0 0.0
        %1628 = vmatprep.subr.mxu0 0.0
        %1629 = vmatpush1.msra.mxu0 0.0
        %1630 = vmatprep.subr.mxu0 0.0
        %v1631 = vand.u32 %v244, 4294901760
        %1632 = vmatpush1.msra.mxu0 %v1631
        %1633 = vmatprep.subr.mxu0 0.0
        %v1634 = vand.u32 %v243, 4294901760
        %1635 = vmatpush1.msra.mxu0 %v1634
        %1636 = vmatprep.subr.mxu0 0.0
        %v1637 = vand.u32 %v242, 4294901760
        %1638 = vmatpush1.msra.mxu0 %v1637
        %1639 = vmatprep.subr.mxu0 0.0
        %v1640 = vand.u32 %v241, 4294901760
        %1641 = vmatpush1.msra.mxu0 %v1640
        %1642 = vmatprep.subr.mxu0 0.0
        %v1643 = vand.u32 %v240, 4294901760
        %1644 = vmatpush1.msra.mxu0 %v1643
        %1645 = vmatprep.subr.mxu0 0.0
        %v1646 = vand.u32 %v239, 4294901760
        %1647 = vmatpush1.msra.mxu0 %v1646
        %1648 = vmatprep.subr.mxu0 0.0
        %v1649 = vand.u32 %v238, 4294901760
        %1650 = vmatpush1.msra.mxu0 %v1649
        %1651 = vmatprep.subr.mxu0 0.0
        %v1652 = vand.u32 %v237, 4294901760
        %1653 = vmatpush1.msra.mxu0 %v1652
        %1654 = vmatprep.subr.mxu0 0.0
        %1655 = vmatpush2.msra.mxu0 0.0
        %1656 = vmatprep.subr.mxu0 0.0
        %1657 = vmatpush2.msra.mxu0 0.0
        %1658 = vmatprep.subr.mxu0 0.0
        %1659 = vmatpush2.msra.mxu0 0.0
        %1660 = vmatprep.subr.mxu0 0.0
        %1661 = vmatpush2.msra.mxu0 0.0
        %1662 = vmatprep.subr.mxu0 0.0
        %1663 = vmatpush2.msra.mxu0 0.0
        %1664 = vmatprep.subr.mxu0 0.0
        %1665 = vmatpush2.msra.mxu0 0.0
        %1666 = vmatprep.subr.mxu0 0.0
        %1667 = vmatpush2.msra.mxu0 0.0
        %1668 = vmatprep.subr.mxu0 0.0
        %1669 = vmatpush2.msra.mxu0 0.0
        %1670 = vmatprep.subr.mxu0 0.0
        %1671 = vmatpush2.msra.mxu0 0.0
        %1672 = vmatprep.subr.mxu0 0.0
        %1673 = vmatpush2.msra.mxu0 0.0
        %1674 = vmatprep.subr.mxu0 0.0
        %1675 = vmatpush2.msra.mxu0 0.0
        %1676 = vmatprep.subr.mxu0 0.0
        %1677 = vmatpush2.msra.mxu0 0.0
        %1678 = vmatprep.subr.mxu0 0.0
        %1679 = vmatpush2.msra.mxu0 0.0
        %1680 = vmatprep.subr.mxu0 0.0
        %1681 = vmatpush2.msra.mxu0 0.0
        %1682 = vmatprep.subr.mxu0 0.0
        %1683 = vmatpush2.msra.mxu0 0.0
        %1684 = vmatprep.subr.mxu0 0.0
        %1685 = vmatpush2.msra.mxu0 0.0
        %1686 = vmatprep.mubr.f32.mxu0 0.0
        %v1687 = vand.u32 %v1154, 4294901760
        %1688 = vmatmul.mubr.f32.gmra.mxu0 %v1687
        %v1689 = vpop.f32.mrf.mxu0
        %v1690 = vadd.f32 %v1611, %v1689
        %v1691 = vpop.f32.mrf.mxu0
        %1692 = vdwg.mxu0
        %vm1693 = vcmp.eq.s32.totalorder %v248, 0
        %v1695 = vcombine.high %v1690, %v1690
        %v1697 = vunpack.c.l.s4 1966171168
        %v1698 = vunpack.c.0.s8 %v1697
        %v1699 = vlaneseq
        %v1700 = vshrl.u32 %v1699, 7
        %v1701 = vsub.s32 %v1698, %v1700
        %v1702 = vrot.slane %v1690, %v1701
        %v1704 = vunpack.c.l.s4 1966171168
        %v1705 = vunpack.c.0.s8 %v1704
        %v1706 = vlaneseq
        %v1707 = vshrl.u32 %v1706, 7
        %v1708 = vsub.s32 %v1705, %v1707
        %v1709 = vrot.slane %v1695, %v1708
        %v1710 = vcombine.high %v1702, %v1702
        %v1711 = vcombine.high %v1709, %v1709
        %v1713 = vunpack.c.l.s4 1966171168
        %v1714 = vunpack.c.0.s8 %v1713
        %v1715 = vlaneseq
        %v1716 = vshrl.u32 %v1715, 7
        %v1717 = vsub.s32 %v1714, %v1716
        %v1718 = vrot.slane %v1702, %v1717
        %v1720 = vunpack.c.l.s4 1966171168
        %v1721 = vunpack.c.0.s8 %v1720
        %v1722 = vlaneseq
        %v1723 = vshrl.u32 %v1722, 7
        %v1724 = vsub.s32 %v1721, %v1723
        %v1725 = vrot.slane %v1709, %v1724
        %v1727 = vunpack.c.l.s4 1966171168
        %v1728 = vunpack.c.0.s8 %v1727
        %v1729 = vlaneseq
        %v1730 = vshrl.u32 %v1729, 7
        %v1731 = vsub.s32 %v1728, %v1730
        %v1732 = vrot.slane %v1710, %v1731
        %v1734 = vunpack.c.l.s4 1966171168
        %v1735 = vunpack.c.0.s8 %v1734
        %v1736 = vlaneseq
        %v1737 = vshrl.u32 %v1736, 7
        %v1738 = vsub.s32 %v1735, %v1737
        %v1739 = vrot.slane %v1711, %v1738
        %v1740 = vcombine.high %v1718, %v1718
        %v1741 = vcombine.high %v1725, %v1725
        %v1742 = vcombine.high %v1732, %v1732
        %v1743 = vcombine.high %v1739, %v1739
        %v1744 = vsel %vm1693, 1, 0
        %vm1745 = vcmp.eq.s32.totalorder %v1744, 1
        %v1746 = vlaneseq
        %v1747 = vshrl.u32 %v1746, 7
        %v1748 = vsub.s32 0, %v1747
        %v1749 = vrot.slane %v1718, %v1748
        %v1750 = vlaneseq
        %v1751 = vshrl.u32 %v1750, 7
        %v1752 = vsub.s32 0, %v1751
        %v1753 = vrot.slane %v1732, %v1752
        %v1754 = vlaneseq
        %v1755 = vshrl.u32 %v1754, 7
        %v1756 = vsub.s32 0, %v1755
        %v1757 = vrot.slane %v1740, %v1756
        %v1758 = vlaneseq
        %v1759 = vshrl.u32 %v1758, 7
        %v1760 = vsub.s32 0, %v1759
        %v1761 = vrot.slane %v1742, %v1760
        %v1762 = vlaneseq
        %v1763 = vshrl.u32 %v1762, 7
        %v1764 = vsub.s32 0, %v1763
        %v1765 = vrot.slane %v1725, %v1764
        %v1766 = vlaneseq
        %v1767 = vshrl.u32 %v1766, 7
        %v1768 = vsub.s32 0, %v1767
        %v1769 = vrot.slane %v1739, %v1768
        %v1770 = vlaneseq
        %v1771 = vshrl.u32 %v1770, 7
        %v1772 = vsub.s32 0, %v1771
        %v1773 = vrot.slane %v1741, %v1772
        %v1774 = vlaneseq
        %v1775 = vshrl.u32 %v1774, 7
        %v1776 = vsub.s32 0, %v1775
        %v1777 = vrot.slane %v1743, %v1776
        %v1786 = vsel %vm1745, %v1749, 0.0
        %v1787 = vsel %vm1745, %v1753, 0.0
        %v1788 = vsel %vm1745, %v1757, 0.0
        %v1789 = vsel %vm1745, %v1761, 0.0
        %v1790 = vsel %vm1745, %v1765, 0.0
        %v1791 = vsel %vm1745, %v1769, 0.0
        %v1792 = vsel %vm1745, %v1773, 0.0
        %v1793 = vsel %vm1745, %v1777, 0.0
        %v1794 = vadd.f32 %v1786, 0.0
        %v1795 = vadd.f32 %v1787, 0.0
        %v1796 = vadd.f32 %v1788, 0.0
        %v1797 = vadd.f32 %v1789, 0.0
        %v1798 = vadd.f32 %v1790, 0.0
        %v1799 = vadd.f32 %v1791, 0.0
        %v1800 = vadd.f32 %v1792, 0.0
        %v1801 = vadd.f32 %v1793, 0.0
        %v1802 = vsel %vm1150, inf, %v1127
        %v1803 = vsel %vm266, %v1802, inf
        %1804 = vmin.xlane.f32.xlu0 %v1803
        %v1805 = vpop.xlane.xlu0 %1804
        %vm1806 = vcmp.eq.f32.partialorder %v1802, %v1805
        %v1807 = vsel %vm1806, %v246, 64
        %v1808 = vsel %vm266, %v1807, 2147483647
        %v1809 = vand.u32 %v1808, 65535
        %v1810 = vshra.s32 %v1808, 16
        %v1811 = vcvt.s32.f32 %v1809
        %v1812 = vcvt.s32.f32 %v1810
        %1813 = vmin.xlane.f32.xlu0 %v1812
        %v1814 = vpop.xlane.xlu0 %1813
        %vm1815 = vcmp.eq.f32.partialorder %v1812, %v1814
        %v1816 = vsel %vm1815, %v1811, inf
        %1817 = vmin.xlane.f32.xlu0 %v1816
        %v1818 = vpop.xlane.xlu0 %1817
        %v1819 = vcvt.f32.s32 %v1818
        %v1820 = vcvt.f32.s32 %v1814
        %v1821 = vshll.u32 %v1820, 16
        %v1822 = vadd.s32 %v1821, %v1819
        %vm1823 = vcmp.eq.s32.totalorder %v246, 1
        %v1824 = vsel %vm1823, 1, 0
        %vm1825 = vcmp.eq.s32.totalorder %v1824, 1
        %v1826 = vsel %vm1825, %v1822, 0
        %v1827 = vadd.s32 %v1149, %v1826
        %vm1828 = vcmp.eq.s32.totalorder %v246, %v1822
        %v1829 = vsel %vm1828, 1, 0
        %v1830 = vcvt.s32.f32 %v1829
        %v1832 = vsel %vm266, %v1830, 0
        %1834 = vmatprep.subr.mxu0 0.0
        %1835 = vmatpush1.msra.mxu0 0.0
        %1836 = vmatprep.subr.mxu0 0.0
        %1837 = vmatpush1.msra.mxu0 0.0
        %1838 = vmatprep.subr.mxu0 0.0
        %1839 = vmatpush1.msra.mxu0 0.0
        %1840 = vmatprep.subr.mxu0 0.0
        %1841 = vmatpush1.msra.mxu0 0.0
        %1842 = vmatprep.subr.mxu0 0.0
        %1843 = vmatpush1.msra.mxu0 0.0
        %1844 = vmatprep.subr.mxu0 0.0
        %1845 = vmatpush1.msra.mxu0 0.0
        %1846 = vmatprep.subr.mxu0 0.0
        %1847 = vmatpush1.msra.mxu0 0.0
        %1848 = vmatprep.subr.mxu0 0.0
        %1849 = vmatpush1.msra.mxu0 0.0
        %1850 = vmatprep.subr.mxu0 0.0
        %v1851 = vand.u32 %v244, 4294901760
        %1852 = vmatpush1.msra.mxu0 %v1851
        %1853 = vmatprep.subr.mxu0 0.0
        %v1854 = vand.u32 %v243, 4294901760
        %1855 = vmatpush1.msra.mxu0 %v1854
        %1856 = vmatprep.subr.mxu0 0.0
        %v1857 = vand.u32 %v242, 4294901760
        %1858 = vmatpush1.msra.mxu0 %v1857
        %1859 = vmatprep.subr.mxu0 0.0
        %v1860 = vand.u32 %v241, 4294901760
        %1861 = vmatpush1.msra.mxu0 %v1860
        %1862 = vmatprep.subr.mxu0 0.0
        %v1863 = vand.u32 %v240, 4294901760
        %1864 = vmatpush1.msra.mxu0 %v1863
        %1865 = vmatprep.subr.mxu0 0.0
        %v1866 = vand.u32 %v239, 4294901760
        %1867 = vmatpush1.msra.mxu0 %v1866
        %1868 = vmatprep.subr.mxu0 0.0
        %v1869 = vand.u32 %v238, 4294901760
        %1870 = vmatpush1.msra.mxu0 %v1869
        %1871 = vmatprep.subr.mxu0 0.0
        %v1872 = vand.u32 %v237, 4294901760
        %1873 = vmatpush1.msra.mxu0 %v1872
        %1874 = vmatprep.subr.mxu0 0.0
        %1875 = vmatpush2.msra.mxu0 0.0
        %1876 = vmatprep.subr.mxu0 0.0
        %1877 = vmatpush2.msra.mxu0 0.0
        %1878 = vmatprep.subr.mxu0 0.0
        %1879 = vmatpush2.msra.mxu0 0.0
        %1880 = vmatprep.subr.mxu0 0.0
        %1881 = vmatpush2.msra.mxu0 0.0
        %1882 = vmatprep.subr.mxu0 0.0
        %1883 = vmatpush2.msra.mxu0 0.0
        %1884 = vmatprep.subr.mxu0 0.0
        %1885 = vmatpush2.msra.mxu0 0.0
        %1886 = vmatprep.subr.mxu0 0.0
        %1887 = vmatpush2.msra.mxu0 0.0
        %1888 = vmatprep.subr.mxu0 0.0
        %1889 = vmatpush2.msra.mxu0 0.0
        %1890 = vmatprep.subr.mxu0 0.0
        %1891 = vmatpush2.msra.mxu0 0.0
        %1892 = vmatprep.subr.mxu0 0.0
        %1893 = vmatpush2.msra.mxu0 0.0
        %1894 = vmatprep.subr.mxu0 0.0
        %1895 = vmatpush2.msra.mxu0 0.0
        %1896 = vmatprep.subr.mxu0 0.0
        %1897 = vmatpush2.msra.mxu0 0.0
        %1898 = vmatprep.subr.mxu0 0.0
        %1899 = vmatpush2.msra.mxu0 0.0
        %1900 = vmatprep.subr.mxu0 0.0
        %1901 = vmatpush2.msra.mxu0 0.0
        %1902 = vmatprep.subr.mxu0 0.0
        %1903 = vmatpush2.msra.mxu0 0.0
        %1904 = vmatprep.subr.mxu0 0.0
        %1905 = vmatpush2.msra.mxu0 0.0
        %1906 = vmatprep.mubr.f32.mxu0 0.0
        %v1907 = vand.u32 %v1832, 4294901760
        %v1908 = vsub.f32 %v1832, %v1907
        %v1909 = vand.u32 %v1908, 4294901760
        %v1910 = vsub.f32 %v1908, %v1909
        %v1911 = vand.u32 %v1910, 4294901760
        %1912 = vmatmul.mubr.f32.gmra.mxu0 %v1911
        %v1913 = vpop.f32.mrf.mxu0
        %v1914 = vadd.f32 0.0, %v1913
        %v1915 = vpop.f32.mrf.mxu0
        %1916 = vdwg.mxu0
        %1917 = vmatprep.subr.mxu0 0.0
        %1918 = vmatpush1.msra.mxu0 0.0
        %1919 = vmatprep.subr.mxu0 0.0
        %1920 = vmatpush1.msra.mxu0 0.0
        %1921 = vmatprep.subr.mxu0 0.0
        %1922 = vmatpush1.msra.mxu0 0.0
        %1923 = vmatprep.subr.mxu0 0.0
        %1924 = vmatpush1.msra.mxu0 0.0
        %1925 = vmatprep.subr.mxu0 0.0
        %1926 = vmatpush1.msra.mxu0 0.0
        %1927 = vmatprep.subr.mxu0 0.0
        %1928 = vmatpush1.msra.mxu0 0.0
        %1929 = vmatprep.subr.mxu0 0.0
        %1930 = vmatpush1.msra.mxu0 0.0
        %1931 = vmatprep.subr.mxu0 0.0
        %1932 = vmatpush1.msra.mxu0 0.0
        %1933 = vmatprep.subr.mxu0 0.0
        %v1934 = vand.u32 %v244, 4294901760
        %v1935 = vsub.f32 %v244, %v1934
        %v1936 = vand.u32 %v1935, 4294901760
        %v1937 = vsub.f32 %v1935, %v1936
        %v1938 = vand.u32 %v1937, 4294901760
        %1939 = vmatpush1.msra.mxu0 %v1938
        %1940 = vmatprep.subr.mxu0 0.0
        %v1941 = vand.u32 %v243, 4294901760
        %v1942 = vsub.f32 %v243, %v1941
        %v1943 = vand.u32 %v1942, 4294901760
        %v1944 = vsub.f32 %v1942, %v1943
        %v1945 = vand.u32 %v1944, 4294901760
        %1946 = vmatpush1.msra.mxu0 %v1945
        %1947 = vmatprep.subr.mxu0 0.0
        %v1948 = vand.u32 %v242, 4294901760
        %v1949 = vsub.f32 %v242, %v1948
        %v1950 = vand.u32 %v1949, 4294901760
        %v1951 = vsub.f32 %v1949, %v1950
        %v1952 = vand.u32 %v1951, 4294901760
        %1953 = vmatpush1.msra.mxu0 %v1952
        %1954 = vmatprep.subr.mxu0 0.0
        %v1955 = vand.u32 %v241, 4294901760
        %v1956 = vsub.f32 %v241, %v1955
        %v1957 = vand.u32 %v1956, 4294901760
        %v1958 = vsub.f32 %v1956, %v1957
        %v1959 = vand.u32 %v1958, 4294901760
        %1960 = vmatpush1.msra.mxu0 %v1959
        %1961 = vmatprep.subr.mxu0 0.0
        %v1962 = vand.u32 %v240, 4294901760
        %v1963 = vsub.f32 %v240, %v1962
        %v1964 = vand.u32 %v1963, 4294901760
        %v1965 = vsub.f32 %v1963, %v1964
        %v1966 = vand.u32 %v1965, 4294901760
        %1967 = vmatpush1.msra.mxu0 %v1966
        %1968 = vmatprep.subr.mxu0 0.0
        %v1969 = vand.u32 %v239, 4294901760
        %v1970 = vsub.f32 %v239, %v1969
        %v1971 = vand.u32 %v1970, 4294901760
        %v1972 = vsub.f32 %v1970, %v1971
        %v1973 = vand.u32 %v1972, 4294901760
        %1974 = vmatpush1.msra.mxu0 %v1973
        %1975 = vmatprep.subr.mxu0 0.0
        %v1976 = vand.u32 %v238, 4294901760
        %v1977 = vsub.f32 %v238, %v1976
        %v1978 = vand.u32 %v1977, 4294901760
        %v1979 = vsub.f32 %v1977, %v1978
        %v1980 = vand.u32 %v1979, 4294901760
        %1981 = vmatpush1.msra.mxu0 %v1980
        %1982 = vmatprep.subr.mxu0 0.0
        %v1983 = vand.u32 %v237, 4294901760
        %v1984 = vsub.f32 %v237, %v1983
        %v1985 = vand.u32 %v1984, 4294901760
        %v1986 = vsub.f32 %v1984, %v1985
        %v1987 = vand.u32 %v1986, 4294901760
        %1988 = vmatpush1.msra.mxu0 %v1987
        %1989 = vmatprep.subr.mxu0 0.0
        %1990 = vmatpush2.msra.mxu0 0.0
        %1991 = vmatprep.subr.mxu0 0.0
        %1992 = vmatpush2.msra.mxu0 0.0
        %1993 = vmatprep.subr.mxu0 0.0
        %1994 = vmatpush2.msra.mxu0 0.0
        %1995 = vmatprep.subr.mxu0 0.0
        %1996 = vmatpush2.msra.mxu0 0.0
        %1997 = vmatprep.subr.mxu0 0.0
        %1998 = vmatpush2.msra.mxu0 0.0
        %1999 = vmatprep.subr.mxu0 0.0
        %2000 = vmatpush2.msra.mxu0 0.0
        %2001 = vmatprep.subr.mxu0 0.0
        %2002 = vmatpush2.msra.mxu0 0.0
        %2003 = vmatprep.subr.mxu0 0.0
        %2004 = vmatpush2.msra.mxu0 0.0
        %2005 = vmatprep.subr.mxu0 0.0
        %2006 = vmatpush2.msra.mxu0 0.0
        %2007 = vmatprep.subr.mxu0 0.0
        %2008 = vmatpush2.msra.mxu0 0.0
        %2009 = vmatprep.subr.mxu0 0.0
        %2010 = vmatpush2.msra.mxu0 0.0
        %2011 = vmatprep.subr.mxu0 0.0
        %2012 = vmatpush2.msra.mxu0 0.0
        %2013 = vmatprep.subr.mxu0 0.0
        %2014 = vmatpush2.msra.mxu0 0.0
        %2015 = vmatprep.subr.mxu0 0.0
        %2016 = vmatpush2.msra.mxu0 0.0
        %2017 = vmatprep.subr.mxu0 0.0
        %2018 = vmatpush2.msra.mxu0 0.0
        %2019 = vmatprep.subr.mxu0 0.0
        %2020 = vmatpush2.msra.mxu0 0.0
        %2021 = vmatprep.mubr.f32.mxu0 0.0
        %v2022 = vand.u32 %v1832, 4294901760
        %2023 = vmatmul.mubr.f32.gmra.mxu0 %v2022
        %v2024 = vpop.f32.mrf.mxu0
        %v2025 = vadd.f32 %v1914, %v2024
        %v2026 = vpop.f32.mrf.mxu0
        %2027 = vdwg.mxu0
        %2028 = vmatprep.subr.mxu0 0.0
        %2029 = vmatpush1.msra.mxu0 0.0
        %2030 = vmatprep.subr.mxu0 0.0
        %2031 = vmatpush1.msra.mxu0 0.0
        %2032 = vmatprep.subr.mxu0 0.0
        %2033 = vmatpush1.msra.mxu0 0.0
        %2034 = vmatprep.subr.mxu0 0.0
        %2035 = vmatpush1.msra.mxu0 0.0
        %2036 = vmatprep.subr.mxu0 0.0
        %2037 = vmatpush1.msra.mxu0 0.0
        %2038 = vmatprep.subr.mxu0 0.0
        %2039 = vmatpush1.msra.mxu0 0.0
        %2040 = vmatprep.subr.mxu0 0.0
        %2041 = vmatpush1.msra.mxu0 0.0
        %2042 = vmatprep.subr.mxu0 0.0
        %2043 = vmatpush1.msra.mxu0 0.0
        %2044 = vmatprep.subr.mxu0 0.0
        %v2045 = vand.u32 %v244, 4294901760
        %v2046 = vsub.f32 %v244, %v2045
        %2047 = vmatpush1.msra.mxu0 %v2046
        %2048 = vmatprep.subr.mxu0 0.0
        %v2049 = vand.u32 %v243, 4294901760
        %v2050 = vsub.f32 %v243, %v2049
        %2051 = vmatpush1.msra.mxu0 %v2050
        %2052 = vmatprep.subr.mxu0 0.0
        %v2053 = vand.u32 %v242, 4294901760
        %v2054 = vsub.f32 %v242, %v2053
        %2055 = vmatpush1.msra.mxu0 %v2054
        %2056 = vmatprep.subr.mxu0 0.0
        %v2057 = vand.u32 %v241, 4294901760
        %v2058 = vsub.f32 %v241, %v2057
        %2059 = vmatpush1.msra.mxu0 %v2058
        %2060 = vmatprep.subr.mxu0 0.0
        %v2061 = vand.u32 %v240, 4294901760
        %v2062 = vsub.f32 %v240, %v2061
        %2063 = vmatpush1.msra.mxu0 %v2062
        %2064 = vmatprep.subr.mxu0 0.0
        %v2065 = vand.u32 %v239, 4294901760
        %v2066 = vsub.f32 %v239, %v2065
        %2067 = vmatpush1.msra.mxu0 %v2066
        %2068 = vmatprep.subr.mxu0 0.0
        %v2069 = vand.u32 %v238, 4294901760
        %v2070 = vsub.f32 %v238, %v2069
        %2071 = vmatpush1.msra.mxu0 %v2070
        %2072 = vmatprep.subr.mxu0 0.0
        %v2073 = vand.u32 %v237, 4294901760
        %v2074 = vsub.f32 %v237, %v2073
        %2075 = vmatpush1.msra.mxu0 %v2074
        %2076 = vmatprep.subr.mxu0 0.0
        %2077 = vmatpush2.msra.mxu0 0.0
        %2078 = vmatprep.subr.mxu0 0.0
        %2079 = vmatpush2.msra.mxu0 0.0
        %2080 = vmatprep.subr.mxu0 0.0
        %2081 = vmatpush2.msra.mxu0 0.0
        %2082 = vmatprep.subr.mxu0 0.0
        %2083 = vmatpush2.msra.mxu0 0.0
        %2084 = vmatprep.subr.mxu0 0.0
        %2085 = vmatpush2.msra.mxu0 0.0
        %2086 = vmatprep.subr.mxu0 0.0
        %2087 = vmatpush2.msra.mxu0 0.0
        %2088 = vmatprep.subr.mxu0 0.0
        %2089 = vmatpush2.msra.mxu0 0.0
        %2090 = vmatprep.subr.mxu0 0.0
        %2091 = vmatpush2.msra.mxu0 0.0
        %2092 = vmatprep.subr.mxu0 0.0
        %2093 = vmatpush2.msra.mxu0 0.0
        %2094 = vmatprep.subr.mxu0 0.0
        %2095 = vmatpush2.msra.mxu0 0.0
        %2096 = vmatprep.subr.mxu0 0.0
        %2097 = vmatpush2.msra.mxu0 0.0
        %2098 = vmatprep.subr.mxu0 0.0
        %2099 = vmatpush2.msra.mxu0 0.0
        %2100 = vmatprep.subr.mxu0 0.0
        %2101 = vmatpush2.msra.mxu0 0.0
        %2102 = vmatprep.subr.mxu0 0.0
        %2103 = vmatpush2.msra.mxu0 0.0
        %2104 = vmatprep.subr.mxu0 0.0
        %2105 = vmatpush2.msra.mxu0 0.0
        %2106 = vmatprep.subr.mxu0 0.0
        %2107 = vmatpush2.msra.mxu0 0.0
        %2108 = vmatprep.mubr.f32.mxu0 0.0
        %v2109 = vand.u32 %v1832, 4294901760
        %v2110 = vsub.f32 %v1832, %v2109
        %2111 = vmatmul.mubr.f32.gmra.mxu0 %v2110
        %v2112 = vpop.f32.mrf.mxu0
        %v2113 = vadd.f32 %v2025, %v2112
        %v2114 = vpop.f32.mrf.mxu0
        %2115 = vdwg.mxu0
        %2116 = vmatprep.subr.mxu0 0.0
        %2117 = vmatpush1.msra.mxu0 0.0
        %2118 = vmatprep.subr.mxu0 0.0
        %2119 = vmatpush1.msra.mxu0 0.0
        %2120 = vmatprep.subr.mxu0 0.0
        %2121 = vmatpush1.msra.mxu0 0.0
        %2122 = vmatprep.subr.mxu0 0.0
        %2123 = vmatpush1.msra.mxu0 0.0
        %2124 = vmatprep.subr.mxu0 0.0
        %2125 = vmatpush1.msra.mxu0 0.0
        %2126 = vmatprep.subr.mxu0 0.0
        %2127 = vmatpush1.msra.mxu0 0.0
        %2128 = vmatprep.subr.mxu0 0.0
        %2129 = vmatpush1.msra.mxu0 0.0
        %2130 = vmatprep.subr.mxu0 0.0
        %2131 = vmatpush1.msra.mxu0 0.0
        %2132 = vmatprep.subr.mxu0 0.0
        %v2133 = vand.u32 %v244, 4294901760
        %2134 = vmatpush1.msra.mxu0 %v2133
        %2135 = vmatprep.subr.mxu0 0.0
        %v2136 = vand.u32 %v243, 4294901760
        %2137 = vmatpush1.msra.mxu0 %v2136
        %2138 = vmatprep.subr.mxu0 0.0
        %v2139 = vand.u32 %v242, 4294901760
        %2140 = vmatpush1.msra.mxu0 %v2139
        %2141 = vmatprep.subr.mxu0 0.0
        %v2142 = vand.u32 %v241, 4294901760
        %2143 = vmatpush1.msra.mxu0 %v2142
        %2144 = vmatprep.subr.mxu0 0.0
        %v2145 = vand.u32 %v240, 4294901760
        %2146 = vmatpush1.msra.mxu0 %v2145
        %2147 = vmatprep.subr.mxu0 0.0
        %v2148 = vand.u32 %v239, 4294901760
        %2149 = vmatpush1.msra.mxu0 %v2148
        %2150 = vmatprep.subr.mxu0 0.0
        %v2151 = vand.u32 %v238, 4294901760
        %2152 = vmatpush1.msra.mxu0 %v2151
        %2153 = vmatprep.subr.mxu0 0.0
        %v2154 = vand.u32 %v237, 4294901760
        %2155 = vmatpush1.msra.mxu0 %v2154
        %2156 = vmatprep.subr.mxu0 0.0
        %2157 = vmatpush2.msra.mxu0 0.0
        %2158 = vmatprep.subr.mxu0 0.0
        %2159 = vmatpush2.msra.mxu0 0.0
        %2160 = vmatprep.subr.mxu0 0.0
        %2161 = vmatpush2.msra.mxu0 0.0
        %2162 = vmatprep.subr.mxu0 0.0
        %2163 = vmatpush2.msra.mxu0 0.0
        %2164 = vmatprep.subr.mxu0 0.0
        %2165 = vmatpush2.msra.mxu0 0.0
        %2166 = vmatprep.subr.mxu0 0.0
        %2167 = vmatpush2.msra.mxu0 0.0
        %2168 = vmatprep.subr.mxu0 0.0
        %2169 = vmatpush2.msra.mxu0 0.0
        %2170 = vmatprep.subr.mxu0 0.0
        %2171 = vmatpush2.msra.mxu0 0.0
        %2172 = vmatprep.subr.mxu0 0.0
        %2173 = vmatpush2.msra.mxu0 0.0
        %2174 = vmatprep.subr.mxu0 0.0
        %2175 = vmatpush2.msra.mxu0 0.0
        %2176 = vmatprep.subr.mxu0 0.0
        %2177 = vmatpush2.msra.mxu0 0.0
        %2178 = vmatprep.subr.mxu0 0.0
        %2179 = vmatpush2.msra.mxu0 0.0
        %2180 = vmatprep.subr.mxu0 0.0
        %2181 = vmatpush2.msra.mxu0 0.0
        %2182 = vmatprep.subr.mxu0 0.0
        %2183 = vmatpush2.msra.mxu0 0.0
        %2184 = vmatprep.subr.mxu0 0.0
        %2185 = vmatpush2.msra.mxu0 0.0
        %2186 = vmatprep.subr.mxu0 0.0
        %2187 = vmatpush2.msra.mxu0 0.0
        %2188 = vmatprep.mubr.f32.mxu0 0.0
        %v2189 = vand.u32 %v1832, 4294901760
        %v2190 = vsub.f32 %v1832, %v2189
        %v2191 = vand.u32 %v2190, 4294901760
        %2192 = vmatmul.mubr.f32.gmra.mxu0 %v2191
        %v2193 = vpop.f32.mrf.mxu0
        %v2194 = vadd.f32 %v2113, %v2193
        %v2195 = vpop.f32.mrf.mxu0
        %2196 = vdwg.mxu0
        %2197 = vmatprep.subr.mxu0 0.0
        %2198 = vmatpush1.msra.mxu0 0.0
        %2199 = vmatprep.subr.mxu0 0.0
        %2200 = vmatpush1.msra.mxu0 0.0
        %2201 = vmatprep.subr.mxu0 0.0
        %2202 = vmatpush1.msra.mxu0 0.0
        %2203 = vmatprep.subr.mxu0 0.0
        %2204 = vmatpush1.msra.mxu0 0.0
        %2205 = vmatprep.subr.mxu0 0.0
        %2206 = vmatpush1.msra.mxu0 0.0
        %2207 = vmatprep.subr.mxu0 0.0
        %2208 = vmatpush1.msra.mxu0 0.0
        %2209 = vmatprep.subr.mxu0 0.0
        %2210 = vmatpush1.msra.mxu0 0.0
        %2211 = vmatprep.subr.mxu0 0.0
        %2212 = vmatpush1.msra.mxu0 0.0
        %2213 = vmatprep.subr.mxu0 0.0
        %v2214 = vand.u32 %v244, 4294901760
        %v2215 = vsub.f32 %v244, %v2214
        %v2216 = vand.u32 %v2215, 4294901760
        %2217 = vmatpush1.msra.mxu0 %v2216
        %2218 = vmatprep.subr.mxu0 0.0
        %v2219 = vand.u32 %v243, 4294901760
        %v2220 = vsub.f32 %v243, %v2219
        %v2221 = vand.u32 %v2220, 4294901760
        %2222 = vmatpush1.msra.mxu0 %v2221
        %2223 = vmatprep.subr.mxu0 0.0
        %v2224 = vand.u32 %v242, 4294901760
        %v2225 = vsub.f32 %v242, %v2224
        %v2226 = vand.u32 %v2225, 4294901760
        %2227 = vmatpush1.msra.mxu0 %v2226
        %2228 = vmatprep.subr.mxu0 0.0
        %v2229 = vand.u32 %v241, 4294901760
        %v2230 = vsub.f32 %v241, %v2229
        %v2231 = vand.u32 %v2230, 4294901760
        %2232 = vmatpush1.msra.mxu0 %v2231
        %2233 = vmatprep.subr.mxu0 0.0
        %v2234 = vand.u32 %v240, 4294901760
        %v2235 = vsub.f32 %v240, %v2234
        %v2236 = vand.u32 %v2235, 4294901760
        %2237 = vmatpush1.msra.mxu0 %v2236
        %2238 = vmatprep.subr.mxu0 0.0
        %v2239 = vand.u32 %v239, 4294901760
        %v2240 = vsub.f32 %v239, %v2239
        %v2241 = vand.u32 %v2240, 4294901760
        %2242 = vmatpush1.msra.mxu0 %v2241
        %2243 = vmatprep.subr.mxu0 0.0
        %v2244 = vand.u32 %v238, 4294901760
        %v2245 = vsub.f32 %v238, %v2244
        %v2246 = vand.u32 %v2245, 4294901760
        %2247 = vmatpush1.msra.mxu0 %v2246
        %2248 = vmatprep.subr.mxu0 0.0
        %v2249 = vand.u32 %v237, 4294901760
        %v2250 = vsub.f32 %v237, %v2249
        %v2251 = vand.u32 %v2250, 4294901760
        %2252 = vmatpush1.msra.mxu0 %v2251
        %2253 = vmatprep.subr.mxu0 0.0
        %2254 = vmatpush2.msra.mxu0 0.0
        %2255 = vmatprep.subr.mxu0 0.0
        %2256 = vmatpush2.msra.mxu0 0.0
        %2257 = vmatprep.subr.mxu0 0.0
        %2258 = vmatpush2.msra.mxu0 0.0
        %2259 = vmatprep.subr.mxu0 0.0
        %2260 = vmatpush2.msra.mxu0 0.0
        %2261 = vmatprep.subr.mxu0 0.0
        %2262 = vmatpush2.msra.mxu0 0.0
        %2263 = vmatprep.subr.mxu0 0.0
        %2264 = vmatpush2.msra.mxu0 0.0
        %2265 = vmatprep.subr.mxu0 0.0
        %2266 = vmatpush2.msra.mxu0 0.0
        %2267 = vmatprep.subr.mxu0 0.0
        %2268 = vmatpush2.msra.mxu0 0.0
        %2269 = vmatprep.subr.mxu0 0.0
        %2270 = vmatpush2.msra.mxu0 0.0
        %2271 = vmatprep.subr.mxu0 0.0
        %2272 = vmatpush2.msra.mxu0 0.0
        %2273 = vmatprep.subr.mxu0 0.0
        %2274 = vmatpush2.msra.mxu0 0.0
        %2275 = vmatprep.subr.mxu0 0.0
        %2276 = vmatpush2.msra.mxu0 0.0
        %2277 = vmatprep.subr.mxu0 0.0
        %2278 = vmatpush2.msra.mxu0 0.0
        %2279 = vmatprep.subr.mxu0 0.0
        %2280 = vmatpush2.msra.mxu0 0.0
        %2281 = vmatprep.subr.mxu0 0.0
        %2282 = vmatpush2.msra.mxu0 0.0
        %2283 = vmatprep.subr.mxu0 0.0
        %2284 = vmatpush2.msra.mxu0 0.0
        %2285 = vmatprep.mubr.f32.mxu0 0.0
        %v2286 = vand.u32 %v1832, 4294901760
        %2287 = vmatmul.mubr.f32.gmra.mxu0 %v2286
        %v2288 = vpop.f32.mrf.mxu0
        %v2289 = vadd.f32 %v2194, %v2288
        %v2290 = vpop.f32.mrf.mxu0
        %2291 = vdwg.mxu0
        %2292 = vmatprep.subr.mxu0 0.0
        %2293 = vmatpush1.msra.mxu0 0.0
        %2294 = vmatprep.subr.mxu0 0.0
        %2295 = vmatpush1.msra.mxu0 0.0
        %2296 = vmatprep.subr.mxu0 0.0
        %2297 = vmatpush1.msra.mxu0 0.0
        %2298 = vmatprep.subr.mxu0 0.0
        %2299 = vmatpush1.msra.mxu0 0.0
        %2300 = vmatprep.subr.mxu0 0.0
        %2301 = vmatpush1.msra.mxu0 0.0
        %2302 = vmatprep.subr.mxu0 0.0
        %2303 = vmatpush1.msra.mxu0 0.0
        %2304 = vmatprep.subr.mxu0 0.0
        %2305 = vmatpush1.msra.mxu0 0.0
        %2306 = vmatprep.subr.mxu0 0.0
        %2307 = vmatpush1.msra.mxu0 0.0
        %2308 = vmatprep.subr.mxu0 0.0
        %v2309 = vand.u32 %v244, 4294901760
        %2310 = vmatpush1.msra.mxu0 %v2309
        %2311 = vmatprep.subr.mxu0 0.0
        %v2312 = vand.u32 %v243, 4294901760
        %2313 = vmatpush1.msra.mxu0 %v2312
        %2314 = vmatprep.subr.mxu0 0.0
        %v2315 = vand.u32 %v242, 4294901760
        %2316 = vmatpush1.msra.mxu0 %v2315
        %2317 = vmatprep.subr.mxu0 0.0
        %v2318 = vand.u32 %v241, 4294901760
        %2319 = vmatpush1.msra.mxu0 %v2318
        %2320 = vmatprep.subr.mxu0 0.0
        %v2321 = vand.u32 %v240, 4294901760
        %2322 = vmatpush1.msra.mxu0 %v2321
        %2323 = vmatprep.subr.mxu0 0.0
        %v2324 = vand.u32 %v239, 4294901760
        %2325 = vmatpush1.msra.mxu0 %v2324
        %2326 = vmatprep.subr.mxu0 0.0
        %v2327 = vand.u32 %v238, 4294901760
        %2328 = vmatpush1.msra.mxu0 %v2327
        %2329 = vmatprep.subr.mxu0 0.0
        %v2330 = vand.u32 %v237, 4294901760
        %2331 = vmatpush1.msra.mxu0 %v2330
        %2332 = vmatprep.subr.mxu0 0.0
        %2333 = vmatpush2.msra.mxu0 0.0
        %2334 = vmatprep.subr.mxu0 0.0
        %2335 = vmatpush2.msra.mxu0 0.0
        %2336 = vmatprep.subr.mxu0 0.0
        %2337 = vmatpush2.msra.mxu0 0.0
        %2338 = vmatprep.subr.mxu0 0.0
        %2339 = vmatpush2.msra.mxu0 0.0
        %2340 = vmatprep.subr.mxu0 0.0
        %2341 = vmatpush2.msra.mxu0 0.0
        %2342 = vmatprep.subr.mxu0 0.0
        %2343 = vmatpush2.msra.mxu0 0.0
        %2344 = vmatprep.subr.mxu0 0.0
        %2345 = vmatpush2.msra.mxu0 0.0
        %2346 = vmatprep.subr.mxu0 0.0
        %2347 = vmatpush2.msra.mxu0 0.0
        %2348 = vmatprep.subr.mxu0 0.0
        %2349 = vmatpush2.msra.mxu0 0.0
        %2350 = vmatprep.subr.mxu0 0.0
        %2351 = vmatpush2.msra.mxu0 0.0
        %2352 = vmatprep.subr.mxu0 0.0
        %2353 = vmatpush2.msra.mxu0 0.0
        %2354 = vmatprep.subr.mxu0 0.0
        %2355 = vmatpush2.msra.mxu0 0.0
        %2356 = vmatprep.subr.mxu0 0.0
        %2357 = vmatpush2.msra.mxu0 0.0
        %2358 = vmatprep.subr.mxu0 0.0
        %2359 = vmatpush2.msra.mxu0 0.0
        %2360 = vmatprep.subr.mxu0 0.0
        %2361 = vmatpush2.msra.mxu0 0.0
        %2362 = vmatprep.subr.mxu0 0.0
        %2363 = vmatpush2.msra.mxu0 0.0
        %2364 = vmatprep.mubr.f32.mxu0 0.0
        %v2365 = vand.u32 %v1832, 4294901760
        %2366 = vmatmul.mubr.f32.gmra.mxu0 %v2365
        %v2367 = vpop.f32.mrf.mxu0
        %v2368 = vadd.f32 %v2289, %v2367
        %v2369 = vpop.f32.mrf.mxu0
        %2370 = vdwg.mxu0
        %v2372 = vcombine.high %v2368, %v2368
        %v2374 = vunpack.c.l.s4 1966171168
        %v2375 = vunpack.c.0.s8 %v2374
        %v2376 = vlaneseq
        %v2377 = vshrl.u32 %v2376, 7
        %v2378 = vsub.s32 %v2375, %v2377
        %v2379 = vrot.slane %v2368, %v2378
        %v2381 = vunpack.c.l.s4 1966171168
        %v2382 = vunpack.c.0.s8 %v2381
        %v2383 = vlaneseq
        %v2384 = vshrl.u32 %v2383, 7
        %v2385 = vsub.s32 %v2382, %v2384
        %v2386 = vrot.slane %v2372, %v2385
        %v2387 = vcombine.high %v2379, %v2379
        %v2388 = vcombine.high %v2386, %v2386
        %v2390 = vunpack.c.l.s4 1966171168
        %v2391 = vunpack.c.0.s8 %v2390
        %v2392 = vlaneseq
        %v2393 = vshrl.u32 %v2392, 7
        %v2394 = vsub.s32 %v2391, %v2393
        %v2395 = vrot.slane %v2379, %v2394
        %v2397 = vunpack.c.l.s4 1966171168
        %v2398 = vunpack.c.0.s8 %v2397
        %v2399 = vlaneseq
        %v2400 = vshrl.u32 %v2399, 7
        %v2401 = vsub.s32 %v2398, %v2400
        %v2402 = vrot.slane %v2386, %v2401
        %v2404 = vunpack.c.l.s4 1966171168
        %v2405 = vunpack.c.0.s8 %v2404
        %v2406 = vlaneseq
        %v2407 = vshrl.u32 %v2406, 7
        %v2408 = vsub.s32 %v2405, %v2407
        %v2409 = vrot.slane %v2387, %v2408
        %v2411 = vunpack.c.l.s4 1966171168
        %v2412 = vunpack.c.0.s8 %v2411
        %v2413 = vlaneseq
        %v2414 = vshrl.u32 %v2413, 7
        %v2415 = vsub.s32 %v2412, %v2414
        %v2416 = vrot.slane %v2388, %v2415
        %v2417 = vcombine.high %v2395, %v2395
        %v2418 = vcombine.high %v2402, %v2402
        %v2419 = vcombine.high %v2409, %v2409
        %v2420 = vcombine.high %v2416, %v2416
        %v2421 = vsel %vm290, 1, 0
        %vm2422 = vcmp.eq.s32.totalorder %v2421, 1
        %v2423 = vlaneseq
        %v2424 = vshrl.u32 %v2423, 7
        %v2425 = vsub.s32 0, %v2424
        %v2426 = vrot.slane %v2395, %v2425
        %v2427 = vlaneseq
        %v2428 = vshrl.u32 %v2427, 7
        %v2429 = vsub.s32 0, %v2428
        %v2430 = vrot.slane %v2409, %v2429
        %v2431 = vlaneseq
        %v2432 = vshrl.u32 %v2431, 7
        %v2433 = vsub.s32 0, %v2432
        %v2434 = vrot.slane %v2417, %v2433
        %v2435 = vlaneseq
        %v2436 = vshrl.u32 %v2435, 7
        %v2437 = vsub.s32 0, %v2436
        %v2438 = vrot.slane %v2419, %v2437
        %v2439 = vlaneseq
        %v2440 = vshrl.u32 %v2439, 7
        %v2441 = vsub.s32 0, %v2440
        %v2442 = vrot.slane %v2402, %v2441
        %v2443 = vlaneseq
        %v2444 = vshrl.u32 %v2443, 7
        %v2445 = vsub.s32 0, %v2444
        %v2446 = vrot.slane %v2416, %v2445
        %v2447 = vlaneseq
        %v2448 = vshrl.u32 %v2447, 7
        %v2449 = vsub.s32 0, %v2448
        %v2450 = vrot.slane %v2418, %v2449
        %v2451 = vlaneseq
        %v2452 = vshrl.u32 %v2451, 7
        %v2453 = vsub.s32 0, %v2452
        %v2454 = vrot.slane %v2420, %v2453
        %v2463 = vsel %vm2422, %v2426, 0.0
        %v2464 = vsel %vm2422, %v2430, 0.0
        %v2465 = vsel %vm2422, %v2434, 0.0
        %v2466 = vsel %vm2422, %v2438, 0.0
        %v2467 = vsel %vm2422, %v2442, 0.0
        %v2468 = vsel %vm2422, %v2446, 0.0
        %v2469 = vsel %vm2422, %v2450, 0.0
        %v2470 = vsel %vm2422, %v2454, 0.0
        %v2471 = vadd.f32 %v1794, %v2463
        %v2472 = vadd.f32 %v1795, %v2464
        %v2473 = vadd.f32 %v1796, %v2465
        %v2474 = vadd.f32 %v1797, %v2466
        %v2475 = vadd.f32 %v1798, %v2467
        %v2476 = vadd.f32 %v1799, %v2468
        %v2477 = vadd.f32 %v1800, %v2469
        %v2478 = vadd.f32 %v1801, %v2470
        %v2479 = vsel %vm1828, inf, %v1802
        %v2480 = vsel %vm266, %v2479, inf
        %2481 = vmin.xlane.f32.xlu0 %v2480
        %v2482 = vpop.xlane.xlu0 %2481
        %vm2483 = vcmp.eq.f32.partialorder %v2479, %v2482
        %v2484 = vsel %vm2483, %v246, 64
        %v2485 = vsel %vm266, %v2484, 2147483647
        %v2486 = vand.u32 %v2485, 65535
        %v2487 = vshra.s32 %v2485, 16
        %v2488 = vcvt.s32.f32 %v2486
        %v2489 = vcvt.s32.f32 %v2487
        %2490 = vmin.xlane.f32.xlu0 %v2489
        %v2491 = vpop.xlane.xlu0 %2490
        %vm2492 = vcmp.eq.f32.partialorder %v2489, %v2491
        %v2493 = vsel %vm2492, %v2488, inf
        %2494 = vmin.xlane.f32.xlu0 %v2493
        %v2495 = vpop.xlane.xlu0 %2494
        %v2496 = vcvt.f32.s32 %v2495
        %v2497 = vcvt.f32.s32 %v2491
        %v2498 = vshll.u32 %v2497, 16
        %v2499 = vadd.s32 %v2498, %v2496
        %vm2500 = vcmp.eq.s32.totalorder %v246, 2
        %v2501 = vsel %vm2500, 1, 0
        %vm2502 = vcmp.eq.s32.totalorder %v2501, 1
        %v2503 = vsel %vm2502, %v2499, 0
        %v2504 = vadd.s32 %v1827, %v2503
        %vm2505 = vcmp.eq.s32.totalorder %v246, %v2499
        %v2506 = vsel %vm2505, 1, 0
        %v2507 = vcvt.s32.f32 %v2506
        %v2509 = vsel %vm266, %v2507, 0
        %2511 = vmatprep.subr.mxu0 0.0
        %2512 = vmatpush1.msra.mxu0 0.0
        %2513 = vmatprep.subr.mxu0 0.0
        %2514 = vmatpush1.msra.mxu0 0.0
        %2515 = vmatprep.subr.mxu0 0.0
        %2516 = vmatpush1.msra.mxu0 0.0
        %2517 = vmatprep.subr.mxu0 0.0
        %2518 = vmatpush1.msra.mxu0 0.0
        %2519 = vmatprep.subr.mxu0 0.0
        %2520 = vmatpush1.msra.mxu0 0.0
        %2521 = vmatprep.subr.mxu0 0.0
        %2522 = vmatpush1.msra.mxu0 0.0
        %2523 = vmatprep.subr.mxu0 0.0
        %2524 = vmatpush1.msra.mxu0 0.0
        %2525 = vmatprep.subr.mxu0 0.0
        %2526 = vmatpush1.msra.mxu0 0.0
        %2527 = vmatprep.subr.mxu0 0.0
        %v2528 = vand.u32 %v244, 4294901760
        %2529 = vmatpush1.msra.mxu0 %v2528
        %2530 = vmatprep.subr.mxu0 0.0
        %v2531 = vand.u32 %v243, 4294901760
        %2532 = vmatpush1.msra.mxu0 %v2531
        %2533 = vmatprep.subr.mxu0 0.0
        %v2534 = vand.u32 %v242, 4294901760
        %2535 = vmatpush1.msra.mxu0 %v2534
        %2536 = vmatprep.subr.mxu0 0.0
        %v2537 = vand.u32 %v241, 4294901760
        %2538 = vmatpush1.msra.mxu0 %v2537
        %2539 = vmatprep.subr.mxu0 0.0
        %v2540 = vand.u32 %v240, 4294901760
        %2541 = vmatpush1.msra.mxu0 %v2540
        %2542 = vmatprep.subr.mxu0 0.0
        %v2543 = vand.u32 %v239, 4294901760
        %2544 = vmatpush1.msra.mxu0 %v2543
        %2545 = vmatprep.subr.mxu0 0.0
        %v2546 = vand.u32 %v238, 4294901760
        %2547 = vmatpush1.msra.mxu0 %v2546
        %2548 = vmatprep.subr.mxu0 0.0
        %v2549 = vand.u32 %v237, 4294901760
        %2550 = vmatpush1.msra.mxu0 %v2549
        %2551 = vmatprep.subr.mxu0 0.0
        %2552 = vmatpush2.msra.mxu0 0.0
        %2553 = vmatprep.subr.mxu0 0.0
        %2554 = vmatpush2.msra.mxu0 0.0
        %2555 = vmatprep.subr.mxu0 0.0
        %2556 = vmatpush2.msra.mxu0 0.0
        %2557 = vmatprep.subr.mxu0 0.0
        %2558 = vmatpush2.msra.mxu0 0.0
        %2559 = vmatprep.subr.mxu0 0.0
        %2560 = vmatpush2.msra.mxu0 0.0
        %2561 = vmatprep.subr.mxu0 0.0
        %2562 = vmatpush2.msra.mxu0 0.0
        %2563 = vmatprep.subr.mxu0 0.0
        %2564 = vmatpush2.msra.mxu0 0.0
        %2565 = vmatprep.subr.mxu0 0.0
        %2566 = vmatpush2.msra.mxu0 0.0
        %2567 = vmatprep.subr.mxu0 0.0
        %2568 = vmatpush2.msra.mxu0 0.0
        %2569 = vmatprep.subr.mxu0 0.0
        %2570 = vmatpush2.msra.mxu0 0.0
        %2571 = vmatprep.subr.mxu0 0.0
        %2572 = vmatpush2.msra.mxu0 0.0
        %2573 = vmatprep.subr.mxu0 0.0
        %2574 = vmatpush2.msra.mxu0 0.0
        %2575 = vmatprep.subr.mxu0 0.0
        %2576 = vmatpush2.msra.mxu0 0.0
        %2577 = vmatprep.subr.mxu0 0.0
        %2578 = vmatpush2.msra.mxu0 0.0
        %2579 = vmatprep.subr.mxu0 0.0
        %2580 = vmatpush2.msra.mxu0 0.0
        %2581 = vmatprep.subr.mxu0 0.0
        %2582 = vmatpush2.msra.mxu0 0.0
        %2583 = vmatprep.mubr.f32.mxu0 0.0
        %v2584 = vand.u32 %v2509, 4294901760
        %v2585 = vsub.f32 %v2509, %v2584
        %v2586 = vand.u32 %v2585, 4294901760
        %v2587 = vsub.f32 %v2585, %v2586
        %v2588 = vand.u32 %v2587, 4294901760
        %2589 = vmatmul.mubr.f32.gmra.mxu0 %v2588
        %v2590 = vpop.f32.mrf.mxu0
        %v2591 = vadd.f32 0.0, %v2590
        %v2592 = vpop.f32.mrf.mxu0
        %2593 = vdwg.mxu0
        %2594 = vmatprep.subr.mxu0 0.0
        %2595 = vmatpush1.msra.mxu0 0.0
        %2596 = vmatprep.subr.mxu0 0.0
        %2597 = vmatpush1.msra.mxu0 0.0
        %2598 = vmatprep.subr.mxu0 0.0
        %2599 = vmatpush1.msra.mxu0 0.0
        %2600 = vmatprep.subr.mxu0 0.0
        %2601 = vmatpush1.msra.mxu0 0.0
        %2602 = vmatprep.subr.mxu0 0.0
        %2603 = vmatpush1.msra.mxu0 0.0
        %2604 = vmatprep.subr.mxu0 0.0
        %2605 = vmatpush1.msra.mxu0 0.0
        %2606 = vmatprep.subr.mxu0 0.0
        %2607 = vmatpush1.msra.mxu0 0.0
        %2608 = vmatprep.subr.mxu0 0.0
        %2609 = vmatpush1.msra.mxu0 0.0
        %2610 = vmatprep.subr.mxu0 0.0
        %v2611 = vand.u32 %v244, 4294901760
        %v2612 = vsub.f32 %v244, %v2611
        %v2613 = vand.u32 %v2612, 4294901760
        %v2614 = vsub.f32 %v2612, %v2613
        %v2615 = vand.u32 %v2614, 4294901760
        %2616 = vmatpush1.msra.mxu0 %v2615
        %2617 = vmatprep.subr.mxu0 0.0
        %v2618 = vand.u32 %v243, 4294901760
        %v2619 = vsub.f32 %v243, %v2618
        %v2620 = vand.u32 %v2619, 4294901760
        %v2621 = vsub.f32 %v2619, %v2620
        %v2622 = vand.u32 %v2621, 4294901760
        %2623 = vmatpush1.msra.mxu0 %v2622
        %2624 = vmatprep.subr.mxu0 0.0
        %v2625 = vand.u32 %v242, 4294901760
        %v2626 = vsub.f32 %v242, %v2625
        %v2627 = vand.u32 %v2626, 4294901760
        %v2628 = vsub.f32 %v2626, %v2627
        %v2629 = vand.u32 %v2628, 4294901760
        %2630 = vmatpush1.msra.mxu0 %v2629
        %2631 = vmatprep.subr.mxu0 0.0
        %v2632 = vand.u32 %v241, 4294901760
        %v2633 = vsub.f32 %v241, %v2632
        %v2634 = vand.u32 %v2633, 4294901760
        %v2635 = vsub.f32 %v2633, %v2634
        %v2636 = vand.u32 %v2635, 4294901760
        %2637 = vmatpush1.msra.mxu0 %v2636
        %2638 = vmatprep.subr.mxu0 0.0
        %v2639 = vand.u32 %v240, 4294901760
        %v2640 = vsub.f32 %v240, %v2639
        %v2641 = vand.u32 %v2640, 4294901760
        %v2642 = vsub.f32 %v2640, %v2641
        %v2643 = vand.u32 %v2642, 4294901760
        %2644 = vmatpush1.msra.mxu0 %v2643
        %2645 = vmatprep.subr.mxu0 0.0
        %v2646 = vand.u32 %v239, 4294901760
        %v2647 = vsub.f32 %v239, %v2646
        %v2648 = vand.u32 %v2647, 4294901760
        %v2649 = vsub.f32 %v2647, %v2648
        %v2650 = vand.u32 %v2649, 4294901760
        %2651 = vmatpush1.msra.mxu0 %v2650
        %2652 = vmatprep.subr.mxu0 0.0
        %v2653 = vand.u32 %v238, 4294901760
        %v2654 = vsub.f32 %v238, %v2653
        %v2655 = vand.u32 %v2654, 4294901760
        %v2656 = vsub.f32 %v2654, %v2655
        %v2657 = vand.u32 %v2656, 4294901760
        %2658 = vmatpush1.msra.mxu0 %v2657
        %2659 = vmatprep.subr.mxu0 0.0
        %v2660 = vand.u32 %v237, 4294901760
        %v2661 = vsub.f32 %v237, %v2660
        %v2662 = vand.u32 %v2661, 4294901760
        %v2663 = vsub.f32 %v2661, %v2662
        %v2664 = vand.u32 %v2663, 4294901760
        %2665 = vmatpush1.msra.mxu0 %v2664
        %2666 = vmatprep.subr.mxu0 0.0
        %2667 = vmatpush2.msra.mxu0 0.0
        %2668 = vmatprep.subr.mxu0 0.0
        %2669 = vmatpush2.msra.mxu0 0.0
        %2670 = vmatprep.subr.mxu0 0.0
        %2671 = vmatpush2.msra.mxu0 0.0
        %2672 = vmatprep.subr.mxu0 0.0
        %2673 = vmatpush2.msra.mxu0 0.0
        %2674 = vmatprep.subr.mxu0 0.0
        %2675 = vmatpush2.msra.mxu0 0.0
        %2676 = vmatprep.subr.mxu0 0.0
        %2677 = vmatpush2.msra.mxu0 0.0
        %2678 = vmatprep.subr.mxu0 0.0
        %2679 = vmatpush2.msra.mxu0 0.0
        %2680 = vmatprep.subr.mxu0 0.0
        %2681 = vmatpush2.msra.mxu0 0.0
        %2682 = vmatprep.subr.mxu0 0.0
        %2683 = vmatpush2.msra.mxu0 0.0
        %2684 = vmatprep.subr.mxu0 0.0
        %2685 = vmatpush2.msra.mxu0 0.0
        %2686 = vmatprep.subr.mxu0 0.0
        %2687 = vmatpush2.msra.mxu0 0.0
        %2688 = vmatprep.subr.mxu0 0.0
        %2689 = vmatpush2.msra.mxu0 0.0
        %2690 = vmatprep.subr.mxu0 0.0
        %2691 = vmatpush2.msra.mxu0 0.0
        %2692 = vmatprep.subr.mxu0 0.0
        %2693 = vmatpush2.msra.mxu0 0.0
        %2694 = vmatprep.subr.mxu0 0.0
        %2695 = vmatpush2.msra.mxu0 0.0
        %2696 = vmatprep.subr.mxu0 0.0
        %2697 = vmatpush2.msra.mxu0 0.0
        %2698 = vmatprep.mubr.f32.mxu0 0.0
        %v2699 = vand.u32 %v2509, 4294901760
        %2700 = vmatmul.mubr.f32.gmra.mxu0 %v2699
        %v2701 = vpop.f32.mrf.mxu0
        %v2702 = vadd.f32 %v2591, %v2701
        %v2703 = vpop.f32.mrf.mxu0
        %2704 = vdwg.mxu0
        %2705 = vmatprep.subr.mxu0 0.0
        %2706 = vmatpush1.msra.mxu0 0.0
        %2707 = vmatprep.subr.mxu0 0.0
        %2708 = vmatpush1.msra.mxu0 0.0
        %2709 = vmatprep.subr.mxu0 0.0
        %2710 = vmatpush1.msra.mxu0 0.0
        %2711 = vmatprep.subr.mxu0 0.0
        %2712 = vmatpush1.msra.mxu0 0.0
        %2713 = vmatprep.subr.mxu0 0.0
        %2714 = vmatpush1.msra.mxu0 0.0
        %2715 = vmatprep.subr.mxu0 0.0
        %2716 = vmatpush1.msra.mxu0 0.0
        %2717 = vmatprep.subr.mxu0 0.0
        %2718 = vmatpush1.msra.mxu0 0.0
        %2719 = vmatprep.subr.mxu0 0.0
        %2720 = vmatpush1.msra.mxu0 0.0
        %2721 = vmatprep.subr.mxu0 0.0
        %v2722 = vand.u32 %v244, 4294901760
        %v2723 = vsub.f32 %v244, %v2722
        %2724 = vmatpush1.msra.mxu0 %v2723
        %2725 = vmatprep.subr.mxu0 0.0
        %v2726 = vand.u32 %v243, 4294901760
        %v2727 = vsub.f32 %v243, %v2726
        %2728 = vmatpush1.msra.mxu0 %v2727
        %2729 = vmatprep.subr.mxu0 0.0
        %v2730 = vand.u32 %v242, 4294901760
        %v2731 = vsub.f32 %v242, %v2730
        %2732 = vmatpush1.msra.mxu0 %v2731
        %2733 = vmatprep.subr.mxu0 0.0
        %v2734 = vand.u32 %v241, 4294901760
        %v2735 = vsub.f32 %v241, %v2734
        %2736 = vmatpush1.msra.mxu0 %v2735
        %2737 = vmatprep.subr.mxu0 0.0
        %v2738 = vand.u32 %v240, 4294901760
        %v2739 = vsub.f32 %v240, %v2738
        %2740 = vmatpush1.msra.mxu0 %v2739
        %2741 = vmatprep.subr.mxu0 0.0
        %v2742 = vand.u32 %v239, 4294901760
        %v2743 = vsub.f32 %v239, %v2742
        %2744 = vmatpush1.msra.mxu0 %v2743
        %2745 = vmatprep.subr.mxu0 0.0
        %v2746 = vand.u32 %v238, 4294901760
        %v2747 = vsub.f32 %v238, %v2746
        %2748 = vmatpush1.msra.mxu0 %v2747
        %2749 = vmatprep.subr.mxu0 0.0
        %v2750 = vand.u32 %v237, 4294901760
        %v2751 = vsub.f32 %v237, %v2750
        %2752 = vmatpush1.msra.mxu0 %v2751
        %2753 = vmatprep.subr.mxu0 0.0
        %2754 = vmatpush2.msra.mxu0 0.0
        %2755 = vmatprep.subr.mxu0 0.0
        %2756 = vmatpush2.msra.mxu0 0.0
        %2757 = vmatprep.subr.mxu0 0.0
        %2758 = vmatpush2.msra.mxu0 0.0
        %2759 = vmatprep.subr.mxu0 0.0
        %2760 = vmatpush2.msra.mxu0 0.0
        %2761 = vmatprep.subr.mxu0 0.0
        %2762 = vmatpush2.msra.mxu0 0.0
        %2763 = vmatprep.subr.mxu0 0.0
        %2764 = vmatpush2.msra.mxu0 0.0
        %2765 = vmatprep.subr.mxu0 0.0
        %2766 = vmatpush2.msra.mxu0 0.0
        %2767 = vmatprep.subr.mxu0 0.0
        %2768 = vmatpush2.msra.mxu0 0.0
        %2769 = vmatprep.subr.mxu0 0.0
        %2770 = vmatpush2.msra.mxu0 0.0
        %2771 = vmatprep.subr.mxu0 0.0
        %2772 = vmatpush2.msra.mxu0 0.0
        %2773 = vmatprep.subr.mxu0 0.0
        %2774 = vmatpush2.msra.mxu0 0.0
        %2775 = vmatprep.subr.mxu0 0.0
        %2776 = vmatpush2.msra.mxu0 0.0
        %2777 = vmatprep.subr.mxu0 0.0
        %2778 = vmatpush2.msra.mxu0 0.0
        %2779 = vmatprep.subr.mxu0 0.0
        %2780 = vmatpush2.msra.mxu0 0.0
        %2781 = vmatprep.subr.mxu0 0.0
        %2782 = vmatpush2.msra.mxu0 0.0
        %2783 = vmatprep.subr.mxu0 0.0
        %2784 = vmatpush2.msra.mxu0 0.0
        %2785 = vmatprep.mubr.f32.mxu0 0.0
        %v2786 = vand.u32 %v2509, 4294901760
        %v2787 = vsub.f32 %v2509, %v2786
        %2788 = vmatmul.mubr.f32.gmra.mxu0 %v2787
        %v2789 = vpop.f32.mrf.mxu0
        %v2790 = vadd.f32 %v2702, %v2789
        %v2791 = vpop.f32.mrf.mxu0
        %2792 = vdwg.mxu0
        %2793 = vmatprep.subr.mxu0 0.0
        %2794 = vmatpush1.msra.mxu0 0.0
        %2795 = vmatprep.subr.mxu0 0.0
        %2796 = vmatpush1.msra.mxu0 0.0
        %2797 = vmatprep.subr.mxu0 0.0
        %2798 = vmatpush1.msra.mxu0 0.0
        %2799 = vmatprep.subr.mxu0 0.0
        %2800 = vmatpush1.msra.mxu0 0.0
        %2801 = vmatprep.subr.mxu0 0.0
        %2802 = vmatpush1.msra.mxu0 0.0
        %2803 = vmatprep.subr.mxu0 0.0
        %2804 = vmatpush1.msra.mxu0 0.0
        %2805 = vmatprep.subr.mxu0 0.0
        %2806 = vmatpush1.msra.mxu0 0.0
        %2807 = vmatprep.subr.mxu0 0.0
        %2808 = vmatpush1.msra.mxu0 0.0
        %2809 = vmatprep.subr.mxu0 0.0
        %v2810 = vand.u32 %v244, 4294901760
        %2811 = vmatpush1.msra.mxu0 %v2810
        %2812 = vmatprep.subr.mxu0 0.0
        %v2813 = vand.u32 %v243, 4294901760
        %2814 = vmatpush1.msra.mxu0 %v2813
        %2815 = vmatprep.subr.mxu0 0.0
        %v2816 = vand.u32 %v242, 4294901760
        %2817 = vmatpush1.msra.mxu0 %v2816
        %2818 = vmatprep.subr.mxu0 0.0
        %v2819 = vand.u32 %v241, 4294901760
        %2820 = vmatpush1.msra.mxu0 %v2819
        %2821 = vmatprep.subr.mxu0 0.0
        %v2822 = vand.u32 %v240, 4294901760
        %2823 = vmatpush1.msra.mxu0 %v2822
        %2824 = vmatprep.subr.mxu0 0.0
        %v2825 = vand.u32 %v239, 4294901760
        %2826 = vmatpush1.msra.mxu0 %v2825
        %2827 = vmatprep.subr.mxu0 0.0
        %v2828 = vand.u32 %v238, 4294901760
        %2829 = vmatpush1.msra.mxu0 %v2828
        %2830 = vmatprep.subr.mxu0 0.0
        %v2831 = vand.u32 %v237, 4294901760
        %2832 = vmatpush1.msra.mxu0 %v2831
        %2833 = vmatprep.subr.mxu0 0.0
        %2834 = vmatpush2.msra.mxu0 0.0
        %2835 = vmatprep.subr.mxu0 0.0
        %2836 = vmatpush2.msra.mxu0 0.0
        %2837 = vmatprep.subr.mxu0 0.0
        %2838 = vmatpush2.msra.mxu0 0.0
        %2839 = vmatprep.subr.mxu0 0.0
        %2840 = vmatpush2.msra.mxu0 0.0
        %2841 = vmatprep.subr.mxu0 0.0
        %2842 = vmatpush2.msra.mxu0 0.0
        %2843 = vmatprep.subr.mxu0 0.0
        %2844 = vmatpush2.msra.mxu0 0.0
        %2845 = vmatprep.subr.mxu0 0.0
        %2846 = vmatpush2.msra.mxu0 0.0
        %2847 = vmatprep.subr.mxu0 0.0
        %2848 = vmatpush2.msra.mxu0 0.0
        %2849 = vmatprep.subr.mxu0 0.0
        %2850 = vmatpush2.msra.mxu0 0.0
        %2851 = vmatprep.subr.mxu0 0.0
        %2852 = vmatpush2.msra.mxu0 0.0
        %2853 = vmatprep.subr.mxu0 0.0
        %2854 = vmatpush2.msra.mxu0 0.0
        %2855 = vmatprep.subr.mxu0 0.0
        %2856 = vmatpush2.msra.mxu0 0.0
        %2857 = vmatprep.subr.mxu0 0.0
        %2858 = vmatpush2.msra.mxu0 0.0
        %2859 = vmatprep.subr.mxu0 0.0
        %2860 = vmatpush2.msra.mxu0 0.0
        %2861 = vmatprep.subr.mxu0 0.0
        %2862 = vmatpush2.msra.mxu0 0.0
        %2863 = vmatprep.subr.mxu0 0.0
        %2864 = vmatpush2.msra.mxu0 0.0
        %2865 = vmatprep.mubr.f32.mxu0 0.0
        %v2866 = vand.u32 %v2509, 4294901760
        %v2867 = vsub.f32 %v2509, %v2866
        %v2868 = vand.u32 %v2867, 4294901760
        %2869 = vmatmul.mubr.f32.gmra.mxu0 %v2868
        %v2870 = vpop.f32.mrf.mxu0
        %v2871 = vadd.f32 %v2790, %v2870
        %v2872 = vpop.f32.mrf.mxu0
        %2873 = vdwg.mxu0
        %2874 = vmatprep.subr.mxu0 0.0
        %2875 = vmatpush1.msra.mxu0 0.0
        %2876 = vmatprep.subr.mxu0 0.0
        %2877 = vmatpush1.msra.mxu0 0.0
        %2878 = vmatprep.subr.mxu0 0.0
        %2879 = vmatpush1.msra.mxu0 0.0
        %2880 = vmatprep.subr.mxu0 0.0
        %2881 = vmatpush1.msra.mxu0 0.0
        %2882 = vmatprep.subr.mxu0 0.0
        %2883 = vmatpush1.msra.mxu0 0.0
        %2884 = vmatprep.subr.mxu0 0.0
        %2885 = vmatpush1.msra.mxu0 0.0
        %2886 = vmatprep.subr.mxu0 0.0
        %2887 = vmatpush1.msra.mxu0 0.0
        %2888 = vmatprep.subr.mxu0 0.0
        %2889 = vmatpush1.msra.mxu0 0.0
        %2890 = vmatprep.subr.mxu0 0.0
        %v2891 = vand.u32 %v244, 4294901760
        %v2892 = vsub.f32 %v244, %v2891
        %v2893 = vand.u32 %v2892, 4294901760
        %2894 = vmatpush1.msra.mxu0 %v2893
        %2895 = vmatprep.subr.mxu0 0.0
        %v2896 = vand.u32 %v243, 4294901760
        %v2897 = vsub.f32 %v243, %v2896
        %v2898 = vand.u32 %v2897, 4294901760
        %2899 = vmatpush1.msra.mxu0 %v2898
        %2900 = vmatprep.subr.mxu0 0.0
        %v2901 = vand.u32 %v242, 4294901760
        %v2902 = vsub.f32 %v242, %v2901
        %v2903 = vand.u32 %v2902, 4294901760
        %2904 = vmatpush1.msra.mxu0 %v2903
        %2905 = vmatprep.subr.mxu0 0.0
        %v2906 = vand.u32 %v241, 4294901760
        %v2907 = vsub.f32 %v241, %v2906
        %v2908 = vand.u32 %v2907, 4294901760
        %2909 = vmatpush1.msra.mxu0 %v2908
        %2910 = vmatprep.subr.mxu0 0.0
        %v2911 = vand.u32 %v240, 4294901760
        %v2912 = vsub.f32 %v240, %v2911
        %v2913 = vand.u32 %v2912, 4294901760
        %2914 = vmatpush1.msra.mxu0 %v2913
        %2915 = vmatprep.subr.mxu0 0.0
        %v2916 = vand.u32 %v239, 4294901760
        %v2917 = vsub.f32 %v239, %v2916
        %v2918 = vand.u32 %v2917, 4294901760
        %2919 = vmatpush1.msra.mxu0 %v2918
        %2920 = vmatprep.subr.mxu0 0.0
        %v2921 = vand.u32 %v238, 4294901760
        %v2922 = vsub.f32 %v238, %v2921
        %v2923 = vand.u32 %v2922, 4294901760
        %2924 = vmatpush1.msra.mxu0 %v2923
        %2925 = vmatprep.subr.mxu0 0.0
        %v2926 = vand.u32 %v237, 4294901760
        %v2927 = vsub.f32 %v237, %v2926
        %v2928 = vand.u32 %v2927, 4294901760
        %2929 = vmatpush1.msra.mxu0 %v2928
        %2930 = vmatprep.subr.mxu0 0.0
        %2931 = vmatpush2.msra.mxu0 0.0
        %2932 = vmatprep.subr.mxu0 0.0
        %2933 = vmatpush2.msra.mxu0 0.0
        %2934 = vmatprep.subr.mxu0 0.0
        %2935 = vmatpush2.msra.mxu0 0.0
        %2936 = vmatprep.subr.mxu0 0.0
        %2937 = vmatpush2.msra.mxu0 0.0
        %2938 = vmatprep.subr.mxu0 0.0
        %2939 = vmatpush2.msra.mxu0 0.0
        %2940 = vmatprep.subr.mxu0 0.0
        %2941 = vmatpush2.msra.mxu0 0.0
        %2942 = vmatprep.subr.mxu0 0.0
        %2943 = vmatpush2.msra.mxu0 0.0
        %2944 = vmatprep.subr.mxu0 0.0
        %2945 = vmatpush2.msra.mxu0 0.0
        %2946 = vmatprep.subr.mxu0 0.0
        %2947 = vmatpush2.msra.mxu0 0.0
        %2948 = vmatprep.subr.mxu0 0.0
        %2949 = vmatpush2.msra.mxu0 0.0
        %2950 = vmatprep.subr.mxu0 0.0
        %2951 = vmatpush2.msra.mxu0 0.0
        %2952 = vmatprep.subr.mxu0 0.0
        %2953 = vmatpush2.msra.mxu0 0.0
        %2954 = vmatprep.subr.mxu0 0.0
        %2955 = vmatpush2.msra.mxu0 0.0
        %2956 = vmatprep.subr.mxu0 0.0
        %2957 = vmatpush2.msra.mxu0 0.0
        %2958 = vmatprep.subr.mxu0 0.0
        %2959 = vmatpush2.msra.mxu0 0.0
        %2960 = vmatprep.subr.mxu0 0.0
        %2961 = vmatpush2.msra.mxu0 0.0
        %2962 = vmatprep.mubr.f32.mxu0 0.0
        %v2963 = vand.u32 %v2509, 4294901760
        %2964 = vmatmul.mubr.f32.gmra.mxu0 %v2963
        %v2965 = vpop.f32.mrf.mxu0
        %v2966 = vadd.f32 %v2871, %v2965
        %v2967 = vpop.f32.mrf.mxu0
        %2968 = vdwg.mxu0
        %2969 = vmatprep.subr.mxu0 0.0
        %2970 = vmatpush1.msra.mxu0 0.0
        %2971 = vmatprep.subr.mxu0 0.0
        %2972 = vmatpush1.msra.mxu0 0.0
        %2973 = vmatprep.subr.mxu0 0.0
        %2974 = vmatpush1.msra.mxu0 0.0
        %2975 = vmatprep.subr.mxu0 0.0
        %2976 = vmatpush1.msra.mxu0 0.0
        %2977 = vmatprep.subr.mxu0 0.0
        %2978 = vmatpush1.msra.mxu0 0.0
        %2979 = vmatprep.subr.mxu0 0.0
        %2980 = vmatpush1.msra.mxu0 0.0
        %2981 = vmatprep.subr.mxu0 0.0
        %2982 = vmatpush1.msra.mxu0 0.0
        %2983 = vmatprep.subr.mxu0 0.0
        %2984 = vmatpush1.msra.mxu0 0.0
        %2985 = vmatprep.subr.mxu0 0.0
        %v2986 = vand.u32 %v244, 4294901760
        %2987 = vmatpush1.msra.mxu0 %v2986
        %2988 = vmatprep.subr.mxu0 0.0
        %v2989 = vand.u32 %v243, 4294901760
        %2990 = vmatpush1.msra.mxu0 %v2989
        %2991 = vmatprep.subr.mxu0 0.0
        %v2992 = vand.u32 %v242, 4294901760
        %2993 = vmatpush1.msra.mxu0 %v2992
        %2994 = vmatprep.subr.mxu0 0.0
        %v2995 = vand.u32 %v241, 4294901760
        %2996 = vmatpush1.msra.mxu0 %v2995
        %2997 = vmatprep.subr.mxu0 0.0
        %v2998 = vand.u32 %v240, 4294901760
        %2999 = vmatpush1.msra.mxu0 %v2998
        %3000 = vmatprep.subr.mxu0 0.0
        %v3001 = vand.u32 %v239, 4294901760
        %3002 = vmatpush1.msra.mxu0 %v3001
        %3003 = vmatprep.subr.mxu0 0.0
        %v3004 = vand.u32 %v238, 4294901760
        %3005 = vmatpush1.msra.mxu0 %v3004
        %3006 = vmatprep.subr.mxu0 0.0
        %v3007 = vand.u32 %v237, 4294901760
        %3008 = vmatpush1.msra.mxu0 %v3007
        %3009 = vmatprep.subr.mxu0 0.0
        %3010 = vmatpush2.msra.mxu0 0.0
        %3011 = vmatprep.subr.mxu0 0.0
        %3012 = vmatpush2.msra.mxu0 0.0
        %3013 = vmatprep.subr.mxu0 0.0
        %3014 = vmatpush2.msra.mxu0 0.0
        %3015 = vmatprep.subr.mxu0 0.0
        %3016 = vmatpush2.msra.mxu0 0.0
        %3017 = vmatprep.subr.mxu0 0.0
        %3018 = vmatpush2.msra.mxu0 0.0
        %3019 = vmatprep.subr.mxu0 0.0
        %3020 = vmatpush2.msra.mxu0 0.0
        %3021 = vmatprep.subr.mxu0 0.0
        %3022 = vmatpush2.msra.mxu0 0.0
        %3023 = vmatprep.subr.mxu0 0.0
        %3024 = vmatpush2.msra.mxu0 0.0
        %3025 = vmatprep.subr.mxu0 0.0
        %3026 = vmatpush2.msra.mxu0 0.0
        %3027 = vmatprep.subr.mxu0 0.0
        %3028 = vmatpush2.msra.mxu0 0.0
        %3029 = vmatprep.subr.mxu0 0.0
        %3030 = vmatpush2.msra.mxu0 0.0
        %3031 = vmatprep.subr.mxu0 0.0
        %3032 = vmatpush2.msra.mxu0 0.0
        %3033 = vmatprep.subr.mxu0 0.0
        %3034 = vmatpush2.msra.mxu0 0.0
        %3035 = vmatprep.subr.mxu0 0.0
        %3036 = vmatpush2.msra.mxu0 0.0
        %3037 = vmatprep.subr.mxu0 0.0
        %3038 = vmatpush2.msra.mxu0 0.0
        %3039 = vmatprep.subr.mxu0 0.0
        %3040 = vmatpush2.msra.mxu0 0.0
        %3041 = vmatprep.mubr.f32.mxu0 0.0
        %v3042 = vand.u32 %v2509, 4294901760
        %3043 = vmatmul.mubr.f32.gmra.mxu0 %v3042
        %v3044 = vpop.f32.mrf.mxu0
        %v3045 = vadd.f32 %v2966, %v3044
        %v3046 = vpop.f32.mrf.mxu0
        %3047 = vdwg.mxu0
        %v3049 = vcombine.high %v3045, %v3045
        %v3051 = vunpack.c.l.s4 1966171168
        %v3052 = vunpack.c.0.s8 %v3051
        %v3053 = vlaneseq
        %v3054 = vshrl.u32 %v3053, 7
        %v3055 = vsub.s32 %v3052, %v3054
        %v3056 = vrot.slane %v3045, %v3055
        %v3058 = vunpack.c.l.s4 1966171168
        %v3059 = vunpack.c.0.s8 %v3058
        %v3060 = vlaneseq
        %v3061 = vshrl.u32 %v3060, 7
        %v3062 = vsub.s32 %v3059, %v3061
        %v3063 = vrot.slane %v3049, %v3062
        %v3064 = vcombine.high %v3056, %v3056
        %v3065 = vcombine.high %v3063, %v3063
        %v3067 = vunpack.c.l.s4 1966171168
        %v3068 = vunpack.c.0.s8 %v3067
        %v3069 = vlaneseq
        %v3070 = vshrl.u32 %v3069, 7
        %v3071 = vsub.s32 %v3068, %v3070
        %v3072 = vrot.slane %v3056, %v3071
        %v3074 = vunpack.c.l.s4 1966171168
        %v3075 = vunpack.c.0.s8 %v3074
        %v3076 = vlaneseq
        %v3077 = vshrl.u32 %v3076, 7
        %v3078 = vsub.s32 %v3075, %v3077
        %v3079 = vrot.slane %v3063, %v3078
        %v3081 = vunpack.c.l.s4 1966171168
        %v3082 = vunpack.c.0.s8 %v3081
        %v3083 = vlaneseq
        %v3084 = vshrl.u32 %v3083, 7
        %v3085 = vsub.s32 %v3082, %v3084
        %v3086 = vrot.slane %v3064, %v3085
        %v3088 = vunpack.c.l.s4 1966171168
        %v3089 = vunpack.c.0.s8 %v3088
        %v3090 = vlaneseq
        %v3091 = vshrl.u32 %v3090, 7
        %v3092 = vsub.s32 %v3089, %v3091
        %v3093 = vrot.slane %v3065, %v3092
        %v3094 = vcombine.high %v3072, %v3072
        %v3095 = vcombine.high %v3079, %v3079
        %v3096 = vcombine.high %v3086, %v3086
        %v3097 = vcombine.high %v3093, %v3093
        %v3098 = vsel %vm333, 1, 0
        %vm3099 = vcmp.eq.s32.totalorder %v3098, 1
        %v3100 = vlaneseq
        %v3101 = vshrl.u32 %v3100, 7
        %v3102 = vsub.s32 0, %v3101
        %v3103 = vrot.slane %v3072, %v3102
        %v3104 = vlaneseq
        %v3105 = vshrl.u32 %v3104, 7
        %v3106 = vsub.s32 0, %v3105
        %v3107 = vrot.slane %v3086, %v3106
        %v3108 = vlaneseq
        %v3109 = vshrl.u32 %v3108, 7
        %v3110 = vsub.s32 0, %v3109
        %v3111 = vrot.slane %v3094, %v3110
        %v3112 = vlaneseq
        %v3113 = vshrl.u32 %v3112, 7
        %v3114 = vsub.s32 0, %v3113
        %v3115 = vrot.slane %v3096, %v3114
        %v3116 = vlaneseq
        %v3117 = vshrl.u32 %v3116, 7
        %v3118 = vsub.s32 0, %v3117
        %v3119 = vrot.slane %v3079, %v3118
        %v3120 = vlaneseq
        %v3121 = vshrl.u32 %v3120, 7
        %v3122 = vsub.s32 0, %v3121
        %v3123 = vrot.slane %v3093, %v3122
        %v3124 = vlaneseq
        %v3125 = vshrl.u32 %v3124, 7
        %v3126 = vsub.s32 0, %v3125
        %v3127 = vrot.slane %v3095, %v3126
        %v3128 = vlaneseq
        %v3129 = vshrl.u32 %v3128, 7
        %v3130 = vsub.s32 0, %v3129
        %v3131 = vrot.slane %v3097, %v3130
        %v3140 = vsel %vm3099, %v3103, 0.0
        %v3141 = vsel %vm3099, %v3107, 0.0
        %v3142 = vsel %vm3099, %v3111, 0.0
        %v3143 = vsel %vm3099, %v3115, 0.0
        %v3144 = vsel %vm3099, %v3119, 0.0
        %v3145 = vsel %vm3099, %v3123, 0.0
        %v3146 = vsel %vm3099, %v3127, 0.0
        %v3147 = vsel %vm3099, %v3131, 0.0
        %v3148 = vadd.f32 %v2471, %v3140
        %v3149 = vadd.f32 %v2472, %v3141
        %v3150 = vadd.f32 %v2473, %v3142
        %v3151 = vadd.f32 %v2474, %v3143
        %v3152 = vadd.f32 %v2475, %v3144
        %v3153 = vadd.f32 %v2476, %v3145
        %v3154 = vadd.f32 %v2477, %v3146
        %v3155 = vadd.f32 %v2478, %v3147
        %v3156 = vsel %vm2505, inf, %v2479
        %v3157 = vsel %vm266, %v3156, inf
        %3158 = vmin.xlane.f32.xlu0 %v3157
        %v3159 = vpop.xlane.xlu0 %3158
        %vm3160 = vcmp.eq.f32.partialorder %v3156, %v3159
        %v3161 = vsel %vm3160, %v246, 64
        %v3162 = vsel %vm266, %v3161, 2147483647
        %v3163 = vand.u32 %v3162, 65535
        %v3164 = vshra.s32 %v3162, 16
        %v3165 = vcvt.s32.f32 %v3163
        %v3166 = vcvt.s32.f32 %v3164
        %3167 = vmin.xlane.f32.xlu0 %v3166
        %v3168 = vpop.xlane.xlu0 %3167
        %vm3169 = vcmp.eq.f32.partialorder %v3166, %v3168
        %v3170 = vsel %vm3169, %v3165, inf
        %3171 = vmin.xlane.f32.xlu0 %v3170
        %v3172 = vpop.xlane.xlu0 %3171
        %v3173 = vcvt.f32.s32 %v3172
        %v3174 = vcvt.f32.s32 %v3168
        %v3175 = vshll.u32 %v3174, 16
        %v3176 = vadd.s32 %v3175, %v3173
        %vm3177 = vcmp.eq.s32.totalorder %v246, 3
        %v3178 = vsel %vm3177, 1, 0
        %vm3179 = vcmp.eq.s32.totalorder %v3178, 1
        %v3180 = vsel %vm3179, %v3176, 0
        %v3181 = vadd.s32 %v2504, %v3180
        %vm3182 = vcmp.eq.s32.totalorder %v246, %v3176
        %v3183 = vsel %vm3182, 1, 0
        %v3184 = vcvt.s32.f32 %v3183
        %v3186 = vsel %vm266, %v3184, 0
        %3188 = vmatprep.subr.mxu0 0.0
        %3189 = vmatpush1.msra.mxu0 0.0
        %3190 = vmatprep.subr.mxu0 0.0
        %3191 = vmatpush1.msra.mxu0 0.0
        %3192 = vmatprep.subr.mxu0 0.0
        %3193 = vmatpush1.msra.mxu0 0.0
        %3194 = vmatprep.subr.mxu0 0.0
        %3195 = vmatpush1.msra.mxu0 0.0
        %3196 = vmatprep.subr.mxu0 0.0
        %3197 = vmatpush1.msra.mxu0 0.0
        %3198 = vmatprep.subr.mxu0 0.0
        %3199 = vmatpush1.msra.mxu0 0.0
        %3200 = vmatprep.subr.mxu0 0.0
        %3201 = vmatpush1.msra.mxu0 0.0
        %3202 = vmatprep.subr.mxu0 0.0
        %3203 = vmatpush1.msra.mxu0 0.0
        %3204 = vmatprep.subr.mxu0 0.0
        %v3205 = vand.u32 %v244, 4294901760
        %3206 = vmatpush1.msra.mxu0 %v3205
        %3207 = vmatprep.subr.mxu0 0.0
        %v3208 = vand.u32 %v243, 4294901760
        %3209 = vmatpush1.msra.mxu0 %v3208
        %3210 = vmatprep.subr.mxu0 0.0
        %v3211 = vand.u32 %v242, 4294901760
        %3212 = vmatpush1.msra.mxu0 %v3211
        %3213 = vmatprep.subr.mxu0 0.0
        %v3214 = vand.u32 %v241, 4294901760
        %3215 = vmatpush1.msra.mxu0 %v3214
        %3216 = vmatprep.subr.mxu0 0.0
        %v3217 = vand.u32 %v240, 4294901760
        %3218 = vmatpush1.msra.mxu0 %v3217
        %3219 = vmatprep.subr.mxu0 0.0
        %v3220 = vand.u32 %v239, 4294901760
        %3221 = vmatpush1.msra.mxu0 %v3220
        %3222 = vmatprep.subr.mxu0 0.0
        %v3223 = vand.u32 %v238, 4294901760
        %3224 = vmatpush1.msra.mxu0 %v3223
        %3225 = vmatprep.subr.mxu0 0.0
        %v3226 = vand.u32 %v237, 4294901760
        %3227 = vmatpush1.msra.mxu0 %v3226
        %3228 = vmatprep.subr.mxu0 0.0
        %3229 = vmatpush2.msra.mxu0 0.0
        %3230 = vmatprep.subr.mxu0 0.0
        %3231 = vmatpush2.msra.mxu0 0.0
        %3232 = vmatprep.subr.mxu0 0.0
        %3233 = vmatpush2.msra.mxu0 0.0
        %3234 = vmatprep.subr.mxu0 0.0
        %3235 = vmatpush2.msra.mxu0 0.0
        %3236 = vmatprep.subr.mxu0 0.0
        %3237 = vmatpush2.msra.mxu0 0.0
        %3238 = vmatprep.subr.mxu0 0.0
        %3239 = vmatpush2.msra.mxu0 0.0
        %3240 = vmatprep.subr.mxu0 0.0
        %3241 = vmatpush2.msra.mxu0 0.0
        %3242 = vmatprep.subr.mxu0 0.0
        %3243 = vmatpush2.msra.mxu0 0.0
        %3244 = vmatprep.subr.mxu0 0.0
        %3245 = vmatpush2.msra.mxu0 0.0
        %3246 = vmatprep.subr.mxu0 0.0
        %3247 = vmatpush2.msra.mxu0 0.0
        %3248 = vmatprep.subr.mxu0 0.0
        %3249 = vmatpush2.msra.mxu0 0.0
        %3250 = vmatprep.subr.mxu0 0.0
        %3251 = vmatpush2.msra.mxu0 0.0
        %3252 = vmatprep.subr.mxu0 0.0
        %3253 = vmatpush2.msra.mxu0 0.0
        %3254 = vmatprep.subr.mxu0 0.0
        %3255 = vmatpush2.msra.mxu0 0.0
        %3256 = vmatprep.subr.mxu0 0.0
        %3257 = vmatpush2.msra.mxu0 0.0
        %3258 = vmatprep.subr.mxu0 0.0
        %3259 = vmatpush2.msra.mxu0 0.0
        %3260 = vmatprep.mubr.f32.mxu0 0.0
        %v3261 = vand.u32 %v3186, 4294901760
        %v3262 = vsub.f32 %v3186, %v3261
        %v3263 = vand.u32 %v3262, 4294901760
        %v3264 = vsub.f32 %v3262, %v3263
        %v3265 = vand.u32 %v3264, 4294901760
        %3266 = vmatmul.mubr.f32.gmra.mxu0 %v3265
        %v3267 = vpop.f32.mrf.mxu0
        %v3268 = vadd.f32 0.0, %v3267
        %v3269 = vpop.f32.mrf.mxu0
        %3270 = vdwg.mxu0
        %3271 = vmatprep.subr.mxu0 0.0
        %3272 = vmatpush1.msra.mxu0 0.0
        %3273 = vmatprep.subr.mxu0 0.0
        %3274 = vmatpush1.msra.mxu0 0.0
        %3275 = vmatprep.subr.mxu0 0.0
        %3276 = vmatpush1.msra.mxu0 0.0
        %3277 = vmatprep.subr.mxu0 0.0
        %3278 = vmatpush1.msra.mxu0 0.0
        %3279 = vmatprep.subr.mxu0 0.0
        %3280 = vmatpush1.msra.mxu0 0.0
        %3281 = vmatprep.subr.mxu0 0.0
        %3282 = vmatpush1.msra.mxu0 0.0
        %3283 = vmatprep.subr.mxu0 0.0
        %3284 = vmatpush1.msra.mxu0 0.0
        %3285 = vmatprep.subr.mxu0 0.0
        %3286 = vmatpush1.msra.mxu0 0.0
        %3287 = vmatprep.subr.mxu0 0.0
        %v3288 = vand.u32 %v244, 4294901760
        %v3289 = vsub.f32 %v244, %v3288
        %v3290 = vand.u32 %v3289, 4294901760
        %v3291 = vsub.f32 %v3289, %v3290
        %v3292 = vand.u32 %v3291, 4294901760
        %3293 = vmatpush1.msra.mxu0 %v3292
        %3294 = vmatprep.subr.mxu0 0.0
        %v3295 = vand.u32 %v243, 4294901760
        %v3296 = vsub.f32 %v243, %v3295
        %v3297 = vand.u32 %v3296, 4294901760
        %v3298 = vsub.f32 %v3296, %v3297
        %v3299 = vand.u32 %v3298, 4294901760
        %3300 = vmatpush1.msra.mxu0 %v3299
        %3301 = vmatprep.subr.mxu0 0.0
        %v3302 = vand.u32 %v242, 4294901760
        %v3303 = vsub.f32 %v242, %v3302
        %v3304 = vand.u32 %v3303, 4294901760
        %v3305 = vsub.f32 %v3303, %v3304
        %v3306 = vand.u32 %v3305, 4294901760
        %3307 = vmatpush1.msra.mxu0 %v3306
        %3308 = vmatprep.subr.mxu0 0.0
        %v3309 = vand.u32 %v241, 4294901760
        %v3310 = vsub.f32 %v241, %v3309
        %v3311 = vand.u32 %v3310, 4294901760
        %v3312 = vsub.f32 %v3310, %v3311
        %v3313 = vand.u32 %v3312, 4294901760
        %3314 = vmatpush1.msra.mxu0 %v3313
        %3315 = vmatprep.subr.mxu0 0.0
        %v3316 = vand.u32 %v240, 4294901760
        %v3317 = vsub.f32 %v240, %v3316
        %v3318 = vand.u32 %v3317, 4294901760
        %v3319 = vsub.f32 %v3317, %v3318
        %v3320 = vand.u32 %v3319, 4294901760
        %3321 = vmatpush1.msra.mxu0 %v3320
        %3322 = vmatprep.subr.mxu0 0.0
        %v3323 = vand.u32 %v239, 4294901760
        %v3324 = vsub.f32 %v239, %v3323
        %v3325 = vand.u32 %v3324, 4294901760
        %v3326 = vsub.f32 %v3324, %v3325
        %v3327 = vand.u32 %v3326, 4294901760
        %3328 = vmatpush1.msra.mxu0 %v3327
        %3329 = vmatprep.subr.mxu0 0.0
        %v3330 = vand.u32 %v238, 4294901760
        %v3331 = vsub.f32 %v238, %v3330
        %v3332 = vand.u32 %v3331, 4294901760
        %v3333 = vsub.f32 %v3331, %v3332
        %v3334 = vand.u32 %v3333, 4294901760
        %3335 = vmatpush1.msra.mxu0 %v3334
        %3336 = vmatprep.subr.mxu0 0.0
        %v3337 = vand.u32 %v237, 4294901760
        %v3338 = vsub.f32 %v237, %v3337
        %v3339 = vand.u32 %v3338, 4294901760
        %v3340 = vsub.f32 %v3338, %v3339
        %v3341 = vand.u32 %v3340, 4294901760
        %3342 = vmatpush1.msra.mxu0 %v3341
        %3343 = vmatprep.subr.mxu0 0.0
        %3344 = vmatpush2.msra.mxu0 0.0
        %3345 = vmatprep.subr.mxu0 0.0
        %3346 = vmatpush2.msra.mxu0 0.0
        %3347 = vmatprep.subr.mxu0 0.0
        %3348 = vmatpush2.msra.mxu0 0.0
        %3349 = vmatprep.subr.mxu0 0.0
        %3350 = vmatpush2.msra.mxu0 0.0
        %3351 = vmatprep.subr.mxu0 0.0
        %3352 = vmatpush2.msra.mxu0 0.0
        %3353 = vmatprep.subr.mxu0 0.0
        %3354 = vmatpush2.msra.mxu0 0.0
        %3355 = vmatprep.subr.mxu0 0.0
        %3356 = vmatpush2.msra.mxu0 0.0
        %3357 = vmatprep.subr.mxu0 0.0
        %3358 = vmatpush2.msra.mxu0 0.0
        %3359 = vmatprep.subr.mxu0 0.0
        %3360 = vmatpush2.msra.mxu0 0.0
        %3361 = vmatprep.subr.mxu0 0.0
        %3362 = vmatpush2.msra.mxu0 0.0
        %3363 = vmatprep.subr.mxu0 0.0
        %3364 = vmatpush2.msra.mxu0 0.0
        %3365 = vmatprep.subr.mxu0 0.0
        %3366 = vmatpush2.msra.mxu0 0.0
        %3367 = vmatprep.subr.mxu0 0.0
        %3368 = vmatpush2.msra.mxu0 0.0
        %3369 = vmatprep.subr.mxu0 0.0
        %3370 = vmatpush2.msra.mxu0 0.0
        %3371 = vmatprep.subr.mxu0 0.0
        %3372 = vmatpush2.msra.mxu0 0.0
        %3373 = vmatprep.subr.mxu0 0.0
        %3374 = vmatpush2.msra.mxu0 0.0
        %3375 = vmatprep.mubr.f32.mxu0 0.0
        %v3376 = vand.u32 %v3186, 4294901760
        %3377 = vmatmul.mubr.f32.gmra.mxu0 %v3376
        %v3378 = vpop.f32.mrf.mxu0
        %v3379 = vadd.f32 %v3268, %v3378
        %v3380 = vpop.f32.mrf.mxu0
        %3381 = vdwg.mxu0
        %3382 = vmatprep.subr.mxu0 0.0
        %3383 = vmatpush1.msra.mxu0 0.0
        %3384 = vmatprep.subr.mxu0 0.0
        %3385 = vmatpush1.msra.mxu0 0.0
        %3386 = vmatprep.subr.mxu0 0.0
        %3387 = vmatpush1.msra.mxu0 0.0
        %3388 = vmatprep.subr.mxu0 0.0
        %3389 = vmatpush1.msra.mxu0 0.0
        %3390 = vmatprep.subr.mxu0 0.0
        %3391 = vmatpush1.msra.mxu0 0.0
        %3392 = vmatprep.subr.mxu0 0.0
        %3393 = vmatpush1.msra.mxu0 0.0
        %3394 = vmatprep.subr.mxu0 0.0
        %3395 = vmatpush1.msra.mxu0 0.0
        %3396 = vmatprep.subr.mxu0 0.0
        %3397 = vmatpush1.msra.mxu0 0.0
        %3398 = vmatprep.subr.mxu0 0.0
        %v3399 = vand.u32 %v244, 4294901760
        %v3400 = vsub.f32 %v244, %v3399
        %3401 = vmatpush1.msra.mxu0 %v3400
        %3402 = vmatprep.subr.mxu0 0.0
        %v3403 = vand.u32 %v243, 4294901760
        %v3404 = vsub.f32 %v243, %v3403
        %3405 = vmatpush1.msra.mxu0 %v3404
        %3406 = vmatprep.subr.mxu0 0.0
        %v3407 = vand.u32 %v242, 4294901760
        %v3408 = vsub.f32 %v242, %v3407
        %3409 = vmatpush1.msra.mxu0 %v3408
        %3410 = vmatprep.subr.mxu0 0.0
        %v3411 = vand.u32 %v241, 4294901760
        %v3412 = vsub.f32 %v241, %v3411
        %3413 = vmatpush1.msra.mxu0 %v3412
        %3414 = vmatprep.subr.mxu0 0.0
        %v3415 = vand.u32 %v240, 4294901760
        %v3416 = vsub.f32 %v240, %v3415
        %3417 = vmatpush1.msra.mxu0 %v3416
        %3418 = vmatprep.subr.mxu0 0.0
        %v3419 = vand.u32 %v239, 4294901760
        %v3420 = vsub.f32 %v239, %v3419
        %3421 = vmatpush1.msra.mxu0 %v3420
        %3422 = vmatprep.subr.mxu0 0.0
        %v3423 = vand.u32 %v238, 4294901760
        %v3424 = vsub.f32 %v238, %v3423
        %3425 = vmatpush1.msra.mxu0 %v3424
        %3426 = vmatprep.subr.mxu0 0.0
        %v3427 = vand.u32 %v237, 4294901760
        %v3428 = vsub.f32 %v237, %v3427
        %3429 = vmatpush1.msra.mxu0 %v3428
        %3430 = vmatprep.subr.mxu0 0.0
        %3431 = vmatpush2.msra.mxu0 0.0
        %3432 = vmatprep.subr.mxu0 0.0
        %3433 = vmatpush2.msra.mxu0 0.0
        %3434 = vmatprep.subr.mxu0 0.0
        %3435 = vmatpush2.msra.mxu0 0.0
        %3436 = vmatprep.subr.mxu0 0.0
        %3437 = vmatpush2.msra.mxu0 0.0
        %3438 = vmatprep.subr.mxu0 0.0
        %3439 = vmatpush2.msra.mxu0 0.0
        %3440 = vmatprep.subr.mxu0 0.0
        %3441 = vmatpush2.msra.mxu0 0.0
        %3442 = vmatprep.subr.mxu0 0.0
        %3443 = vmatpush2.msra.mxu0 0.0
        %3444 = vmatprep.subr.mxu0 0.0
        %3445 = vmatpush2.msra.mxu0 0.0
        %3446 = vmatprep.subr.mxu0 0.0
        %3447 = vmatpush2.msra.mxu0 0.0
        %3448 = vmatprep.subr.mxu0 0.0
        %3449 = vmatpush2.msra.mxu0 0.0
        %3450 = vmatprep.subr.mxu0 0.0
        %3451 = vmatpush2.msra.mxu0 0.0
        %3452 = vmatprep.subr.mxu0 0.0
        %3453 = vmatpush2.msra.mxu0 0.0
        %3454 = vmatprep.subr.mxu0 0.0
        %3455 = vmatpush2.msra.mxu0 0.0
        %3456 = vmatprep.subr.mxu0 0.0
        %3457 = vmatpush2.msra.mxu0 0.0
        %3458 = vmatprep.subr.mxu0 0.0
        %3459 = vmatpush2.msra.mxu0 0.0
        %3460 = vmatprep.subr.mxu0 0.0
        %3461 = vmatpush2.msra.mxu0 0.0
        %3462 = vmatprep.mubr.f32.mxu0 0.0
        %v3463 = vand.u32 %v3186, 4294901760
        %v3464 = vsub.f32 %v3186, %v3463
        %3465 = vmatmul.mubr.f32.gmra.mxu0 %v3464
        %v3466 = vpop.f32.mrf.mxu0
        %v3467 = vadd.f32 %v3379, %v3466
        %v3468 = vpop.f32.mrf.mxu0
        %3469 = vdwg.mxu0
        %3470 = vmatprep.subr.mxu0 0.0
        %3471 = vmatpush1.msra.mxu0 0.0
        %3472 = vmatprep.subr.mxu0 0.0
        %3473 = vmatpush1.msra.mxu0 0.0
        %3474 = vmatprep.subr.mxu0 0.0
        %3475 = vmatpush1.msra.mxu0 0.0
        %3476 = vmatprep.subr.mxu0 0.0
        %3477 = vmatpush1.msra.mxu0 0.0
        %3478 = vmatprep.subr.mxu0 0.0
        %3479 = vmatpush1.msra.mxu0 0.0
        %3480 = vmatprep.subr.mxu0 0.0
        %3481 = vmatpush1.msra.mxu0 0.0
        %3482 = vmatprep.subr.mxu0 0.0
        %3483 = vmatpush1.msra.mxu0 0.0
        %3484 = vmatprep.subr.mxu0 0.0
        %3485 = vmatpush1.msra.mxu0 0.0
        %3486 = vmatprep.subr.mxu0 0.0
        %v3487 = vand.u32 %v244, 4294901760
        %3488 = vmatpush1.msra.mxu0 %v3487
        %3489 = vmatprep.subr.mxu0 0.0
        %v3490 = vand.u32 %v243, 4294901760
        %3491 = vmatpush1.msra.mxu0 %v3490
        %3492 = vmatprep.subr.mxu0 0.0
        %v3493 = vand.u32 %v242, 4294901760
        %3494 = vmatpush1.msra.mxu0 %v3493
        %3495 = vmatprep.subr.mxu0 0.0
        %v3496 = vand.u32 %v241, 4294901760
        %3497 = vmatpush1.msra.mxu0 %v3496
        %3498 = vmatprep.subr.mxu0 0.0
        %v3499 = vand.u32 %v240, 4294901760
        %3500 = vmatpush1.msra.mxu0 %v3499
        %3501 = vmatprep.subr.mxu0 0.0
        %v3502 = vand.u32 %v239, 4294901760
        %3503 = vmatpush1.msra.mxu0 %v3502
        %3504 = vmatprep.subr.mxu0 0.0
        %v3505 = vand.u32 %v238, 4294901760
        %3506 = vmatpush1.msra.mxu0 %v3505
        %3507 = vmatprep.subr.mxu0 0.0
        %v3508 = vand.u32 %v237, 4294901760
        %3509 = vmatpush1.msra.mxu0 %v3508
        %3510 = vmatprep.subr.mxu0 0.0
        %3511 = vmatpush2.msra.mxu0 0.0
        %3512 = vmatprep.subr.mxu0 0.0
        %3513 = vmatpush2.msra.mxu0 0.0
        %3514 = vmatprep.subr.mxu0 0.0
        %3515 = vmatpush2.msra.mxu0 0.0
        %3516 = vmatprep.subr.mxu0 0.0
        %3517 = vmatpush2.msra.mxu0 0.0
        %3518 = vmatprep.subr.mxu0 0.0
        %3519 = vmatpush2.msra.mxu0 0.0
        %3520 = vmatprep.subr.mxu0 0.0
        %3521 = vmatpush2.msra.mxu0 0.0
        %3522 = vmatprep.subr.mxu0 0.0
        %3523 = vmatpush2.msra.mxu0 0.0
        %3524 = vmatprep.subr.mxu0 0.0
        %3525 = vmatpush2.msra.mxu0 0.0
        %3526 = vmatprep.subr.mxu0 0.0
        %3527 = vmatpush2.msra.mxu0 0.0
        %3528 = vmatprep.subr.mxu0 0.0
        %3529 = vmatpush2.msra.mxu0 0.0
        %3530 = vmatprep.subr.mxu0 0.0
        %3531 = vmatpush2.msra.mxu0 0.0
        %3532 = vmatprep.subr.mxu0 0.0
        %3533 = vmatpush2.msra.mxu0 0.0
        %3534 = vmatprep.subr.mxu0 0.0
        %3535 = vmatpush2.msra.mxu0 0.0
        %3536 = vmatprep.subr.mxu0 0.0
        %3537 = vmatpush2.msra.mxu0 0.0
        %3538 = vmatprep.subr.mxu0 0.0
        %3539 = vmatpush2.msra.mxu0 0.0
        %3540 = vmatprep.subr.mxu0 0.0
        %3541 = vmatpush2.msra.mxu0 0.0
        %3542 = vmatprep.mubr.f32.mxu0 0.0
        %v3543 = vand.u32 %v3186, 4294901760
        %v3544 = vsub.f32 %v3186, %v3543
        %v3545 = vand.u32 %v3544, 4294901760
        %3546 = vmatmul.mubr.f32.gmra.mxu0 %v3545
        %v3547 = vpop.f32.mrf.mxu0
        %v3548 = vadd.f32 %v3467, %v3547
        %v3549 = vpop.f32.mrf.mxu0
        %3550 = vdwg.mxu0
        %3551 = vmatprep.subr.mxu0 0.0
        %3552 = vmatpush1.msra.mxu0 0.0
        %3553 = vmatprep.subr.mxu0 0.0
        %3554 = vmatpush1.msra.mxu0 0.0
        %3555 = vmatprep.subr.mxu0 0.0
        %3556 = vmatpush1.msra.mxu0 0.0
        %3557 = vmatprep.subr.mxu0 0.0
        %3558 = vmatpush1.msra.mxu0 0.0
        %3559 = vmatprep.subr.mxu0 0.0
        %3560 = vmatpush1.msra.mxu0 0.0
        %3561 = vmatprep.subr.mxu0 0.0
        %3562 = vmatpush1.msra.mxu0 0.0
        %3563 = vmatprep.subr.mxu0 0.0
        %3564 = vmatpush1.msra.mxu0 0.0
        %3565 = vmatprep.subr.mxu0 0.0
        %3566 = vmatpush1.msra.mxu0 0.0
        %3567 = vmatprep.subr.mxu0 0.0
        %v3568 = vand.u32 %v244, 4294901760
        %v3569 = vsub.f32 %v244, %v3568
        %v3570 = vand.u32 %v3569, 4294901760
        %3571 = vmatpush1.msra.mxu0 %v3570
        %3572 = vmatprep.subr.mxu0 0.0
        %v3573 = vand.u32 %v243, 4294901760
        %v3574 = vsub.f32 %v243, %v3573
        %v3575 = vand.u32 %v3574, 4294901760
        %3576 = vmatpush1.msra.mxu0 %v3575
        %3577 = vmatprep.subr.mxu0 0.0
        %v3578 = vand.u32 %v242, 4294901760
        %v3579 = vsub.f32 %v242, %v3578
        %v3580 = vand.u32 %v3579, 4294901760
        %3581 = vmatpush1.msra.mxu0 %v3580
        %3582 = vmatprep.subr.mxu0 0.0
        %v3583 = vand.u32 %v241, 4294901760
        %v3584 = vsub.f32 %v241, %v3583
        %v3585 = vand.u32 %v3584, 4294901760
        %3586 = vmatpush1.msra.mxu0 %v3585
        %3587 = vmatprep.subr.mxu0 0.0
        %v3588 = vand.u32 %v240, 4294901760
        %v3589 = vsub.f32 %v240, %v3588
        %v3590 = vand.u32 %v3589, 4294901760
        %3591 = vmatpush1.msra.mxu0 %v3590
        %3592 = vmatprep.subr.mxu0 0.0
        %v3593 = vand.u32 %v239, 4294901760
        %v3594 = vsub.f32 %v239, %v3593
        %v3595 = vand.u32 %v3594, 4294901760
        %3596 = vmatpush1.msra.mxu0 %v3595
        %3597 = vmatprep.subr.mxu0 0.0
        %v3598 = vand.u32 %v238, 4294901760
        %v3599 = vsub.f32 %v238, %v3598
        %v3600 = vand.u32 %v3599, 4294901760
        %3601 = vmatpush1.msra.mxu0 %v3600
        %3602 = vmatprep.subr.mxu0 0.0
        %v3603 = vand.u32 %v237, 4294901760
        %v3604 = vsub.f32 %v237, %v3603
        %v3605 = vand.u32 %v3604, 4294901760
        %3606 = vmatpush1.msra.mxu0 %v3605
        %3607 = vmatprep.subr.mxu0 0.0
        %3608 = vmatpush2.msra.mxu0 0.0
        %3609 = vmatprep.subr.mxu0 0.0
        %3610 = vmatpush2.msra.mxu0 0.0
        %3611 = vmatprep.subr.mxu0 0.0
        %3612 = vmatpush2.msra.mxu0 0.0
        %3613 = vmatprep.subr.mxu0 0.0
        %3614 = vmatpush2.msra.mxu0 0.0
        %3615 = vmatprep.subr.mxu0 0.0
        %3616 = vmatpush2.msra.mxu0 0.0
        %3617 = vmatprep.subr.mxu0 0.0
        %3618 = vmatpush2.msra.mxu0 0.0
        %3619 = vmatprep.subr.mxu0 0.0
        %3620 = vmatpush2.msra.mxu0 0.0
        %3621 = vmatprep.subr.mxu0 0.0
        %3622 = vmatpush2.msra.mxu0 0.0
        %3623 = vmatprep.subr.mxu0 0.0
        %3624 = vmatpush2.msra.mxu0 0.0
        %3625 = vmatprep.subr.mxu0 0.0
        %3626 = vmatpush2.msra.mxu0 0.0
        %3627 = vmatprep.subr.mxu0 0.0
        %3628 = vmatpush2.msra.mxu0 0.0
        %3629 = vmatprep.subr.mxu0 0.0
        %3630 = vmatpush2.msra.mxu0 0.0
        %3631 = vmatprep.subr.mxu0 0.0
        %3632 = vmatpush2.msra.mxu0 0.0
        %3633 = vmatprep.subr.mxu0 0.0
        %3634 = vmatpush2.msra.mxu0 0.0
        %3635 = vmatprep.subr.mxu0 0.0
        %3636 = vmatpush2.msra.mxu0 0.0
        %3637 = vmatprep.subr.mxu0 0.0
        %3638 = vmatpush2.msra.mxu0 0.0
        %3639 = vmatprep.mubr.f32.mxu0 0.0
        %v3640 = vand.u32 %v3186, 4294901760
        %3641 = vmatmul.mubr.f32.gmra.mxu0 %v3640
        %v3642 = vpop.f32.mrf.mxu0
        %v3643 = vadd.f32 %v3548, %v3642
        %v3644 = vpop.f32.mrf.mxu0
        %3645 = vdwg.mxu0
        %3646 = vmatprep.subr.mxu0 0.0
        %3647 = vmatpush1.msra.mxu0 0.0
        %3648 = vmatprep.subr.mxu0 0.0
        %3649 = vmatpush1.msra.mxu0 0.0
        %3650 = vmatprep.subr.mxu0 0.0
        %3651 = vmatpush1.msra.mxu0 0.0
        %3652 = vmatprep.subr.mxu0 0.0
        %3653 = vmatpush1.msra.mxu0 0.0
        %3654 = vmatprep.subr.mxu0 0.0
        %3655 = vmatpush1.msra.mxu0 0.0
        %3656 = vmatprep.subr.mxu0 0.0
        %3657 = vmatpush1.msra.mxu0 0.0
        %3658 = vmatprep.subr.mxu0 0.0
        %3659 = vmatpush1.msra.mxu0 0.0
        %3660 = vmatprep.subr.mxu0 0.0
        %3661 = vmatpush1.msra.mxu0 0.0
        %3662 = vmatprep.subr.mxu0 0.0
        %v3663 = vand.u32 %v244, 4294901760
        %3664 = vmatpush1.msra.mxu0 %v3663
        %3665 = vmatprep.subr.mxu0 0.0
        %v3666 = vand.u32 %v243, 4294901760
        %3667 = vmatpush1.msra.mxu0 %v3666
        %3668 = vmatprep.subr.mxu0 0.0
        %v3669 = vand.u32 %v242, 4294901760
        %3670 = vmatpush1.msra.mxu0 %v3669
        %3671 = vmatprep.subr.mxu0 0.0
        %v3672 = vand.u32 %v241, 4294901760
        %3673 = vmatpush1.msra.mxu0 %v3672
        %3674 = vmatprep.subr.mxu0 0.0
        %v3675 = vand.u32 %v240, 4294901760
        %3676 = vmatpush1.msra.mxu0 %v3675
        %3677 = vmatprep.subr.mxu0 0.0
        %v3678 = vand.u32 %v239, 4294901760
        %3679 = vmatpush1.msra.mxu0 %v3678
        %3680 = vmatprep.subr.mxu0 0.0
        %v3681 = vand.u32 %v238, 4294901760
        %3682 = vmatpush1.msra.mxu0 %v3681
        %3683 = vmatprep.subr.mxu0 0.0
        %v3684 = vand.u32 %v237, 4294901760
        %3685 = vmatpush1.msra.mxu0 %v3684
        %3686 = vmatprep.subr.mxu0 0.0
        %3687 = vmatpush2.msra.mxu0 0.0
        %3688 = vmatprep.subr.mxu0 0.0
        %3689 = vmatpush2.msra.mxu0 0.0
        %3690 = vmatprep.subr.mxu0 0.0
        %3691 = vmatpush2.msra.mxu0 0.0
        %3692 = vmatprep.subr.mxu0 0.0
        %3693 = vmatpush2.msra.mxu0 0.0
        %3694 = vmatprep.subr.mxu0 0.0
        %3695 = vmatpush2.msra.mxu0 0.0
        %3696 = vmatprep.subr.mxu0 0.0
        %3697 = vmatpush2.msra.mxu0 0.0
        %3698 = vmatprep.subr.mxu0 0.0
        %3699 = vmatpush2.msra.mxu0 0.0
        %3700 = vmatprep.subr.mxu0 0.0
        %3701 = vmatpush2.msra.mxu0 0.0
        %3702 = vmatprep.subr.mxu0 0.0
        %3703 = vmatpush2.msra.mxu0 0.0
        %3704 = vmatprep.subr.mxu0 0.0
        %3705 = vmatpush2.msra.mxu0 0.0
        %3706 = vmatprep.subr.mxu0 0.0
        %3707 = vmatpush2.msra.mxu0 0.0
        %3708 = vmatprep.subr.mxu0 0.0
        %3709 = vmatpush2.msra.mxu0 0.0
        %3710 = vmatprep.subr.mxu0 0.0
        %3711 = vmatpush2.msra.mxu0 0.0
        %3712 = vmatprep.subr.mxu0 0.0
        %3713 = vmatpush2.msra.mxu0 0.0
        %3714 = vmatprep.subr.mxu0 0.0
        %3715 = vmatpush2.msra.mxu0 0.0
        %3716 = vmatprep.subr.mxu0 0.0
        %3717 = vmatpush2.msra.mxu0 0.0
        %3718 = vmatprep.mubr.f32.mxu0 0.0
        %v3719 = vand.u32 %v3186, 4294901760
        %3720 = vmatmul.mubr.f32.gmra.mxu0 %v3719
        %v3721 = vpop.f32.mrf.mxu0
        %v3722 = vadd.f32 %v3643, %v3721
        %v3723 = vpop.f32.mrf.mxu0
        %3724 = vdwg.mxu0
        %v3726 = vcombine.high %v3722, %v3722
        %v3728 = vunpack.c.l.s4 1966171168
        %v3729 = vunpack.c.0.s8 %v3728
        %v3730 = vlaneseq
        %v3731 = vshrl.u32 %v3730, 7
        %v3732 = vsub.s32 %v3729, %v3731
        %v3733 = vrot.slane %v3722, %v3732
        %v3735 = vunpack.c.l.s4 1966171168
        %v3736 = vunpack.c.0.s8 %v3735
        %v3737 = vlaneseq
        %v3738 = vshrl.u32 %v3737, 7
        %v3739 = vsub.s32 %v3736, %v3738
        %v3740 = vrot.slane %v3726, %v3739
        %v3741 = vcombine.high %v3733, %v3733
        %v3742 = vcombine.high %v3740, %v3740
        %v3744 = vunpack.c.l.s4 1966171168
        %v3745 = vunpack.c.0.s8 %v3744
        %v3746 = vlaneseq
        %v3747 = vshrl.u32 %v3746, 7
        %v3748 = vsub.s32 %v3745, %v3747
        %v3749 = vrot.slane %v3733, %v3748
        %v3751 = vunpack.c.l.s4 1966171168
        %v3752 = vunpack.c.0.s8 %v3751
        %v3753 = vlaneseq
        %v3754 = vshrl.u32 %v3753, 7
        %v3755 = vsub.s32 %v3752, %v3754
        %v3756 = vrot.slane %v3740, %v3755
        %v3758 = vunpack.c.l.s4 1966171168
        %v3759 = vunpack.c.0.s8 %v3758
        %v3760 = vlaneseq
        %v3761 = vshrl.u32 %v3760, 7
        %v3762 = vsub.s32 %v3759, %v3761
        %v3763 = vrot.slane %v3741, %v3762
        %v3765 = vunpack.c.l.s4 1966171168
        %v3766 = vunpack.c.0.s8 %v3765
        %v3767 = vlaneseq
        %v3768 = vshrl.u32 %v3767, 7
        %v3769 = vsub.s32 %v3766, %v3768
        %v3770 = vrot.slane %v3742, %v3769
        %v3771 = vcombine.high %v3749, %v3749
        %v3772 = vcombine.high %v3756, %v3756
        %v3773 = vcombine.high %v3763, %v3763
        %v3774 = vcombine.high %v3770, %v3770
        %v3775 = vsel %vm376, 1, 0
        %vm3776 = vcmp.eq.s32.totalorder %v3775, 1
        %v3777 = vlaneseq
        %v3778 = vshrl.u32 %v3777, 7
        %v3779 = vsub.s32 0, %v3778
        %v3780 = vrot.slane %v3749, %v3779
        %v3781 = vlaneseq
        %v3782 = vshrl.u32 %v3781, 7
        %v3783 = vsub.s32 0, %v3782
        %v3784 = vrot.slane %v3763, %v3783
        %v3785 = vlaneseq
        %v3786 = vshrl.u32 %v3785, 7
        %v3787 = vsub.s32 0, %v3786
        %v3788 = vrot.slane %v3771, %v3787
        %v3789 = vlaneseq
        %v3790 = vshrl.u32 %v3789, 7
        %v3791 = vsub.s32 0, %v3790
        %v3792 = vrot.slane %v3773, %v3791
        %v3793 = vlaneseq
        %v3794 = vshrl.u32 %v3793, 7
        %v3795 = vsub.s32 0, %v3794
        %v3796 = vrot.slane %v3756, %v3795
        %v3797 = vlaneseq
        %v3798 = vshrl.u32 %v3797, 7
        %v3799 = vsub.s32 0, %v3798
        %v3800 = vrot.slane %v3770, %v3799
        %v3801 = vlaneseq
        %v3802 = vshrl.u32 %v3801, 7
        %v3803 = vsub.s32 0, %v3802
        %v3804 = vrot.slane %v3772, %v3803
        %v3805 = vlaneseq
        %v3806 = vshrl.u32 %v3805, 7
        %v3807 = vsub.s32 0, %v3806
        %v3808 = vrot.slane %v3774, %v3807
        %v3817 = vsel %vm3776, %v3780, 0.0
        %v3818 = vsel %vm3776, %v3784, 0.0
        %v3819 = vsel %vm3776, %v3788, 0.0
        %v3820 = vsel %vm3776, %v3792, 0.0
        %v3821 = vsel %vm3776, %v3796, 0.0
        %v3822 = vsel %vm3776, %v3800, 0.0
        %v3823 = vsel %vm3776, %v3804, 0.0
        %v3824 = vsel %vm3776, %v3808, 0.0
        %v3825 = vadd.f32 %v3148, %v3817
        %v3826 = vadd.f32 %v3149, %v3818
        %v3827 = vadd.f32 %v3150, %v3819
        %v3828 = vadd.f32 %v3151, %v3820
        %v3829 = vadd.f32 %v3152, %v3821
        %v3830 = vadd.f32 %v3153, %v3822
        %v3831 = vadd.f32 %v3154, %v3823
        %v3832 = vadd.f32 %v3155, %v3824
        %v3833 = vsel %vm3182, inf, %v3156
        %v3834 = vsel %vm266, %v3833, inf
        %3835 = vmin.xlane.f32.xlu0 %v3834
        %v3836 = vpop.xlane.xlu0 %3835
        %vm3837 = vcmp.eq.f32.partialorder %v3833, %v3836
        %v3838 = vsel %vm3837, %v246, 64
        %v3839 = vsel %vm266, %v3838, 2147483647
        %v3840 = vand.u32 %v3839, 65535
        %v3841 = vshra.s32 %v3839, 16
        %v3842 = vcvt.s32.f32 %v3840
        %v3843 = vcvt.s32.f32 %v3841
        %3844 = vmin.xlane.f32.xlu0 %v3843
        %v3845 = vpop.xlane.xlu0 %3844
        %vm3846 = vcmp.eq.f32.partialorder %v3843, %v3845
        %v3847 = vsel %vm3846, %v3842, inf
        %3848 = vmin.xlane.f32.xlu0 %v3847
        %v3849 = vpop.xlane.xlu0 %3848
        %v3850 = vcvt.f32.s32 %v3849
        %v3851 = vcvt.f32.s32 %v3845
        %v3852 = vshll.u32 %v3851, 16
        %v3853 = vadd.s32 %v3852, %v3850
        %vm3854 = vcmp.eq.s32.totalorder %v246, 4
        %v3855 = vsel %vm3854, 1, 0
        %vm3856 = vcmp.eq.s32.totalorder %v3855, 1
        %v3857 = vsel %vm3856, %v3853, 0
        %v3858 = vadd.s32 %v3181, %v3857
        %vm3859 = vcmp.eq.s32.totalorder %v246, %v3853
        %v3860 = vsel %vm3859, 1, 0
        %v3861 = vcvt.s32.f32 %v3860
        %v3863 = vsel %vm266, %v3861, 0
        %3865 = vmatprep.subr.mxu0 0.0
        %3866 = vmatpush1.msra.mxu0 0.0
        %3867 = vmatprep.subr.mxu0 0.0
        %3868 = vmatpush1.msra.mxu0 0.0
        %3869 = vmatprep.subr.mxu0 0.0
        %3870 = vmatpush1.msra.mxu0 0.0
        %3871 = vmatprep.subr.mxu0 0.0
        %3872 = vmatpush1.msra.mxu0 0.0
        %3873 = vmatprep.subr.mxu0 0.0
        %3874 = vmatpush1.msra.mxu0 0.0
        %3875 = vmatprep.subr.mxu0 0.0
        %3876 = vmatpush1.msra.mxu0 0.0
        %3877 = vmatprep.subr.mxu0 0.0
        %3878 = vmatpush1.msra.mxu0 0.0
        %3879 = vmatprep.subr.mxu0 0.0
        %3880 = vmatpush1.msra.mxu0 0.0
        %3881 = vmatprep.subr.mxu0 0.0
        %v3882 = vand.u32 %v244, 4294901760
        %3883 = vmatpush1.msra.mxu0 %v3882
        %3884 = vmatprep.subr.mxu0 0.0
        %v3885 = vand.u32 %v243, 4294901760
        %3886 = vmatpush1.msra.mxu0 %v3885
        %3887 = vmatprep.subr.mxu0 0.0
        %v3888 = vand.u32 %v242, 4294901760
        %3889 = vmatpush1.msra.mxu0 %v3888
        %3890 = vmatprep.subr.mxu0 0.0
        %v3891 = vand.u32 %v241, 4294901760
        %3892 = vmatpush1.msra.mxu0 %v3891
        %3893 = vmatprep.subr.mxu0 0.0
        %v3894 = vand.u32 %v240, 4294901760
        %3895 = vmatpush1.msra.mxu0 %v3894
        %3896 = vmatprep.subr.mxu0 0.0
        %v3897 = vand.u32 %v239, 4294901760
        %3898 = vmatpush1.msra.mxu0 %v3897
        %3899 = vmatprep.subr.mxu0 0.0
        %v3900 = vand.u32 %v238, 4294901760
        %3901 = vmatpush1.msra.mxu0 %v3900
        %3902 = vmatprep.subr.mxu0 0.0
        %v3903 = vand.u32 %v237, 4294901760
        %3904 = vmatpush1.msra.mxu0 %v3903
        %3905 = vmatprep.subr.mxu0 0.0
        %3906 = vmatpush2.msra.mxu0 0.0
        %3907 = vmatprep.subr.mxu0 0.0
        %3908 = vmatpush2.msra.mxu0 0.0
        %3909 = vmatprep.subr.mxu0 0.0
        %3910 = vmatpush2.msra.mxu0 0.0
        %3911 = vmatprep.subr.mxu0 0.0
        %3912 = vmatpush2.msra.mxu0 0.0
        %3913 = vmatprep.subr.mxu0 0.0
        %3914 = vmatpush2.msra.mxu0 0.0
        %3915 = vmatprep.subr.mxu0 0.0
        %3916 = vmatpush2.msra.mxu0 0.0
        %3917 = vmatprep.subr.mxu0 0.0
        %3918 = vmatpush2.msra.mxu0 0.0
        %3919 = vmatprep.subr.mxu0 0.0
        %3920 = vmatpush2.msra.mxu0 0.0
        %3921 = vmatprep.subr.mxu0 0.0
        %3922 = vmatpush2.msra.mxu0 0.0
        %3923 = vmatprep.subr.mxu0 0.0
        %3924 = vmatpush2.msra.mxu0 0.0
        %3925 = vmatprep.subr.mxu0 0.0
        %3926 = vmatpush2.msra.mxu0 0.0
        %3927 = vmatprep.subr.mxu0 0.0
        %3928 = vmatpush2.msra.mxu0 0.0
        %3929 = vmatprep.subr.mxu0 0.0
        %3930 = vmatpush2.msra.mxu0 0.0
        %3931 = vmatprep.subr.mxu0 0.0
        %3932 = vmatpush2.msra.mxu0 0.0
        %3933 = vmatprep.subr.mxu0 0.0
        %3934 = vmatpush2.msra.mxu0 0.0
        %3935 = vmatprep.subr.mxu0 0.0
        %3936 = vmatpush2.msra.mxu0 0.0
        %3937 = vmatprep.mubr.f32.mxu0 0.0
        %v3938 = vand.u32 %v3863, 4294901760
        %v3939 = vsub.f32 %v3863, %v3938
        %v3940 = vand.u32 %v3939, 4294901760
        %v3941 = vsub.f32 %v3939, %v3940
        %v3942 = vand.u32 %v3941, 4294901760
        %3943 = vmatmul.mubr.f32.gmra.mxu0 %v3942
        %v3944 = vpop.f32.mrf.mxu0
        %v3945 = vadd.f32 0.0, %v3944
        %v3946 = vpop.f32.mrf.mxu0
        %3947 = vdwg.mxu0
        %3948 = vmatprep.subr.mxu0 0.0
        %3949 = vmatpush1.msra.mxu0 0.0
        %3950 = vmatprep.subr.mxu0 0.0
        %3951 = vmatpush1.msra.mxu0 0.0
        %3952 = vmatprep.subr.mxu0 0.0
        %3953 = vmatpush1.msra.mxu0 0.0
        %3954 = vmatprep.subr.mxu0 0.0
        %3955 = vmatpush1.msra.mxu0 0.0
        %3956 = vmatprep.subr.mxu0 0.0
        %3957 = vmatpush1.msra.mxu0 0.0
        %3958 = vmatprep.subr.mxu0 0.0
        %3959 = vmatpush1.msra.mxu0 0.0
        %3960 = vmatprep.subr.mxu0 0.0
        %3961 = vmatpush1.msra.mxu0 0.0
        %3962 = vmatprep.subr.mxu0 0.0
        %3963 = vmatpush1.msra.mxu0 0.0
        %3964 = vmatprep.subr.mxu0 0.0
        %v3965 = vand.u32 %v244, 4294901760
        %v3966 = vsub.f32 %v244, %v3965
        %v3967 = vand.u32 %v3966, 4294901760
        %v3968 = vsub.f32 %v3966, %v3967
        %v3969 = vand.u32 %v3968, 4294901760
        %3970 = vmatpush1.msra.mxu0 %v3969
        %3971 = vmatprep.subr.mxu0 0.0
        %v3972 = vand.u32 %v243, 4294901760
        %v3973 = vsub.f32 %v243, %v3972
        %v3974 = vand.u32 %v3973, 4294901760
        %v3975 = vsub.f32 %v3973, %v3974
        %v3976 = vand.u32 %v3975, 4294901760
        %3977 = vmatpush1.msra.mxu0 %v3976
        %3978 = vmatprep.subr.mxu0 0.0
        %v3979 = vand.u32 %v242, 4294901760
        %v3980 = vsub.f32 %v242, %v3979
        %v3981 = vand.u32 %v3980, 4294901760
        %v3982 = vsub.f32 %v3980, %v3981
        %v3983 = vand.u32 %v3982, 4294901760
        %3984 = vmatpush1.msra.mxu0 %v3983
        %3985 = vmatprep.subr.mxu0 0.0
        %v3986 = vand.u32 %v241, 4294901760
        %v3987 = vsub.f32 %v241, %v3986
        %v3988 = vand.u32 %v3987, 4294901760
        %v3989 = vsub.f32 %v3987, %v3988
        %v3990 = vand.u32 %v3989, 4294901760
        %3991 = vmatpush1.msra.mxu0 %v3990
        %3992 = vmatprep.subr.mxu0 0.0
        %v3993 = vand.u32 %v240, 4294901760
        %v3994 = vsub.f32 %v240, %v3993
        %v3995 = vand.u32 %v3994, 4294901760
        %v3996 = vsub.f32 %v3994, %v3995
        %v3997 = vand.u32 %v3996, 4294901760
        %3998 = vmatpush1.msra.mxu0 %v3997
        %3999 = vmatprep.subr.mxu0 0.0
        %v4000 = vand.u32 %v239, 4294901760
        %v4001 = vsub.f32 %v239, %v4000
        %v4002 = vand.u32 %v4001, 4294901760
        %v4003 = vsub.f32 %v4001, %v4002
        %v4004 = vand.u32 %v4003, 4294901760
        %4005 = vmatpush1.msra.mxu0 %v4004
        %4006 = vmatprep.subr.mxu0 0.0
        %v4007 = vand.u32 %v238, 4294901760
        %v4008 = vsub.f32 %v238, %v4007
        %v4009 = vand.u32 %v4008, 4294901760
        %v4010 = vsub.f32 %v4008, %v4009
        %v4011 = vand.u32 %v4010, 4294901760
        %4012 = vmatpush1.msra.mxu0 %v4011
        %4013 = vmatprep.subr.mxu0 0.0
        %v4014 = vand.u32 %v237, 4294901760
        %v4015 = vsub.f32 %v237, %v4014
        %v4016 = vand.u32 %v4015, 4294901760
        %v4017 = vsub.f32 %v4015, %v4016
        %v4018 = vand.u32 %v4017, 4294901760
        %4019 = vmatpush1.msra.mxu0 %v4018
        %4020 = vmatprep.subr.mxu0 0.0
        %4021 = vmatpush2.msra.mxu0 0.0
        %4022 = vmatprep.subr.mxu0 0.0
        %4023 = vmatpush2.msra.mxu0 0.0
        %4024 = vmatprep.subr.mxu0 0.0
        %4025 = vmatpush2.msra.mxu0 0.0
        %4026 = vmatprep.subr.mxu0 0.0
        %4027 = vmatpush2.msra.mxu0 0.0
        %4028 = vmatprep.subr.mxu0 0.0
        %4029 = vmatpush2.msra.mxu0 0.0
        %4030 = vmatprep.subr.mxu0 0.0
        %4031 = vmatpush2.msra.mxu0 0.0
        %4032 = vmatprep.subr.mxu0 0.0
        %4033 = vmatpush2.msra.mxu0 0.0
        %4034 = vmatprep.subr.mxu0 0.0
        %4035 = vmatpush2.msra.mxu0 0.0
        %4036 = vmatprep.subr.mxu0 0.0
        %4037 = vmatpush2.msra.mxu0 0.0
        %4038 = vmatprep.subr.mxu0 0.0
        %4039 = vmatpush2.msra.mxu0 0.0
        %4040 = vmatprep.subr.mxu0 0.0
        %4041 = vmatpush2.msra.mxu0 0.0
        %4042 = vmatprep.subr.mxu0 0.0
        %4043 = vmatpush2.msra.mxu0 0.0
        %4044 = vmatprep.subr.mxu0 0.0
        %4045 = vmatpush2.msra.mxu0 0.0
        %4046 = vmatprep.subr.mxu0 0.0
        %4047 = vmatpush2.msra.mxu0 0.0
        %4048 = vmatprep.subr.mxu0 0.0
        %4049 = vmatpush2.msra.mxu0 0.0
        %4050 = vmatprep.subr.mxu0 0.0
        %4051 = vmatpush2.msra.mxu0 0.0
        %4052 = vmatprep.mubr.f32.mxu0 0.0
        %v4053 = vand.u32 %v3863, 4294901760
        %4054 = vmatmul.mubr.f32.gmra.mxu0 %v4053
        %v4055 = vpop.f32.mrf.mxu0
        %v4056 = vadd.f32 %v3945, %v4055
        %v4057 = vpop.f32.mrf.mxu0
        %4058 = vdwg.mxu0
        %4059 = vmatprep.subr.mxu0 0.0
        %4060 = vmatpush1.msra.mxu0 0.0
        %4061 = vmatprep.subr.mxu0 0.0
        %4062 = vmatpush1.msra.mxu0 0.0
        %4063 = vmatprep.subr.mxu0 0.0
        %4064 = vmatpush1.msra.mxu0 0.0
        %4065 = vmatprep.subr.mxu0 0.0
        %4066 = vmatpush1.msra.mxu0 0.0
        %4067 = vmatprep.subr.mxu0 0.0
        %4068 = vmatpush1.msra.mxu0 0.0
        %4069 = vmatprep.subr.mxu0 0.0
        %4070 = vmatpush1.msra.mxu0 0.0
        %4071 = vmatprep.subr.mxu0 0.0
        %4072 = vmatpush1.msra.mxu0 0.0
        %4073 = vmatprep.subr.mxu0 0.0
        %4074 = vmatpush1.msra.mxu0 0.0
        %4075 = vmatprep.subr.mxu0 0.0
        %v4076 = vand.u32 %v244, 4294901760
        %v4077 = vsub.f32 %v244, %v4076
        %4078 = vmatpush1.msra.mxu0 %v4077
        %4079 = vmatprep.subr.mxu0 0.0
        %v4080 = vand.u32 %v243, 4294901760
        %v4081 = vsub.f32 %v243, %v4080
        %4082 = vmatpush1.msra.mxu0 %v4081
        %4083 = vmatprep.subr.mxu0 0.0
        %v4084 = vand.u32 %v242, 4294901760
        %v4085 = vsub.f32 %v242, %v4084
        %4086 = vmatpush1.msra.mxu0 %v4085
        %4087 = vmatprep.subr.mxu0 0.0
        %v4088 = vand.u32 %v241, 4294901760
        %v4089 = vsub.f32 %v241, %v4088
        %4090 = vmatpush1.msra.mxu0 %v4089
        %4091 = vmatprep.subr.mxu0 0.0
        %v4092 = vand.u32 %v240, 4294901760
        %v4093 = vsub.f32 %v240, %v4092
        %4094 = vmatpush1.msra.mxu0 %v4093
        %4095 = vmatprep.subr.mxu0 0.0
        %v4096 = vand.u32 %v239, 4294901760
        %v4097 = vsub.f32 %v239, %v4096
        %4098 = vmatpush1.msra.mxu0 %v4097
        %4099 = vmatprep.subr.mxu0 0.0
        %v4100 = vand.u32 %v238, 4294901760
        %v4101 = vsub.f32 %v238, %v4100
        %4102 = vmatpush1.msra.mxu0 %v4101
        %4103 = vmatprep.subr.mxu0 0.0
        %v4104 = vand.u32 %v237, 4294901760
        %v4105 = vsub.f32 %v237, %v4104
        %4106 = vmatpush1.msra.mxu0 %v4105
        %4107 = vmatprep.subr.mxu0 0.0
        %4108 = vmatpush2.msra.mxu0 0.0
        %4109 = vmatprep.subr.mxu0 0.0
        %4110 = vmatpush2.msra.mxu0 0.0
        %4111 = vmatprep.subr.mxu0 0.0
        %4112 = vmatpush2.msra.mxu0 0.0
        %4113 = vmatprep.subr.mxu0 0.0
        %4114 = vmatpush2.msra.mxu0 0.0
        %4115 = vmatprep.subr.mxu0 0.0
        %4116 = vmatpush2.msra.mxu0 0.0
        %4117 = vmatprep.subr.mxu0 0.0
        %4118 = vmatpush2.msra.mxu0 0.0
        %4119 = vmatprep.subr.mxu0 0.0
        %4120 = vmatpush2.msra.mxu0 0.0
        %4121 = vmatprep.subr.mxu0 0.0
        %4122 = vmatpush2.msra.mxu0 0.0
        %4123 = vmatprep.subr.mxu0 0.0
        %4124 = vmatpush2.msra.mxu0 0.0
        %4125 = vmatprep.subr.mxu0 0.0
        %4126 = vmatpush2.msra.mxu0 0.0
        %4127 = vmatprep.subr.mxu0 0.0
        %4128 = vmatpush2.msra.mxu0 0.0
        %4129 = vmatprep.subr.mxu0 0.0
        %4130 = vmatpush2.msra.mxu0 0.0
        %4131 = vmatprep.subr.mxu0 0.0
        %4132 = vmatpush2.msra.mxu0 0.0
        %4133 = vmatprep.subr.mxu0 0.0
        %4134 = vmatpush2.msra.mxu0 0.0
        %4135 = vmatprep.subr.mxu0 0.0
        %4136 = vmatpush2.msra.mxu0 0.0
        %4137 = vmatprep.subr.mxu0 0.0
        %4138 = vmatpush2.msra.mxu0 0.0
        %4139 = vmatprep.mubr.f32.mxu0 0.0
        %v4140 = vand.u32 %v3863, 4294901760
        %v4141 = vsub.f32 %v3863, %v4140
        %4142 = vmatmul.mubr.f32.gmra.mxu0 %v4141
        %v4143 = vpop.f32.mrf.mxu0
        %v4144 = vadd.f32 %v4056, %v4143
        %v4145 = vpop.f32.mrf.mxu0
        %4146 = vdwg.mxu0
        %4147 = vmatprep.subr.mxu0 0.0
        %4148 = vmatpush1.msra.mxu0 0.0
        %4149 = vmatprep.subr.mxu0 0.0
        %4150 = vmatpush1.msra.mxu0 0.0
        %4151 = vmatprep.subr.mxu0 0.0
        %4152 = vmatpush1.msra.mxu0 0.0
        %4153 = vmatprep.subr.mxu0 0.0
        %4154 = vmatpush1.msra.mxu0 0.0
        %4155 = vmatprep.subr.mxu0 0.0
        %4156 = vmatpush1.msra.mxu0 0.0
        %4157 = vmatprep.subr.mxu0 0.0
        %4158 = vmatpush1.msra.mxu0 0.0
        %4159 = vmatprep.subr.mxu0 0.0
        %4160 = vmatpush1.msra.mxu0 0.0
        %4161 = vmatprep.subr.mxu0 0.0
        %4162 = vmatpush1.msra.mxu0 0.0
        %4163 = vmatprep.subr.mxu0 0.0
        %v4164 = vand.u32 %v244, 4294901760
        %4165 = vmatpush1.msra.mxu0 %v4164
        %4166 = vmatprep.subr.mxu0 0.0
        %v4167 = vand.u32 %v243, 4294901760
        %4168 = vmatpush1.msra.mxu0 %v4167
        %4169 = vmatprep.subr.mxu0 0.0
        %v4170 = vand.u32 %v242, 4294901760
        %4171 = vmatpush1.msra.mxu0 %v4170
        %4172 = vmatprep.subr.mxu0 0.0
        %v4173 = vand.u32 %v241, 4294901760
        %4174 = vmatpush1.msra.mxu0 %v4173
        %4175 = vmatprep.subr.mxu0 0.0
        %v4176 = vand.u32 %v240, 4294901760
        %4177 = vmatpush1.msra.mxu0 %v4176
        %4178 = vmatprep.subr.mxu0 0.0
        %v4179 = vand.u32 %v239, 4294901760
        %4180 = vmatpush1.msra.mxu0 %v4179
        %4181 = vmatprep.subr.mxu0 0.0
        %v4182 = vand.u32 %v238, 4294901760
        %4183 = vmatpush1.msra.mxu0 %v4182
        %4184 = vmatprep.subr.mxu0 0.0
        %v4185 = vand.u32 %v237, 4294901760
        %4186 = vmatpush1.msra.mxu0 %v4185
        %4187 = vmatprep.subr.mxu0 0.0
        %4188 = vmatpush2.msra.mxu0 0.0
        %4189 = vmatprep.subr.mxu0 0.0
        %4190 = vmatpush2.msra.mxu0 0.0
        %4191 = vmatprep.subr.mxu0 0.0
        %4192 = vmatpush2.msra.mxu0 0.0
        %4193 = vmatprep.subr.mxu0 0.0
        %4194 = vmatpush2.msra.mxu0 0.0
        %4195 = vmatprep.subr.mxu0 0.0
        %4196 = vmatpush2.msra.mxu0 0.0
        %4197 = vmatprep.subr.mxu0 0.0
        %4198 = vmatpush2.msra.mxu0 0.0
        %4199 = vmatprep.subr.mxu0 0.0
        %4200 = vmatpush2.msra.mxu0 0.0
        %4201 = vmatprep.subr.mxu0 0.0
        %4202 = vmatpush2.msra.mxu0 0.0
        %4203 = vmatprep.subr.mxu0 0.0
        %4204 = vmatpush2.msra.mxu0 0.0
        %4205 = vmatprep.subr.mxu0 0.0
        %4206 = vmatpush2.msra.mxu0 0.0
        %4207 = vmatprep.subr.mxu0 0.0
        %4208 = vmatpush2.msra.mxu0 0.0
        %4209 = vmatprep.subr.mxu0 0.0
        %4210 = vmatpush2.msra.mxu0 0.0
        %4211 = vmatprep.subr.mxu0 0.0
        %4212 = vmatpush2.msra.mxu0 0.0
        %4213 = vmatprep.subr.mxu0 0.0
        %4214 = vmatpush2.msra.mxu0 0.0
        %4215 = vmatprep.subr.mxu0 0.0
        %4216 = vmatpush2.msra.mxu0 0.0
        %4217 = vmatprep.subr.mxu0 0.0
        %4218 = vmatpush2.msra.mxu0 0.0
        %4219 = vmatprep.mubr.f32.mxu0 0.0
        %v4220 = vand.u32 %v3863, 4294901760
        %v4221 = vsub.f32 %v3863, %v4220
        %v4222 = vand.u32 %v4221, 4294901760
        %4223 = vmatmul.mubr.f32.gmra.mxu0 %v4222
        %v4224 = vpop.f32.mrf.mxu0
        %v4225 = vadd.f32 %v4144, %v4224
        %v4226 = vpop.f32.mrf.mxu0
        %4227 = vdwg.mxu0
        %4228 = vmatprep.subr.mxu0 0.0
        %4229 = vmatpush1.msra.mxu0 0.0
        %4230 = vmatprep.subr.mxu0 0.0
        %4231 = vmatpush1.msra.mxu0 0.0
        %4232 = vmatprep.subr.mxu0 0.0
        %4233 = vmatpush1.msra.mxu0 0.0
        %4234 = vmatprep.subr.mxu0 0.0
        %4235 = vmatpush1.msra.mxu0 0.0
        %4236 = vmatprep.subr.mxu0 0.0
        %4237 = vmatpush1.msra.mxu0 0.0
        %4238 = vmatprep.subr.mxu0 0.0
        %4239 = vmatpush1.msra.mxu0 0.0
        %4240 = vmatprep.subr.mxu0 0.0
        %4241 = vmatpush1.msra.mxu0 0.0
        %4242 = vmatprep.subr.mxu0 0.0
        %4243 = vmatpush1.msra.mxu0 0.0
        %4244 = vmatprep.subr.mxu0 0.0
        %v4245 = vand.u32 %v244, 4294901760
        %v4246 = vsub.f32 %v244, %v4245
        %v4247 = vand.u32 %v4246, 4294901760
        %4248 = vmatpush1.msra.mxu0 %v4247
        %4249 = vmatprep.subr.mxu0 0.0
        %v4250 = vand.u32 %v243, 4294901760
        %v4251 = vsub.f32 %v243, %v4250
        %v4252 = vand.u32 %v4251, 4294901760
        %4253 = vmatpush1.msra.mxu0 %v4252
        %4254 = vmatprep.subr.mxu0 0.0
        %v4255 = vand.u32 %v242, 4294901760
        %v4256 = vsub.f32 %v242, %v4255
        %v4257 = vand.u32 %v4256, 4294901760
        %4258 = vmatpush1.msra.mxu0 %v4257
        %4259 = vmatprep.subr.mxu0 0.0
        %v4260 = vand.u32 %v241, 4294901760
        %v4261 = vsub.f32 %v241, %v4260
        %v4262 = vand.u32 %v4261, 4294901760
        %4263 = vmatpush1.msra.mxu0 %v4262
        %4264 = vmatprep.subr.mxu0 0.0
        %v4265 = vand.u32 %v240, 4294901760
        %v4266 = vsub.f32 %v240, %v4265
        %v4267 = vand.u32 %v4266, 4294901760
        %4268 = vmatpush1.msra.mxu0 %v4267
        %4269 = vmatprep.subr.mxu0 0.0
        %v4270 = vand.u32 %v239, 4294901760
        %v4271 = vsub.f32 %v239, %v4270
        %v4272 = vand.u32 %v4271, 4294901760
        %4273 = vmatpush1.msra.mxu0 %v4272
        %4274 = vmatprep.subr.mxu0 0.0
        %v4275 = vand.u32 %v238, 4294901760
        %v4276 = vsub.f32 %v238, %v4275
        %v4277 = vand.u32 %v4276, 4294901760
        %4278 = vmatpush1.msra.mxu0 %v4277
        %4279 = vmatprep.subr.mxu0 0.0
        %v4280 = vand.u32 %v237, 4294901760
        %v4281 = vsub.f32 %v237, %v4280
        %v4282 = vand.u32 %v4281, 4294901760
        %4283 = vmatpush1.msra.mxu0 %v4282
        %4284 = vmatprep.subr.mxu0 0.0
        %4285 = vmatpush2.msra.mxu0 0.0
        %4286 = vmatprep.subr.mxu0 0.0
        %4287 = vmatpush2.msra.mxu0 0.0
        %4288 = vmatprep.subr.mxu0 0.0
        %4289 = vmatpush2.msra.mxu0 0.0
        %4290 = vmatprep.subr.mxu0 0.0
        %4291 = vmatpush2.msra.mxu0 0.0
        %4292 = vmatprep.subr.mxu0 0.0
        %4293 = vmatpush2.msra.mxu0 0.0
        %4294 = vmatprep.subr.mxu0 0.0
        %4295 = vmatpush2.msra.mxu0 0.0
        %4296 = vmatprep.subr.mxu0 0.0
        %4297 = vmatpush2.msra.mxu0 0.0
        %4298 = vmatprep.subr.mxu0 0.0
        %4299 = vmatpush2.msra.mxu0 0.0
        %4300 = vmatprep.subr.mxu0 0.0
        %4301 = vmatpush2.msra.mxu0 0.0
        %4302 = vmatprep.subr.mxu0 0.0
        %4303 = vmatpush2.msra.mxu0 0.0
        %4304 = vmatprep.subr.mxu0 0.0
        %4305 = vmatpush2.msra.mxu0 0.0
        %4306 = vmatprep.subr.mxu0 0.0
        %4307 = vmatpush2.msra.mxu0 0.0
        %4308 = vmatprep.subr.mxu0 0.0
        %4309 = vmatpush2.msra.mxu0 0.0
        %4310 = vmatprep.subr.mxu0 0.0
        %4311 = vmatpush2.msra.mxu0 0.0
        %4312 = vmatprep.subr.mxu0 0.0
        %4313 = vmatpush2.msra.mxu0 0.0
        %4314 = vmatprep.subr.mxu0 0.0
        %4315 = vmatpush2.msra.mxu0 0.0
        %4316 = vmatprep.mubr.f32.mxu0 0.0
        %v4317 = vand.u32 %v3863, 4294901760
        %4318 = vmatmul.mubr.f32.gmra.mxu0 %v4317
        %v4319 = vpop.f32.mrf.mxu0
        %v4320 = vadd.f32 %v4225, %v4319
        %v4321 = vpop.f32.mrf.mxu0
        %4322 = vdwg.mxu0
        %4323 = vmatprep.subr.mxu0 0.0
        %4324 = vmatpush1.msra.mxu0 0.0
        %4325 = vmatprep.subr.mxu0 0.0
        %4326 = vmatpush1.msra.mxu0 0.0
        %4327 = vmatprep.subr.mxu0 0.0
        %4328 = vmatpush1.msra.mxu0 0.0
        %4329 = vmatprep.subr.mxu0 0.0
        %4330 = vmatpush1.msra.mxu0 0.0
        %4331 = vmatprep.subr.mxu0 0.0
        %4332 = vmatpush1.msra.mxu0 0.0
        %4333 = vmatprep.subr.mxu0 0.0
        %4334 = vmatpush1.msra.mxu0 0.0
        %4335 = vmatprep.subr.mxu0 0.0
        %4336 = vmatpush1.msra.mxu0 0.0
        %4337 = vmatprep.subr.mxu0 0.0
        %4338 = vmatpush1.msra.mxu0 0.0
        %4339 = vmatprep.subr.mxu0 0.0
        %v4340 = vand.u32 %v244, 4294901760
        %4341 = vmatpush1.msra.mxu0 %v4340
        %4342 = vmatprep.subr.mxu0 0.0
        %v4343 = vand.u32 %v243, 4294901760
        %4344 = vmatpush1.msra.mxu0 %v4343
        %4345 = vmatprep.subr.mxu0 0.0
        %v4346 = vand.u32 %v242, 4294901760
        %4347 = vmatpush1.msra.mxu0 %v4346
        %4348 = vmatprep.subr.mxu0 0.0
        %v4349 = vand.u32 %v241, 4294901760
        %4350 = vmatpush1.msra.mxu0 %v4349
        %4351 = vmatprep.subr.mxu0 0.0
        %v4352 = vand.u32 %v240, 4294901760
        %4353 = vmatpush1.msra.mxu0 %v4352
        %4354 = vmatprep.subr.mxu0 0.0
        %v4355 = vand.u32 %v239, 4294901760
        %4356 = vmatpush1.msra.mxu0 %v4355
        %4357 = vmatprep.subr.mxu0 0.0
        %v4358 = vand.u32 %v238, 4294901760
        %4359 = vmatpush1.msra.mxu0 %v4358
        %4360 = vmatprep.subr.mxu0 0.0
        %v4361 = vand.u32 %v237, 4294901760
        %4362 = vmatpush1.msra.mxu0 %v4361
        %4363 = vmatprep.subr.mxu0 0.0
        %4364 = vmatpush2.msra.mxu0 0.0
        %4365 = vmatprep.subr.mxu0 0.0
        %4366 = vmatpush2.msra.mxu0 0.0
        %4367 = vmatprep.subr.mxu0 0.0
        %4368 = vmatpush2.msra.mxu0 0.0
        %4369 = vmatprep.subr.mxu0 0.0
        %4370 = vmatpush2.msra.mxu0 0.0
        %4371 = vmatprep.subr.mxu0 0.0
        %4372 = vmatpush2.msra.mxu0 0.0
        %4373 = vmatprep.subr.mxu0 0.0
        %4374 = vmatpush2.msra.mxu0 0.0
        %4375 = vmatprep.subr.mxu0 0.0
        %4376 = vmatpush2.msra.mxu0 0.0
        %4377 = vmatprep.subr.mxu0 0.0
        %4378 = vmatpush2.msra.mxu0 0.0
        %4379 = vmatprep.subr.mxu0 0.0
        %4380 = vmatpush2.msra.mxu0 0.0
        %4381 = vmatprep.subr.mxu0 0.0
        %4382 = vmatpush2.msra.mxu0 0.0
        %4383 = vmatprep.subr.mxu0 0.0
        %4384 = vmatpush2.msra.mxu0 0.0
        %4385 = vmatprep.subr.mxu0 0.0
        %4386 = vmatpush2.msra.mxu0 0.0
        %4387 = vmatprep.subr.mxu0 0.0
        %4388 = vmatpush2.msra.mxu0 0.0
        %4389 = vmatprep.subr.mxu0 0.0
        %4390 = vmatpush2.msra.mxu0 0.0
        %4391 = vmatprep.subr.mxu0 0.0
        %4392 = vmatpush2.msra.mxu0 0.0
        %4393 = vmatprep.subr.mxu0 0.0
        %4394 = vmatpush2.msra.mxu0 0.0
        %4395 = vmatprep.mubr.f32.mxu0 0.0
        %v4396 = vand.u32 %v3863, 4294901760
        %4397 = vmatmul.mubr.f32.gmra.mxu0 %v4396
        %v4398 = vpop.f32.mrf.mxu0
        %v4399 = vadd.f32 %v4320, %v4398
        %v4400 = vpop.f32.mrf.mxu0
        %4401 = vdwg.mxu0
        %v4403 = vcombine.high %v4399, %v4399
        %v4405 = vunpack.c.l.s4 1966171168
        %v4406 = vunpack.c.0.s8 %v4405
        %v4407 = vlaneseq
        %v4408 = vshrl.u32 %v4407, 7
        %v4409 = vsub.s32 %v4406, %v4408
        %v4410 = vrot.slane %v4399, %v4409
        %v4412 = vunpack.c.l.s4 1966171168
        %v4413 = vunpack.c.0.s8 %v4412
        %v4414 = vlaneseq
        %v4415 = vshrl.u32 %v4414, 7
        %v4416 = vsub.s32 %v4413, %v4415
        %v4417 = vrot.slane %v4403, %v4416
        %v4418 = vcombine.high %v4410, %v4410
        %v4419 = vcombine.high %v4417, %v4417
        %v4421 = vunpack.c.l.s4 1966171168
        %v4422 = vunpack.c.0.s8 %v4421
        %v4423 = vlaneseq
        %v4424 = vshrl.u32 %v4423, 7
        %v4425 = vsub.s32 %v4422, %v4424
        %v4426 = vrot.slane %v4410, %v4425
        %v4428 = vunpack.c.l.s4 1966171168
        %v4429 = vunpack.c.0.s8 %v4428
        %v4430 = vlaneseq
        %v4431 = vshrl.u32 %v4430, 7
        %v4432 = vsub.s32 %v4429, %v4431
        %v4433 = vrot.slane %v4417, %v4432
        %v4435 = vunpack.c.l.s4 1966171168
        %v4436 = vunpack.c.0.s8 %v4435
        %v4437 = vlaneseq
        %v4438 = vshrl.u32 %v4437, 7
        %v4439 = vsub.s32 %v4436, %v4438
        %v4440 = vrot.slane %v4418, %v4439
        %v4442 = vunpack.c.l.s4 1966171168
        %v4443 = vunpack.c.0.s8 %v4442
        %v4444 = vlaneseq
        %v4445 = vshrl.u32 %v4444, 7
        %v4446 = vsub.s32 %v4443, %v4445
        %v4447 = vrot.slane %v4419, %v4446
        %v4448 = vcombine.high %v4426, %v4426
        %v4449 = vcombine.high %v4433, %v4433
        %v4450 = vcombine.high %v4440, %v4440
        %v4451 = vcombine.high %v4447, %v4447
        %v4452 = vsel %vm419, 1, 0
        %vm4453 = vcmp.eq.s32.totalorder %v4452, 1
        %v4454 = vlaneseq
        %v4455 = vshrl.u32 %v4454, 7
        %v4456 = vsub.s32 0, %v4455
        %v4457 = vrot.slane %v4426, %v4456
        %v4458 = vlaneseq
        %v4459 = vshrl.u32 %v4458, 7
        %v4460 = vsub.s32 0, %v4459
        %v4461 = vrot.slane %v4440, %v4460
        %v4462 = vlaneseq
        %v4463 = vshrl.u32 %v4462, 7
        %v4464 = vsub.s32 0, %v4463
        %v4465 = vrot.slane %v4448, %v4464
        %v4466 = vlaneseq
        %v4467 = vshrl.u32 %v4466, 7
        %v4468 = vsub.s32 0, %v4467
        %v4469 = vrot.slane %v4450, %v4468
        %v4470 = vlaneseq
        %v4471 = vshrl.u32 %v4470, 7
        %v4472 = vsub.s32 0, %v4471
        %v4473 = vrot.slane %v4433, %v4472
        %v4474 = vlaneseq
        %v4475 = vshrl.u32 %v4474, 7
        %v4476 = vsub.s32 0, %v4475
        %v4477 = vrot.slane %v4447, %v4476
        %v4478 = vlaneseq
        %v4479 = vshrl.u32 %v4478, 7
        %v4480 = vsub.s32 0, %v4479
        %v4481 = vrot.slane %v4449, %v4480
        %v4482 = vlaneseq
        %v4483 = vshrl.u32 %v4482, 7
        %v4484 = vsub.s32 0, %v4483
        %v4485 = vrot.slane %v4451, %v4484
        %v4494 = vsel %vm4453, %v4457, 0.0
        %v4495 = vsel %vm4453, %v4461, 0.0
        %v4496 = vsel %vm4453, %v4465, 0.0
        %v4497 = vsel %vm4453, %v4469, 0.0
        %v4498 = vsel %vm4453, %v4473, 0.0
        %v4499 = vsel %vm4453, %v4477, 0.0
        %v4500 = vsel %vm4453, %v4481, 0.0
        %v4501 = vsel %vm4453, %v4485, 0.0
        %v4502 = vadd.f32 %v3825, %v4494
        %v4503 = vadd.f32 %v3826, %v4495
        %v4504 = vadd.f32 %v3827, %v4496
        %v4505 = vadd.f32 %v3828, %v4497
        %v4506 = vadd.f32 %v3829, %v4498
        %v4507 = vadd.f32 %v3830, %v4499
        %v4508 = vadd.f32 %v3831, %v4500
        %v4509 = vadd.f32 %v3832, %v4501
        %v4510 = vsel %vm3859, inf, %v3833
        %v4511 = vsel %vm266, %v4510, inf
        %4512 = vmin.xlane.f32.xlu0 %v4511
        %v4513 = vpop.xlane.xlu0 %4512
        %vm4514 = vcmp.eq.f32.partialorder %v4510, %v4513
        %v4515 = vsel %vm4514, %v246, 64
        %v4516 = vsel %vm266, %v4515, 2147483647
        %v4517 = vand.u32 %v4516, 65535
        %v4518 = vshra.s32 %v4516, 16
        %v4519 = vcvt.s32.f32 %v4517
        %v4520 = vcvt.s32.f32 %v4518
        %4521 = vmin.xlane.f32.xlu0 %v4520
        %v4522 = vpop.xlane.xlu0 %4521
        %vm4523 = vcmp.eq.f32.partialorder %v4520, %v4522
        %v4524 = vsel %vm4523, %v4519, inf
        %4525 = vmin.xlane.f32.xlu0 %v4524
        %v4526 = vpop.xlane.xlu0 %4525
        %v4527 = vcvt.f32.s32 %v4526
        %v4528 = vcvt.f32.s32 %v4522
        %v4529 = vshll.u32 %v4528, 16
        %v4530 = vadd.s32 %v4529, %v4527
        %vm4531 = vcmp.eq.s32.totalorder %v246, 5
        %v4532 = vsel %vm4531, 1, 0
        %vm4533 = vcmp.eq.s32.totalorder %v4532, 1
        %v4534 = vsel %vm4533, %v4530, 0
        %v4535 = vadd.s32 %v3858, %v4534
        %vm4536 = vcmp.eq.s32.totalorder %v246, %v4530
        %v4537 = vsel %vm4536, 1, 0
        %v4538 = vcvt.s32.f32 %v4537
        %v4540 = vsel %vm266, %v4538, 0
        %4542 = vmatprep.subr.mxu0 0.0
        %4543 = vmatpush1.msra.mxu0 0.0
        %4544 = vmatprep.subr.mxu0 0.0
        %4545 = vmatpush1.msra.mxu0 0.0
        %4546 = vmatprep.subr.mxu0 0.0
        %4547 = vmatpush1.msra.mxu0 0.0
        %4548 = vmatprep.subr.mxu0 0.0
        %4549 = vmatpush1.msra.mxu0 0.0
        %4550 = vmatprep.subr.mxu0 0.0
        %4551 = vmatpush1.msra.mxu0 0.0
        %4552 = vmatprep.subr.mxu0 0.0
        %4553 = vmatpush1.msra.mxu0 0.0
        %4554 = vmatprep.subr.mxu0 0.0
        %4555 = vmatpush1.msra.mxu0 0.0
        %4556 = vmatprep.subr.mxu0 0.0
        %4557 = vmatpush1.msra.mxu0 0.0
        %4558 = vmatprep.subr.mxu0 0.0
        %v4559 = vand.u32 %v244, 4294901760
        %4560 = vmatpush1.msra.mxu0 %v4559
        %4561 = vmatprep.subr.mxu0 0.0
        %v4562 = vand.u32 %v243, 4294901760
        %4563 = vmatpush1.msra.mxu0 %v4562
        %4564 = vmatprep.subr.mxu0 0.0
        %v4565 = vand.u32 %v242, 4294901760
        %4566 = vmatpush1.msra.mxu0 %v4565
        %4567 = vmatprep.subr.mxu0 0.0
        %v4568 = vand.u32 %v241, 4294901760
        %4569 = vmatpush1.msra.mxu0 %v4568
        %4570 = vmatprep.subr.mxu0 0.0
        %v4571 = vand.u32 %v240, 4294901760
        %4572 = vmatpush1.msra.mxu0 %v4571
        %4573 = vmatprep.subr.mxu0 0.0
        %v4574 = vand.u32 %v239, 4294901760
        %4575 = vmatpush1.msra.mxu0 %v4574
        %4576 = vmatprep.subr.mxu0 0.0
        %v4577 = vand.u32 %v238, 4294901760
        %4578 = vmatpush1.msra.mxu0 %v4577
        %4579 = vmatprep.subr.mxu0 0.0
        %v4580 = vand.u32 %v237, 4294901760
        %4581 = vmatpush1.msra.mxu0 %v4580
        %4582 = vmatprep.subr.mxu0 0.0
        %4583 = vmatpush2.msra.mxu0 0.0
        %4584 = vmatprep.subr.mxu0 0.0
        %4585 = vmatpush2.msra.mxu0 0.0
        %4586 = vmatprep.subr.mxu0 0.0
        %4587 = vmatpush2.msra.mxu0 0.0
        %4588 = vmatprep.subr.mxu0 0.0
        %4589 = vmatpush2.msra.mxu0 0.0
        %4590 = vmatprep.subr.mxu0 0.0
        %4591 = vmatpush2.msra.mxu0 0.0
        %4592 = vmatprep.subr.mxu0 0.0
        %4593 = vmatpush2.msra.mxu0 0.0
        %4594 = vmatprep.subr.mxu0 0.0
        %4595 = vmatpush2.msra.mxu0 0.0
        %4596 = vmatprep.subr.mxu0 0.0
        %4597 = vmatpush2.msra.mxu0 0.0
        %4598 = vmatprep.subr.mxu0 0.0
        %4599 = vmatpush2.msra.mxu0 0.0
        %4600 = vmatprep.subr.mxu0 0.0
        %4601 = vmatpush2.msra.mxu0 0.0
        %4602 = vmatprep.subr.mxu0 0.0
        %4603 = vmatpush2.msra.mxu0 0.0
        %4604 = vmatprep.subr.mxu0 0.0
        %4605 = vmatpush2.msra.mxu0 0.0
        %4606 = vmatprep.subr.mxu0 0.0
        %4607 = vmatpush2.msra.mxu0 0.0
        %4608 = vmatprep.subr.mxu0 0.0
        %4609 = vmatpush2.msra.mxu0 0.0
        %4610 = vmatprep.subr.mxu0 0.0
        %4611 = vmatpush2.msra.mxu0 0.0
        %4612 = vmatprep.subr.mxu0 0.0
        %4613 = vmatpush2.msra.mxu0 0.0
        %4614 = vmatprep.mubr.f32.mxu0 0.0
        %v4615 = vand.u32 %v4540, 4294901760
        %v4616 = vsub.f32 %v4540, %v4615
        %v4617 = vand.u32 %v4616, 4294901760
        %v4618 = vsub.f32 %v4616, %v4617
        %v4619 = vand.u32 %v4618, 4294901760
        %4620 = vmatmul.mubr.f32.gmra.mxu0 %v4619
        %v4621 = vpop.f32.mrf.mxu0
        %v4622 = vadd.f32 0.0, %v4621
        %v4623 = vpop.f32.mrf.mxu0
        %4624 = vdwg.mxu0
        %4625 = vmatprep.subr.mxu0 0.0
        %4626 = vmatpush1.msra.mxu0 0.0
        %4627 = vmatprep.subr.mxu0 0.0
        %4628 = vmatpush1.msra.mxu0 0.0
        %4629 = vmatprep.subr.mxu0 0.0
        %4630 = vmatpush1.msra.mxu0 0.0
        %4631 = vmatprep.subr.mxu0 0.0
        %4632 = vmatpush1.msra.mxu0 0.0
        %4633 = vmatprep.subr.mxu0 0.0
        %4634 = vmatpush1.msra.mxu0 0.0
        %4635 = vmatprep.subr.mxu0 0.0
        %4636 = vmatpush1.msra.mxu0 0.0
        %4637 = vmatprep.subr.mxu0 0.0
        %4638 = vmatpush1.msra.mxu0 0.0
        %4639 = vmatprep.subr.mxu0 0.0
        %4640 = vmatpush1.msra.mxu0 0.0
        %4641 = vmatprep.subr.mxu0 0.0
        %v4642 = vand.u32 %v244, 4294901760
        %v4643 = vsub.f32 %v244, %v4642
        %v4644 = vand.u32 %v4643, 4294901760
        %v4645 = vsub.f32 %v4643, %v4644
        %v4646 = vand.u32 %v4645, 4294901760
        %4647 = vmatpush1.msra.mxu0 %v4646
        %4648 = vmatprep.subr.mxu0 0.0
        %v4649 = vand.u32 %v243, 4294901760
        %v4650 = vsub.f32 %v243, %v4649
        %v4651 = vand.u32 %v4650, 4294901760
        %v4652 = vsub.f32 %v4650, %v4651
        %v4653 = vand.u32 %v4652, 4294901760
        %4654 = vmatpush1.msra.mxu0 %v4653
        %4655 = vmatprep.subr.mxu0 0.0
        %v4656 = vand.u32 %v242, 4294901760
        %v4657 = vsub.f32 %v242, %v4656
        %v4658 = vand.u32 %v4657, 4294901760
        %v4659 = vsub.f32 %v4657, %v4658
        %v4660 = vand.u32 %v4659, 4294901760
        %4661 = vmatpush1.msra.mxu0 %v4660
        %4662 = vmatprep.subr.mxu0 0.0
        %v4663 = vand.u32 %v241, 4294901760
        %v4664 = vsub.f32 %v241, %v4663
        %v4665 = vand.u32 %v4664, 4294901760
        %v4666 = vsub.f32 %v4664, %v4665
        %v4667 = vand.u32 %v4666, 4294901760
        %4668 = vmatpush1.msra.mxu0 %v4667
        %4669 = vmatprep.subr.mxu0 0.0
        %v4670 = vand.u32 %v240, 4294901760
        %v4671 = vsub.f32 %v240, %v4670
        %v4672 = vand.u32 %v4671, 4294901760
        %v4673 = vsub.f32 %v4671, %v4672
        %v4674 = vand.u32 %v4673, 4294901760
        %4675 = vmatpush1.msra.mxu0 %v4674
        %4676 = vmatprep.subr.mxu0 0.0
        %v4677 = vand.u32 %v239, 4294901760
        %v4678 = vsub.f32 %v239, %v4677
        %v4679 = vand.u32 %v4678, 4294901760
        %v4680 = vsub.f32 %v4678, %v4679
        %v4681 = vand.u32 %v4680, 4294901760
        %4682 = vmatpush1.msra.mxu0 %v4681
        %4683 = vmatprep.subr.mxu0 0.0
        %v4684 = vand.u32 %v238, 4294901760
        %v4685 = vsub.f32 %v238, %v4684
        %v4686 = vand.u32 %v4685, 4294901760
        %v4687 = vsub.f32 %v4685, %v4686
        %v4688 = vand.u32 %v4687, 4294901760
        %4689 = vmatpush1.msra.mxu0 %v4688
        %4690 = vmatprep.subr.mxu0 0.0
        %v4691 = vand.u32 %v237, 4294901760
        %v4692 = vsub.f32 %v237, %v4691
        %v4693 = vand.u32 %v4692, 4294901760
        %v4694 = vsub.f32 %v4692, %v4693
        %v4695 = vand.u32 %v4694, 4294901760
        %4696 = vmatpush1.msra.mxu0 %v4695
        %4697 = vmatprep.subr.mxu0 0.0
        %4698 = vmatpush2.msra.mxu0 0.0
        %4699 = vmatprep.subr.mxu0 0.0
        %4700 = vmatpush2.msra.mxu0 0.0
        %4701 = vmatprep.subr.mxu0 0.0
        %4702 = vmatpush2.msra.mxu0 0.0
        %4703 = vmatprep.subr.mxu0 0.0
        %4704 = vmatpush2.msra.mxu0 0.0
        %4705 = vmatprep.subr.mxu0 0.0
        %4706 = vmatpush2.msra.mxu0 0.0
        %4707 = vmatprep.subr.mxu0 0.0
        %4708 = vmatpush2.msra.mxu0 0.0
        %4709 = vmatprep.subr.mxu0 0.0
        %4710 = vmatpush2.msra.mxu0 0.0
        %4711 = vmatprep.subr.mxu0 0.0
        %4712 = vmatpush2.msra.mxu0 0.0
        %4713 = vmatprep.subr.mxu0 0.0
        %4714 = vmatpush2.msra.mxu0 0.0
        %4715 = vmatprep.subr.mxu0 0.0
        %4716 = vmatpush2.msra.mxu0 0.0
        %4717 = vmatprep.subr.mxu0 0.0
        %4718 = vmatpush2.msra.mxu0 0.0
        %4719 = vmatprep.subr.mxu0 0.0
        %4720 = vmatpush2.msra.mxu0 0.0
        %4721 = vmatprep.subr.mxu0 0.0
        %4722 = vmatpush2.msra.mxu0 0.0
        %4723 = vmatprep.subr.mxu0 0.0
        %4724 = vmatpush2.msra.mxu0 0.0
        %4725 = vmatprep.subr.mxu0 0.0
        %4726 = vmatpush2.msra.mxu0 0.0
        %4727 = vmatprep.subr.mxu0 0.0
        %4728 = vmatpush2.msra.mxu0 0.0
        %4729 = vmatprep.mubr.f32.mxu0 0.0
        %v4730 = vand.u32 %v4540, 4294901760
        %4731 = vmatmul.mubr.f32.gmra.mxu0 %v4730
        %v4732 = vpop.f32.mrf.mxu0
        %v4733 = vadd.f32 %v4622, %v4732
        %v4734 = vpop.f32.mrf.mxu0
        %4735 = vdwg.mxu0
        %4736 = vmatprep.subr.mxu0 0.0
        %4737 = vmatpush1.msra.mxu0 0.0
        %4738 = vmatprep.subr.mxu0 0.0
        %4739 = vmatpush1.msra.mxu0 0.0
        %4740 = vmatprep.subr.mxu0 0.0
        %4741 = vmatpush1.msra.mxu0 0.0
        %4742 = vmatprep.subr.mxu0 0.0
        %4743 = vmatpush1.msra.mxu0 0.0
        %4744 = vmatprep.subr.mxu0 0.0
        %4745 = vmatpush1.msra.mxu0 0.0
        %4746 = vmatprep.subr.mxu0 0.0
        %4747 = vmatpush1.msra.mxu0 0.0
        %4748 = vmatprep.subr.mxu0 0.0
        %4749 = vmatpush1.msra.mxu0 0.0
        %4750 = vmatprep.subr.mxu0 0.0
        %4751 = vmatpush1.msra.mxu0 0.0
        %4752 = vmatprep.subr.mxu0 0.0
        %v4753 = vand.u32 %v244, 4294901760
        %v4754 = vsub.f32 %v244, %v4753
        %4755 = vmatpush1.msra.mxu0 %v4754
        %4756 = vmatprep.subr.mxu0 0.0
        %v4757 = vand.u32 %v243, 4294901760
        %v4758 = vsub.f32 %v243, %v4757
        %4759 = vmatpush1.msra.mxu0 %v4758
        %4760 = vmatprep.subr.mxu0 0.0
        %v4761 = vand.u32 %v242, 4294901760
        %v4762 = vsub.f32 %v242, %v4761
        %4763 = vmatpush1.msra.mxu0 %v4762
        %4764 = vmatprep.subr.mxu0 0.0
        %v4765 = vand.u32 %v241, 4294901760
        %v4766 = vsub.f32 %v241, %v4765
        %4767 = vmatpush1.msra.mxu0 %v4766
        %4768 = vmatprep.subr.mxu0 0.0
        %v4769 = vand.u32 %v240, 4294901760
        %v4770 = vsub.f32 %v240, %v4769
        %4771 = vmatpush1.msra.mxu0 %v4770
        %4772 = vmatprep.subr.mxu0 0.0
        %v4773 = vand.u32 %v239, 4294901760
        %v4774 = vsub.f32 %v239, %v4773
        %4775 = vmatpush1.msra.mxu0 %v4774
        %4776 = vmatprep.subr.mxu0 0.0
        %v4777 = vand.u32 %v238, 4294901760
        %v4778 = vsub.f32 %v238, %v4777
        %4779 = vmatpush1.msra.mxu0 %v4778
        %4780 = vmatprep.subr.mxu0 0.0
        %v4781 = vand.u32 %v237, 4294901760
        %v4782 = vsub.f32 %v237, %v4781
        %4783 = vmatpush1.msra.mxu0 %v4782
        %4784 = vmatprep.subr.mxu0 0.0
        %4785 = vmatpush2.msra.mxu0 0.0
        %4786 = vmatprep.subr.mxu0 0.0
        %4787 = vmatpush2.msra.mxu0 0.0
        %4788 = vmatprep.subr.mxu0 0.0
        %4789 = vmatpush2.msra.mxu0 0.0
        %4790 = vmatprep.subr.mxu0 0.0
        %4791 = vmatpush2.msra.mxu0 0.0
        %4792 = vmatprep.subr.mxu0 0.0
        %4793 = vmatpush2.msra.mxu0 0.0
        %4794 = vmatprep.subr.mxu0 0.0
        %4795 = vmatpush2.msra.mxu0 0.0
        %4796 = vmatprep.subr.mxu0 0.0
        %4797 = vmatpush2.msra.mxu0 0.0
        %4798 = vmatprep.subr.mxu0 0.0
        %4799 = vmatpush2.msra.mxu0 0.0
        %4800 = vmatprep.subr.mxu0 0.0
        %4801 = vmatpush2.msra.mxu0 0.0
        %4802 = vmatprep.subr.mxu0 0.0
        %4803 = vmatpush2.msra.mxu0 0.0
        %4804 = vmatprep.subr.mxu0 0.0
        %4805 = vmatpush2.msra.mxu0 0.0
        %4806 = vmatprep.subr.mxu0 0.0
        %4807 = vmatpush2.msra.mxu0 0.0
        %4808 = vmatprep.subr.mxu0 0.0
        %4809 = vmatpush2.msra.mxu0 0.0
        %4810 = vmatprep.subr.mxu0 0.0
        %4811 = vmatpush2.msra.mxu0 0.0
        %4812 = vmatprep.subr.mxu0 0.0
        %4813 = vmatpush2.msra.mxu0 0.0
        %4814 = vmatprep.subr.mxu0 0.0
        %4815 = vmatpush2.msra.mxu0 0.0
        %4816 = vmatprep.mubr.f32.mxu0 0.0
        %v4817 = vand.u32 %v4540, 4294901760
        %v4818 = vsub.f32 %v4540, %v4817
        %4819 = vmatmul.mubr.f32.gmra.mxu0 %v4818
        %v4820 = vpop.f32.mrf.mxu0
        %v4821 = vadd.f32 %v4733, %v4820
        %v4822 = vpop.f32.mrf.mxu0
        %4823 = vdwg.mxu0
        %4824 = vmatprep.subr.mxu0 0.0
        %4825 = vmatpush1.msra.mxu0 0.0
        %4826 = vmatprep.subr.mxu0 0.0
        %4827 = vmatpush1.msra.mxu0 0.0
        %4828 = vmatprep.subr.mxu0 0.0
        %4829 = vmatpush1.msra.mxu0 0.0
        %4830 = vmatprep.subr.mxu0 0.0
        %4831 = vmatpush1.msra.mxu0 0.0
        %4832 = vmatprep.subr.mxu0 0.0
        %4833 = vmatpush1.msra.mxu0 0.0
        %4834 = vmatprep.subr.mxu0 0.0
        %4835 = vmatpush1.msra.mxu0 0.0
        %4836 = vmatprep.subr.mxu0 0.0
        %4837 = vmatpush1.msra.mxu0 0.0
        %4838 = vmatprep.subr.mxu0 0.0
        %4839 = vmatpush1.msra.mxu0 0.0
        %4840 = vmatprep.subr.mxu0 0.0
        %v4841 = vand.u32 %v244, 4294901760
        %4842 = vmatpush1.msra.mxu0 %v4841
        %4843 = vmatprep.subr.mxu0 0.0
        %v4844 = vand.u32 %v243, 4294901760
        %4845 = vmatpush1.msra.mxu0 %v4844
        %4846 = vmatprep.subr.mxu0 0.0
        %v4847 = vand.u32 %v242, 4294901760
        %4848 = vmatpush1.msra.mxu0 %v4847
        %4849 = vmatprep.subr.mxu0 0.0
        %v4850 = vand.u32 %v241, 4294901760
        %4851 = vmatpush1.msra.mxu0 %v4850
        %4852 = vmatprep.subr.mxu0 0.0
        %v4853 = vand.u32 %v240, 4294901760
        %4854 = vmatpush1.msra.mxu0 %v4853
        %4855 = vmatprep.subr.mxu0 0.0
        %v4856 = vand.u32 %v239, 4294901760
        %4857 = vmatpush1.msra.mxu0 %v4856
        %4858 = vmatprep.subr.mxu0 0.0
        %v4859 = vand.u32 %v238, 4294901760
        %4860 = vmatpush1.msra.mxu0 %v4859
        %4861 = vmatprep.subr.mxu0 0.0
        %v4862 = vand.u32 %v237, 4294901760
        %4863 = vmatpush1.msra.mxu0 %v4862
        %4864 = vmatprep.subr.mxu0 0.0
        %4865 = vmatpush2.msra.mxu0 0.0
        %4866 = vmatprep.subr.mxu0 0.0
        %4867 = vmatpush2.msra.mxu0 0.0
        %4868 = vmatprep.subr.mxu0 0.0
        %4869 = vmatpush2.msra.mxu0 0.0
        %4870 = vmatprep.subr.mxu0 0.0
        %4871 = vmatpush2.msra.mxu0 0.0
        %4872 = vmatprep.subr.mxu0 0.0
        %4873 = vmatpush2.msra.mxu0 0.0
        %4874 = vmatprep.subr.mxu0 0.0
        %4875 = vmatpush2.msra.mxu0 0.0
        %4876 = vmatprep.subr.mxu0 0.0
        %4877 = vmatpush2.msra.mxu0 0.0
        %4878 = vmatprep.subr.mxu0 0.0
        %4879 = vmatpush2.msra.mxu0 0.0
        %4880 = vmatprep.subr.mxu0 0.0
        %4881 = vmatpush2.msra.mxu0 0.0
        %4882 = vmatprep.subr.mxu0 0.0
        %4883 = vmatpush2.msra.mxu0 0.0
        %4884 = vmatprep.subr.mxu0 0.0
        %4885 = vmatpush2.msra.mxu0 0.0
        %4886 = vmatprep.subr.mxu0 0.0
        %4887 = vmatpush2.msra.mxu0 0.0
        %4888 = vmatprep.subr.mxu0 0.0
        %4889 = vmatpush2.msra.mxu0 0.0
        %4890 = vmatprep.subr.mxu0 0.0
        %4891 = vmatpush2.msra.mxu0 0.0
        %4892 = vmatprep.subr.mxu0 0.0
        %4893 = vmatpush2.msra.mxu0 0.0
        %4894 = vmatprep.subr.mxu0 0.0
        %4895 = vmatpush2.msra.mxu0 0.0
        %4896 = vmatprep.mubr.f32.mxu0 0.0
        %v4897 = vand.u32 %v4540, 4294901760
        %v4898 = vsub.f32 %v4540, %v4897
        %v4899 = vand.u32 %v4898, 4294901760
        %4900 = vmatmul.mubr.f32.gmra.mxu0 %v4899
        %v4901 = vpop.f32.mrf.mxu0
        %v4902 = vadd.f32 %v4821, %v4901
        %v4903 = vpop.f32.mrf.mxu0
        %4904 = vdwg.mxu0
        %4905 = vmatprep.subr.mxu0 0.0
        %4906 = vmatpush1.msra.mxu0 0.0
        %4907 = vmatprep.subr.mxu0 0.0
        %4908 = vmatpush1.msra.mxu0 0.0
        %4909 = vmatprep.subr.mxu0 0.0
        %4910 = vmatpush1.msra.mxu0 0.0
        %4911 = vmatprep.subr.mxu0 0.0
        %4912 = vmatpush1.msra.mxu0 0.0
        %4913 = vmatprep.subr.mxu0 0.0
        %4914 = vmatpush1.msra.mxu0 0.0
        %4915 = vmatprep.subr.mxu0 0.0
        %4916 = vmatpush1.msra.mxu0 0.0
        %4917 = vmatprep.subr.mxu0 0.0
        %4918 = vmatpush1.msra.mxu0 0.0
        %4919 = vmatprep.subr.mxu0 0.0
        %4920 = vmatpush1.msra.mxu0 0.0
        %4921 = vmatprep.subr.mxu0 0.0
        %v4922 = vand.u32 %v244, 4294901760
        %v4923 = vsub.f32 %v244, %v4922
        %v4924 = vand.u32 %v4923, 4294901760
        %4925 = vmatpush1.msra.mxu0 %v4924
        %4926 = vmatprep.subr.mxu0 0.0
        %v4927 = vand.u32 %v243, 4294901760
        %v4928 = vsub.f32 %v243, %v4927
        %v4929 = vand.u32 %v4928, 4294901760
        %4930 = vmatpush1.msra.mxu0 %v4929
        %4931 = vmatprep.subr.mxu0 0.0
        %v4932 = vand.u32 %v242, 4294901760
        %v4933 = vsub.f32 %v242, %v4932
        %v4934 = vand.u32 %v4933, 4294901760
        %4935 = vmatpush1.msra.mxu0 %v4934
        %4936 = vmatprep.subr.mxu0 0.0
        %v4937 = vand.u32 %v241, 4294901760
        %v4938 = vsub.f32 %v241, %v4937
        %v4939 = vand.u32 %v4938, 4294901760
        %4940 = vmatpush1.msra.mxu0 %v4939
        %4941 = vmatprep.subr.mxu0 0.0
        %v4942 = vand.u32 %v240, 4294901760
        %v4943 = vsub.f32 %v240, %v4942
        %v4944 = vand.u32 %v4943, 4294901760
        %4945 = vmatpush1.msra.mxu0 %v4944
        %4946 = vmatprep.subr.mxu0 0.0
        %v4947 = vand.u32 %v239, 4294901760
        %v4948 = vsub.f32 %v239, %v4947
        %v4949 = vand.u32 %v4948, 4294901760
        %4950 = vmatpush1.msra.mxu0 %v4949
        %4951 = vmatprep.subr.mxu0 0.0
        %v4952 = vand.u32 %v238, 4294901760
        %v4953 = vsub.f32 %v238, %v4952
        %v4954 = vand.u32 %v4953, 4294901760
        %4955 = vmatpush1.msra.mxu0 %v4954
        %4956 = vmatprep.subr.mxu0 0.0
        %v4957 = vand.u32 %v237, 4294901760
        %v4958 = vsub.f32 %v237, %v4957
        %v4959 = vand.u32 %v4958, 4294901760
        %4960 = vmatpush1.msra.mxu0 %v4959
        %4961 = vmatprep.subr.mxu0 0.0
        %4962 = vmatpush2.msra.mxu0 0.0
        %4963 = vmatprep.subr.mxu0 0.0
        %4964 = vmatpush2.msra.mxu0 0.0
        %4965 = vmatprep.subr.mxu0 0.0
        %4966 = vmatpush2.msra.mxu0 0.0
        %4967 = vmatprep.subr.mxu0 0.0
        %4968 = vmatpush2.msra.mxu0 0.0
        %4969 = vmatprep.subr.mxu0 0.0
        %4970 = vmatpush2.msra.mxu0 0.0
        %4971 = vmatprep.subr.mxu0 0.0
        %4972 = vmatpush2.msra.mxu0 0.0
        %4973 = vmatprep.subr.mxu0 0.0
        %4974 = vmatpush2.msra.mxu0 0.0
        %4975 = vmatprep.subr.mxu0 0.0
        %4976 = vmatpush2.msra.mxu0 0.0
        %4977 = vmatprep.subr.mxu0 0.0
        %4978 = vmatpush2.msra.mxu0 0.0
        %4979 = vmatprep.subr.mxu0 0.0
        %4980 = vmatpush2.msra.mxu0 0.0
        %4981 = vmatprep.subr.mxu0 0.0
        %4982 = vmatpush2.msra.mxu0 0.0
        %4983 = vmatprep.subr.mxu0 0.0
        %4984 = vmatpush2.msra.mxu0 0.0
        %4985 = vmatprep.subr.mxu0 0.0
        %4986 = vmatpush2.msra.mxu0 0.0
        %4987 = vmatprep.subr.mxu0 0.0
        %4988 = vmatpush2.msra.mxu0 0.0
        %4989 = vmatprep.subr.mxu0 0.0
        %4990 = vmatpush2.msra.mxu0 0.0
        %4991 = vmatprep.subr.mxu0 0.0
        %4992 = vmatpush2.msra.mxu0 0.0
        %4993 = vmatprep.mubr.f32.mxu0 0.0
        %v4994 = vand.u32 %v4540, 4294901760
        %4995 = vmatmul.mubr.f32.gmra.mxu0 %v4994
        %v4996 = vpop.f32.mrf.mxu0
        %v4997 = vadd.f32 %v4902, %v4996
        %v4998 = vpop.f32.mrf.mxu0
        %4999 = vdwg.mxu0
        %5000 = vmatprep.subr.mxu0 0.0
        %5001 = vmatpush1.msra.mxu0 0.0
        %5002 = vmatprep.subr.mxu0 0.0
        %5003 = vmatpush1.msra.mxu0 0.0
        %5004 = vmatprep.subr.mxu0 0.0
        %5005 = vmatpush1.msra.mxu0 0.0
        %5006 = vmatprep.subr.mxu0 0.0
        %5007 = vmatpush1.msra.mxu0 0.0
        %5008 = vmatprep.subr.mxu0 0.0
        %5009 = vmatpush1.msra.mxu0 0.0
        %5010 = vmatprep.subr.mxu0 0.0
        %5011 = vmatpush1.msra.mxu0 0.0
        %5012 = vmatprep.subr.mxu0 0.0
        %5013 = vmatpush1.msra.mxu0 0.0
        %5014 = vmatprep.subr.mxu0 0.0
        %5015 = vmatpush1.msra.mxu0 0.0
        %5016 = vmatprep.subr.mxu0 0.0
        %v5017 = vand.u32 %v244, 4294901760
        %5018 = vmatpush1.msra.mxu0 %v5017
        %5019 = vmatprep.subr.mxu0 0.0
        %v5020 = vand.u32 %v243, 4294901760
        %5021 = vmatpush1.msra.mxu0 %v5020
        %5022 = vmatprep.subr.mxu0 0.0
        %v5023 = vand.u32 %v242, 4294901760
        %5024 = vmatpush1.msra.mxu0 %v5023
        %5025 = vmatprep.subr.mxu0 0.0
        %v5026 = vand.u32 %v241, 4294901760
        %5027 = vmatpush1.msra.mxu0 %v5026
        %5028 = vmatprep.subr.mxu0 0.0
        %v5029 = vand.u32 %v240, 4294901760
        %5030 = vmatpush1.msra.mxu0 %v5029
        %5031 = vmatprep.subr.mxu0 0.0
        %v5032 = vand.u32 %v239, 4294901760
        %5033 = vmatpush1.msra.mxu0 %v5032
        %5034 = vmatprep.subr.mxu0 0.0
        %v5035 = vand.u32 %v238, 4294901760
        %5036 = vmatpush1.msra.mxu0 %v5035
        %5037 = vmatprep.subr.mxu0 0.0
        %v5038 = vand.u32 %v237, 4294901760
        %5039 = vmatpush1.msra.mxu0 %v5038
        %5040 = vmatprep.subr.mxu0 0.0
        %5041 = vmatpush2.msra.mxu0 0.0
        %5042 = vmatprep.subr.mxu0 0.0
        %5043 = vmatpush2.msra.mxu0 0.0
        %5044 = vmatprep.subr.mxu0 0.0
        %5045 = vmatpush2.msra.mxu0 0.0
        %5046 = vmatprep.subr.mxu0 0.0
        %5047 = vmatpush2.msra.mxu0 0.0
        %5048 = vmatprep.subr.mxu0 0.0
        %5049 = vmatpush2.msra.mxu0 0.0
        %5050 = vmatprep.subr.mxu0 0.0
        %5051 = vmatpush2.msra.mxu0 0.0
        %5052 = vmatprep.subr.mxu0 0.0
        %5053 = vmatpush2.msra.mxu0 0.0
        %5054 = vmatprep.subr.mxu0 0.0
        %5055 = vmatpush2.msra.mxu0 0.0
        %5056 = vmatprep.subr.mxu0 0.0
        %5057 = vmatpush2.msra.mxu0 0.0
        %5058 = vmatprep.subr.mxu0 0.0
        %5059 = vmatpush2.msra.mxu0 0.0
        %5060 = vmatprep.subr.mxu0 0.0
        %5061 = vmatpush2.msra.mxu0 0.0
        %5062 = vmatprep.subr.mxu0 0.0
        %5063 = vmatpush2.msra.mxu0 0.0
        %5064 = vmatprep.subr.mxu0 0.0
        %5065 = vmatpush2.msra.mxu0 0.0
        %5066 = vmatprep.subr.mxu0 0.0
        %5067 = vmatpush2.msra.mxu0 0.0
        %5068 = vmatprep.subr.mxu0 0.0
        %5069 = vmatpush2.msra.mxu0 0.0
        %5070 = vmatprep.subr.mxu0 0.0
        %5071 = vmatpush2.msra.mxu0 0.0
        %5072 = vmatprep.mubr.f32.mxu0 0.0
        %v5073 = vand.u32 %v4540, 4294901760
        %5074 = vmatmul.mubr.f32.gmra.mxu0 %v5073
        %v5075 = vpop.f32.mrf.mxu0
        %v5076 = vadd.f32 %v4997, %v5075
        %v5077 = vpop.f32.mrf.mxu0
        %5078 = vdwg.mxu0
        %v5080 = vcombine.high %v5076, %v5076
        %v5082 = vunpack.c.l.s4 1966171168
        %v5083 = vunpack.c.0.s8 %v5082
        %v5084 = vlaneseq
        %v5085 = vshrl.u32 %v5084, 7
        %v5086 = vsub.s32 %v5083, %v5085
        %v5087 = vrot.slane %v5076, %v5086
        %v5089 = vunpack.c.l.s4 1966171168
        %v5090 = vunpack.c.0.s8 %v5089
        %v5091 = vlaneseq
        %v5092 = vshrl.u32 %v5091, 7
        %v5093 = vsub.s32 %v5090, %v5092
        %v5094 = vrot.slane %v5080, %v5093
        %v5095 = vcombine.high %v5087, %v5087
        %v5096 = vcombine.high %v5094, %v5094
        %v5098 = vunpack.c.l.s4 1966171168
        %v5099 = vunpack.c.0.s8 %v5098
        %v5100 = vlaneseq
        %v5101 = vshrl.u32 %v5100, 7
        %v5102 = vsub.s32 %v5099, %v5101
        %v5103 = vrot.slane %v5087, %v5102
        %v5105 = vunpack.c.l.s4 1966171168
        %v5106 = vunpack.c.0.s8 %v5105
        %v5107 = vlaneseq
        %v5108 = vshrl.u32 %v5107, 7
        %v5109 = vsub.s32 %v5106, %v5108
        %v5110 = vrot.slane %v5094, %v5109
        %v5112 = vunpack.c.l.s4 1966171168
        %v5113 = vunpack.c.0.s8 %v5112
        %v5114 = vlaneseq
        %v5115 = vshrl.u32 %v5114, 7
        %v5116 = vsub.s32 %v5113, %v5115
        %v5117 = vrot.slane %v5095, %v5116
        %v5119 = vunpack.c.l.s4 1966171168
        %v5120 = vunpack.c.0.s8 %v5119
        %v5121 = vlaneseq
        %v5122 = vshrl.u32 %v5121, 7
        %v5123 = vsub.s32 %v5120, %v5122
        %v5124 = vrot.slane %v5096, %v5123
        %v5125 = vcombine.high %v5103, %v5103
        %v5126 = vcombine.high %v5110, %v5110
        %v5127 = vcombine.high %v5117, %v5117
        %v5128 = vcombine.high %v5124, %v5124
        %v5129 = vsel %vm462, 1, 0
        %vm5130 = vcmp.eq.s32.totalorder %v5129, 1
        %v5131 = vlaneseq
        %v5132 = vshrl.u32 %v5131, 7
        %v5133 = vsub.s32 0, %v5132
        %v5134 = vrot.slane %v5103, %v5133
        %v5135 = vlaneseq
        %v5136 = vshrl.u32 %v5135, 7
        %v5137 = vsub.s32 0, %v5136
        %v5138 = vrot.slane %v5117, %v5137
        %v5139 = vlaneseq
        %v5140 = vshrl.u32 %v5139, 7
        %v5141 = vsub.s32 0, %v5140
        %v5142 = vrot.slane %v5125, %v5141
        %v5143 = vlaneseq
        %v5144 = vshrl.u32 %v5143, 7
        %v5145 = vsub.s32 0, %v5144
        %v5146 = vrot.slane %v5127, %v5145
        %v5147 = vlaneseq
        %v5148 = vshrl.u32 %v5147, 7
        %v5149 = vsub.s32 0, %v5148
        %v5150 = vrot.slane %v5110, %v5149
        %v5151 = vlaneseq
        %v5152 = vshrl.u32 %v5151, 7
        %v5153 = vsub.s32 0, %v5152
        %v5154 = vrot.slane %v5124, %v5153
        %v5155 = vlaneseq
        %v5156 = vshrl.u32 %v5155, 7
        %v5157 = vsub.s32 0, %v5156
        %v5158 = vrot.slane %v5126, %v5157
        %v5159 = vlaneseq
        %v5160 = vshrl.u32 %v5159, 7
        %v5161 = vsub.s32 0, %v5160
        %v5162 = vrot.slane %v5128, %v5161
        %v5171 = vsel %vm5130, %v5134, 0.0
        %v5172 = vsel %vm5130, %v5138, 0.0
        %v5173 = vsel %vm5130, %v5142, 0.0
        %v5174 = vsel %vm5130, %v5146, 0.0
        %v5175 = vsel %vm5130, %v5150, 0.0
        %v5176 = vsel %vm5130, %v5154, 0.0
        %v5177 = vsel %vm5130, %v5158, 0.0
        %v5178 = vsel %vm5130, %v5162, 0.0
        %v5179 = vadd.f32 %v4502, %v5171
        %v5180 = vadd.f32 %v4503, %v5172
        %v5181 = vadd.f32 %v4504, %v5173
        %v5182 = vadd.f32 %v4505, %v5174
        %v5183 = vadd.f32 %v4506, %v5175
        %v5184 = vadd.f32 %v4507, %v5176
        %v5185 = vadd.f32 %v4508, %v5177
        %v5186 = vadd.f32 %v4509, %v5178
        %v5187 = vsel %vm4536, inf, %v4510
        %v5188 = vsel %vm266, %v5187, inf
        %5189 = vmin.xlane.f32.xlu0 %v5188
        %v5190 = vpop.xlane.xlu0 %5189
        %vm5191 = vcmp.eq.f32.partialorder %v5187, %v5190
        %v5192 = vsel %vm5191, %v246, 64
        %v5193 = vsel %vm266, %v5192, 2147483647
        %v5194 = vand.u32 %v5193, 65535
        %v5195 = vshra.s32 %v5193, 16
        %v5196 = vcvt.s32.f32 %v5194
        %v5197 = vcvt.s32.f32 %v5195
        %5198 = vmin.xlane.f32.xlu0 %v5197
        %v5199 = vpop.xlane.xlu0 %5198
        %vm5200 = vcmp.eq.f32.partialorder %v5197, %v5199
        %v5201 = vsel %vm5200, %v5196, inf
        %5202 = vmin.xlane.f32.xlu0 %v5201
        %v5203 = vpop.xlane.xlu0 %5202
        %v5204 = vcvt.f32.s32 %v5203
        %v5205 = vcvt.f32.s32 %v5199
        %v5206 = vshll.u32 %v5205, 16
        %v5207 = vadd.s32 %v5206, %v5204
        %vm5208 = vcmp.eq.s32.totalorder %v246, 6
        %v5209 = vsel %vm5208, 1, 0
        %vm5210 = vcmp.eq.s32.totalorder %v5209, 1
        %v5211 = vsel %vm5210, %v5207, 0
        %v5212 = vadd.s32 %v4535, %v5211
        %vm5213 = vcmp.eq.s32.totalorder %v246, %v5207
        %v5214 = vsel %vm5213, 1, 0
        %v5215 = vcvt.s32.f32 %v5214
        %v5217 = vsel %vm266, %v5215, 0
        %5219 = vmatprep.subr.mxu0 0.0
        %5220 = vmatpush1.msra.mxu0 0.0
        %5221 = vmatprep.subr.mxu0 0.0
        %5222 = vmatpush1.msra.mxu0 0.0
        %5223 = vmatprep.subr.mxu0 0.0
        %5224 = vmatpush1.msra.mxu0 0.0
        %5225 = vmatprep.subr.mxu0 0.0
        %5226 = vmatpush1.msra.mxu0 0.0
        %5227 = vmatprep.subr.mxu0 0.0
        %5228 = vmatpush1.msra.mxu0 0.0
        %5229 = vmatprep.subr.mxu0 0.0
        %5230 = vmatpush1.msra.mxu0 0.0
        %5231 = vmatprep.subr.mxu0 0.0
        %5232 = vmatpush1.msra.mxu0 0.0
        %5233 = vmatprep.subr.mxu0 0.0
        %5234 = vmatpush1.msra.mxu0 0.0
        %5235 = vmatprep.subr.mxu0 0.0
        %v5236 = vand.u32 %v244, 4294901760
        %5237 = vmatpush1.msra.mxu0 %v5236
        %5238 = vmatprep.subr.mxu0 0.0
        %v5239 = vand.u32 %v243, 4294901760
        %5240 = vmatpush1.msra.mxu0 %v5239
        %5241 = vmatprep.subr.mxu0 0.0
        %v5242 = vand.u32 %v242, 4294901760
        %5243 = vmatpush1.msra.mxu0 %v5242
        %5244 = vmatprep.subr.mxu0 0.0
        %v5245 = vand.u32 %v241, 4294901760
        %5246 = vmatpush1.msra.mxu0 %v5245
        %5247 = vmatprep.subr.mxu0 0.0
        %v5248 = vand.u32 %v240, 4294901760
        %5249 = vmatpush1.msra.mxu0 %v5248
        %5250 = vmatprep.subr.mxu0 0.0
        %v5251 = vand.u32 %v239, 4294901760
        %5252 = vmatpush1.msra.mxu0 %v5251
        %5253 = vmatprep.subr.mxu0 0.0
        %v5254 = vand.u32 %v238, 4294901760
        %5255 = vmatpush1.msra.mxu0 %v5254
        %5256 = vmatprep.subr.mxu0 0.0
        %v5257 = vand.u32 %v237, 4294901760
        %5258 = vmatpush1.msra.mxu0 %v5257
        %5259 = vmatprep.subr.mxu0 0.0
        %5260 = vmatpush2.msra.mxu0 0.0
        %5261 = vmatprep.subr.mxu0 0.0
        %5262 = vmatpush2.msra.mxu0 0.0
        %5263 = vmatprep.subr.mxu0 0.0
        %5264 = vmatpush2.msra.mxu0 0.0
        %5265 = vmatprep.subr.mxu0 0.0
        %5266 = vmatpush2.msra.mxu0 0.0
        %5267 = vmatprep.subr.mxu0 0.0
        %5268 = vmatpush2.msra.mxu0 0.0
        %5269 = vmatprep.subr.mxu0 0.0
        %5270 = vmatpush2.msra.mxu0 0.0
        %5271 = vmatprep.subr.mxu0 0.0
        %5272 = vmatpush2.msra.mxu0 0.0
        %5273 = vmatprep.subr.mxu0 0.0
        %5274 = vmatpush2.msra.mxu0 0.0
        %5275 = vmatprep.subr.mxu0 0.0
        %5276 = vmatpush2.msra.mxu0 0.0
        %5277 = vmatprep.subr.mxu0 0.0
        %5278 = vmatpush2.msra.mxu0 0.0
        %5279 = vmatprep.subr.mxu0 0.0
        %5280 = vmatpush2.msra.mxu0 0.0
        %5281 = vmatprep.subr.mxu0 0.0
        %5282 = vmatpush2.msra.mxu0 0.0
        %5283 = vmatprep.subr.mxu0 0.0
        %5284 = vmatpush2.msra.mxu0 0.0
        %5285 = vmatprep.subr.mxu0 0.0
        %5286 = vmatpush2.msra.mxu0 0.0
        %5287 = vmatprep.subr.mxu0 0.0
        %5288 = vmatpush2.msra.mxu0 0.0
        %5289 = vmatprep.subr.mxu0 0.0
        %5290 = vmatpush2.msra.mxu0 0.0
        %5291 = vmatprep.mubr.f32.mxu0 0.0
        %v5292 = vand.u32 %v5217, 4294901760
        %v5293 = vsub.f32 %v5217, %v5292
        %v5294 = vand.u32 %v5293, 4294901760
        %v5295 = vsub.f32 %v5293, %v5294
        %v5296 = vand.u32 %v5295, 4294901760
        %5297 = vmatmul.mubr.f32.gmra.mxu0 %v5296
        %v5298 = vpop.f32.mrf.mxu0
        %v5299 = vadd.f32 0.0, %v5298
        %v5300 = vpop.f32.mrf.mxu0
        %5301 = vdwg.mxu0
        %5302 = vmatprep.subr.mxu0 0.0
        %5303 = vmatpush1.msra.mxu0 0.0
        %5304 = vmatprep.subr.mxu0 0.0
        %5305 = vmatpush1.msra.mxu0 0.0
        %5306 = vmatprep.subr.mxu0 0.0
        %5307 = vmatpush1.msra.mxu0 0.0
        %5308 = vmatprep.subr.mxu0 0.0
        %5309 = vmatpush1.msra.mxu0 0.0
        %5310 = vmatprep.subr.mxu0 0.0
        %5311 = vmatpush1.msra.mxu0 0.0
        %5312 = vmatprep.subr.mxu0 0.0
        %5313 = vmatpush1.msra.mxu0 0.0
        %5314 = vmatprep.subr.mxu0 0.0
        %5315 = vmatpush1.msra.mxu0 0.0
        %5316 = vmatprep.subr.mxu0 0.0
        %5317 = vmatpush1.msra.mxu0 0.0
        %5318 = vmatprep.subr.mxu0 0.0
        %v5319 = vand.u32 %v244, 4294901760
        %v5320 = vsub.f32 %v244, %v5319
        %v5321 = vand.u32 %v5320, 4294901760
        %v5322 = vsub.f32 %v5320, %v5321
        %v5323 = vand.u32 %v5322, 4294901760
        %5324 = vmatpush1.msra.mxu0 %v5323
        %5325 = vmatprep.subr.mxu0 0.0
        %v5326 = vand.u32 %v243, 4294901760
        %v5327 = vsub.f32 %v243, %v5326
        %v5328 = vand.u32 %v5327, 4294901760
        %v5329 = vsub.f32 %v5327, %v5328
        %v5330 = vand.u32 %v5329, 4294901760
        %5331 = vmatpush1.msra.mxu0 %v5330
        %5332 = vmatprep.subr.mxu0 0.0
        %v5333 = vand.u32 %v242, 4294901760
        %v5334 = vsub.f32 %v242, %v5333
        %v5335 = vand.u32 %v5334, 4294901760
        %v5336 = vsub.f32 %v5334, %v5335
        %v5337 = vand.u32 %v5336, 4294901760
        %5338 = vmatpush1.msra.mxu0 %v5337
        %5339 = vmatprep.subr.mxu0 0.0
        %v5340 = vand.u32 %v241, 4294901760
        %v5341 = vsub.f32 %v241, %v5340
        %v5342 = vand.u32 %v5341, 4294901760
        %v5343 = vsub.f32 %v5341, %v5342
        %v5344 = vand.u32 %v5343, 4294901760
        %5345 = vmatpush1.msra.mxu0 %v5344
        %5346 = vmatprep.subr.mxu0 0.0
        %v5347 = vand.u32 %v240, 4294901760
        %v5348 = vsub.f32 %v240, %v5347
        %v5349 = vand.u32 %v5348, 4294901760
        %v5350 = vsub.f32 %v5348, %v5349
        %v5351 = vand.u32 %v5350, 4294901760
        %5352 = vmatpush1.msra.mxu0 %v5351
        %5353 = vmatprep.subr.mxu0 0.0
        %v5354 = vand.u32 %v239, 4294901760
        %v5355 = vsub.f32 %v239, %v5354
        %v5356 = vand.u32 %v5355, 4294901760
        %v5357 = vsub.f32 %v5355, %v5356
        %v5358 = vand.u32 %v5357, 4294901760
        %5359 = vmatpush1.msra.mxu0 %v5358
        %5360 = vmatprep.subr.mxu0 0.0
        %v5361 = vand.u32 %v238, 4294901760
        %v5362 = vsub.f32 %v238, %v5361
        %v5363 = vand.u32 %v5362, 4294901760
        %v5364 = vsub.f32 %v5362, %v5363
        %v5365 = vand.u32 %v5364, 4294901760
        %5366 = vmatpush1.msra.mxu0 %v5365
        %5367 = vmatprep.subr.mxu0 0.0
        %v5368 = vand.u32 %v237, 4294901760
        %v5369 = vsub.f32 %v237, %v5368
        %v5370 = vand.u32 %v5369, 4294901760
        %v5371 = vsub.f32 %v5369, %v5370
        %v5372 = vand.u32 %v5371, 4294901760
        %5373 = vmatpush1.msra.mxu0 %v5372
        %5374 = vmatprep.subr.mxu0 0.0
        %5375 = vmatpush2.msra.mxu0 0.0
        %5376 = vmatprep.subr.mxu0 0.0
        %5377 = vmatpush2.msra.mxu0 0.0
        %5378 = vmatprep.subr.mxu0 0.0
        %5379 = vmatpush2.msra.mxu0 0.0
        %5380 = vmatprep.subr.mxu0 0.0
        %5381 = vmatpush2.msra.mxu0 0.0
        %5382 = vmatprep.subr.mxu0 0.0
        %5383 = vmatpush2.msra.mxu0 0.0
        %5384 = vmatprep.subr.mxu0 0.0
        %5385 = vmatpush2.msra.mxu0 0.0
        %5386 = vmatprep.subr.mxu0 0.0
        %5387 = vmatpush2.msra.mxu0 0.0
        %5388 = vmatprep.subr.mxu0 0.0
        %5389 = vmatpush2.msra.mxu0 0.0
        %5390 = vmatprep.subr.mxu0 0.0
        %5391 = vmatpush2.msra.mxu0 0.0
        %5392 = vmatprep.subr.mxu0 0.0
        %5393 = vmatpush2.msra.mxu0 0.0
        %5394 = vmatprep.subr.mxu0 0.0
        %5395 = vmatpush2.msra.mxu0 0.0
        %5396 = vmatprep.subr.mxu0 0.0
        %5397 = vmatpush2.msra.mxu0 0.0
        %5398 = vmatprep.subr.mxu0 0.0
        %5399 = vmatpush2.msra.mxu0 0.0
        %5400 = vmatprep.subr.mxu0 0.0
        %5401 = vmatpush2.msra.mxu0 0.0
        %5402 = vmatprep.subr.mxu0 0.0
        %5403 = vmatpush2.msra.mxu0 0.0
        %5404 = vmatprep.subr.mxu0 0.0
        %5405 = vmatpush2.msra.mxu0 0.0
        %5406 = vmatprep.mubr.f32.mxu0 0.0
        %v5407 = vand.u32 %v5217, 4294901760
        %5408 = vmatmul.mubr.f32.gmra.mxu0 %v5407
        %v5409 = vpop.f32.mrf.mxu0
        %v5410 = vadd.f32 %v5299, %v5409
        %v5411 = vpop.f32.mrf.mxu0
        %5412 = vdwg.mxu0
        %5413 = vmatprep.subr.mxu0 0.0
        %5414 = vmatpush1.msra.mxu0 0.0
        %5415 = vmatprep.subr.mxu0 0.0
        %5416 = vmatpush1.msra.mxu0 0.0
        %5417 = vmatprep.subr.mxu0 0.0
        %5418 = vmatpush1.msra.mxu0 0.0
        %5419 = vmatprep.subr.mxu0 0.0
        %5420 = vmatpush1.msra.mxu0 0.0
        %5421 = vmatprep.subr.mxu0 0.0
        %5422 = vmatpush1.msra.mxu0 0.0
        %5423 = vmatprep.subr.mxu0 0.0
        %5424 = vmatpush1.msra.mxu0 0.0
        %5425 = vmatprep.subr.mxu0 0.0
        %5426 = vmatpush1.msra.mxu0 0.0
        %5427 = vmatprep.subr.mxu0 0.0
        %5428 = vmatpush1.msra.mxu0 0.0
        %5429 = vmatprep.subr.mxu0 0.0
        %v5430 = vand.u32 %v244, 4294901760
        %v5431 = vsub.f32 %v244, %v5430
        %5432 = vmatpush1.msra.mxu0 %v5431
        %5433 = vmatprep.subr.mxu0 0.0
        %v5434 = vand.u32 %v243, 4294901760
        %v5435 = vsub.f32 %v243, %v5434
        %5436 = vmatpush1.msra.mxu0 %v5435
        %5437 = vmatprep.subr.mxu0 0.0
        %v5438 = vand.u32 %v242, 4294901760
        %v5439 = vsub.f32 %v242, %v5438
        %5440 = vmatpush1.msra.mxu0 %v5439
        %5441 = vmatprep.subr.mxu0 0.0
        %v5442 = vand.u32 %v241, 4294901760
        %v5443 = vsub.f32 %v241, %v5442
        %5444 = vmatpush1.msra.mxu0 %v5443
        %5445 = vmatprep.subr.mxu0 0.0
        %v5446 = vand.u32 %v240, 4294901760
        %v5447 = vsub.f32 %v240, %v5446
        %5448 = vmatpush1.msra.mxu0 %v5447
        %5449 = vmatprep.subr.mxu0 0.0
        %v5450 = vand.u32 %v239, 4294901760
        %v5451 = vsub.f32 %v239, %v5450
        %5452 = vmatpush1.msra.mxu0 %v5451
        %5453 = vmatprep.subr.mxu0 0.0
        %v5454 = vand.u32 %v238, 4294901760
        %v5455 = vsub.f32 %v238, %v5454
        %5456 = vmatpush1.msra.mxu0 %v5455
        %5457 = vmatprep.subr.mxu0 0.0
        %v5458 = vand.u32 %v237, 4294901760
        %v5459 = vsub.f32 %v237, %v5458
        %5460 = vmatpush1.msra.mxu0 %v5459
        %5461 = vmatprep.subr.mxu0 0.0
        %5462 = vmatpush2.msra.mxu0 0.0
        %5463 = vmatprep.subr.mxu0 0.0
        %5464 = vmatpush2.msra.mxu0 0.0
        %5465 = vmatprep.subr.mxu0 0.0
        %5466 = vmatpush2.msra.mxu0 0.0
        %5467 = vmatprep.subr.mxu0 0.0
        %5468 = vmatpush2.msra.mxu0 0.0
        %5469 = vmatprep.subr.mxu0 0.0
        %5470 = vmatpush2.msra.mxu0 0.0
        %5471 = vmatprep.subr.mxu0 0.0
        %5472 = vmatpush2.msra.mxu0 0.0
        %5473 = vmatprep.subr.mxu0 0.0
        %5474 = vmatpush2.msra.mxu0 0.0
        %5475 = vmatprep.subr.mxu0 0.0
        %5476 = vmatpush2.msra.mxu0 0.0
        %5477 = vmatprep.subr.mxu0 0.0
        %5478 = vmatpush2.msra.mxu0 0.0
        %5479 = vmatprep.subr.mxu0 0.0
        %5480 = vmatpush2.msra.mxu0 0.0
        %5481 = vmatprep.subr.mxu0 0.0
        %5482 = vmatpush2.msra.mxu0 0.0
        %5483 = vmatprep.subr.mxu0 0.0
        %5484 = vmatpush2.msra.mxu0 0.0
        %5485 = vmatprep.subr.mxu0 0.0
        %5486 = vmatpush2.msra.mxu0 0.0
        %5487 = vmatprep.subr.mxu0 0.0
        %5488 = vmatpush2.msra.mxu0 0.0
        %5489 = vmatprep.subr.mxu0 0.0
        %5490 = vmatpush2.msra.mxu0 0.0
        %5491 = vmatprep.subr.mxu0 0.0
        %5492 = vmatpush2.msra.mxu0 0.0
        %5493 = vmatprep.mubr.f32.mxu0 0.0
        %v5494 = vand.u32 %v5217, 4294901760
        %v5495 = vsub.f32 %v5217, %v5494
        %5496 = vmatmul.mubr.f32.gmra.mxu0 %v5495
        %v5497 = vpop.f32.mrf.mxu0
        %v5498 = vadd.f32 %v5410, %v5497
        %v5499 = vpop.f32.mrf.mxu0
        %5500 = vdwg.mxu0
        %5501 = vmatprep.subr.mxu0 0.0
        %5502 = vmatpush1.msra.mxu0 0.0
        %5503 = vmatprep.subr.mxu0 0.0
        %5504 = vmatpush1.msra.mxu0 0.0
        %5505 = vmatprep.subr.mxu0 0.0
        %5506 = vmatpush1.msra.mxu0 0.0
        %5507 = vmatprep.subr.mxu0 0.0
        %5508 = vmatpush1.msra.mxu0 0.0
        %5509 = vmatprep.subr.mxu0 0.0
        %5510 = vmatpush1.msra.mxu0 0.0
        %5511 = vmatprep.subr.mxu0 0.0
        %5512 = vmatpush1.msra.mxu0 0.0
        %5513 = vmatprep.subr.mxu0 0.0
        %5514 = vmatpush1.msra.mxu0 0.0
        %5515 = vmatprep.subr.mxu0 0.0
        %5516 = vmatpush1.msra.mxu0 0.0
        %5517 = vmatprep.subr.mxu0 0.0
        %v5518 = vand.u32 %v244, 4294901760
        %5519 = vmatpush1.msra.mxu0 %v5518
        %5520 = vmatprep.subr.mxu0 0.0
        %v5521 = vand.u32 %v243, 4294901760
        %5522 = vmatpush1.msra.mxu0 %v5521
        %5523 = vmatprep.subr.mxu0 0.0
        %v5524 = vand.u32 %v242, 4294901760
        %5525 = vmatpush1.msra.mxu0 %v5524
        %5526 = vmatprep.subr.mxu0 0.0
        %v5527 = vand.u32 %v241, 4294901760
        %5528 = vmatpush1.msra.mxu0 %v5527
        %5529 = vmatprep.subr.mxu0 0.0
        %v5530 = vand.u32 %v240, 4294901760
        %5531 = vmatpush1.msra.mxu0 %v5530
        %5532 = vmatprep.subr.mxu0 0.0
        %v5533 = vand.u32 %v239, 4294901760
        %5534 = vmatpush1.msra.mxu0 %v5533
        %5535 = vmatprep.subr.mxu0 0.0
        %v5536 = vand.u32 %v238, 4294901760
        %5537 = vmatpush1.msra.mxu0 %v5536
        %5538 = vmatprep.subr.mxu0 0.0
        %v5539 = vand.u32 %v237, 4294901760
        %5540 = vmatpush1.msra.mxu0 %v5539
        %5541 = vmatprep.subr.mxu0 0.0
        %5542 = vmatpush2.msra.mxu0 0.0
        %5543 = vmatprep.subr.mxu0 0.0
        %5544 = vmatpush2.msra.mxu0 0.0
        %5545 = vmatprep.subr.mxu0 0.0
        %5546 = vmatpush2.msra.mxu0 0.0
        %5547 = vmatprep.subr.mxu0 0.0
        %5548 = vmatpush2.msra.mxu0 0.0
        %5549 = vmatprep.subr.mxu0 0.0
        %5550 = vmatpush2.msra.mxu0 0.0
        %5551 = vmatprep.subr.mxu0 0.0
        %5552 = vmatpush2.msra.mxu0 0.0
        %5553 = vmatprep.subr.mxu0 0.0
        %5554 = vmatpush2.msra.mxu0 0.0
        %5555 = vmatprep.subr.mxu0 0.0
        %5556 = vmatpush2.msra.mxu0 0.0
        %5557 = vmatprep.subr.mxu0 0.0
        %5558 = vmatpush2.msra.mxu0 0.0
        %5559 = vmatprep.subr.mxu0 0.0
        %5560 = vmatpush2.msra.mxu0 0.0
        %5561 = vmatprep.subr.mxu0 0.0
        %5562 = vmatpush2.msra.mxu0 0.0
        %5563 = vmatprep.subr.mxu0 0.0
        %5564 = vmatpush2.msra.mxu0 0.0
        %5565 = vmatprep.subr.mxu0 0.0
        %5566 = vmatpush2.msra.mxu0 0.0
        %5567 = vmatprep.subr.mxu0 0.0
        %5568 = vmatpush2.msra.mxu0 0.0
        %5569 = vmatprep.subr.mxu0 0.0
        %5570 = vmatpush2.msra.mxu0 0.0
        %5571 = vmatprep.subr.mxu0 0.0
        %5572 = vmatpush2.msra.mxu0 0.0
        %5573 = vmatprep.mubr.f32.mxu0 0.0
        %v5574 = vand.u32 %v5217, 4294901760
        %v5575 = vsub.f32 %v5217, %v5574
        %v5576 = vand.u32 %v5575, 4294901760
        %5577 = vmatmul.mubr.f32.gmra.mxu0 %v5576
        %v5578 = vpop.f32.mrf.mxu0
        %v5579 = vadd.f32 %v5498, %v5578
        %v5580 = vpop.f32.mrf.mxu0
        %5581 = vdwg.mxu0
        %5582 = vmatprep.subr.mxu0 0.0
        %5583 = vmatpush1.msra.mxu0 0.0
        %5584 = vmatprep.subr.mxu0 0.0
        %5585 = vmatpush1.msra.mxu0 0.0
        %5586 = vmatprep.subr.mxu0 0.0
        %5587 = vmatpush1.msra.mxu0 0.0
        %5588 = vmatprep.subr.mxu0 0.0
        %5589 = vmatpush1.msra.mxu0 0.0
        %5590 = vmatprep.subr.mxu0 0.0
        %5591 = vmatpush1.msra.mxu0 0.0
        %5592 = vmatprep.subr.mxu0 0.0
        %5593 = vmatpush1.msra.mxu0 0.0
        %5594 = vmatprep.subr.mxu0 0.0
        %5595 = vmatpush1.msra.mxu0 0.0
        %5596 = vmatprep.subr.mxu0 0.0
        %5597 = vmatpush1.msra.mxu0 0.0
        %5598 = vmatprep.subr.mxu0 0.0
        %v5599 = vand.u32 %v244, 4294901760
        %v5600 = vsub.f32 %v244, %v5599
        %v5601 = vand.u32 %v5600, 4294901760
        %5602 = vmatpush1.msra.mxu0 %v5601
        %5603 = vmatprep.subr.mxu0 0.0
        %v5604 = vand.u32 %v243, 4294901760
        %v5605 = vsub.f32 %v243, %v5604
        %v5606 = vand.u32 %v5605, 4294901760
        %5607 = vmatpush1.msra.mxu0 %v5606
        %5608 = vmatprep.subr.mxu0 0.0
        %v5609 = vand.u32 %v242, 4294901760
        %v5610 = vsub.f32 %v242, %v5609
        %v5611 = vand.u32 %v5610, 4294901760
        %5612 = vmatpush1.msra.mxu0 %v5611
        %5613 = vmatprep.subr.mxu0 0.0
        %v5614 = vand.u32 %v241, 4294901760
        %v5615 = vsub.f32 %v241, %v5614
        %v5616 = vand.u32 %v5615, 4294901760
        %5617 = vmatpush1.msra.mxu0 %v5616
        %5618 = vmatprep.subr.mxu0 0.0
        %v5619 = vand.u32 %v240, 4294901760
        %v5620 = vsub.f32 %v240, %v5619
        %v5621 = vand.u32 %v5620, 4294901760
        %5622 = vmatpush1.msra.mxu0 %v5621
        %5623 = vmatprep.subr.mxu0 0.0
        %v5624 = vand.u32 %v239, 4294901760
        %v5625 = vsub.f32 %v239, %v5624
        %v5626 = vand.u32 %v5625, 4294901760
        %5627 = vmatpush1.msra.mxu0 %v5626
        %5628 = vmatprep.subr.mxu0 0.0
        %v5629 = vand.u32 %v238, 4294901760
        %v5630 = vsub.f32 %v238, %v5629
        %v5631 = vand.u32 %v5630, 4294901760
        %5632 = vmatpush1.msra.mxu0 %v5631
        %5633 = vmatprep.subr.mxu0 0.0
        %v5634 = vand.u32 %v237, 4294901760
        %v5635 = vsub.f32 %v237, %v5634
        %v5636 = vand.u32 %v5635, 4294901760
        %5637 = vmatpush1.msra.mxu0 %v5636
        %5638 = vmatprep.subr.mxu0 0.0
        %5639 = vmatpush2.msra.mxu0 0.0
        %5640 = vmatprep.subr.mxu0 0.0
        %5641 = vmatpush2.msra.mxu0 0.0
        %5642 = vmatprep.subr.mxu0 0.0
        %5643 = vmatpush2.msra.mxu0 0.0
        %5644 = vmatprep.subr.mxu0 0.0
        %5645 = vmatpush2.msra.mxu0 0.0
        %5646 = vmatprep.subr.mxu0 0.0
        %5647 = vmatpush2.msra.mxu0 0.0
        %5648 = vmatprep.subr.mxu0 0.0
        %5649 = vmatpush2.msra.mxu0 0.0
        %5650 = vmatprep.subr.mxu0 0.0
        %5651 = vmatpush2.msra.mxu0 0.0
        %5652 = vmatprep.subr.mxu0 0.0
        %5653 = vmatpush2.msra.mxu0 0.0
        %5654 = vmatprep.subr.mxu0 0.0
        %5655 = vmatpush2.msra.mxu0 0.0
        %5656 = vmatprep.subr.mxu0 0.0
        %5657 = vmatpush2.msra.mxu0 0.0
        %5658 = vmatprep.subr.mxu0 0.0
        %5659 = vmatpush2.msra.mxu0 0.0
        %5660 = vmatprep.subr.mxu0 0.0
        %5661 = vmatpush2.msra.mxu0 0.0
        %5662 = vmatprep.subr.mxu0 0.0
        %5663 = vmatpush2.msra.mxu0 0.0
        %5664 = vmatprep.subr.mxu0 0.0
        %5665 = vmatpush2.msra.mxu0 0.0
        %5666 = vmatprep.subr.mxu0 0.0
        %5667 = vmatpush2.msra.mxu0 0.0
        %5668 = vmatprep.subr.mxu0 0.0
        %5669 = vmatpush2.msra.mxu0 0.0
        %5670 = vmatprep.mubr.f32.mxu0 0.0
        %v5671 = vand.u32 %v5217, 4294901760
        %5672 = vmatmul.mubr.f32.gmra.mxu0 %v5671
        %v5673 = vpop.f32.mrf.mxu0
        %v5674 = vadd.f32 %v5579, %v5673
        %v5675 = vpop.f32.mrf.mxu0
        %5676 = vdwg.mxu0
        %5677 = vmatprep.subr.mxu0 0.0
        %5678 = vmatpush1.msra.mxu0 0.0
        %5679 = vmatprep.subr.mxu0 0.0
        %5680 = vmatpush1.msra.mxu0 0.0
        %5681 = vmatprep.subr.mxu0 0.0
        %5682 = vmatpush1.msra.mxu0 0.0
        %5683 = vmatprep.subr.mxu0 0.0
        %5684 = vmatpush1.msra.mxu0 0.0
        %5685 = vmatprep.subr.mxu0 0.0
        %5686 = vmatpush1.msra.mxu0 0.0
        %5687 = vmatprep.subr.mxu0 0.0
        %5688 = vmatpush1.msra.mxu0 0.0
        %5689 = vmatprep.subr.mxu0 0.0
        %5690 = vmatpush1.msra.mxu0 0.0
        %5691 = vmatprep.subr.mxu0 0.0
        %5692 = vmatpush1.msra.mxu0 0.0
        %5693 = vmatprep.subr.mxu0 0.0
        %v5694 = vand.u32 %v244, 4294901760
        %5695 = vmatpush1.msra.mxu0 %v5694
        %5696 = vmatprep.subr.mxu0 0.0
        %v5697 = vand.u32 %v243, 4294901760
        %5698 = vmatpush1.msra.mxu0 %v5697
        %5699 = vmatprep.subr.mxu0 0.0
        %v5700 = vand.u32 %v242, 4294901760
        %5701 = vmatpush1.msra.mxu0 %v5700
        %5702 = vmatprep.subr.mxu0 0.0
        %v5703 = vand.u32 %v241, 4294901760
        %5704 = vmatpush1.msra.mxu0 %v5703
        %5705 = vmatprep.subr.mxu0 0.0
        %v5706 = vand.u32 %v240, 4294901760
        %5707 = vmatpush1.msra.mxu0 %v5706
        %5708 = vmatprep.subr.mxu0 0.0
        %v5709 = vand.u32 %v239, 4294901760
        %5710 = vmatpush1.msra.mxu0 %v5709
        %5711 = vmatprep.subr.mxu0 0.0
        %v5712 = vand.u32 %v238, 4294901760
        %5713 = vmatpush1.msra.mxu0 %v5712
        %5714 = vmatprep.subr.mxu0 0.0
        %v5715 = vand.u32 %v237, 4294901760
        %5716 = vmatpush1.msra.mxu0 %v5715
        %5717 = vmatprep.subr.mxu0 0.0
        %5718 = vmatpush2.msra.mxu0 0.0
        %5719 = vmatprep.subr.mxu0 0.0
        %5720 = vmatpush2.msra.mxu0 0.0
        %5721 = vmatprep.subr.mxu0 0.0
        %5722 = vmatpush2.msra.mxu0 0.0
        %5723 = vmatprep.subr.mxu0 0.0
        %5724 = vmatpush2.msra.mxu0 0.0
        %5725 = vmatprep.subr.mxu0 0.0
        %5726 = vmatpush2.msra.mxu0 0.0
        %5727 = vmatprep.subr.mxu0 0.0
        %5728 = vmatpush2.msra.mxu0 0.0
        %5729 = vmatprep.subr.mxu0 0.0
        %5730 = vmatpush2.msra.mxu0 0.0
        %5731 = vmatprep.subr.mxu0 0.0
        %5732 = vmatpush2.msra.mxu0 0.0
        %5733 = vmatprep.subr.mxu0 0.0
        %5734 = vmatpush2.msra.mxu0 0.0
        %5735 = vmatprep.subr.mxu0 0.0
        %5736 = vmatpush2.msra.mxu0 0.0
        %5737 = vmatprep.subr.mxu0 0.0
        %5738 = vmatpush2.msra.mxu0 0.0
        %5739 = vmatprep.subr.mxu0 0.0
        %5740 = vmatpush2.msra.mxu0 0.0
        %5741 = vmatprep.subr.mxu0 0.0
        %5742 = vmatpush2.msra.mxu0 0.0
        %5743 = vmatprep.subr.mxu0 0.0
        %5744 = vmatpush2.msra.mxu0 0.0
        %5745 = vmatprep.subr.mxu0 0.0
        %5746 = vmatpush2.msra.mxu0 0.0
        %5747 = vmatprep.subr.mxu0 0.0
        %5748 = vmatpush2.msra.mxu0 0.0
        %5749 = vmatprep.mubr.f32.mxu0 0.0
        %v5750 = vand.u32 %v5217, 4294901760
        %5751 = vmatmul.mubr.f32.gmra.mxu0 %v5750
        %v5752 = vpop.f32.mrf.mxu0
        %v5753 = vadd.f32 %v5674, %v5752
        %v5754 = vpop.f32.mrf.mxu0
        %5755 = vdwg.mxu0
        %v5757 = vcombine.high %v5753, %v5753
        %v5759 = vunpack.c.l.s4 1966171168
        %v5760 = vunpack.c.0.s8 %v5759
        %v5761 = vlaneseq
        %v5762 = vshrl.u32 %v5761, 7
        %v5763 = vsub.s32 %v5760, %v5762
        %v5764 = vrot.slane %v5753, %v5763
        %v5766 = vunpack.c.l.s4 1966171168
        %v5767 = vunpack.c.0.s8 %v5766
        %v5768 = vlaneseq
        %v5769 = vshrl.u32 %v5768, 7
        %v5770 = vsub.s32 %v5767, %v5769
        %v5771 = vrot.slane %v5757, %v5770
        %v5772 = vcombine.high %v5764, %v5764
        %v5773 = vcombine.high %v5771, %v5771
        %v5775 = vunpack.c.l.s4 1966171168
        %v5776 = vunpack.c.0.s8 %v5775
        %v5777 = vlaneseq
        %v5778 = vshrl.u32 %v5777, 7
        %v5779 = vsub.s32 %v5776, %v5778
        %v5780 = vrot.slane %v5764, %v5779
        %v5782 = vunpack.c.l.s4 1966171168
        %v5783 = vunpack.c.0.s8 %v5782
        %v5784 = vlaneseq
        %v5785 = vshrl.u32 %v5784, 7
        %v5786 = vsub.s32 %v5783, %v5785
        %v5787 = vrot.slane %v5771, %v5786
        %v5789 = vunpack.c.l.s4 1966171168
        %v5790 = vunpack.c.0.s8 %v5789
        %v5791 = vlaneseq
        %v5792 = vshrl.u32 %v5791, 7
        %v5793 = vsub.s32 %v5790, %v5792
        %v5794 = vrot.slane %v5772, %v5793
        %v5796 = vunpack.c.l.s4 1966171168
        %v5797 = vunpack.c.0.s8 %v5796
        %v5798 = vlaneseq
        %v5799 = vshrl.u32 %v5798, 7
        %v5800 = vsub.s32 %v5797, %v5799
        %v5801 = vrot.slane %v5773, %v5800
        %v5802 = vcombine.high %v5780, %v5780
        %v5803 = vcombine.high %v5787, %v5787
        %v5804 = vcombine.high %v5794, %v5794
        %v5805 = vcombine.high %v5801, %v5801
        %v5806 = vsel %vm505, 1, 0
        %vm5807 = vcmp.eq.s32.totalorder %v5806, 1
        %v5808 = vlaneseq
        %v5809 = vshrl.u32 %v5808, 7
        %v5810 = vsub.s32 0, %v5809
        %v5811 = vrot.slane %v5780, %v5810
        %v5812 = vlaneseq
        %v5813 = vshrl.u32 %v5812, 7
        %v5814 = vsub.s32 0, %v5813
        %v5815 = vrot.slane %v5794, %v5814
        %v5816 = vlaneseq
        %v5817 = vshrl.u32 %v5816, 7
        %v5818 = vsub.s32 0, %v5817
        %v5819 = vrot.slane %v5802, %v5818
        %v5820 = vlaneseq
        %v5821 = vshrl.u32 %v5820, 7
        %v5822 = vsub.s32 0, %v5821
        %v5823 = vrot.slane %v5804, %v5822
        %v5824 = vlaneseq
        %v5825 = vshrl.u32 %v5824, 7
        %v5826 = vsub.s32 0, %v5825
        %v5827 = vrot.slane %v5787, %v5826
        %v5828 = vlaneseq
        %v5829 = vshrl.u32 %v5828, 7
        %v5830 = vsub.s32 0, %v5829
        %v5831 = vrot.slane %v5801, %v5830
        %v5832 = vlaneseq
        %v5833 = vshrl.u32 %v5832, 7
        %v5834 = vsub.s32 0, %v5833
        %v5835 = vrot.slane %v5803, %v5834
        %v5836 = vlaneseq
        %v5837 = vshrl.u32 %v5836, 7
        %v5838 = vsub.s32 0, %v5837
        %v5839 = vrot.slane %v5805, %v5838
        %v5848 = vsel %vm5807, %v5811, 0.0
        %v5849 = vsel %vm5807, %v5815, 0.0
        %v5850 = vsel %vm5807, %v5819, 0.0
        %v5851 = vsel %vm5807, %v5823, 0.0
        %v5852 = vsel %vm5807, %v5827, 0.0
        %v5853 = vsel %vm5807, %v5831, 0.0
        %v5854 = vsel %vm5807, %v5835, 0.0
        %v5855 = vsel %vm5807, %v5839, 0.0
        %v5856 = vadd.f32 %v5179, %v5848
        %v5857 = vadd.f32 %v5180, %v5849
        %v5858 = vadd.f32 %v5181, %v5850
        %v5859 = vadd.f32 %v5182, %v5851
        %v5860 = vadd.f32 %v5183, %v5852
        %v5861 = vadd.f32 %v5184, %v5853
        %v5862 = vadd.f32 %v5185, %v5854
        %v5863 = vadd.f32 %v5186, %v5855
        %v5864 = vsel %vm5213, inf, %v5187
        %v5865 = vsel %vm266, %v5864, inf
        %5866 = vmin.xlane.f32.xlu0 %v5865
        %v5867 = vpop.xlane.xlu0 %5866
        %vm5868 = vcmp.eq.f32.partialorder %v5864, %v5867
        %v5869 = vsel %vm5868, %v246, 64
        %v5870 = vsel %vm266, %v5869, 2147483647
        %v5871 = vand.u32 %v5870, 65535
        %v5872 = vshra.s32 %v5870, 16
        %v5873 = vcvt.s32.f32 %v5871
        %v5874 = vcvt.s32.f32 %v5872
        %5875 = vmin.xlane.f32.xlu0 %v5874
        %v5876 = vpop.xlane.xlu0 %5875
        %vm5877 = vcmp.eq.f32.partialorder %v5874, %v5876
        %v5878 = vsel %vm5877, %v5873, inf
        %5879 = vmin.xlane.f32.xlu0 %v5878
        %v5880 = vpop.xlane.xlu0 %5879
        %v5881 = vcvt.f32.s32 %v5880
        %v5882 = vcvt.f32.s32 %v5876
        %v5883 = vshll.u32 %v5882, 16
        %v5884 = vadd.s32 %v5883, %v5881
        %vm5885 = vcmp.eq.s32.totalorder %v246, 7
        %v5886 = vsel %vm5885, 1, 0
        %vm5887 = vcmp.eq.s32.totalorder %v5886, 1
        %v5888 = vsel %vm5887, %v5884, 0
        %v5889 = vadd.s32 %v5212, %v5888
        %vm5890 = vcmp.eq.s32.totalorder %v246, %v5884
        %v5891 = vsel %vm5890, 1, 0
        %v5892 = vcvt.s32.f32 %v5891
        %v5894 = vsel %vm266, %v5892, 0
        %5896 = vmatprep.subr.mxu0 0.0
        %5897 = vmatpush1.msra.mxu0 0.0
        %5898 = vmatprep.subr.mxu0 0.0
        %5899 = vmatpush1.msra.mxu0 0.0
        %5900 = vmatprep.subr.mxu0 0.0
        %5901 = vmatpush1.msra.mxu0 0.0
        %5902 = vmatprep.subr.mxu0 0.0
        %5903 = vmatpush1.msra.mxu0 0.0
        %5904 = vmatprep.subr.mxu0 0.0
        %5905 = vmatpush1.msra.mxu0 0.0
        %5906 = vmatprep.subr.mxu0 0.0
        %5907 = vmatpush1.msra.mxu0 0.0
        %5908 = vmatprep.subr.mxu0 0.0
        %5909 = vmatpush1.msra.mxu0 0.0
        %5910 = vmatprep.subr.mxu0 0.0
        %5911 = vmatpush1.msra.mxu0 0.0
        %5912 = vmatprep.subr.mxu0 0.0
        %v5913 = vand.u32 %v244, 4294901760
        %5914 = vmatpush1.msra.mxu0 %v5913
        %5915 = vmatprep.subr.mxu0 0.0
        %v5916 = vand.u32 %v243, 4294901760
        %5917 = vmatpush1.msra.mxu0 %v5916
        %5918 = vmatprep.subr.mxu0 0.0
        %v5919 = vand.u32 %v242, 4294901760
        %5920 = vmatpush1.msra.mxu0 %v5919
        %5921 = vmatprep.subr.mxu0 0.0
        %v5922 = vand.u32 %v241, 4294901760
        %5923 = vmatpush1.msra.mxu0 %v5922
        %5924 = vmatprep.subr.mxu0 0.0
        %v5925 = vand.u32 %v240, 4294901760
        %5926 = vmatpush1.msra.mxu0 %v5925
        %5927 = vmatprep.subr.mxu0 0.0
        %v5928 = vand.u32 %v239, 4294901760
        %5929 = vmatpush1.msra.mxu0 %v5928
        %5930 = vmatprep.subr.mxu0 0.0
        %v5931 = vand.u32 %v238, 4294901760
        %5932 = vmatpush1.msra.mxu0 %v5931
        %5933 = vmatprep.subr.mxu0 0.0
        %v5934 = vand.u32 %v237, 4294901760
        %5935 = vmatpush1.msra.mxu0 %v5934
        %5936 = vmatprep.subr.mxu0 0.0
        %5937 = vmatpush2.msra.mxu0 0.0
        %5938 = vmatprep.subr.mxu0 0.0
        %5939 = vmatpush2.msra.mxu0 0.0
        %5940 = vmatprep.subr.mxu0 0.0
        %5941 = vmatpush2.msra.mxu0 0.0
        %5942 = vmatprep.subr.mxu0 0.0
        %5943 = vmatpush2.msra.mxu0 0.0
        %5944 = vmatprep.subr.mxu0 0.0
        %5945 = vmatpush2.msra.mxu0 0.0
        %5946 = vmatprep.subr.mxu0 0.0
        %5947 = vmatpush2.msra.mxu0 0.0
        %5948 = vmatprep.subr.mxu0 0.0
        %5949 = vmatpush2.msra.mxu0 0.0
        %5950 = vmatprep.subr.mxu0 0.0
        %5951 = vmatpush2.msra.mxu0 0.0
        %5952 = vmatprep.subr.mxu0 0.0
        %5953 = vmatpush2.msra.mxu0 0.0
        %5954 = vmatprep.subr.mxu0 0.0
        %5955 = vmatpush2.msra.mxu0 0.0
        %5956 = vmatprep.subr.mxu0 0.0
        %5957 = vmatpush2.msra.mxu0 0.0
        %5958 = vmatprep.subr.mxu0 0.0
        %5959 = vmatpush2.msra.mxu0 0.0
        %5960 = vmatprep.subr.mxu0 0.0
        %5961 = vmatpush2.msra.mxu0 0.0
        %5962 = vmatprep.subr.mxu0 0.0
        %5963 = vmatpush2.msra.mxu0 0.0
        %5964 = vmatprep.subr.mxu0 0.0
        %5965 = vmatpush2.msra.mxu0 0.0
        %5966 = vmatprep.subr.mxu0 0.0
        %5967 = vmatpush2.msra.mxu0 0.0
        %5968 = vmatprep.mubr.f32.mxu0 0.0
        %v5969 = vand.u32 %v5894, 4294901760
        %v5970 = vsub.f32 %v5894, %v5969
        %v5971 = vand.u32 %v5970, 4294901760
        %v5972 = vsub.f32 %v5970, %v5971
        %v5973 = vand.u32 %v5972, 4294901760
        %5974 = vmatmul.mubr.f32.gmra.mxu0 %v5973
        %v5975 = vpop.f32.mrf.mxu0
        %v5976 = vadd.f32 0.0, %v5975
        %v5977 = vpop.f32.mrf.mxu0
        %5978 = vdwg.mxu0
        %5979 = vmatprep.subr.mxu0 0.0
        %5980 = vmatpush1.msra.mxu0 0.0
        %5981 = vmatprep.subr.mxu0 0.0
        %5982 = vmatpush1.msra.mxu0 0.0
        %5983 = vmatprep.subr.mxu0 0.0
        %5984 = vmatpush1.msra.mxu0 0.0
        %5985 = vmatprep.subr.mxu0 0.0
        %5986 = vmatpush1.msra.mxu0 0.0
        %5987 = vmatprep.subr.mxu0 0.0
        %5988 = vmatpush1.msra.mxu0 0.0
        %5989 = vmatprep.subr.mxu0 0.0
        %5990 = vmatpush1.msra.mxu0 0.0
        %5991 = vmatprep.subr.mxu0 0.0
        %5992 = vmatpush1.msra.mxu0 0.0
        %5993 = vmatprep.subr.mxu0 0.0
        %5994 = vmatpush1.msra.mxu0 0.0
        %5995 = vmatprep.subr.mxu0 0.0
        %v5996 = vand.u32 %v244, 4294901760
        %v5997 = vsub.f32 %v244, %v5996
        %v5998 = vand.u32 %v5997, 4294901760
        %v5999 = vsub.f32 %v5997, %v5998
        %v6000 = vand.u32 %v5999, 4294901760
        %6001 = vmatpush1.msra.mxu0 %v6000
        %6002 = vmatprep.subr.mxu0 0.0
        %v6003 = vand.u32 %v243, 4294901760
        %v6004 = vsub.f32 %v243, %v6003
        %v6005 = vand.u32 %v6004, 4294901760
        %v6006 = vsub.f32 %v6004, %v6005
        %v6007 = vand.u32 %v6006, 4294901760
        %6008 = vmatpush1.msra.mxu0 %v6007
        %6009 = vmatprep.subr.mxu0 0.0
        %v6010 = vand.u32 %v242, 4294901760
        %v6011 = vsub.f32 %v242, %v6010
        %v6012 = vand.u32 %v6011, 4294901760
        %v6013 = vsub.f32 %v6011, %v6012
        %v6014 = vand.u32 %v6013, 4294901760
        %6015 = vmatpush1.msra.mxu0 %v6014
        %6016 = vmatprep.subr.mxu0 0.0
        %v6017 = vand.u32 %v241, 4294901760
        %v6018 = vsub.f32 %v241, %v6017
        %v6019 = vand.u32 %v6018, 4294901760
        %v6020 = vsub.f32 %v6018, %v6019
        %v6021 = vand.u32 %v6020, 4294901760
        %6022 = vmatpush1.msra.mxu0 %v6021
        %6023 = vmatprep.subr.mxu0 0.0
        %v6024 = vand.u32 %v240, 4294901760
        %v6025 = vsub.f32 %v240, %v6024
        %v6026 = vand.u32 %v6025, 4294901760
        %v6027 = vsub.f32 %v6025, %v6026
        %v6028 = vand.u32 %v6027, 4294901760
        %6029 = vmatpush1.msra.mxu0 %v6028
        %6030 = vmatprep.subr.mxu0 0.0
        %v6031 = vand.u32 %v239, 4294901760
        %v6032 = vsub.f32 %v239, %v6031
        %v6033 = vand.u32 %v6032, 4294901760
        %v6034 = vsub.f32 %v6032, %v6033
        %v6035 = vand.u32 %v6034, 4294901760
        %6036 = vmatpush1.msra.mxu0 %v6035
        %6037 = vmatprep.subr.mxu0 0.0
        %v6038 = vand.u32 %v238, 4294901760
        %v6039 = vsub.f32 %v238, %v6038
        %v6040 = vand.u32 %v6039, 4294901760
        %v6041 = vsub.f32 %v6039, %v6040
        %v6042 = vand.u32 %v6041, 4294901760
        %6043 = vmatpush1.msra.mxu0 %v6042
        %6044 = vmatprep.subr.mxu0 0.0
        %v6045 = vand.u32 %v237, 4294901760
        %v6046 = vsub.f32 %v237, %v6045
        %v6047 = vand.u32 %v6046, 4294901760
        %v6048 = vsub.f32 %v6046, %v6047
        %v6049 = vand.u32 %v6048, 4294901760
        %6050 = vmatpush1.msra.mxu0 %v6049
        %6051 = vmatprep.subr.mxu0 0.0
        %6052 = vmatpush2.msra.mxu0 0.0
        %6053 = vmatprep.subr.mxu0 0.0
        %6054 = vmatpush2.msra.mxu0 0.0
        %6055 = vmatprep.subr.mxu0 0.0
        %6056 = vmatpush2.msra.mxu0 0.0
        %6057 = vmatprep.subr.mxu0 0.0
        %6058 = vmatpush2.msra.mxu0 0.0
        %6059 = vmatprep.subr.mxu0 0.0
        %6060 = vmatpush2.msra.mxu0 0.0
        %6061 = vmatprep.subr.mxu0 0.0
        %6062 = vmatpush2.msra.mxu0 0.0
        %6063 = vmatprep.subr.mxu0 0.0
        %6064 = vmatpush2.msra.mxu0 0.0
        %6065 = vmatprep.subr.mxu0 0.0
        %6066 = vmatpush2.msra.mxu0 0.0
        %6067 = vmatprep.subr.mxu0 0.0
        %6068 = vmatpush2.msra.mxu0 0.0
        %6069 = vmatprep.subr.mxu0 0.0
        %6070 = vmatpush2.msra.mxu0 0.0
        %6071 = vmatprep.subr.mxu0 0.0
        %6072 = vmatpush2.msra.mxu0 0.0
        %6073 = vmatprep.subr.mxu0 0.0
        %6074 = vmatpush2.msra.mxu0 0.0
        %6075 = vmatprep.subr.mxu0 0.0
        %6076 = vmatpush2.msra.mxu0 0.0
        %6077 = vmatprep.subr.mxu0 0.0
        %6078 = vmatpush2.msra.mxu0 0.0
        %6079 = vmatprep.subr.mxu0 0.0
        %6080 = vmatpush2.msra.mxu0 0.0
        %6081 = vmatprep.subr.mxu0 0.0
        %6082 = vmatpush2.msra.mxu0 0.0
        %6083 = vmatprep.mubr.f32.mxu0 0.0
        %v6084 = vand.u32 %v5894, 4294901760
        %6085 = vmatmul.mubr.f32.gmra.mxu0 %v6084
        %v6086 = vpop.f32.mrf.mxu0
        %v6087 = vadd.f32 %v5976, %v6086
        %v6088 = vpop.f32.mrf.mxu0
        %6089 = vdwg.mxu0
        %6090 = vmatprep.subr.mxu0 0.0
        %6091 = vmatpush1.msra.mxu0 0.0
        %6092 = vmatprep.subr.mxu0 0.0
        %6093 = vmatpush1.msra.mxu0 0.0
        %6094 = vmatprep.subr.mxu0 0.0
        %6095 = vmatpush1.msra.mxu0 0.0
        %6096 = vmatprep.subr.mxu0 0.0
        %6097 = vmatpush1.msra.mxu0 0.0
        %6098 = vmatprep.subr.mxu0 0.0
        %6099 = vmatpush1.msra.mxu0 0.0
        %6100 = vmatprep.subr.mxu0 0.0
        %6101 = vmatpush1.msra.mxu0 0.0
        %6102 = vmatprep.subr.mxu0 0.0
        %6103 = vmatpush1.msra.mxu0 0.0
        %6104 = vmatprep.subr.mxu0 0.0
        %6105 = vmatpush1.msra.mxu0 0.0
        %6106 = vmatprep.subr.mxu0 0.0
        %v6107 = vand.u32 %v244, 4294901760
        %v6108 = vsub.f32 %v244, %v6107
        %6109 = vmatpush1.msra.mxu0 %v6108
        %6110 = vmatprep.subr.mxu0 0.0
        %v6111 = vand.u32 %v243, 4294901760
        %v6112 = vsub.f32 %v243, %v6111
        %6113 = vmatpush1.msra.mxu0 %v6112
        %6114 = vmatprep.subr.mxu0 0.0
        %v6115 = vand.u32 %v242, 4294901760
        %v6116 = vsub.f32 %v242, %v6115
        %6117 = vmatpush1.msra.mxu0 %v6116
        %6118 = vmatprep.subr.mxu0 0.0
        %v6119 = vand.u32 %v241, 4294901760
        %v6120 = vsub.f32 %v241, %v6119
        %6121 = vmatpush1.msra.mxu0 %v6120
        %6122 = vmatprep.subr.mxu0 0.0
        %v6123 = vand.u32 %v240, 4294901760
        %v6124 = vsub.f32 %v240, %v6123
        %6125 = vmatpush1.msra.mxu0 %v6124
        %6126 = vmatprep.subr.mxu0 0.0
        %v6127 = vand.u32 %v239, 4294901760
        %v6128 = vsub.f32 %v239, %v6127
        %6129 = vmatpush1.msra.mxu0 %v6128
        %6130 = vmatprep.subr.mxu0 0.0
        %v6131 = vand.u32 %v238, 4294901760
        %v6132 = vsub.f32 %v238, %v6131
        %6133 = vmatpush1.msra.mxu0 %v6132
        %6134 = vmatprep.subr.mxu0 0.0
        %v6135 = vand.u32 %v237, 4294901760
        %v6136 = vsub.f32 %v237, %v6135
        %6137 = vmatpush1.msra.mxu0 %v6136
        %6138 = vmatprep.subr.mxu0 0.0
        %6139 = vmatpush2.msra.mxu0 0.0
        %6140 = vmatprep.subr.mxu0 0.0
        %6141 = vmatpush2.msra.mxu0 0.0
        %6142 = vmatprep.subr.mxu0 0.0
        %6143 = vmatpush2.msra.mxu0 0.0
        %6144 = vmatprep.subr.mxu0 0.0
        %6145 = vmatpush2.msra.mxu0 0.0
        %6146 = vmatprep.subr.mxu0 0.0
        %6147 = vmatpush2.msra.mxu0 0.0
        %6148 = vmatprep.subr.mxu0 0.0
        %6149 = vmatpush2.msra.mxu0 0.0
        %6150 = vmatprep.subr.mxu0 0.0
        %6151 = vmatpush2.msra.mxu0 0.0
        %6152 = vmatprep.subr.mxu0 0.0
        %6153 = vmatpush2.msra.mxu0 0.0
        %6154 = vmatprep.subr.mxu0 0.0
        %6155 = vmatpush2.msra.mxu0 0.0
        %6156 = vmatprep.subr.mxu0 0.0
        %6157 = vmatpush2.msra.mxu0 0.0
        %6158 = vmatprep.subr.mxu0 0.0
        %6159 = vmatpush2.msra.mxu0 0.0
        %6160 = vmatprep.subr.mxu0 0.0
        %6161 = vmatpush2.msra.mxu0 0.0
        %6162 = vmatprep.subr.mxu0 0.0
        %6163 = vmatpush2.msra.mxu0 0.0
        %6164 = vmatprep.subr.mxu0 0.0
        %6165 = vmatpush2.msra.mxu0 0.0
        %6166 = vmatprep.subr.mxu0 0.0
        %6167 = vmatpush2.msra.mxu0 0.0
        %6168 = vmatprep.subr.mxu0 0.0
        %6169 = vmatpush2.msra.mxu0 0.0
        %6170 = vmatprep.mubr.f32.mxu0 0.0
        %v6171 = vand.u32 %v5894, 4294901760
        %v6172 = vsub.f32 %v5894, %v6171
        %6173 = vmatmul.mubr.f32.gmra.mxu0 %v6172
        %v6174 = vpop.f32.mrf.mxu0
        %v6175 = vadd.f32 %v6087, %v6174
        %v6176 = vpop.f32.mrf.mxu0
        %6177 = vdwg.mxu0
        %6178 = vmatprep.subr.mxu0 0.0
        %6179 = vmatpush1.msra.mxu0 0.0
        %6180 = vmatprep.subr.mxu0 0.0
        %6181 = vmatpush1.msra.mxu0 0.0
        %6182 = vmatprep.subr.mxu0 0.0
        %6183 = vmatpush1.msra.mxu0 0.0
        %6184 = vmatprep.subr.mxu0 0.0
        %6185 = vmatpush1.msra.mxu0 0.0
        %6186 = vmatprep.subr.mxu0 0.0
        %6187 = vmatpush1.msra.mxu0 0.0
        %6188 = vmatprep.subr.mxu0 0.0
        %6189 = vmatpush1.msra.mxu0 0.0
        %6190 = vmatprep.subr.mxu0 0.0
        %6191 = vmatpush1.msra.mxu0 0.0
        %6192 = vmatprep.subr.mxu0 0.0
        %6193 = vmatpush1.msra.mxu0 0.0
        %6194 = vmatprep.subr.mxu0 0.0
        %v6195 = vand.u32 %v244, 4294901760
        %6196 = vmatpush1.msra.mxu0 %v6195
        %6197 = vmatprep.subr.mxu0 0.0
        %v6198 = vand.u32 %v243, 4294901760
        %6199 = vmatpush1.msra.mxu0 %v6198
        %6200 = vmatprep.subr.mxu0 0.0
        %v6201 = vand.u32 %v242, 4294901760
        %6202 = vmatpush1.msra.mxu0 %v6201
        %6203 = vmatprep.subr.mxu0 0.0
        %v6204 = vand.u32 %v241, 4294901760
        %6205 = vmatpush1.msra.mxu0 %v6204
        %6206 = vmatprep.subr.mxu0 0.0
        %v6207 = vand.u32 %v240, 4294901760
        %6208 = vmatpush1.msra.mxu0 %v6207
        %6209 = vmatprep.subr.mxu0 0.0
        %v6210 = vand.u32 %v239, 4294901760
        %6211 = vmatpush1.msra.mxu0 %v6210
        %6212 = vmatprep.subr.mxu0 0.0
        %v6213 = vand.u32 %v238, 4294901760
        %6214 = vmatpush1.msra.mxu0 %v6213
        %6215 = vmatprep.subr.mxu0 0.0
        %v6216 = vand.u32 %v237, 4294901760
        %6217 = vmatpush1.msra.mxu0 %v6216
        %6218 = vmatprep.subr.mxu0 0.0
        %6219 = vmatpush2.msra.mxu0 0.0
        %6220 = vmatprep.subr.mxu0 0.0
        %6221 = vmatpush2.msra.mxu0 0.0
        %6222 = vmatprep.subr.mxu0 0.0
        %6223 = vmatpush2.msra.mxu0 0.0
        %6224 = vmatprep.subr.mxu0 0.0
        %6225 = vmatpush2.msra.mxu0 0.0
        %6226 = vmatprep.subr.mxu0 0.0
        %6227 = vmatpush2.msra.mxu0 0.0
        %6228 = vmatprep.subr.mxu0 0.0
        %6229 = vmatpush2.msra.mxu0 0.0
        %6230 = vmatprep.subr.mxu0 0.0
        %6231 = vmatpush2.msra.mxu0 0.0
        %6232 = vmatprep.subr.mxu0 0.0
        %6233 = vmatpush2.msra.mxu0 0.0
        %6234 = vmatprep.subr.mxu0 0.0
        %6235 = vmatpush2.msra.mxu0 0.0
        %6236 = vmatprep.subr.mxu0 0.0
        %6237 = vmatpush2.msra.mxu0 0.0
        %6238 = vmatprep.subr.mxu0 0.0
        %6239 = vmatpush2.msra.mxu0 0.0
        %6240 = vmatprep.subr.mxu0 0.0
        %6241 = vmatpush2.msra.mxu0 0.0
        %6242 = vmatprep.subr.mxu0 0.0
        %6243 = vmatpush2.msra.mxu0 0.0
        %6244 = vmatprep.subr.mxu0 0.0
        %6245 = vmatpush2.msra.mxu0 0.0
        %6246 = vmatprep.subr.mxu0 0.0
        %6247 = vmatpush2.msra.mxu0 0.0
        %6248 = vmatprep.subr.mxu0 0.0
        %6249 = vmatpush2.msra.mxu0 0.0
        %6250 = vmatprep.mubr.f32.mxu0 0.0
        %v6251 = vand.u32 %v5894, 4294901760
        %v6252 = vsub.f32 %v5894, %v6251
        %v6253 = vand.u32 %v6252, 4294901760
        %6254 = vmatmul.mubr.f32.gmra.mxu0 %v6253
        %v6255 = vpop.f32.mrf.mxu0
        %v6256 = vadd.f32 %v6175, %v6255
        %v6257 = vpop.f32.mrf.mxu0
        %6258 = vdwg.mxu0
        %6259 = vmatprep.subr.mxu0 0.0
        %6260 = vmatpush1.msra.mxu0 0.0
        %6261 = vmatprep.subr.mxu0 0.0
        %6262 = vmatpush1.msra.mxu0 0.0
        %6263 = vmatprep.subr.mxu0 0.0
        %6264 = vmatpush1.msra.mxu0 0.0
        %6265 = vmatprep.subr.mxu0 0.0
        %6266 = vmatpush1.msra.mxu0 0.0
        %6267 = vmatprep.subr.mxu0 0.0
        %6268 = vmatpush1.msra.mxu0 0.0
        %6269 = vmatprep.subr.mxu0 0.0
        %6270 = vmatpush1.msra.mxu0 0.0
        %6271 = vmatprep.subr.mxu0 0.0
        %6272 = vmatpush1.msra.mxu0 0.0
        %6273 = vmatprep.subr.mxu0 0.0
        %6274 = vmatpush1.msra.mxu0 0.0
        %6275 = vmatprep.subr.mxu0 0.0
        %v6276 = vand.u32 %v244, 4294901760
        %v6277 = vsub.f32 %v244, %v6276
        %v6278 = vand.u32 %v6277, 4294901760
        %6279 = vmatpush1.msra.mxu0 %v6278
        %6280 = vmatprep.subr.mxu0 0.0
        %v6281 = vand.u32 %v243, 4294901760
        %v6282 = vsub.f32 %v243, %v6281
        %v6283 = vand.u32 %v6282, 4294901760
        %6284 = vmatpush1.msra.mxu0 %v6283
        %6285 = vmatprep.subr.mxu0 0.0
        %v6286 = vand.u32 %v242, 4294901760
        %v6287 = vsub.f32 %v242, %v6286
        %v6288 = vand.u32 %v6287, 4294901760
        %6289 = vmatpush1.msra.mxu0 %v6288
        %6290 = vmatprep.subr.mxu0 0.0
        %v6291 = vand.u32 %v241, 4294901760
        %v6292 = vsub.f32 %v241, %v6291
        %v6293 = vand.u32 %v6292, 4294901760
        %6294 = vmatpush1.msra.mxu0 %v6293
        %6295 = vmatprep.subr.mxu0 0.0
        %v6296 = vand.u32 %v240, 4294901760
        %v6297 = vsub.f32 %v240, %v6296
        %v6298 = vand.u32 %v6297, 4294901760
        %6299 = vmatpush1.msra.mxu0 %v6298
        %6300 = vmatprep.subr.mxu0 0.0
        %v6301 = vand.u32 %v239, 4294901760
        %v6302 = vsub.f32 %v239, %v6301
        %v6303 = vand.u32 %v6302, 4294901760
        %6304 = vmatpush1.msra.mxu0 %v6303
        %6305 = vmatprep.subr.mxu0 0.0
        %v6306 = vand.u32 %v238, 4294901760
        %v6307 = vsub.f32 %v238, %v6306
        %v6308 = vand.u32 %v6307, 4294901760
        %6309 = vmatpush1.msra.mxu0 %v6308
        %6310 = vmatprep.subr.mxu0 0.0
        %v6311 = vand.u32 %v237, 4294901760
        %v6312 = vsub.f32 %v237, %v6311
        %v6313 = vand.u32 %v6312, 4294901760
        %6314 = vmatpush1.msra.mxu0 %v6313
        %6315 = vmatprep.subr.mxu0 0.0
        %6316 = vmatpush2.msra.mxu0 0.0
        %6317 = vmatprep.subr.mxu0 0.0
        %6318 = vmatpush2.msra.mxu0 0.0
        %6319 = vmatprep.subr.mxu0 0.0
        %6320 = vmatpush2.msra.mxu0 0.0
        %6321 = vmatprep.subr.mxu0 0.0
        %6322 = vmatpush2.msra.mxu0 0.0
        %6323 = vmatprep.subr.mxu0 0.0
        %6324 = vmatpush2.msra.mxu0 0.0
        %6325 = vmatprep.subr.mxu0 0.0
        %6326 = vmatpush2.msra.mxu0 0.0
        %6327 = vmatprep.subr.mxu0 0.0
        %6328 = vmatpush2.msra.mxu0 0.0
        %6329 = vmatprep.subr.mxu0 0.0
        %6330 = vmatpush2.msra.mxu0 0.0
        %6331 = vmatprep.subr.mxu0 0.0
        %6332 = vmatpush2.msra.mxu0 0.0
        %6333 = vmatprep.subr.mxu0 0.0
        %6334 = vmatpush2.msra.mxu0 0.0
        %6335 = vmatprep.subr.mxu0 0.0
        %6336 = vmatpush2.msra.mxu0 0.0
        %6337 = vmatprep.subr.mxu0 0.0
        %6338 = vmatpush2.msra.mxu0 0.0
        %6339 = vmatprep.subr.mxu0 0.0
        %6340 = vmatpush2.msra.mxu0 0.0
        %6341 = vmatprep.subr.mxu0 0.0
        %6342 = vmatpush2.msra.mxu0 0.0
        %6343 = vmatprep.subr.mxu0 0.0
        %6344 = vmatpush2.msra.mxu0 0.0
        %6345 = vmatprep.subr.mxu0 0.0
        %6346 = vmatpush2.msra.mxu0 0.0
        %6347 = vmatprep.mubr.f32.mxu0 0.0
        %v6348 = vand.u32 %v5894, 4294901760
        %6349 = vmatmul.mubr.f32.gmra.mxu0 %v6348
        %v6350 = vpop.f32.mrf.mxu0
        %v6351 = vadd.f32 %v6256, %v6350
        %v6352 = vpop.f32.mrf.mxu0
        %6353 = vdwg.mxu0
        %6354 = vmatprep.subr.mxu0 0.0
        %6355 = vmatpush1.msra.mxu0 0.0
        %6356 = vmatprep.subr.mxu0 0.0
        %6357 = vmatpush1.msra.mxu0 0.0
        %6358 = vmatprep.subr.mxu0 0.0
        %6359 = vmatpush1.msra.mxu0 0.0
        %6360 = vmatprep.subr.mxu0 0.0
        %6361 = vmatpush1.msra.mxu0 0.0
        %6362 = vmatprep.subr.mxu0 0.0
        %6363 = vmatpush1.msra.mxu0 0.0
        %6364 = vmatprep.subr.mxu0 0.0
        %6365 = vmatpush1.msra.mxu0 0.0
        %6366 = vmatprep.subr.mxu0 0.0
        %6367 = vmatpush1.msra.mxu0 0.0
        %6368 = vmatprep.subr.mxu0 0.0
        %6369 = vmatpush1.msra.mxu0 0.0
        %6370 = vmatprep.subr.mxu0 0.0
        %v6371 = vand.u32 %v244, 4294901760
        %6372 = vmatpush1.msra.mxu0 %v6371
        %6373 = vmatprep.subr.mxu0 0.0
        %v6374 = vand.u32 %v243, 4294901760
        %6375 = vmatpush1.msra.mxu0 %v6374
        %6376 = vmatprep.subr.mxu0 0.0
        %v6377 = vand.u32 %v242, 4294901760
        %6378 = vmatpush1.msra.mxu0 %v6377
        %6379 = vmatprep.subr.mxu0 0.0
        %v6380 = vand.u32 %v241, 4294901760
        %6381 = vmatpush1.msra.mxu0 %v6380
        %6382 = vmatprep.subr.mxu0 0.0
        %v6383 = vand.u32 %v240, 4294901760
        %6384 = vmatpush1.msra.mxu0 %v6383
        %6385 = vmatprep.subr.mxu0 0.0
        %v6386 = vand.u32 %v239, 4294901760
        %6387 = vmatpush1.msra.mxu0 %v6386
        %6388 = vmatprep.subr.mxu0 0.0
        %v6389 = vand.u32 %v238, 4294901760
        %6390 = vmatpush1.msra.mxu0 %v6389
        %6391 = vmatprep.subr.mxu0 0.0
        %v6392 = vand.u32 %v237, 4294901760
        %6393 = vmatpush1.msra.mxu0 %v6392
        %6394 = vmatprep.subr.mxu0 0.0
        %6395 = vmatpush2.msra.mxu0 0.0
        %6396 = vmatprep.subr.mxu0 0.0
        %6397 = vmatpush2.msra.mxu0 0.0
        %6398 = vmatprep.subr.mxu0 0.0
        %6399 = vmatpush2.msra.mxu0 0.0
        %6400 = vmatprep.subr.mxu0 0.0
        %6401 = vmatpush2.msra.mxu0 0.0
        %6402 = vmatprep.subr.mxu0 0.0
        %6403 = vmatpush2.msra.mxu0 0.0
        %6404 = vmatprep.subr.mxu0 0.0
        %6405 = vmatpush2.msra.mxu0 0.0
        %6406 = vmatprep.subr.mxu0 0.0
        %6407 = vmatpush2.msra.mxu0 0.0
        %6408 = vmatprep.subr.mxu0 0.0
        %6409 = vmatpush2.msra.mxu0 0.0
        %6410 = vmatprep.subr.mxu0 0.0
        %6411 = vmatpush2.msra.mxu0 0.0
        %6412 = vmatprep.subr.mxu0 0.0
        %6413 = vmatpush2.msra.mxu0 0.0
        %6414 = vmatprep.subr.mxu0 0.0
        %6415 = vmatpush2.msra.mxu0 0.0
        %6416 = vmatprep.subr.mxu0 0.0
        %6417 = vmatpush2.msra.mxu0 0.0
        %6418 = vmatprep.subr.mxu0 0.0
        %6419 = vmatpush2.msra.mxu0 0.0
        %6420 = vmatprep.subr.mxu0 0.0
        %6421 = vmatpush2.msra.mxu0 0.0
        %6422 = vmatprep.subr.mxu0 0.0
        %6423 = vmatpush2.msra.mxu0 0.0
        %6424 = vmatprep.subr.mxu0 0.0
        %6425 = vmatpush2.msra.mxu0 0.0
        %6426 = vmatprep.mubr.f32.mxu0 0.0
        %v6427 = vand.u32 %v5894, 4294901760
        %6428 = vmatmul.mubr.f32.gmra.mxu0 %v6427
        %v6429 = vpop.f32.mrf.mxu0
        %v6430 = vadd.f32 %v6351, %v6429
        %v6431 = vpop.f32.mrf.mxu0
        %6432 = vdwg.mxu0
        %v6434 = vcombine.high %v6430, %v6430
        %v6436 = vunpack.c.l.s4 1966171168
        %v6437 = vunpack.c.0.s8 %v6436
        %v6438 = vlaneseq
        %v6439 = vshrl.u32 %v6438, 7
        %v6440 = vsub.s32 %v6437, %v6439
        %v6441 = vrot.slane %v6430, %v6440
        %v6443 = vunpack.c.l.s4 1966171168
        %v6444 = vunpack.c.0.s8 %v6443
        %v6445 = vlaneseq
        %v6446 = vshrl.u32 %v6445, 7
        %v6447 = vsub.s32 %v6444, %v6446
        %v6448 = vrot.slane %v6434, %v6447
        %v6449 = vcombine.high %v6441, %v6441
        %v6450 = vcombine.high %v6448, %v6448
        %v6452 = vunpack.c.l.s4 1966171168
        %v6453 = vunpack.c.0.s8 %v6452
        %v6454 = vlaneseq
        %v6455 = vshrl.u32 %v6454, 7
        %v6456 = vsub.s32 %v6453, %v6455
        %v6457 = vrot.slane %v6441, %v6456
        %v6459 = vunpack.c.l.s4 1966171168
        %v6460 = vunpack.c.0.s8 %v6459
        %v6461 = vlaneseq
        %v6462 = vshrl.u32 %v6461, 7
        %v6463 = vsub.s32 %v6460, %v6462
        %v6464 = vrot.slane %v6448, %v6463
        %v6466 = vunpack.c.l.s4 1966171168
        %v6467 = vunpack.c.0.s8 %v6466
        %v6468 = vlaneseq
        %v6469 = vshrl.u32 %v6468, 7
        %v6470 = vsub.s32 %v6467, %v6469
        %v6471 = vrot.slane %v6449, %v6470
        %v6473 = vunpack.c.l.s4 1966171168
        %v6474 = vunpack.c.0.s8 %v6473
        %v6475 = vlaneseq
        %v6476 = vshrl.u32 %v6475, 7
        %v6477 = vsub.s32 %v6474, %v6476
        %v6478 = vrot.slane %v6450, %v6477
        %v6479 = vcombine.high %v6457, %v6457
        %v6480 = vcombine.high %v6464, %v6464
        %v6481 = vcombine.high %v6471, %v6471
        %v6482 = vcombine.high %v6478, %v6478
        %v6483 = vsel %vm548, 1, 0
        %vm6484 = vcmp.eq.s32.totalorder %v6483, 1
        %v6485 = vlaneseq
        %v6486 = vshrl.u32 %v6485, 7
        %v6487 = vsub.s32 0, %v6486
        %v6488 = vrot.slane %v6457, %v6487
        %v6489 = vlaneseq
        %v6490 = vshrl.u32 %v6489, 7
        %v6491 = vsub.s32 0, %v6490
        %v6492 = vrot.slane %v6471, %v6491
        %v6493 = vlaneseq
        %v6494 = vshrl.u32 %v6493, 7
        %v6495 = vsub.s32 0, %v6494
        %v6496 = vrot.slane %v6479, %v6495
        %v6497 = vlaneseq
        %v6498 = vshrl.u32 %v6497, 7
        %v6499 = vsub.s32 0, %v6498
        %v6500 = vrot.slane %v6481, %v6499
        %v6501 = vlaneseq
        %v6502 = vshrl.u32 %v6501, 7
        %v6503 = vsub.s32 0, %v6502
        %v6504 = vrot.slane %v6464, %v6503
        %v6505 = vlaneseq
        %v6506 = vshrl.u32 %v6505, 7
        %v6507 = vsub.s32 0, %v6506
        %v6508 = vrot.slane %v6478, %v6507
        %v6509 = vlaneseq
        %v6510 = vshrl.u32 %v6509, 7
        %v6511 = vsub.s32 0, %v6510
        %v6512 = vrot.slane %v6480, %v6511
        %v6513 = vlaneseq
        %v6514 = vshrl.u32 %v6513, 7
        %v6515 = vsub.s32 0, %v6514
        %v6516 = vrot.slane %v6482, %v6515
        %v6525 = vsel %vm6484, %v6488, 0.0
        %v6526 = vsel %vm6484, %v6492, 0.0
        %v6527 = vsel %vm6484, %v6496, 0.0
        %v6528 = vsel %vm6484, %v6500, 0.0
        %v6529 = vsel %vm6484, %v6504, 0.0
        %v6530 = vsel %vm6484, %v6508, 0.0
        %v6531 = vsel %vm6484, %v6512, 0.0
        %v6532 = vsel %vm6484, %v6516, 0.0
        %v6533 = vadd.f32 %v5856, %v6525
        %v6534 = vadd.f32 %v5857, %v6526
        %v6535 = vadd.f32 %v5858, %v6527
        %v6536 = vadd.f32 %v5859, %v6528
        %v6537 = vadd.f32 %v5860, %v6529
        %v6538 = vadd.f32 %v5861, %v6530
        %v6539 = vadd.f32 %v5862, %v6531
        %v6540 = vadd.f32 %v5863, %v6532
        %vm6541 = vcmp.lt.s32.totalorder %v246, 3
        %v6542 = vcombine.high %v1091, %v1091
        %v6544 = vunpack.c.l.s4 1966171168
        %v6545 = vunpack.c.0.s8 %v6544
        %v6546 = vlaneseq
        %v6547 = vshrl.u32 %v6546, 7
        %v6548 = vsub.s32 %v6545, %v6547
        %v6549 = vrot.slane %v1091, %v6548
        %v6551 = vunpack.c.l.s4 1966171168
        %v6552 = vunpack.c.0.s8 %v6551
        %v6553 = vlaneseq
        %v6554 = vshrl.u32 %v6553, 7
        %v6555 = vsub.s32 %v6552, %v6554
        %v6556 = vrot.slane %v6542, %v6555
        %v6557 = vcombine.high %v6549, %v6549
        %v6558 = vcombine.high %v6556, %v6556
        %v6560 = vunpack.c.l.s4 1966171168
        %v6561 = vunpack.c.0.s8 %v6560
        %v6562 = vlaneseq
        %v6563 = vshrl.u32 %v6562, 7
        %v6564 = vsub.s32 %v6561, %v6563
        %v6565 = vrot.slane %v6549, %v6564
        %v6567 = vunpack.c.l.s4 1966171168
        %v6568 = vunpack.c.0.s8 %v6567
        %v6569 = vlaneseq
        %v6570 = vshrl.u32 %v6569, 7
        %v6571 = vsub.s32 %v6568, %v6570
        %v6572 = vrot.slane %v6556, %v6571
        %v6574 = vunpack.c.l.s4 1966171168
        %v6575 = vunpack.c.0.s8 %v6574
        %v6576 = vlaneseq
        %v6577 = vshrl.u32 %v6576, 7
        %v6578 = vsub.s32 %v6575, %v6577
        %v6579 = vrot.slane %v6557, %v6578
        %v6581 = vunpack.c.l.s4 1966171168
        %v6582 = vunpack.c.0.s8 %v6581
        %v6583 = vlaneseq
        %v6584 = vshrl.u32 %v6583, 7
        %v6585 = vsub.s32 %v6582, %v6584
        %v6586 = vrot.slane %v6558, %v6585
        %v6587 = vcombine.high %v6565, %v6565
        %v6588 = vcombine.high %v6572, %v6572
        %v6589 = vcombine.high %v6579, %v6579
        %v6590 = vcombine.high %v6586, %v6586
        %v6599 = vsel %vm6541, 1, 0
        %vm6600 = vcmp.eq.s32.totalorder %v6599, 1
        %v6601 = vsel %vm6600, %v6565, 0.0
        %v6602 = vsel %vm6600, %v6579, 0.0
        %v6603 = vsel %vm6600, %v6587, 0.0
        %v6604 = vsel %vm6600, %v6589, 0.0
        %v6605 = vsel %vm6600, %v6572, 0.0
        %v6606 = vsel %vm6600, %v6586, 0.0
        %v6607 = vsel %vm6600, %v6588, 0.0
        %v6608 = vsel %vm6600, %v6590, 0.0
        %v6609 = vlaneseq
        %v6610 = vshrl.u32 %v6609, 7
        %v6611 = vsub.s32 0, %v6610
        %v6612 = vrot.slane %v6601, %v6611
        %v6613 = vlaneseq
        %v6614 = vshrl.u32 %v6613, 7
        %v6615 = vsub.s32 0, %v6614
        %v6616 = vrot.slane %v6602, %v6615
        %v6617 = vlaneseq
        %v6618 = vshrl.u32 %v6617, 7
        %v6619 = vsub.s32 0, %v6618
        %v6620 = vrot.slane %v6603, %v6619
        %v6621 = vlaneseq
        %v6622 = vshrl.u32 %v6621, 7
        %v6623 = vsub.s32 0, %v6622
        %v6624 = vrot.slane %v6604, %v6623
        %v6625 = vlaneseq
        %v6626 = vshrl.u32 %v6625, 7
        %v6627 = vsub.s32 0, %v6626
        %v6628 = vrot.slane %v6605, %v6627
        %v6629 = vlaneseq
        %v6630 = vshrl.u32 %v6629, 7
        %v6631 = vsub.s32 0, %v6630
        %v6632 = vrot.slane %v6606, %v6631
        %v6633 = vlaneseq
        %v6634 = vshrl.u32 %v6633, 7
        %v6635 = vsub.s32 0, %v6634
        %v6636 = vrot.slane %v6607, %v6635
        %v6637 = vlaneseq
        %v6638 = vshrl.u32 %v6637, 7
        %v6639 = vsub.s32 0, %v6638
        %v6640 = vrot.slane %v6608, %v6639
        %v6641 = vsub.f32 %v6533, %v6612
        %v6642 = vsub.f32 %v6534, %v6616
        %v6643 = vsub.f32 %v6535, %v6620
        %v6644 = vsub.f32 %v6536, %v6624
        %v6645 = vsub.f32 %v6537, %v6628
        %v6646 = vsub.f32 %v6538, %v6632
        %v6647 = vsub.f32 %v6539, %v6636
        %v6648 = vsub.f32 %v6540, %v6640
        %vm6649 = vcmask 48128
        %6650 = vst.msk [vmem:[%s231] sm:$0xff] %vm6649, %v6641
        %6651 = vst.msk [vmem:[%s231 + $0x8] sm:$0xff] %vm6649, %v6642
        %6652 = vst.msk [vmem:[%s231 + $0x10] sm:$0xff] %vm6649, %v6643
        %6653 = vst.msk [vmem:[%s231 + $0x18] sm:$0xff] %vm6649, %v6644
        %6654 = vst.msk [vmem:[%s231 + $0x20] sm:$0xff] %vm6649, %v6645
        %6655 = vst.msk [vmem:[%s231 + $0x28] sm:$0xff] %vm6649, %v6646
        %6656 = vst.msk [vmem:[%s231 + $0x30] sm:$0xff] %vm6649, %v6647
        %6657 = vst.msk [vmem:[%s231 + $0x38] sm:$0xff] %vm6649, %v6648
        %6658 = vst.msk [vmem:[%s235] sm:$0xff] %vm6649, %v1091
        %vm6659 = vcmask 64512
        %6660 = vst.msk [vmem:[%s217] sm:$0xff] %vm6659, %v5889
        %p6661 = scmp.lt.s32.totalorder %s19, 1
        %s6662 = scalar_select %p6661, %s19, 1
        %s6663 = smul.addr %s6662, 8
        %s6664 = smul.addr %s6663, 8
        %s6665 = scalar_lea.vmem %s2, %s6664
        %p6666 = scmp.lt.s32.totalorder %s19, 1
        %s6667 = scalar_select %p6666, %s19, 1
        %s6668 = smul.addr %s6667, 8
        %s6669 = scalar_lea.vmem %s3, %s6668
        %s6670 = sand.u32 %s131, 1
        %s6671 = scalar_lea.sflag [#allocation3], %s6670
        %s6672 = sand.u32 %s131, 1
        %s6673 = smul.addr %s6672, 8
        %s6674 = scalar_lea.vmem [#allocation2], %s6673
        // Predicated region
        $region29: #{tpu_custom_call.1} parent=27 // pred_check
          %p6675 = pneg %p89
        $region30: #{tpu_custom_call.1} parent=27 // pred_check_branch
          %6677 = sbr.rel (%p6675) target = $region32
        $region31: #{tpu_custom_call.1} parent=27 // pred_region
          _
        $region32: #{tpu_custom_call.1} parent=27 // pred_fallthru
          _
        // Predicated region
        $region33: #{tpu_custom_call.1} parent=27 // pred_check
          %p6678 = pneg %p115
        $region34: #{tpu_custom_call.1} parent=27 // pred_check_branch
          %6680 = sbr.rel (%p6678) target = $region36
        $region35: #{tpu_custom_call.1} parent=27 // pred_region
          _
        $region36: #{tpu_custom_call.1} parent=27 // pred_fallthru
          _
        // Predicated region
        $region37: #{tpu_custom_call.1} parent=27 // pred_check
          %p6681 = pneg %p141
        $region38: #{tpu_custom_call.1} parent=27 // pred_check_branch
          %6683 = sbr.rel (%p6681) target = $region40
        $region39: #{tpu_custom_call.1} parent=27 // pred_region
          %s6685 = ssub.s32 128, 128
          %6686 = vsyncadd %s6671, %s6685
          %s6687 = smul.addr %s19, 128
          %s6688 = scalar_lea.hbm %s4, %s6687
          %s6690 = sshll.u32 %s6674, 4
          %s6691 = int_to_ptr.vmem [resolvable:$true] %s6690
          %6693 = dma.vmem_to_hbm [thread:$0]  %s6691, 128, %s6688, %s6671
        $region40: #{tpu_custom_call.1} parent=27 // pred_fallthru
          _
      $region28: #{tpu_custom_call.1} parent=5 // pred_fallthru
        _
      %p6694 = scmp.le.s32.totalorder 2, %s14
      // Predicated region
      $region41: #{tpu_custom_call.1} parent=5 // pred_check
        %p6695 = pneg %p6694
      $region42: #{tpu_custom_call.1} parent=5 // pred_check_branch
        %6697 = sbr.rel (%p6695) target = $region44
      $region43: #{tpu_custom_call.1} parent=5 // pred_region
        %s6698 = ssub.s32 %s14, 2
        // Predicated region
        $region45: #{tpu_custom_call.1} parent=43 // pred_check
          %p6699 = pneg %p95
        $region46: #{tpu_custom_call.1} parent=43 // pred_check_branch
          %6701 = sbr.rel (%p6699) target = $region48
        $region47: #{tpu_custom_call.1} parent=43 // pred_region
          %p6702 = scmp.lt.s32.totalorder %s20, 1
          %s6703 = scalar_select %p6702, %s20, 1
          %s6704 = smul.addr %s6703, 8
          %s6705 = smul.addr %s6704, 8
          %s6706 = scalar_lea.vmem %s2, %s6705
        $region48: #{tpu_custom_call.1} parent=43 // pred_fallthru
          _
        // Predicated region
        $region49: #{tpu_custom_call.1} parent=43 // pred_check
          %p6707 = pneg %p121
        $region50: #{tpu_custom_call.1} parent=43 // pred_check_branch
          %6709 = sbr.rel (%p6707) target = $region52
        $region51: #{tpu_custom_call.1} parent=43 // pred_region
          %p6710 = scmp.lt.s32.totalorder %s20, 1
          %s6711 = scalar_select %p6710, %s20, 1
          %s6712 = smul.addr %s6711, 8
          %s6713 = scalar_lea.vmem %s3, %s6712
        $region52: #{tpu_custom_call.1} parent=43 // pred_fallthru
          _
        // Predicated region
        $region53: #{tpu_custom_call.1} parent=43 // pred_check
          %p6714 = pneg %p147
        $region54: #{tpu_custom_call.1} parent=43 // pred_check_branch
          %6716 = sbr.rel (%p6714) target = $region56
        $region55: #{tpu_custom_call.1} parent=43 // pred_region
          %s6717 = sand.u32 %s132, 1
          %s6718 = scalar_lea.sflag [#allocation3], %s6717
          %s6719 = sand.u32 %s132, 1
          %s6720 = smul.addr %s6719, 8
          %s6721 = scalar_lea.vmem [#allocation2], %s6720
          %6722 = dma.done %s6718, 128
        $region56: #{tpu_custom_call.1} parent=43 // pred_fallthru
          _
      $region44: #{tpu_custom_call.1} parent=5 // pred_fallthru
        _
    $region6: #{tpu_custom_call.1} parent=1 // loop_footer
      %s18 = sadd.s32 1, %s14
    $region7: #{tpu_custom_call.1} parent=1 // loop_footer_branch
      %13 = sbr.rel target = $region3
    $region8: #{tpu_custom_call.1} parent=1 // loop_exit
      _
    %6723 = vsyncpa [#allocation3], 1
    %s6724 = scalar_lea.sflag [#allocation3], 1
    %6725 = vsyncpa %s6724, 1

</llo_original>
